<compile_context>
chip_gen: v7x
topology: tpu7x:2x2x1
jax: 0.10.0
libtpu: 0.0.40
codegen_flags: <defaults>
</compile_context>

<pallas_src>
import numpy as np
import jax
import jax.numpy as jnp
from jax import lax
from jax.experimental import pallas as pl
from jax.experimental.pallas import tpu as pltpu

_COMPUTE_DTYPE = jnp.bfloat16      # MXU-native input dtype; accumulation stays f32


def _band_conv_weights(w_hwio, W):
    """(kh,kw,Cin,Cout) -> (kh, W*Cin, W*Cout): fold the kx (width) taps and the
    SAME width zero-padding into banded matrices so the conv becomes kh matmuls
    over H-row slabs.  B[ky, q*Cin+ci, w*Cout+co] = w[ky, q-w+kw//2, ci, co]."""
    kh, kw, Cin, Cout = w_hwio.shape
    pw = kw // 2
    kx = jnp.arange(kw)[:, None, None]
    q = jnp.arange(W)[None, :, None]
    wo = jnp.arange(W)[None, None, :]
    shift = (q == wo + kx - pw).astype(w_hwio.dtype)          # (kw, W, W)
    band = jnp.einsum('kqw,ykio->yqiwo', shift, w_hwio)       # (kh, W, Cin, W, Cout)
    return band.reshape(kh, W * Cin, W * Cout)


def prepare_af_params(params, W):
    """One-time setup (kept OUT of the hot forward path): band the conv weights,
    split the 7x7 weights along the concat boundary (so no runtime HBM concat),
    tile biases to the (w*Cout + co) lane layout, cast weights to bf16."""
    n_feats = params["f2_w"].shape[-1]
    in_planes = params["f1_w"].shape[2]
    c_m = in_planes - n_feats
    w1_m = params["f1_w"][:, :, :c_m, :]
    w1_f = params["f1_w"][:, :, c_m:, :]
    cd = _COMPUTE_DTYPE
    tile_bias = lambda b: jnp.tile(b, (W,)).reshape(1, W * b.shape[0]).astype(jnp.float32)
    return {
        "B1m": _band_conv_weights(w1_m, W).astype(cd),
        "B1f": _band_conv_weights(w1_f, W).astype(cd),
        "B2": _band_conv_weights(params["f2_w"], W).astype(cd),
        "B3": _band_conv_weights(params["r1_w"], W).astype(cd),
        "B4": _band_conv_weights(params["r2_w"], W).astype(cd),
        "b1": tile_bias(params["f1_b"]),
        "b2": tile_bias(params["f2_b"]),
        "b3": tile_bias(params["r1_b"]),
        "b4": tile_bias(params["r2_b"]),
    }


def _make_af_kernel(*, nb, H, W, S, T, c_mid, n_feats, k1, k2):
    """nb images per grid step, each occupying S = H + 2*T rows of the stacked
    padded slabs (data at rows b*S+T .. b*S+T+H-1, zero halos elsewhere)."""
    M_vo = (nb - 1) * S + H          # rows of every conv's "valid output" slab
    cd = _COMPUTE_DTYPE
    f32 = jnp.float32

    def lrelu(x):                    # LeakyReLU(0.2)
        return jnp.where(x >= 0, x, 0.2 * x)

    def conv(pairs, bias_ref, kh):
        """SAME conv as kh banded matmuls over the whole image stack.
        acc initialised from the first tap; bias added once at the end."""
        ph = kh // 2
        off0 = T - ph
        acc = None
        for ky in range(kh):
            for xp, B in pairs:
                d = jnp.dot(xp[off0 + ky:off0 + ky + M_vo, :], B[ky],
                            preferred_element_type=f32)
                acc = d if acc is None else acc + d
        return acc + bias_ref[...]

    def zero_halos(xp):
        # Zero only the 2*T halo rows per image (not the whole slab); the data
        # rows are fully rewritten every grid step.  Done every step so it stays
        # correct when grid steps are sharded across TensorCores (megacore).
        z = jnp.zeros((T, xp.shape[1]), xp.dtype)
        for b in range(nb):
            xp[b * S:b * S + T, :] = z
            xp[b * S + T + H:(b + 1) * S, :] = z

    def kernel(m_ref, f_ref, c_ref,
               B1m, B1f, b1, B2, b2, B3, b3, B4, b4,
               out_ref, xp_m, xp_f, xp_h1, xp_fu, xp_r):
        for xp in (xp_m, xp_f, xp_h1, xp_fu, xp_r):
            zero_halos(xp)

        # Stage this step's nb images into the stacked-padded bf16 slabs.
        for b in range(nb):
            r0 = b * S + T
            xp_m[r0:r0 + H, :] = m_ref[b].astype(cd)
            xp_f[r0:r0 + H, :] = f_ref[b].astype(cd)

        # fusion11[0]: 7x7 conv over cat(M,F) (weights pre-split) + LeakyReLU(0.2)
        h1 = lrelu(conv([(xp_m, B1m), (xp_f, B1f)], b1, k1))
        for b in range(nb):
            xp_h1[b * S + T:b * S + T + H, :] = h1[b * S:b * S + H, :].astype(cd)

        # fusion11[1]: kxk conv + LeakyReLU(0.2); then
        # fused = alpha(C) * fusion11(cat) + F_SR   (alpha == identity)
        y2 = lrelu(conv([(xp_h1, B2)], b2, k2))
        for b in range(nb):
            fu = (c_ref[b].astype(f32) * y2[b * S:b * S + H, :]
                  + xp_f[b * S + T:b * S + T + H, :].astype(f32))
            xp_fu[b * S + T:b * S + T + H, :] = fu.astype(cd)

        # resBlock: conv -> ReLU -> conv, + identity
        r = jnp.maximum(conv([(xp_fu, B3)], b3, k2), 0.0)
        for b in range(nb):
            xp_r[b * S + T:b * S + T + H, :] = r[b * S:b * S + H, :].astype(cd)

        y4 = conv([(xp_r, B4)], b4, k2)
        for b in range(nb):
            out_ref[b] = (y4[b * S:b * S + H, :]
                          + xp_fu[b * S + T:b * S + T + H, :].astype(f32)
                          ).astype(out_ref.dtype)

    return kernel


def af_forward(prep, M_SR, F_SR, C, *, single_buffer_weights=True):
    """M_SR: (N, C_M, H, W); F_SR, C: (N, n_feats, H, W)  — NCHW like PyTorch.
    NOTE: the NCHW interface costs two wrapper transposes (HBM passes); an
    NHWC-native caller could drop them."""
    out_dtype = F_SR.dtype
    cd = _COMPUTE_DTYPE
    to_nhwc = lambda t: jnp.transpose(t, (0, 2, 3, 1))
    N, c_m, H, W = M_SR.shape
    n_feats = F_SR.shape[1]

    k1 = prep["B1m"].shape[0]
    k2 = prep["B2"].shape[0]
    c_mid = prep["B2"].shape[1] // W
    assert prep["B1m"].shape[1] == W * c_m and prep["B1f"].shape[1] == W * n_feats, \
        "prepared params do not match input shapes (re-run prepare_af_params)"

    # Lane-dense bf16 slabs (N, H, W*C) — free reshape of contiguous NHWC.
    m2 = to_nhwc(M_SR).astype(cd).reshape(N, H, W * c_m)
    f2 = to_nhwc(F_SR).astype(cd).reshape(N, H, W * n_feats)
    c2 = to_nhwc(C).astype(cd).reshape(N, H, W * n_feats)

    # Batch-stack images per grid step to raise MXU row occupancy.
    p_max = max(k1, k2) // 2
    S = H + 2 * p_max
    nb = max(1, min(N, 256 // S))      # target M ~ 256 rows (keeps f32 acc small)
    while N % nb != 0:
        nb -= 1
    grid = (N // nb,)

    per_step = lambda g: (g, 0, 0)

    def const_spec(shape):
        imap = (lambda g: (0, 0, 0)) if len(shape) == 3 else (lambda g: (0, 0))
        if single_buffer_weights:
            return pl.BlockSpec(shape, imap, pipeline_mode=pl.Buffered(1))
        return pl.BlockSpec(shape, imap)

    in_specs = [
        pl.BlockSpec((nb, H, W * c_m), per_step),
        pl.BlockSpec((nb, H, W * n_feats), per_step),
        pl.BlockSpec((nb, H, W * n_feats), per_step),
        const_spec(prep["B1m"].shape), const_spec(prep["B1f"].shape),
        const_spec(prep["b1"].shape),
        const_spec(prep["B2"].shape), const_spec(prep["b2"].shape),
        const_spec(prep["B3"].shape), const_spec(prep["b3"].shape),
        const_spec(prep["B4"].shape), const_spec(prep["b4"].shape),
    ]
    scratch = [
        pltpu.VMEM((nb * S, W * c_m), cd),       # xp_m
        pltpu.VMEM((nb * S, W * n_feats), cd),   # xp_f
        pltpu.VMEM((nb * S, W * c_mid), cd),     # xp_h1
        pltpu.VMEM((nb * S, W * n_feats), cd),   # xp_fused
        pltpu.VMEM((nb * S, W * n_feats), cd),   # xp_r
    ]

    # VMEM budget derived from the actual block/scratch sizes, capped for v7x.
    isz = np.dtype(cd).itemsize
    osz = np.dtype(out_dtype).itemsize
    wbuf = 1 if single_buffer_weights else 2
    est = 2 * nb * H * W * c_m * isz
    est += 2 * 2 * nb * H * W * n_feats * isz                 # f2, c2 blocks
    est += 2 * nb * H * W * n_feats * osz                     # out block
    for k in ("B1m", "B1f", "B2", "B3", "B4"):
        est += wbuf * prep[k].size * isz
    for k in ("b1", "b2", "b3", "b4"):
        est += wbuf * prep[k].size * 4
    est += nb * S * W * (c_m + 3 * n_feats + c_mid) * isz     # scratch slabs
    vmem_limit = int(min(max(2 * est + (8 << 20), 32 << 20), 56 << 20))

    kernel = _make_af_kernel(nb=nb, H=H, W=W, S=S, T=p_max,
                             c_mid=c_mid, n_feats=n_feats, k1=k1, k2=k2)

    out2 = pl.pallas_call(
        kernel,
        out_shape=jax.ShapeDtypeStruct((N, H, W * n_feats), out_dtype),
        grid_spec=pltpu.PrefetchScalarGridSpec(
            num_scalar_prefetch=0,
            grid=grid,
            in_specs=in_specs,
            out_specs=pl.BlockSpec((nb, H, W * n_feats), per_step),
            scratch_shapes=scratch,
        ),
        compiler_params=pltpu.CompilerParams(
            dimension_semantics=("parallel",),
            vmem_limit_bytes=vmem_limit,
        ),
    )(m2, f2, c2,
      prep["B1m"], prep["B1f"], prep["b1"], prep["B2"], prep["b2"],
      prep["B3"], prep["b3"], prep["B4"], prep["b4"])

    out = out2.reshape(N, H, W, n_feats)
    return jnp.transpose(out, (0, 3, 1, 2))          # back to NCHW


def init_af_params(key, in_planes, n_feats, kernel_size):
    def conv_p(k, kh, kw, cin, cout):
        kw_, kb_ = jax.random.split(k)
        w = jax.random.normal(kw_, (kh, kw, cin, cout), jnp.float32)
        w = w * (1.0 / (kh * kw * cin) ** 0.5)
        b = jax.random.normal(kb_, (cout,), jnp.float32) * 0.01
        return w, b

    ks = jax.random.split(key, 4)
    p = {}
    # fusion11 = [conv(in_planes->16, 7x7)+LReLU(0.2), conv(16->n_feats, kxk)+LReLU(0.2)]
    p["f1_w"], p["f1_b"] = conv_p(ks[0], 7, 7, in_planes, 16)
    p["f2_w"], p["f2_b"] = conv_p(ks[1], kernel_size, kernel_size, 16, n_feats)
    # resBlock = conv(kxk) -> ReLU -> conv(kxk), + identity
    p["r1_w"], p["r1_b"] = conv_p(ks[2], kernel_size, kernel_size, n_feats, n_feats)
    p["r2_w"], p["r2_b"] = conv_p(ks[3], kernel_size, kernel_size, n_feats, n_feats)
    return p


def _ref_forward(params, M_SR, F_SR, C):
    """Pure-JAX reference mirroring the kernel's bf16-input / f32-accumulate math."""
    bf = jnp.bfloat16
    to_nhwc = lambda t: jnp.transpose(t, (0, 2, 3, 1))
    m = to_nhwc(M_SR).astype(bf)
    f = to_nhwc(F_SR).astype(bf)
    c = to_nhwc(C).astype(bf)

    def conv(x, w, b):
        ph, pw = w.shape[0] // 2, w.shape[1] // 2
        y = lax.conv_general_dilated(
            x.astype(bf), w.astype(bf), (1, 1), [(ph, ph), (pw, pw)],
            dimension_numbers=('NHWC', 'HWIO', 'NHWC'),
            preferred_element_type=jnp.float32)
        return y + b

    lrelu = lambda x: jnp.where(x >= 0, x, 0.2 * x)
    cat = jnp.concatenate([m, f], axis=-1)
    h = lrelu(conv(cat, params["f1_w"], params["f1_b"]))
    y = lrelu(conv(h, params["f2_w"], params["f2_b"]))
    fused = c.astype(jnp.float32) * y + f.astype(jnp.float32)
    fused_b = fused.astype(bf)
    r = jnp.maximum(conv(fused_b, params["r1_w"], params["r1_b"]), 0.0)
    out = conv(r, params["r2_w"], params["r2_b"]) + fused_b.astype(jnp.float32)
    return jnp.transpose(out, (0, 3, 1, 2))


if __name__ == "__main__":
    key = jax.random.PRNGKey(0)
    N, H, W = 2, 16, 16
    c_m, n_feats, kernel_size = 1, 8, 3
    in_planes = c_m + n_feats

    k_p, k_m, k_f, k_c = jax.random.split(key, 4)
    params = init_af_params(k_p, in_planes, n_feats, kernel_size)
    prep = prepare_af_params(params, W)          # one-time setup, off the hot path
    M_SR = jax.random.normal(k_m, (N, c_m, H, W), jnp.float32)
    F_SR = jax.random.normal(k_f, (N, n_feats, H, W), jnp.float32)
    C = jax.random.normal(k_c, (N, n_feats, H, W), jnp.float32)

    fwd = jax.jit(af_forward, static_argnames=("single_buffer_weights",))
    try:
        out = fwd(prep, M_SR, F_SR, C, single_buffer_weights=True)
        out = jax.block_until_ready(out)
    except Exception:
        # Fallback if this Pallas build rejects single-buffered (Buffered(1)) specs.
        out = fwd(prep, M_SR, F_SR, C, single_buffer_weights=False)
        out = jax.block_until_ready(out)

    assert out.shape == (N, n_feats, H, W) and out.dtype == jnp.float32

    ref = _ref_forward(params, M_SR, F_SR, C)
    err = float(jnp.max(jnp.abs(out - ref)))
    assert err < 2e-2, f"mismatch vs pure-JAX reference: max abs err = {err}"
    print("KERNEL_OK")
</pallas_src>

<mosaic_0001>
module attributes {stable_mosaic.version = 11 : i64} {
  func.func @kernel(%arg0: i32, %arg1: memref<2x16x16xbf16, #tpu.memory_space<vmem>>, %arg2: memref<2x16x128xbf16, #tpu.memory_space<vmem>>, %arg3: memref<2x16x128xbf16, #tpu.memory_space<vmem>>, %arg4: memref<7x16x256xbf16, #tpu.memory_space<vmem>>, %arg5: memref<7x128x256xbf16, #tpu.memory_space<vmem>>, %arg6: memref<1x256xf32, #tpu.memory_space<vmem>>, %arg7: memref<3x256x128xbf16, #tpu.memory_space<vmem>>, %arg8: memref<1x128xf32, #tpu.memory_space<vmem>>, %arg9: memref<3x128x128xbf16, #tpu.memory_space<vmem>>, %arg10: memref<1x128xf32, #tpu.memory_space<vmem>>, %arg11: memref<3x128x128xbf16, #tpu.memory_space<vmem>>, %arg12: memref<1x128xf32, #tpu.memory_space<vmem>>, %arg13: memref<2x16x128xf32, #tpu.memory_space<vmem>>, %arg14: memref<44x16xbf16, #tpu.memory_space<vmem>>, %arg15: memref<44x128xbf16, #tpu.memory_space<vmem>>, %arg16: memref<44x256xbf16, #tpu.memory_space<vmem>>, %arg17: memref<44x128xbf16, #tpu.memory_space<vmem>>, %arg18: memref<44x128xbf16, #tpu.memory_space<vmem>>) attributes {dimension_semantics = [#tpu.dimension_semantics<parallel>], iteration_bounds = array<i64: 1>, scalar_prefetch = 0 : i64, scratch_operands = 5 : i64, tpu.core_type = #tpu.core_type<tc>, window_params = [{transform_indices = @transform_0, window_bounds = array<i64: 2, 16, 16>}, {transform_indices = @transform_1, window_bounds = array<i64: 2, 16, 128>}, {transform_indices = @transform_2, window_bounds = array<i64: 2, 16, 128>}, {pipeline_mode = #tpu.pipeline_mode<synchronous>, transform_indices = @transform_3, window_bounds = array<i64: 7, 16, 256>}, {pipeline_mode = #tpu.pipeline_mode<synchronous>, transform_indices = @transform_4, window_bounds = array<i64: 7, 128, 256>}, {pipeline_mode = #tpu.pipeline_mode<synchronous>, transform_indices = @transform_5, window_bounds = array<i64: 1, 256>}, {pipeline_mode = #tpu.pipeline_mode<synchronous>, transform_indices = @transform_6, window_bounds = array<i64: 3, 256, 128>}, {pipeline_mode = #tpu.pipeline_mode<synchronous>, transform_indices = @transform_7, window_bounds = array<i64: 1, 128>}, {pipeline_mode = #tpu.pipeline_mode<synchronous>, transform_indices = @transform_8, window_bounds = array<i64: 3, 128, 128>}, {pipeline_mode = #tpu.pipeline_mode<synchronous>, transform_indices = @transform_9, window_bounds = array<i64: 1, 128>}, {pipeline_mode = #tpu.pipeline_mode<synchronous>, transform_indices = @transform_10, window_bounds = array<i64: 3, 128, 128>}, {pipeline_mode = #tpu.pipeline_mode<synchronous>, transform_indices = @transform_11, window_bounds = array<i64: 1, 128>}, {transform_indices = @transform_12, window_bounds = array<i64: 2, 16, 128>}]} {
    %cst = arith.constant 0.000000e+00 : bf16
    %0 = vector.broadcast %cst : bf16 to vector<3x16xbf16>
    %c0 = arith.constant 0 : index
    %c0_0 = arith.constant 0 : index
    %1 = vector.load %arg14[%c0, %c0_0] : memref<44x16xbf16, #tpu.memory_space<vmem>>, vector<3x16xbf16>
    tpu.vector_store %arg14[%c0, %c0_0], %0 {strides = array<i32>} : memref<44x16xbf16, #tpu.memory_space<vmem>>, vector<3x16xbf16>,
    %c19 = arith.constant 19 : index
    %c0_1 = arith.constant 0 : index
    %2 = vector.load %arg14[%c19, %c0_1] : memref<44x16xbf16, #tpu.memory_space<vmem>>, vector<3x16xbf16>
    tpu.vector_store %arg14[%c19, %c0_1], %0 {strides = array<i32>} : memref<44x16xbf16, #tpu.memory_space<vmem>>, vector<3x16xbf16>,
    %c22 = arith.constant 22 : index
    %c0_2 = arith.constant 0 : index
    %3 = vector.load %arg14[%c22, %c0_2] : memref<44x16xbf16, #tpu.memory_space<vmem>>, vector<3x16xbf16>
    tpu.vector_store %arg14[%c22, %c0_2], %0 {strides = array<i32>} : memref<44x16xbf16, #tpu.memory_space<vmem>>, vector<3x16xbf16>,
    %c41 = arith.constant 41 : index
    %c0_3 = arith.constant 0 : index
    %4 = vector.load %arg14[%c41, %c0_3] : memref<44x16xbf16, #tpu.memory_space<vmem>>, vector<3x16xbf16>
    tpu.vector_store %arg14[%c41, %c0_3], %0 {strides = array<i32>} : memref<44x16xbf16, #tpu.memory_space<vmem>>, vector<3x16xbf16>,
    %cst_4 = arith.constant 0.000000e+00 : bf16
    %5 = vector.broadcast %cst_4 : bf16 to vector<3x128xbf16>
    %c0_5 = arith.constant 0 : index
    %c0_6 = arith.constant 0 : index
    %6 = vector.load %arg15[%c0_5, %c0_6] : memref<44x128xbf16, #tpu.memory_space<vmem>>, vector<3x128xbf16>
    tpu.vector_store %arg15[%c0_5, %c0_6], %5 {strides = array<i32>} : memref<44x128xbf16, #tpu.memory_space<vmem>>, vector<3x128xbf16>,
    %c19_7 = arith.constant 19 : index
    %c0_8 = arith.constant 0 : index
    %7 = vector.load %arg15[%c19_7, %c0_8] : memref<44x128xbf16, #tpu.memory_space<vmem>>, vector<3x128xbf16>
    tpu.vector_store %arg15[%c19_7, %c0_8], %5 {strides = array<i32>} : memref<44x128xbf16, #tpu.memory_space<vmem>>, vector<3x128xbf16>,
    %c22_9 = arith.constant 22 : index
    %c0_10 = arith.constant 0 : index
    %8 = vector.load %arg15[%c22_9, %c0_10] : memref<44x128xbf16, #tpu.memory_space<vmem>>, vector<3x128xbf16>
    tpu.vector_store %arg15[%c22_9, %c0_10], %5 {strides = array<i32>} : memref<44x128xbf16, #tpu.memory_space<vmem>>, vector<3x128xbf16>,
    %c41_11 = arith.constant 41 : index
    %c0_12 = arith.constant 0 : index
    %9 = vector.load %arg15[%c41_11, %c0_12] : memref<44x128xbf16, #tpu.memory_space<vmem>>, vector<3x128xbf16>
    tpu.vector_store %arg15[%c41_11, %c0_12], %5 {strides = array<i32>} : memref<44x128xbf16, #tpu.memory_space<vmem>>, vector<3x128xbf16>,
    %cst_13 = arith.constant 0.000000e+00 : bf16
    %10 = vector.broadcast %cst_13 : bf16 to vector<3x256xbf16>
    %c0_14 = arith.constant 0 : index
    %c0_15 = arith.constant 0 : index
    %11 = vector.load %arg16[%c0_14, %c0_15] : memref<44x256xbf16, #tpu.memory_space<vmem>>, vector<3x256xbf16>
    tpu.vector_store %arg16[%c0_14, %c0_15], %10 {strides = array<i32>} : memref<44x256xbf16, #tpu.memory_space<vmem>>, vector<3x256xbf16>,
    %c19_16 = arith.constant 19 : index
    %c0_17 = arith.constant 0 : index
    %12 = vector.load %arg16[%c19_16, %c0_17] : memref<44x256xbf16, #tpu.memory_space<vmem>>, vector<3x256xbf16>
    tpu.vector_store %arg16[%c19_16, %c0_17], %10 {strides = array<i32>} : memref<44x256xbf16, #tpu.memory_space<vmem>>, vector<3x256xbf16>,
    %c22_18 = arith.constant 22 : index
    %c0_19 = arith.constant 0 : index
    %13 = vector.load %arg16[%c22_18, %c0_19] : memref<44x256xbf16, #tpu.memory_space<vmem>>, vector<3x256xbf16>
    tpu.vector_store %arg16[%c22_18, %c0_19], %10 {strides = array<i32>} : memref<44x256xbf16, #tpu.memory_space<vmem>>, vector<3x256xbf16>,
    %c41_20 = arith.constant 41 : index
    %c0_21 = arith.constant 0 : index
    %14 = vector.load %arg16[%c41_20, %c0_21] : memref<44x256xbf16, #tpu.memory_space<vmem>>, vector<3x256xbf16>
    tpu.vector_store %arg16[%c41_20, %c0_21], %10 {strides = array<i32>} : memref<44x256xbf16, #tpu.memory_space<vmem>>, vector<3x256xbf16>,
    %cst_22 = arith.constant 0.000000e+00 : bf16
    %15 = vector.broadcast %cst_22 : bf16 to vector<3x128xbf16>
    %c0_23 = arith.constant 0 : index
    %c0_24 = arith.constant 0 : index
    %16 = vector.load %arg17[%c0_23, %c0_24] : memref<44x128xbf16, #tpu.memory_space<vmem>>, vector<3x128xbf16>
    tpu.vector_store %arg17[%c0_23, %c0_24], %15 {strides = array<i32>} : memref<44x128xbf16, #tpu.memory_space<vmem>>, vector<3x128xbf16>,
    %c19_25 = arith.constant 19 : index
    %c0_26 = arith.constant 0 : index
    %17 = vector.load %arg17[%c19_25, %c0_26] : memref<44x128xbf16, #tpu.memory_space<vmem>>, vector<3x128xbf16>
    tpu.vector_store %arg17[%c19_25, %c0_26], %15 {strides = array<i32>} : memref<44x128xbf16, #tpu.memory_space<vmem>>, vector<3x128xbf16>,
    %c22_27 = arith.constant 22 : index
    %c0_28 = arith.constant 0 : index
    %18 = vector.load %arg17[%c22_27, %c0_28] : memref<44x128xbf16, #tpu.memory_space<vmem>>, vector<3x128xbf16>
    tpu.vector_store %arg17[%c22_27, %c0_28], %15 {strides = array<i32>} : memref<44x128xbf16, #tpu.memory_space<vmem>>, vector<3x128xbf16>,
    %c41_29 = arith.constant 41 : index
    %c0_30 = arith.constant 0 : index
    %19 = vector.load %arg17[%c41_29, %c0_30] : memref<44x128xbf16, #tpu.memory_space<vmem>>, vector<3x128xbf16>
    tpu.vector_store %arg17[%c41_29, %c0_30], %15 {strides = array<i32>} : memref<44x128xbf16, #tpu.memory_space<vmem>>, vector<3x128xbf16>,
    %cst_31 = arith.constant 0.000000e+00 : bf16
    %20 = vector.broadcast %cst_31 : bf16 to vector<3x128xbf16>
    %c0_32 = arith.constant 0 : index
    %c0_33 = arith.constant 0 : index
    %21 = vector.load %arg18[%c0_32, %c0_33] : memref<44x128xbf16, #tpu.memory_space<vmem>>, vector<3x128xbf16>
    tpu.vector_store %arg18[%c0_32, %c0_33], %20 {strides = array<i32>} : memref<44x128xbf16, #tpu.memory_space<vmem>>, vector<3x128xbf16>,
    %c19_34 = arith.constant 19 : index
    %c0_35 = arith.constant 0 : index
    %22 = vector.load %arg18[%c19_34, %c0_35] : memref<44x128xbf16, #tpu.memory_space<vmem>>, vector<3x128xbf16>
    tpu.vector_store %arg18[%c19_34, %c0_35], %20 {strides = array<i32>} : memref<44x128xbf16, #tpu.memory_space<vmem>>, vector<3x128xbf16>,
    %c22_36 = arith.constant 22 : index
    %c0_37 = arith.constant 0 : index
    %23 = vector.load %arg18[%c22_36, %c0_37] : memref<44x128xbf16, #tpu.memory_space<vmem>>, vector<3x128xbf16>
    tpu.vector_store %arg18[%c22_36, %c0_37], %20 {strides = array<i32>} : memref<44x128xbf16, #tpu.memory_space<vmem>>, vector<3x128xbf16>,
    %c41_38 = arith.constant 41 : index
    %c0_39 = arith.constant 0 : index
    %24 = vector.load %arg18[%c41_38, %c0_39] : memref<44x128xbf16, #tpu.memory_space<vmem>>, vector<3x128xbf16>
    tpu.vector_store %arg18[%c41_38, %c0_39], %20 {strides = array<i32>} : memref<44x128xbf16, #tpu.memory_space<vmem>>, vector<3x128xbf16>,
    %c0_40 = arith.constant 0 : index
    %c0_41 = arith.constant 0 : index
    %c0_42 = arith.constant 0 : index
    %25 = vector.load %arg1[%c0_40, %c0_41, %c0_42] : memref<2x16x16xbf16, #tpu.memory_space<vmem>>, vector<1x16x16xbf16>
    %26 = vector.shape_cast %25 : vector<1x16x16xbf16> to vector<16x16xbf16>
    %c3 = arith.constant 3 : index
    %c0_43 = arith.constant 0 : index
    %27 = vector.load %arg14[%c3, %c0_43] : memref<44x16xbf16, #tpu.memory_space<vmem>>, vector<16x16xbf16>
    tpu.vector_store %arg14[%c3, %c0_43], %26 {strides = array<i32>} : memref<44x16xbf16, #tpu.memory_space<vmem>>, vector<16x16xbf16>,
    %c0_44 = arith.constant 0 : index
    %c0_45 = arith.constant 0 : index
    %c0_46 = arith.constant 0 : index
    %28 = vector.load %arg2[%c0_44, %c0_45, %c0_46] : memref<2x16x128xbf16, #tpu.memory_space<vmem>>, vector<1x16x128xbf16>
    %29 = vector.shape_cast %28 : vector<1x16x128xbf16> to vector<16x128xbf16>
    %c3_47 = arith.constant 3 : index
    %c0_48 = arith.constant 0 : index
    %30 = vector.load %arg15[%c3_47, %c0_48] : memref<44x128xbf16, #tpu.memory_space<vmem>>, vector<16x128xbf16>
    tpu.vector_store %arg15[%c3_47, %c0_48], %29 {strides = array<i32>} : memref<44x128xbf16, #tpu.memory_space<vmem>>, vector<16x128xbf16>,
    %c1 = arith.constant 1 : index
    %c0_49 = arith.constant 0 : index
    %c0_50 = arith.constant 0 : index
    %31 = vector.load %arg1[%c1, %c0_49, %c0_50] : memref<2x16x16xbf16, #tpu.memory_space<vmem>>, vector<1x16x16xbf16>
    %32 = vector.shape_cast %31 : vector<1x16x16xbf16> to vector<16x16xbf16>
    %c25 = arith.constant 25 : index
    %c0_51 = arith.constant 0 : index
    %33 = vector.load %arg14[%c25, %c0_51] : memref<44x16xbf16, #tpu.memory_space<vmem>>, vector<16x16xbf16>
    tpu.vector_store %arg14[%c25, %c0_51], %32 {strides = array<i32>} : memref<44x16xbf16, #tpu.memory_space<vmem>>, vector<16x16xbf16>,
    %c1_52 = arith.constant 1 : index
    %c0_53 = arith.constant 0 : index
    %c0_54 = arith.constant 0 : index
    %34 = vector.load %arg2[%c1_52, %c0_53, %c0_54] : memref<2x16x128xbf16, #tpu.memory_space<vmem>>, vector<1x16x128xbf16>
    %35 = vector.shape_cast %34 : vector<1x16x128xbf16> to vector<16x128xbf16>
    %c25_55 = arith.constant 25 : index
    %c0_56 = arith.constant 0 : index
    %36 = vector.load %arg15[%c25_55, %c0_56] : memref<44x128xbf16, #tpu.memory_space<vmem>>, vector<16x128xbf16>
    tpu.vector_store %arg15[%c25_55, %c0_56], %35 {strides = array<i32>} : memref<44x128xbf16, #tpu.memory_space<vmem>>, vector<16x128xbf16>,
    %c0_57 = arith.constant 0 : index
    %c0_58 = arith.constant 0 : index
    %37 = vector.load %arg14[%c0_57, %c0_58] : memref<44x16xbf16, #tpu.memory_space<vmem>>, vector<38x16xbf16>
    %c0_59 = arith.constant 0 : index
    %c0_60 = arith.constant 0 : index
    %c0_61 = arith.constant 0 : index
    %38 = vector.load %arg4[%c0_59, %c0_60, %c0_61] : memref<7x16x256xbf16, #tpu.memory_space<vmem>>, vector<1x16x256xbf16>
    %39 = vector.shape_cast %38 : vector<1x16x256xbf16> to vector<16x256xbf16>
    %cst_62 = arith.constant dense<0.000000e+00> : vector<38x256xf32>
    %40 = tpu.matmul %37, %39, %cst_62 {dimension_numbers = #tpu.dot_dimension_numbers<[1], [0], [0], [1], [0, 0, 1, 1], [], []>} : vector<38x16xbf16>, vector<16x256xbf16>, vector<38x256xf32> -> vector<38x256xf32>
    %c0_63 = arith.constant 0 : index
    %c0_64 = arith.constant 0 : index
    %41 = vector.load %arg15[%c0_63, %c0_64] : memref<44x128xbf16, #tpu.memory_space<vmem>>, vector<38x128xbf16>
    %c0_65 = arith.constant 0 : index
    %c0_66 = arith.constant 0 : index
    %c0_67 = arith.constant 0 : index
    %42 = vector.load %arg5[%c0_65, %c0_66, %c0_67] : memref<7x128x256xbf16, #tpu.memory_space<vmem>>, vector<1x128x256xbf16>
    %43 = vector.shape_cast %42 : vector<1x128x256xbf16> to vector<128x256xbf16>
    %cst_68 = arith.constant dense<0.000000e+00> : vector<38x256xf32>
    %44 = tpu.matmul %41, %43, %cst_68 {dimension_numbers = #tpu.dot_dimension_numbers<[1], [0], [0], [1], [0, 0, 1, 1], [], []>} : vector<38x128xbf16>, vector<128x256xbf16>, vector<38x256xf32> -> vector<38x256xf32>
    %45 = arith.addf %40, %44 : vector<38x256xf32>
    %c1_69 = arith.constant 1 : index
    %c0_70 = arith.constant 0 : index
    %46 = vector.load %arg14[%c1_69, %c0_70] : memref<44x16xbf16, #tpu.memory_space<vmem>>, vector<38x16xbf16>
    %c1_71 = arith.constant 1 : index
    %c0_72 = arith.constant 0 : index
    %c0_73 = arith.constant 0 : index
    %47 = vector.load %arg4[%c1_71, %c0_72, %c0_73] : memref<7x16x256xbf16, #tpu.memory_space<vmem>>, vector<1x16x256xbf16>
    %48 = vector.shape_cast %47 : vector<1x16x256xbf16> to vector<16x256xbf16>
    %cst_74 = arith.constant dense<0.000000e+00> : vector<38x256xf32>
    %49 = tpu.matmul %46, %48, %cst_74 {dimension_numbers = #tpu.dot_dimension_numbers<[1], [0], [0], [1], [0, 0, 1, 1], [], []>} : vector<38x16xbf16>, vector<16x256xbf16>, vector<38x256xf32> -> vector<38x256xf32>
    %50 = arith.addf %45, %49 : vector<38x256xf32>
    %c1_75 = arith.constant 1 : index
    %c0_76 = arith.constant 0 : index
    %51 = vector.load %arg15[%c1_75, %c0_76] : memref<44x128xbf16, #tpu.memory_space<vmem>>, vector<38x128xbf16>
    %c1_77 = arith.constant 1 : index
    %c0_78 = arith.constant 0 : index
    %c0_79 = arith.constant 0 : index
    %52 = vector.load %arg5[%c1_77, %c0_78, %c0_79] : memref<7x128x256xbf16, #tpu.memory_space<vmem>>, vector<1x128x256xbf16>
    %53 = vector.shape_cast %52 : vector<1x128x256xbf16> to vector<128x256xbf16>
    %cst_80 = arith.constant dense<0.000000e+00> : vector<38x256xf32>
    %54 = tpu.matmul %51, %53, %cst_80 {dimension_numbers = #tpu.dot_dimension_numbers<[1], [0], [0], [1], [0, 0, 1, 1], [], []>} : vector<38x128xbf16>, vector<128x256xbf16>, vector<38x256xf32> -> vector<38x256xf32>
    %55 = arith.addf %50, %54 : vector<38x256xf32>
    %c2 = arith.constant 2 : index
    %c0_81 = arith.constant 0 : index
    %56 = vector.load %arg14[%c2, %c0_81] : memref<44x16xbf16, #tpu.memory_space<vmem>>, vector<38x16xbf16>
    %c2_82 = arith.constant 2 : index
    %c0_83 = arith.constant 0 : index
    %c0_84 = arith.constant 0 : index
    %57 = vector.load %arg4[%c2_82, %c0_83, %c0_84] : memref<7x16x256xbf16, #tpu.memory_space<vmem>>, vector<1x16x256xbf16>
    %58 = vector.shape_cast %57 : vector<1x16x256xbf16> to vector<16x256xbf16>
    %cst_85 = arith.constant dense<0.000000e+00> : vector<38x256xf32>
    %59 = tpu.matmul %56, %58, %cst_85 {dimension_numbers = #tpu.dot_dimension_numbers<[1], [0], [0], [1], [0, 0, 1, 1], [], []>} : vector<38x16xbf16>, vector<16x256xbf16>, vector<38x256xf32> -> vector<38x256xf32>
    %60 = arith.addf %55, %59 : vector<38x256xf32>
    %c2_86 = arith.constant 2 : index
    %c0_87 = arith.constant 0 : index
    %61 = vector.load %arg15[%c2_86, %c0_87] : memref<44x128xbf16, #tpu.memory_space<vmem>>, vector<38x128xbf16>
    %c2_88 = arith.constant 2 : index
    %c0_89 = arith.constant 0 : index
    %c0_90 = arith.constant 0 : index
    %62 = vector.load %arg5[%c2_88, %c0_89, %c0_90] : memref<7x128x256xbf16, #tpu.memory_space<vmem>>, vector<1x128x256xbf16>
    %63 = vector.shape_cast %62 : vector<1x128x256xbf16> to vector<128x256xbf16>
    %cst_91 = arith.constant dense<0.000000e+00> : vector<38x256xf32>
    %64 = tpu.matmul %61, %63, %cst_91 {dimension_numbers = #tpu.dot_dimension_numbers<[1], [0], [0], [1], [0, 0, 1, 1], [], []>} : vector<38x128xbf16>, vector<128x256xbf16>, vector<38x256xf32> -> vector<38x256xf32>
    %65 = arith.addf %60, %64 : vector<38x256xf32>
    %c3_92 = arith.constant 3 : index
    %c0_93 = arith.constant 0 : index
    %66 = vector.load %arg14[%c3_92, %c0_93] : memref<44x16xbf16, #tpu.memory_space<vmem>>, vector<38x16xbf16>
    %c3_94 = arith.constant 3 : index
    %c0_95 = arith.constant 0 : index
    %c0_96 = arith.constant 0 : index
    %67 = vector.load %arg4[%c3_94, %c0_95, %c0_96] : memref<7x16x256xbf16, #tpu.memory_space<vmem>>, vector<1x16x256xbf16>
    %68 = vector.shape_cast %67 : vector<1x16x256xbf16> to vector<16x256xbf16>
    %cst_97 = arith.constant dense<0.000000e+00> : vector<38x256xf32>
    %69 = tpu.matmul %66, %68, %cst_97 {dimension_numbers = #tpu.dot_dimension_numbers<[1], [0], [0], [1], [0, 0, 1, 1], [], []>} : vector<38x16xbf16>, vector<16x256xbf16>, vector<38x256xf32> -> vector<38x256xf32>
    %70 = arith.addf %65, %69 : vector<38x256xf32>
    %c3_98 = arith.constant 3 : index
    %c0_99 = arith.constant 0 : index
    %71 = vector.load %arg15[%c3_98, %c0_99] : memref<44x128xbf16, #tpu.memory_space<vmem>>, vector<38x128xbf16>
    %c3_100 = arith.constant 3 : index
    %c0_101 = arith.constant 0 : index
    %c0_102 = arith.constant 0 : index
    %72 = vector.load %arg5[%c3_100, %c0_101, %c0_102] : memref<7x128x256xbf16, #tpu.memory_space<vmem>>, vector<1x128x256xbf16>
    %73 = vector.shape_cast %72 : vector<1x128x256xbf16> to vector<128x256xbf16>
    %cst_103 = arith.constant dense<0.000000e+00> : vector<38x256xf32>
    %74 = tpu.matmul %71, %73, %cst_103 {dimension_numbers = #tpu.dot_dimension_numbers<[1], [0], [0], [1], [0, 0, 1, 1], [], []>} : vector<38x128xbf16>, vector<128x256xbf16>, vector<38x256xf32> -> vector<38x256xf32>
    %75 = arith.addf %70, %74 : vector<38x256xf32>
    %c4 = arith.constant 4 : index
    %c0_104 = arith.constant 0 : index
    %76 = vector.load %arg14[%c4, %c0_104] : memref<44x16xbf16, #tpu.memory_space<vmem>>, vector<38x16xbf16>
    %c4_105 = arith.constant 4 : index
    %c0_106 = arith.constant 0 : index
    %c0_107 = arith.constant 0 : index
    %77 = vector.load %arg4[%c4_105, %c0_106, %c0_107] : memref<7x16x256xbf16, #tpu.memory_space<vmem>>, vector<1x16x256xbf16>
    %78 = vector.shape_cast %77 : vector<1x16x256xbf16> to vector<16x256xbf16>
    %cst_108 = arith.constant dense<0.000000e+00> : vector<38x256xf32>
    %79 = tpu.matmul %76, %78, %cst_108 {dimension_numbers = #tpu.dot_dimension_numbers<[1], [0], [0], [1], [0, 0, 1, 1], [], []>} : vector<38x16xbf16>, vector<16x256xbf16>, vector<38x256xf32> -> vector<38x256xf32>
    %80 = arith.addf %75, %79 : vector<38x256xf32>
    %c4_109 = arith.constant 4 : index
    %c0_110 = arith.constant 0 : index
    %81 = vector.load %arg15[%c4_109, %c0_110] : memref<44x128xbf16, #tpu.memory_space<vmem>>, vector<38x128xbf16>
    %c4_111 = arith.constant 4 : index
    %c0_112 = arith.constant 0 : index
    %c0_113 = arith.constant 0 : index
    %82 = vector.load %arg5[%c4_111, %c0_112, %c0_113] : memref<7x128x256xbf16, #tpu.memory_space<vmem>>, vector<1x128x256xbf16>
    %83 = vector.shape_cast %82 : vector<1x128x256xbf16> to vector<128x256xbf16>
    %cst_114 = arith.constant dense<0.000000e+00> : vector<38x256xf32>
    %84 = tpu.matmul %81, %83, %cst_114 {dimension_numbers = #tpu.dot_dimension_numbers<[1], [0], [0], [1], [0, 0, 1, 1], [], []>} : vector<38x128xbf16>, vector<128x256xbf16>, vector<38x256xf32> -> vector<38x256xf32>
    %85 = arith.addf %80, %84 : vector<38x256xf32>
    %c5 = arith.constant 5 : index
    %c0_115 = arith.constant 0 : index
    %86 = vector.load %arg14[%c5, %c0_115] : memref<44x16xbf16, #tpu.memory_space<vmem>>, vector<38x16xbf16>
    %c5_116 = arith.constant 5 : index
    %c0_117 = arith.constant 0 : index
    %c0_118 = arith.constant 0 : index
    %87 = vector.load %arg4[%c5_116, %c0_117, %c0_118] : memref<7x16x256xbf16, #tpu.memory_space<vmem>>, vector<1x16x256xbf16>
    %88 = vector.shape_cast %87 : vector<1x16x256xbf16> to vector<16x256xbf16>
    %cst_119 = arith.constant dense<0.000000e+00> : vector<38x256xf32>
    %89 = tpu.matmul %86, %88, %cst_119 {dimension_numbers = #tpu.dot_dimension_numbers<[1], [0], [0], [1], [0, 0, 1, 1], [], []>} : vector<38x16xbf16>, vector<16x256xbf16>, vector<38x256xf32> -> vector<38x256xf32>
    %90 = arith.addf %85, %89 : vector<38x256xf32>
    %c5_120 = arith.constant 5 : index
    %c0_121 = arith.constant 0 : index
    %91 = vector.load %arg15[%c5_120, %c0_121] : memref<44x128xbf16, #tpu.memory_space<vmem>>, vector<38x128xbf16>
    %c5_122 = arith.constant 5 : index
    %c0_123 = arith.constant 0 : index
    %c0_124 = arith.constant 0 : index
    %92 = vector.load %arg5[%c5_122, %c0_123, %c0_124] : memref<7x128x256xbf16, #tpu.memory_space<vmem>>, vector<1x128x256xbf16>
    %93 = vector.shape_cast %92 : vector<1x128x256xbf16> to vector<128x256xbf16>
    %cst_125 = arith.constant dense<0.000000e+00> : vector<38x256xf32>
    %94 = tpu.matmul %91, %93, %cst_125 {dimension_numbers = #tpu.dot_dimension_numbers<[1], [0], [0], [1], [0, 0, 1, 1], [], []>} : vector<38x128xbf16>, vector<128x256xbf16>, vector<38x256xf32> -> vector<38x256xf32>
    %95 = arith.addf %90, %94 : vector<38x256xf32>
    %c6 = arith.constant 6 : index
    %c0_126 = arith.constant 0 : index
    %96 = vector.load %arg14[%c6, %c0_126] : memref<44x16xbf16, #tpu.memory_space<vmem>>, vector<38x16xbf16>
    %c6_127 = arith.constant 6 : index
    %c0_128 = arith.constant 0 : index
    %c0_129 = arith.constant 0 : index
    %97 = vector.load %arg4[%c6_127, %c0_128, %c0_129] : memref<7x16x256xbf16, #tpu.memory_space<vmem>>, vector<1x16x256xbf16>
    %98 = vector.shape_cast %97 : vector<1x16x256xbf16> to vector<16x256xbf16>
    %cst_130 = arith.constant dense<0.000000e+00> : vector<38x256xf32>
    %99 = tpu.matmul %96, %98, %cst_130 {dimension_numbers = #tpu.dot_dimension_numbers<[1], [0], [0], [1], [0, 0, 1, 1], [], []>} : vector<38x16xbf16>, vector<16x256xbf16>, vector<38x256xf32> -> vector<38x256xf32>
    %100 = arith.addf %95, %99 : vector<38x256xf32>
    %c6_131 = arith.constant 6 : index
    %c0_132 = arith.constant 0 : index
    %101 = vector.load %arg15[%c6_131, %c0_132] : memref<44x128xbf16, #tpu.memory_space<vmem>>, vector<38x128xbf16>
    %c6_133 = arith.constant 6 : index
    %c0_134 = arith.constant 0 : index
    %c0_135 = arith.constant 0 : index
    %102 = vector.load %arg5[%c6_133, %c0_134, %c0_135] : memref<7x128x256xbf16, #tpu.memory_space<vmem>>, vector<1x128x256xbf16>
    %103 = vector.shape_cast %102 : vector<1x128x256xbf16> to vector<128x256xbf16>
    %cst_136 = arith.constant dense<0.000000e+00> : vector<38x256xf32>
    %104 = tpu.matmul %101, %103, %cst_136 {dimension_numbers = #tpu.dot_dimension_numbers<[1], [0], [0], [1], [0, 0, 1, 1], [], []>} : vector<38x128xbf16>, vector<128x256xbf16>, vector<38x256xf32> -> vector<38x256xf32>
    %105 = arith.addf %100, %104 : vector<38x256xf32>
    %c0_137 = arith.constant 0 : index
    %c0_138 = arith.constant 0 : index
    %106 = vector.load %arg6[%c0_137, %c0_138] : memref<1x256xf32, #tpu.memory_space<vmem>>, vector<1x256xf32>
    %107 = vector.broadcast %106 : vector<1x256xf32> to vector<38x256xf32>
    %108 = arith.addf %105, %107 : vector<38x256xf32>
    %cst_139 = arith.constant 0.000000e+00 : f32
    %109 = vector.broadcast %cst_139 : f32 to vector<38x256xf32>
    %110 = arith.cmpf oge, %108, %109 : vector<38x256xf32>
    %cst_140 = arith.constant 2.000000e-01 : f32
    %111 = vector.broadcast %cst_140 : f32 to vector<38x256xf32>
    %112 = arith.mulf %111, %108 : vector<38x256xf32>
    %113 = arith.select %110, %108, %112 : vector<38x256xi1>, vector<38x256xf32>
    %114 = vector.extract_strided_slice %113 {offsets = [0, 0], sizes = [16, 256], strides = [1, 1]} : vector<38x256xf32> to vector<16x256xf32>
    %115 = arith.truncf %114 : vector<16x256xf32> to vector<16x256xbf16>
    %c3_141 = arith.constant 3 : index
    %c0_142 = arith.constant 0 : index
    %116 = vector.load %arg16[%c3_141, %c0_142] : memref<44x256xbf16, #tpu.memory_space<vmem>>, vector<16x256xbf16>
    tpu.vector_store %arg16[%c3_141, %c0_142], %115 {strides = array<i32>} : memref<44x256xbf16, #tpu.memory_space<vmem>>, vector<16x256xbf16>,
    %117 = vector.extract_strided_slice %113 {offsets = [22, 0], sizes = [16, 256], strides = [1, 1]} : vector<38x256xf32> to vector<16x256xf32>
    %118 = arith.truncf %117 : vector<16x256xf32> to vector<16x256xbf16>
    %c25_143 = arith.constant 25 : index
    %c0_144 = arith.constant 0 : index
    %119 = vector.load %arg16[%c25_143, %c0_144] : memref<44x256xbf16, #tpu.memory_space<vmem>>, vector<16x256xbf16>
    tpu.vector_store %arg16[%c25_143, %c0_144], %118 {strides = array<i32>} : memref<44x256xbf16, #tpu.memory_space<vmem>>, vector<16x256xbf16>,
    %c2_145 = arith.constant 2 : index
    %c0_146 = arith.constant 0 : index
    %120 = vector.load %arg16[%c2_145, %c0_146] : memref<44x256xbf16, #tpu.memory_space<vmem>>, vector<38x256xbf16>
    %c0_147 = arith.constant 0 : index
    %c0_148 = arith.constant 0 : index
    %c0_149 = arith.constant 0 : index
    %121 = vector.load %arg7[%c0_147, %c0_148, %c0_149] : memref<3x256x128xbf16, #tpu.memory_space<vmem>>, vector<1x256x128xbf16>
    %122 = vector.shape_cast %121 : vector<1x256x128xbf16> to vector<256x128xbf16>
    %cst_150 = arith.constant dense<0.000000e+00> : vector<38x128xf32>
    %123 = tpu.matmul %120, %122, %cst_150 {dimension_numbers = #tpu.dot_dimension_numbers<[1], [0], [0], [1], [0, 0, 1, 1], [], []>} : vector<38x256xbf16>, vector<256x128xbf16>, vector<38x128xf32> -> vector<38x128xf32>
    %c3_151 = arith.constant 3 : index
    %c0_152 = arith.constant 0 : index
    %124 = vector.load %arg16[%c3_151, %c0_152] : memref<44x256xbf16, #tpu.memory_space<vmem>>, vector<38x256xbf16>
    %c1_153 = arith.constant 1 : index
    %c0_154 = arith.constant 0 : index
    %c0_155 = arith.constant 0 : index
    %125 = vector.load %arg7[%c1_153, %c0_154, %c0_155] : memref<3x256x128xbf16, #tpu.memory_space<vmem>>, vector<1x256x128xbf16>
    %126 = vector.shape_cast %125 : vector<1x256x128xbf16> to vector<256x128xbf16>
    %cst_156 = arith.constant dense<0.000000e+00> : vector<38x128xf32>
    %127 = tpu.matmul %124, %126, %cst_156 {dimension_numbers = #tpu.dot_dimension_numbers<[1], [0], [0], [1], [0, 0, 1, 1], [], []>} : vector<38x256xbf16>, vector<256x128xbf16>, vector<38x128xf32> -> vector<38x128xf32>
    %128 = arith.addf %123, %127 : vector<38x128xf32>
    %c4_157 = arith.constant 4 : index
    %c0_158 = arith.constant 0 : index
    %129 = vector.load %arg16[%c4_157, %c0_158] : memref<44x256xbf16, #tpu.memory_space<vmem>>, vector<38x256xbf16>
    %c2_159 = arith.constant 2 : index
    %c0_160 = arith.constant 0 : index
    %c0_161 = arith.constant 0 : index
    %130 = vector.load %arg7[%c2_159, %c0_160, %c0_161] : memref<3x256x128xbf16, #tpu.memory_space<vmem>>, vector<1x256x128xbf16>
    %131 = vector.shape_cast %130 : vector<1x256x128xbf16> to vector<256x128xbf16>
    %cst_162 = arith.constant dense<0.000000e+00> : vector<38x128xf32>
    %132 = tpu.matmul %129, %131, %cst_162 {dimension_numbers = #tpu.dot_dimension_numbers<[1], [0], [0], [1], [0, 0, 1, 1], [], []>} : vector<38x256xbf16>, vector<256x128xbf16>, vector<38x128xf32> -> vector<38x128xf32>
    %133 = arith.addf %128, %132 : vector<38x128xf32>
    %c0_163 = arith.constant 0 : index
    %c0_164 = arith.constant 0 : index
    %134 = vector.load %arg8[%c0_163, %c0_164] : memref<1x128xf32, #tpu.memory_space<vmem>>, vector<1x128xf32>
    %135 = vector.broadcast %134 : vector<1x128xf32> to vector<38x128xf32>
    %136 = arith.addf %133, %135 : vector<38x128xf32>
    %cst_165 = arith.constant 0.000000e+00 : f32
    %137 = vector.broadcast %cst_165 : f32 to vector<38x128xf32>
    %138 = arith.cmpf oge, %136, %137 : vector<38x128xf32>
    %cst_166 = arith.constant 2.000000e-01 : f32
    %139 = vector.broadcast %cst_166 : f32 to vector<38x128xf32>
    %140 = arith.mulf %139, %136 : vector<38x128xf32>
    %141 = arith.select %138, %136, %140 : vector<38x128xi1>, vector<38x128xf32>
    %c0_167 = arith.constant 0 : index
    %c0_168 = arith.constant 0 : index
    %c0_169 = arith.constant 0 : index
    %142 = vector.load %arg3[%c0_167, %c0_168, %c0_169] : memref<2x16x128xbf16, #tpu.memory_space<vmem>>, vector<1x16x128xbf16>
    %143 = vector.shape_cast %142 : vector<1x16x128xbf16> to vector<16x128xbf16>
    %144 = arith.extf %143 : vector<16x128xbf16> to vector<16x128xf32>
    %145 = vector.extract_strided_slice %141 {offsets = [0, 0], sizes = [16, 128], strides = [1, 1]} : vector<38x128xf32> to vector<16x128xf32>
    %146 = arith.mulf %144, %145 : vector<16x128xf32>
    %c3_170 = arith.constant 3 : index
    %c0_171 = arith.constant 0 : index
    %147 = vector.load %arg15[%c3_170, %c0_171] : memref<44x128xbf16, #tpu.memory_space<vmem>>, vector<16x128xbf16>
    %148 = arith.extf %147 : vector<16x128xbf16> to vector<16x128xf32>
    %149 = arith.addf %146, %148 : vector<16x128xf32>
    %150 = arith.truncf %149 : vector<16x128xf32> to vector<16x128xbf16>
    %c3_172 = arith.constant 3 : index
    %c0_173 = arith.constant 0 : index
    %151 = vector.load %arg17[%c3_172, %c0_173] : memref<44x128xbf16, #tpu.memory_space<vmem>>, vector<16x128xbf16>
    tpu.vector_store %arg17[%c3_172, %c0_173], %150 {strides = array<i32>} : memref<44x128xbf16, #tpu.memory_space<vmem>>, vector<16x128xbf16>,
    %c1_174 = arith.constant 1 : index
    %c0_175 = arith.constant 0 : index
    %c0_176 = arith.constant 0 : index
    %152 = vector.load %arg3[%c1_174, %c0_175, %c0_176] : memref<2x16x128xbf16, #tpu.memory_space<vmem>>, vector<1x16x128xbf16>
    %153 = vector.shape_cast %152 : vector<1x16x128xbf16> to vector<16x128xbf16>
    %154 = arith.extf %153 : vector<16x128xbf16> to vector<16x128xf32>
    %155 = vector.extract_strided_slice %141 {offsets = [22, 0], sizes = [16, 128], strides = [1, 1]} : vector<38x128xf32> to vector<16x128xf32>
    %156 = arith.mulf %154, %155 : vector<16x128xf32>
    %c25_177 = arith.constant 25 : index
    %c0_178 = arith.constant 0 : index
    %157 = vector.load %arg15[%c25_177, %c0_178] : memref<44x128xbf16, #tpu.memory_space<vmem>>, vector<16x128xbf16>
    %158 = arith.extf %157 : vector<16x128xbf16> to vector<16x128xf32>
    %159 = arith.addf %156, %158 : vector<16x128xf32>
    %160 = arith.truncf %159 : vector<16x128xf32> to vector<16x128xbf16>
    %c25_179 = arith.constant 25 : index
    %c0_180 = arith.constant 0 : index
    %161 = vector.load %arg17[%c25_179, %c0_180] : memref<44x128xbf16, #tpu.memory_space<vmem>>, vector<16x128xbf16>
    tpu.vector_store %arg17[%c25_179, %c0_180], %160 {strides = array<i32>} : memref<44x128xbf16, #tpu.memory_space<vmem>>, vector<16x128xbf16>,
    %c2_181 = arith.constant 2 : index
    %c0_182 = arith.constant 0 : index
    %162 = vector.load %arg17[%c2_181, %c0_182] : memref<44x128xbf16, #tpu.memory_space<vmem>>, vector<38x128xbf16>
    %c0_183 = arith.constant 0 : index
    %c0_184 = arith.constant 0 : index
    %c0_185 = arith.constant 0 : index
    %163 = vector.load %arg9[%c0_183, %c0_184, %c0_185] : memref<3x128x128xbf16, #tpu.memory_space<vmem>>, vector<1x128x128xbf16>
    %164 = vector.shape_cast %163 : vector<1x128x128xbf16> to vector<128x128xbf16>
    %cst_186 = arith.constant dense<0.000000e+00> : vector<38x128xf32>
    %165 = tpu.matmul %162, %164, %cst_186 {dimension_numbers = #tpu.dot_dimension_numbers<[1], [0], [0], [1], [0, 0, 1, 1], [], []>} : vector<38x128xbf16>, vector<128x128xbf16>, vector<38x128xf32> -> vector<38x128xf32>
    %c3_187 = arith.constant 3 : index
    %c0_188 = arith.constant 0 : index
    %166 = vector.load %arg17[%c3_187, %c0_188] : memref<44x128xbf16, #tpu.memory_space<vmem>>, vector<38x128xbf16>
    %c1_189 = arith.constant 1 : index
    %c0_190 = arith.constant 0 : index
    %c0_191 = arith.constant 0 : index
    %167 = vector.load %arg9[%c1_189, %c0_190, %c0_191] : memref<3x128x128xbf16, #tpu.memory_space<vmem>>, vector<1x128x128xbf16>
    %168 = vector.shape_cast %167 : vector<1x128x128xbf16> to vector<128x128xbf16>
    %cst_192 = arith.constant dense<0.000000e+00> : vector<38x128xf32>
    %169 = tpu.matmul %166, %168, %cst_192 {dimension_numbers = #tpu.dot_dimension_numbers<[1], [0], [0], [1], [0, 0, 1, 1], [], []>} : vector<38x128xbf16>, vector<128x128xbf16>, vector<38x128xf32> -> vector<38x128xf32>
    %170 = arith.addf %165, %169 : vector<38x128xf32>
    %c4_193 = arith.constant 4 : index
    %c0_194 = arith.constant 0 : index
    %171 = vector.load %arg17[%c4_193, %c0_194] : memref<44x128xbf16, #tpu.memory_space<vmem>>, vector<38x128xbf16>
    %c2_195 = arith.constant 2 : index
    %c0_196 = arith.constant 0 : index
    %c0_197 = arith.constant 0 : index
    %172 = vector.load %arg9[%c2_195, %c0_196, %c0_197] : memref<3x128x128xbf16, #tpu.memory_space<vmem>>, vector<1x128x128xbf16>
    %173 = vector.shape_cast %172 : vector<1x128x128xbf16> to vector<128x128xbf16>
    %cst_198 = arith.constant dense<0.000000e+00> : vector<38x128xf32>
    %174 = tpu.matmul %171, %173, %cst_198 {dimension_numbers = #tpu.dot_dimension_numbers<[1], [0], [0], [1], [0, 0, 1, 1], [], []>} : vector<38x128xbf16>, vector<128x128xbf16>, vector<38x128xf32> -> vector<38x128xf32>
    %175 = arith.addf %170, %174 : vector<38x128xf32>
    %c0_199 = arith.constant 0 : index
    %c0_200 = arith.constant 0 : index
    %176 = vector.load %arg10[%c0_199, %c0_200] : memref<1x128xf32, #tpu.memory_space<vmem>>, vector<1x128xf32>
    %177 = vector.broadcast %176 : vector<1x128xf32> to vector<38x128xf32>
    %178 = arith.addf %175, %177 : vector<38x128xf32>
    %cst_201 = arith.constant 0.000000e+00 : f32
    %179 = vector.broadcast %cst_201 : f32 to vector<38x128xf32>
    %180 = arith.maximumf %178, %179 : vector<38x128xf32>
    %181 = vector.extract_strided_slice %180 {offsets = [0, 0], sizes = [16, 128], strides = [1, 1]} : vector<38x128xf32> to vector<16x128xf32>
    %182 = arith.truncf %181 : vector<16x128xf32> to vector<16x128xbf16>
    %c3_202 = arith.constant 3 : index
    %c0_203 = arith.constant 0 : index
    %183 = vector.load %arg18[%c3_202, %c0_203] : memref<44x128xbf16, #tpu.memory_space<vmem>>, vector<16x128xbf16>
    tpu.vector_store %arg18[%c3_202, %c0_203], %182 {strides = array<i32>} : memref<44x128xbf16, #tpu.memory_space<vmem>>, vector<16x128xbf16>,
    %184 = vector.extract_strided_slice %180 {offsets = [22, 0], sizes = [16, 128], strides = [1, 1]} : vector<38x128xf32> to vector<16x128xf32>
    %185 = arith.truncf %184 : vector<16x128xf32> to vector<16x128xbf16>
    %c25_204 = arith.constant 25 : index
    %c0_205 = arith.constant 0 : index
    %186 = vector.load %arg18[%c25_204, %c0_205] : memref<44x128xbf16, #tpu.memory_space<vmem>>, vector<16x128xbf16>
    tpu.vector_store %arg18[%c25_204, %c0_205], %185 {strides = array<i32>} : memref<44x128xbf16, #tpu.memory_space<vmem>>, vector<16x128xbf16>,
    %c2_206 = arith.constant 2 : index
    %c0_207 = arith.constant 0 : index
    %187 = vector.load %arg18[%c2_206, %c0_207] : memref<44x128xbf16, #tpu.memory_space<vmem>>, vector<38x128xbf16>
    %c0_208 = arith.constant 0 : index
    %c0_209 = arith.constant 0 : index
    %c0_210 = arith.constant 0 : index
    %188 = vector.load %arg11[%c0_208, %c0_209, %c0_210] : memref<3x128x128xbf16, #tpu.memory_space<vmem>>, vector<1x128x128xbf16>
    %189 = vector.shape_cast %188 : vector<1x128x128xbf16> to vector<128x128xbf16>
    %cst_211 = arith.constant dense<0.000000e+00> : vector<38x128xf32>
    %190 = tpu.matmul %187, %189, %cst_211 {dimension_numbers = #tpu.dot_dimension_numbers<[1], [0], [0], [1], [0, 0, 1, 1], [], []>} : vector<38x128xbf16>, vector<128x128xbf16>, vector<38x128xf32> -> vector<38x128xf32>
    %c3_212 = arith.constant 3 : index
    %c0_213 = arith.constant 0 : index
    %191 = vector.load %arg18[%c3_212, %c0_213] : memref<44x128xbf16, #tpu.memory_space<vmem>>, vector<38x128xbf16>
    %c1_214 = arith.constant 1 : index
    %c0_215 = arith.constant 0 : index
    %c0_216 = arith.constant 0 : index
    %192 = vector.load %arg11[%c1_214, %c0_215, %c0_216] : memref<3x128x128xbf16, #tpu.memory_space<vmem>>, vector<1x128x128xbf16>
    %193 = vector.shape_cast %192 : vector<1x128x128xbf16> to vector<128x128xbf16>
    %cst_217 = arith.constant dense<0.000000e+00> : vector<38x128xf32>
    %194 = tpu.matmul %191, %193, %cst_217 {dimension_numbers = #tpu.dot_dimension_numbers<[1], [0], [0], [1], [0, 0, 1, 1], [], []>} : vector<38x128xbf16>, vector<128x128xbf16>, vector<38x128xf32> -> vector<38x128xf32>
    %195 = arith.addf %190, %194 : vector<38x128xf32>
    %c4_218 = arith.constant 4 : index
    %c0_219 = arith.constant 0 : index
    %196 = vector.load %arg18[%c4_218, %c0_219] : memref<44x128xbf16, #tpu.memory_space<vmem>>, vector<38x128xbf16>
    %c2_220 = arith.constant 2 : index
    %c0_221 = arith.constant 0 : index
    %c0_222 = arith.constant 0 : index
    %197 = vector.load %arg11[%c2_220, %c0_221, %c0_222] : memref<3x128x128xbf16, #tpu.memory_space<vmem>>, vector<1x128x128xbf16>
    %198 = vector.shape_cast %197 : vector<1x128x128xbf16> to vector<128x128xbf16>
    %cst_223 = arith.constant dense<0.000000e+00> : vector<38x128xf32>
    %199 = tpu.matmul %196, %198, %cst_223 {dimension_numbers = #tpu.dot_dimension_numbers<[1], [0], [0], [1], [0, 0, 1, 1], [], []>} : vector<38x128xbf16>, vector<128x128xbf16>, vector<38x128xf32> -> vector<38x128xf32>
    %200 = arith.addf %195, %199 : vector<38x128xf32>
    %c0_224 = arith.constant 0 : index
    %c0_225 = arith.constant 0 : index
    %201 = vector.load %arg12[%c0_224, %c0_225] : memref<1x128xf32, #tpu.memory_space<vmem>>, vector<1x128xf32>
    %202 = vector.broadcast %201 : vector<1x128xf32> to vector<38x128xf32>
    %203 = arith.addf %200, %202 : vector<38x128xf32>
    %204 = vector.extract_strided_slice %203 {offsets = [0, 0], sizes = [16, 128], strides = [1, 1]} : vector<38x128xf32> to vector<16x128xf32>
    %c3_226 = arith.constant 3 : index
    %c0_227 = arith.constant 0 : index
    %205 = vector.load %arg17[%c3_226, %c0_227] : memref<44x128xbf16, #tpu.memory_space<vmem>>, vector<16x128xbf16>
    %206 = arith.extf %205 : vector<16x128xbf16> to vector<16x128xf32>
    %207 = arith.addf %204, %206 : vector<16x128xf32>
    %c0_228 = arith.constant 0 : index
    %c0_229 = arith.constant 0 : index
    %c0_230 = arith.constant 0 : index
    %208 = vector.load %arg13[%c0_228, %c0_229, %c0_230] : memref<2x16x128xf32, #tpu.memory_space<vmem>>, vector<1x16x128xf32>
    %209 = vector.shape_cast %208 : vector<1x16x128xf32> to vector<16x128xf32>
    %210 = vector.shape_cast %207 : vector<16x128xf32> to vector<1x16x128xf32>
    tpu.vector_store %arg13[%c0_228, %c0_229, %c0_230], %210 {strides = array<i32>} : memref<2x16x128xf32, #tpu.memory_space<vmem>>, vector<1x16x128xf32>,
    %211 = vector.extract_strided_slice %203 {offsets = [22, 0], sizes = [16, 128], strides = [1, 1]} : vector<38x128xf32> to vector<16x128xf32>
    %c25_231 = arith.constant 25 : index
    %c0_232 = arith.constant 0 : index
    %212 = vector.load %arg17[%c25_231, %c0_232] : memref<44x128xbf16, #tpu.memory_space<vmem>>, vector<16x128xbf16>
    %213 = arith.extf %212 : vector<16x128xbf16> to vector<16x128xf32>
    %214 = arith.addf %211, %213 : vector<16x128xf32>
    %c1_233 = arith.constant 1 : index
    %c0_234 = arith.constant 0 : index
    %c0_235 = arith.constant 0 : index
    %215 = vector.load %arg13[%c1_233, %c0_234, %c0_235] : memref<2x16x128xf32, #tpu.memory_space<vmem>>, vector<1x16x128xf32>
    %216 = vector.shape_cast %215 : vector<1x16x128xf32> to vector<16x128xf32>
    %217 = vector.shape_cast %214 : vector<16x128xf32> to vector<1x16x128xf32>
    tpu.vector_store %arg13[%c1_233, %c0_234, %c0_235], %217 {strides = array<i32>} : memref<2x16x128xf32, #tpu.memory_space<vmem>>, vector<1x16x128xf32>,
    return
  }
  func.func @transform_0(%arg0: i32) -> (i32, i32, i32) {
    %c0_i32 = arith.constant 0 : i32
    %c0_i32_0 = arith.constant 0 : i32
    %c0_i32_1 = arith.constant 0 : i32
    return %arg0, %c0_i32, %c0_i32_0 : i32, i32, i32
  }
  func.func @transform_1(%arg0: i32) -> (i32, i32, i32) {
    %c0_i32 = arith.constant 0 : i32
    %c0_i32_0 = arith.constant 0 : i32
    %c0_i32_1 = arith.constant 0 : i32
    return %arg0, %c0_i32, %c0_i32_0 : i32, i32, i32
  }
  func.func @transform_2(%arg0: i32) -> (i32, i32, i32) {
    %c0_i32 = arith.constant 0 : i32
    %c0_i32_0 = arith.constant 0 : i32
    %c0_i32_1 = arith.constant 0 : i32
    return %arg0, %c0_i32, %c0_i32_0 : i32, i32, i32
  }
  func.func @transform_3(%arg0: i32) -> (i32, i32, i32) {
    %c0_i32 = arith.constant 0 : i32
    %c0_i32_0 = arith.constant 0 : i32
    %c0_i32_1 = arith.constant 0 : i32
    %c0_i32_2 = arith.constant 0 : i32
    return %c0_i32, %c0_i32_0, %c0_i32_1 : i32, i32, i32
  }
  func.func @transform_4(%arg0: i32) -> (i32, i32, i32) {
    %c0_i32 = arith.constant 0 : i32
    %c0_i32_0 = arith.constant 0 : i32
    %c0_i32_1 = arith.constant 0 : i32
    %c0_i32_2 = arith.constant 0 : i32
    return %c0_i32, %c0_i32_0, %c0_i32_1 : i32, i32, i32
  }
  func.func @transform_5(%arg0: i32) -> (i32, i32) {
    %c0_i32 = arith.constant 0 : i32
    %c0_i32_0 = arith.constant 0 : i32
    %c0_i32_1 = arith.constant 0 : i32
    return %c0_i32, %c0_i32_0 : i32, i32
  }
  func.func @transform_6(%arg0: i32) -> (i32, i32, i32) {
    %c0_i32 = arith.constant 0 : i32
    %c0_i32_0 = arith.constant 0 : i32
    %c0_i32_1 = arith.constant 0 : i32
    %c0_i32_2 = arith.constant 0 : i32
    return %c0_i32, %c0_i32_0, %c0_i32_1 : i32, i32, i32
  }
  func.func @transform_7(%arg0: i32) -> (i32, i32) {
    %c0_i32 = arith.constant 0 : i32
    %c0_i32_0 = arith.constant 0 : i32
    %c0_i32_1 = arith.constant 0 : i32
    return %c0_i32, %c0_i32_0 : i32, i32
  }
  func.func @transform_8(%arg0: i32) -> (i32, i32, i32) {
    %c0_i32 = arith.constant 0 : i32
    %c0_i32_0 = arith.constant 0 : i32
    %c0_i32_1 = arith.constant 0 : i32
    %c0_i32_2 = arith.constant 0 : i32
    return %c0_i32, %c0_i32_0, %c0_i32_1 : i32, i32, i32
  }
  func.func @transform_9(%arg0: i32) -> (i32, i32) {
    %c0_i32 = arith.constant 0 : i32
    %c0_i32_0 = arith.constant 0 : i32
    %c0_i32_1 = arith.constant 0 : i32
    return %c0_i32, %c0_i32_0 : i32, i32
  }
  func.func @transform_10(%arg0: i32) -> (i32, i32, i32) {
    %c0_i32 = arith.constant 0 : i32
    %c0_i32_0 = arith.constant 0 : i32
    %c0_i32_1 = arith.constant 0 : i32
    %c0_i32_2 = arith.constant 0 : i32
    return %c0_i32, %c0_i32_0, %c0_i32_1 : i32, i32, i32
  }
  func.func @transform_11(%arg0: i32) -> (i32, i32) {
    %c0_i32 = arith.constant 0 : i32
    %c0_i32_0 = arith.constant 0 : i32
    %c0_i32_1 = arith.constant 0 : i32
    return %c0_i32, %c0_i32_0 : i32, i32
  }
  func.func @transform_12(%arg0: i32) -> (i32, i32, i32) {
    %c0_i32 = arith.constant 0 : i32
    %c0_i32_0 = arith.constant 0 : i32
    %c0_i32_1 = arith.constant 0 : i32
    return %arg0, %c0_i32, %c0_i32_0 : i32, i32, i32
  }
}

module attributes {stable_mosaic.version = 11 : i64} {
  func.func @kernel(%arg0: i32, %arg1: memref<2x16x16xbf16, #tpu.memory_space<vmem>>, %arg2: memref<2x16x128xbf16, #tpu.memory_space<vmem>>, %arg3: memref<2x16x128xbf16, #tpu.memory_space<vmem>>, %arg4: memref<7x16x256xbf16, #tpu.memory_space<vmem>>, %arg5: memref<7x128x256xbf16, #tpu.memory_space<vmem>>, %arg6: memref<1x256xf32, #tpu.memory_space<vmem>>, %arg7: memref<3x256x128xbf16, #tpu.memory_space<vmem>>, %arg8: memref<1x128xf32, #tpu.memory_space<vmem>>, %arg9: memref<3x128x128xbf16, #tpu.memory_space<vmem>>, %arg10: memref<1x128xf32, #tpu.memory_space<vmem>>, %arg11: memref<3x128x128xbf16, #tpu.memory_space<vmem>>, %arg12: memref<1x128xf32, #tpu.memory_space<vmem>>, %arg13: memref<2x16x128xf32, #tpu.memory_space<vmem>>, %arg14: memref<44x16xbf16, #tpu.memory_space<vmem>>, %arg15: memref<44x128xbf16, #tpu.memory_space<vmem>>, %arg16: memref<44x256xbf16, #tpu.memory_space<vmem>>, %arg17: memref<44x128xbf16, #tpu.memory_space<vmem>>, %arg18: memref<44x128xbf16, #tpu.memory_space<vmem>>) attributes {dimension_semantics = [#tpu.dimension_semantics<parallel>], iteration_bounds = array<i64: 1>, scalar_prefetch = 0 : i64, scratch_operands = 5 : i64, tpu.core_type = #tpu.core_type<tc>, window_params = [{transform_indices = @transform_0, window_bounds = array<i64: 2, 16, 16>}, {transform_indices = @transform_1, window_bounds = array<i64: 2, 16, 128>}, {transform_indices = @transform_2, window_bounds = array<i64: 2, 16, 128>}, {pipeline_mode = #tpu.pipeline_mode<synchronous>, transform_indices = @transform_3, window_bounds = array<i64: 7, 16, 256>}, {pipeline_mode = #tpu.pipeline_mode<synchronous>, transform_indices = @transform_4, window_bounds = array<i64: 7, 128, 256>}, {pipeline_mode = #tpu.pipeline_mode<synchronous>, transform_indices = @transform_5, window_bounds = array<i64: 1, 256>}, {pipeline_mode = #tpu.pipeline_mode<synchronous>, transform_indices = @transform_6, window_bounds = array<i64: 3, 256, 128>}, {pipeline_mode = #tpu.pipeline_mode<synchronous>, transform_indices = @transform_7, window_bounds = array<i64: 1, 128>}, {pipeline_mode = #tpu.pipeline_mode<synchronous>, transform_indices = @transform_8, window_bounds = array<i64: 3, 128, 128>}, {pipeline_mode = #tpu.pipeline_mode<synchronous>, transform_indices = @transform_9, window_bounds = array<i64: 1, 128>}, {pipeline_mode = #tpu.pipeline_mode<synchronous>, transform_indices = @transform_10, window_bounds = array<i64: 3, 128, 128>}, {pipeline_mode = #tpu.pipeline_mode<synchronous>, transform_indices = @transform_11, window_bounds = array<i64: 1, 128>}, {transform_indices = @transform_12, window_bounds = array<i64: 2, 16, 128>}]} {
    %cst = arith.constant 0.000000e+00 : bf16
    %0 = vector.broadcast %cst : bf16 to vector<3x16xbf16>
    %c0 = arith.constant 0 : index
    %c0_0 = arith.constant 0 : index
    %1 = vector.load %arg14[%c0, %c0_0] : memref<44x16xbf16, #tpu.memory_space<vmem>>, vector<3x16xbf16>
    tpu.vector_store %arg14[%c0, %c0_0], %0 {strides = array<i32>} : memref<44x16xbf16, #tpu.memory_space<vmem>>, vector<3x16xbf16>,
    %c19 = arith.constant 19 : index
    %c0_1 = arith.constant 0 : index
    %2 = vector.load %arg14[%c19, %c0_1] : memref<44x16xbf16, #tpu.memory_space<vmem>>, vector<3x16xbf16>
    tpu.vector_store %arg14[%c19, %c0_1], %0 {strides = array<i32>} : memref<44x16xbf16, #tpu.memory_space<vmem>>, vector<3x16xbf16>,
    %c22 = arith.constant 22 : index
    %c0_2 = arith.constant 0 : index
    %3 = vector.load %arg14[%c22, %c0_2] : memref<44x16xbf16, #tpu.memory_space<vmem>>, vector<3x16xbf16>
    tpu.vector_store %arg14[%c22, %c0_2], %0 {strides = array<i32>} : memref<44x16xbf16, #tpu.memory_space<vmem>>, vector<3x16xbf16>,
    %c41 = arith.constant 41 : index
    %c0_3 = arith.constant 0 : index
    %4 = vector.load %arg14[%c41, %c0_3] : memref<44x16xbf16, #tpu.memory_space<vmem>>, vector<3x16xbf16>
    tpu.vector_store %arg14[%c41, %c0_3], %0 {strides = array<i32>} : memref<44x16xbf16, #tpu.memory_space<vmem>>, vector<3x16xbf16>,
    %cst_4 = arith.constant 0.000000e+00 : bf16
    %5 = vector.broadcast %cst_4 : bf16 to vector<3x128xbf16>
    %c0_5 = arith.constant 0 : index
    %c0_6 = arith.constant 0 : index
    %6 = vector.load %arg15[%c0_5, %c0_6] : memref<44x128xbf16, #tpu.memory_space<vmem>>, vector<3x128xbf16>
    tpu.vector_store %arg15[%c0_5, %c0_6], %5 {strides = array<i32>} : memref<44x128xbf16, #tpu.memory_space<vmem>>, vector<3x128xbf16>,
    %c19_7 = arith.constant 19 : index
    %c0_8 = arith.constant 0 : index
    %7 = vector.load %arg15[%c19_7, %c0_8] : memref<44x128xbf16, #tpu.memory_space<vmem>>, vector<3x128xbf16>
    tpu.vector_store %arg15[%c19_7, %c0_8], %5 {strides = array<i32>} : memref<44x128xbf16, #tpu.memory_space<vmem>>, vector<3x128xbf16>,
    %c22_9 = arith.constant 22 : index
    %c0_10 = arith.constant 0 : index
    %8 = vector.load %arg15[%c22_9, %c0_10] : memref<44x128xbf16, #tpu.memory_space<vmem>>, vector<3x128xbf16>
    tpu.vector_store %arg15[%c22_9, %c0_10], %5 {strides = array<i32>} : memref<44x128xbf16, #tpu.memory_space<vmem>>, vector<3x128xbf16>,
    %c41_11 = arith.constant 41 : index
    %c0_12 = arith.constant 0 : index
    %9 = vector.load %arg15[%c41_11, %c0_12] : memref<44x128xbf16, #tpu.memory_space<vmem>>, vector<3x128xbf16>
    tpu.vector_store %arg15[%c41_11, %c0_12], %5 {strides = array<i32>} : memref<44x128xbf16, #tpu.memory_space<vmem>>, vector<3x128xbf16>,
    %cst_13 = arith.constant 0.000000e+00 : bf16
    %10 = vector.broadcast %cst_13 : bf16 to vector<3x256xbf16>
    %c0_14 = arith.constant 0 : index
    %c0_15 = arith.constant 0 : index
    %11 = vector.load %arg16[%c0_14, %c0_15] : memref<44x256xbf16, #tpu.memory_space<vmem>>, vector<3x256xbf16>
    tpu.vector_store %arg16[%c0_14, %c0_15], %10 {strides = array<i32>} : memref<44x256xbf16, #tpu.memory_space<vmem>>, vector<3x256xbf16>,
    %c19_16 = arith.constant 19 : index
    %c0_17 = arith.constant 0 : index
    %12 = vector.load %arg16[%c19_16, %c0_17] : memref<44x256xbf16, #tpu.memory_space<vmem>>, vector<3x256xbf16>
    tpu.vector_store %arg16[%c19_16, %c0_17], %10 {strides = array<i32>} : memref<44x256xbf16, #tpu.memory_space<vmem>>, vector<3x256xbf16>,
    %c22_18 = arith.constant 22 : index
    %c0_19 = arith.constant 0 : index
    %13 = vector.load %arg16[%c22_18, %c0_19] : memref<44x256xbf16, #tpu.memory_space<vmem>>, vector<3x256xbf16>
    tpu.vector_store %arg16[%c22_18, %c0_19], %10 {strides = array<i32>} : memref<44x256xbf16, #tpu.memory_space<vmem>>, vector<3x256xbf16>,
    %c41_20 = arith.constant 41 : index
    %c0_21 = arith.constant 0 : index
    %14 = vector.load %arg16[%c41_20, %c0_21] : memref<44x256xbf16, #tpu.memory_space<vmem>>, vector<3x256xbf16>
    tpu.vector_store %arg16[%c41_20, %c0_21], %10 {strides = array<i32>} : memref<44x256xbf16, #tpu.memory_space<vmem>>, vector<3x256xbf16>,
    %cst_22 = arith.constant 0.000000e+00 : bf16
    %15 = vector.broadcast %cst_22 : bf16 to vector<3x128xbf16>
    %c0_23 = arith.constant 0 : index
    %c0_24 = arith.constant 0 : index
    %16 = vector.load %arg17[%c0_23, %c0_24] : memref<44x128xbf16, #tpu.memory_space<vmem>>, vector<3x128xbf16>
    tpu.vector_store %arg17[%c0_23, %c0_24], %15 {strides = array<i32>} : memref<44x128xbf16, #tpu.memory_space<vmem>>, vector<3x128xbf16>,
    %c19_25 = arith.constant 19 : index
    %c0_26 = arith.constant 0 : index
    %17 = vector.load %arg17[%c19_25, %c0_26] : memref<44x128xbf16, #tpu.memory_space<vmem>>, vector<3x128xbf16>
    tpu.vector_store %arg17[%c19_25, %c0_26], %15 {strides = array<i32>} : memref<44x128xbf16, #tpu.memory_space<vmem>>, vector<3x128xbf16>,
    %c22_27 = arith.constant 22 : index
    %c0_28 = arith.constant 0 : index
    %18 = vector.load %arg17[%c22_27, %c0_28] : memref<44x128xbf16, #tpu.memory_space<vmem>>, vector<3x128xbf16>
    tpu.vector_store %arg17[%c22_27, %c0_28], %15 {strides = array<i32>} : memref<44x128xbf16, #tpu.memory_space<vmem>>, vector<3x128xbf16>,
    %c41_29 = arith.constant 41 : index
    %c0_30 = arith.constant 0 : index
    %19 = vector.load %arg17[%c41_29, %c0_30] : memref<44x128xbf16, #tpu.memory_space<vmem>>, vector<3x128xbf16>
    tpu.vector_store %arg17[%c41_29, %c0_30], %15 {strides = array<i32>} : memref<44x128xbf16, #tpu.memory_space<vmem>>, vector<3x128xbf16>,
    %cst_31 = arith.constant 0.000000e+00 : bf16
    %20 = vector.broadcast %cst_31 : bf16 to vector<3x128xbf16>
    %c0_32 = arith.constant 0 : index
    %c0_33 = arith.constant 0 : index
    %21 = vector.load %arg18[%c0_32, %c0_33] : memref<44x128xbf16, #tpu.memory_space<vmem>>, vector<3x128xbf16>
    tpu.vector_store %arg18[%c0_32, %c0_33], %20 {strides = array<i32>} : memref<44x128xbf16, #tpu.memory_space<vmem>>, vector<3x128xbf16>,
    %c19_34 = arith.constant 19 : index
    %c0_35 = arith.constant 0 : index
    %22 = vector.load %arg18[%c19_34, %c0_35] : memref<44x128xbf16, #tpu.memory_space<vmem>>, vector<3x128xbf16>
    tpu.vector_store %arg18[%c19_34, %c0_35], %20 {strides = array<i32>} : memref<44x128xbf16, #tpu.memory_space<vmem>>, vector<3x128xbf16>,
    %c22_36 = arith.constant 22 : index
    %c0_37 = arith.constant 0 : index
    %23 = vector.load %arg18[%c22_36, %c0_37] : memref<44x128xbf16, #tpu.memory_space<vmem>>, vector<3x128xbf16>
    tpu.vector_store %arg18[%c22_36, %c0_37], %20 {strides = array<i32>} : memref<44x128xbf16, #tpu.memory_space<vmem>>, vector<3x128xbf16>,
    %c41_38 = arith.constant 41 : index
    %c0_39 = arith.constant 0 : index
    %24 = vector.load %arg18[%c41_38, %c0_39] : memref<44x128xbf16, #tpu.memory_space<vmem>>, vector<3x128xbf16>
    tpu.vector_store %arg18[%c41_38, %c0_39], %20 {strides = array<i32>} : memref<44x128xbf16, #tpu.memory_space<vmem>>, vector<3x128xbf16>,
    %c0_40 = arith.constant 0 : index
    %c0_41 = arith.constant 0 : index
    %c0_42 = arith.constant 0 : index
    %25 = vector.load %arg1[%c0_40, %c0_41, %c0_42] : memref<2x16x16xbf16, #tpu.memory_space<vmem>>, vector<1x16x16xbf16>
    %26 = vector.shape_cast %25 : vector<1x16x16xbf16> to vector<16x16xbf16>
    %c3 = arith.constant 3 : index
    %c0_43 = arith.constant 0 : index
    %27 = vector.load %arg14[%c3, %c0_43] : memref<44x16xbf16, #tpu.memory_space<vmem>>, vector<16x16xbf16>
    tpu.vector_store %arg14[%c3, %c0_43], %26 {strides = array<i32>} : memref<44x16xbf16, #tpu.memory_space<vmem>>, vector<16x16xbf16>,
    %c0_44 = arith.constant 0 : index
    %c0_45 = arith.constant 0 : index
    %c0_46 = arith.constant 0 : index
    %28 = vector.load %arg2[%c0_44, %c0_45, %c0_46] : memref<2x16x128xbf16, #tpu.memory_space<vmem>>, vector<1x16x128xbf16>
    %29 = vector.shape_cast %28 : vector<1x16x128xbf16> to vector<16x128xbf16>
    %c3_47 = arith.constant 3 : index
    %c0_48 = arith.constant 0 : index
    %30 = vector.load %arg15[%c3_47, %c0_48] : memref<44x128xbf16, #tpu.memory_space<vmem>>, vector<16x128xbf16>
    tpu.vector_store %arg15[%c3_47, %c0_48], %29 {strides = array<i32>} : memref<44x128xbf16, #tpu.memory_space<vmem>>, vector<16x128xbf16>,
    %c1 = arith.constant 1 : index
    %c0_49 = arith.constant 0 : index
    %c0_50 = arith.constant 0 : index
    %31 = vector.load %arg1[%c1, %c0_49, %c0_50] : memref<2x16x16xbf16, #tpu.memory_space<vmem>>, vector<1x16x16xbf16>
    %32 = vector.shape_cast %31 : vector<1x16x16xbf16> to vector<16x16xbf16>
    %c25 = arith.constant 25 : index
    %c0_51 = arith.constant 0 : index
    %33 = vector.load %arg14[%c25, %c0_51] : memref<44x16xbf16, #tpu.memory_space<vmem>>, vector<16x16xbf16>
    tpu.vector_store %arg14[%c25, %c0_51], %32 {strides = array<i32>} : memref<44x16xbf16, #tpu.memory_space<vmem>>, vector<16x16xbf16>,
    %c1_52 = arith.constant 1 : index
    %c0_53 = arith.constant 0 : index
    %c0_54 = arith.constant 0 : index
    %34 = vector.load %arg2[%c1_52, %c0_53, %c0_54] : memref<2x16x128xbf16, #tpu.memory_space<vmem>>, vector<1x16x128xbf16>
    %35 = vector.shape_cast %34 : vector<1x16x128xbf16> to vector<16x128xbf16>
    %c25_55 = arith.constant 25 : index
    %c0_56 = arith.constant 0 : index
    %36 = vector.load %arg15[%c25_55, %c0_56] : memref<44x128xbf16, #tpu.memory_space<vmem>>, vector<16x128xbf16>
    tpu.vector_store %arg15[%c25_55, %c0_56], %35 {strides = array<i32>} : memref<44x128xbf16, #tpu.memory_space<vmem>>, vector<16x128xbf16>,
    %c0_57 = arith.constant 0 : index
    %c0_58 = arith.constant 0 : index
    %37 = vector.load %arg14[%c0_57, %c0_58] : memref<44x16xbf16, #tpu.memory_space<vmem>>, vector<38x16xbf16>
    %c0_59 = arith.constant 0 : index
    %c0_60 = arith.constant 0 : index
    %c0_61 = arith.constant 0 : index
    %38 = vector.load %arg4[%c0_59, %c0_60, %c0_61] : memref<7x16x256xbf16, #tpu.memory_space<vmem>>, vector<1x16x256xbf16>
    %39 = vector.shape_cast %38 : vector<1x16x256xbf16> to vector<16x256xbf16>
    %cst_62 = arith.constant dense<0.000000e+00> : vector<38x256xf32>
    %40 = tpu.matmul %37, %39, %cst_62 {dimension_numbers = #tpu.dot_dimension_numbers<[1], [0], [0], [1], [0, 0, 1, 1], [], []>} : vector<38x16xbf16>, vector<16x256xbf16>, vector<38x256xf32> -> vector<38x256xf32>
    %c0_63 = arith.constant 0 : index
    %c0_64 = arith.constant 0 : index
    %41 = vector.load %arg15[%c0_63, %c0_64] : memref<44x128xbf16, #tpu.memory_space<vmem>>, vector<38x128xbf16>
    %c0_65 = arith.constant 0 : index
    %c0_66 = arith.constant 0 : index
    %c0_67 = arith.constant 0 : index
    %42 = vector.load %arg5[%c0_65, %c0_66, %c0_67] : memref<7x128x256xbf16, #tpu.memory_space<vmem>>, vector<1x128x256xbf16>
    %43 = vector.shape_cast %42 : vector<1x128x256xbf16> to vector<128x256xbf16>
    %cst_68 = arith.constant dense<0.000000e+00> : vector<38x256xf32>
    %44 = tpu.matmul %41, %43, %cst_68 {dimension_numbers = #tpu.dot_dimension_numbers<[1], [0], [0], [1], [0, 0, 1, 1], [], []>} : vector<38x128xbf16>, vector<128x256xbf16>, vector<38x256xf32> -> vector<38x256xf32>
    %45 = arith.addf %40, %44 : vector<38x256xf32>
    %c1_69 = arith.constant 1 : index
    %c0_70 = arith.constant 0 : index
    %46 = vector.load %arg14[%c1_69, %c0_70] : memref<44x16xbf16, #tpu.memory_space<vmem>>, vector<38x16xbf16>
    %c1_71 = arith.constant 1 : index
    %c0_72 = arith.constant 0 : index
    %c0_73 = arith.constant 0 : index
    %47 = vector.load %arg4[%c1_71, %c0_72, %c0_73] : memref<7x16x256xbf16, #tpu.memory_space<vmem>>, vector<1x16x256xbf16>
    %48 = vector.shape_cast %47 : vector<1x16x256xbf16> to vector<16x256xbf16>
    %cst_74 = arith.constant dense<0.000000e+00> : vector<38x256xf32>
    %49 = tpu.matmul %46, %48, %cst_74 {dimension_numbers = #tpu.dot_dimension_numbers<[1], [0], [0], [1], [0, 0, 1, 1], [], []>} : vector<38x16xbf16>, vector<16x256xbf16>, vector<38x256xf32> -> vector<38x256xf32>
    %50 = arith.addf %45, %49 : vector<38x256xf32>
    %c1_75 = arith.constant 1 : index
    %c0_76 = arith.constant 0 : index
    %51 = vector.load %arg15[%c1_75, %c0_76] : memref<44x128xbf16, #tpu.memory_space<vmem>>, vector<38x128xbf16>
    %c1_77 = arith.constant 1 : index
    %c0_78 = arith.constant 0 : index
    %c0_79 = arith.constant 0 : index
    %52 = vector.load %arg5[%c1_77, %c0_78, %c0_79] : memref<7x128x256xbf16, #tpu.memory_space<vmem>>, vector<1x128x256xbf16>
    %53 = vector.shape_cast %52 : vector<1x128x256xbf16> to vector<128x256xbf16>
    %cst_80 = arith.constant dense<0.000000e+00> : vector<38x256xf32>
    %54 = tpu.matmul %51, %53, %cst_80 {dimension_numbers = #tpu.dot_dimension_numbers<[1], [0], [0], [1], [0, 0, 1, 1], [], []>} : vector<38x128xbf16>, vector<128x256xbf16>, vector<38x256xf32> -> vector<38x256xf32>
    %55 = arith.addf %50, %54 : vector<38x256xf32>
    %c2 = arith.constant 2 : index
    %c0_81 = arith.constant 0 : index
    %56 = vector.load %arg14[%c2, %c0_81] : memref<44x16xbf16, #tpu.memory_space<vmem>>, vector<38x16xbf16>
    %c2_82 = arith.constant 2 : index
    %c0_83 = arith.constant 0 : index
    %c0_84 = arith.constant 0 : index
    %57 = vector.load %arg4[%c2_82, %c0_83, %c0_84] : memref<7x16x256xbf16, #tpu.memory_space<vmem>>, vector<1x16x256xbf16>
    %58 = vector.shape_cast %57 : vector<1x16x256xbf16> to vector<16x256xbf16>
    %cst_85 = arith.constant dense<0.000000e+00> : vector<38x256xf32>
    %59 = tpu.matmul %56, %58, %cst_85 {dimension_numbers = #tpu.dot_dimension_numbers<[1], [0], [0], [1], [0, 0, 1, 1], [], []>} : vector<38x16xbf16>, vector<16x256xbf16>, vector<38x256xf32> -> vector<38x256xf32>
    %60 = arith.addf %55, %59 : vector<38x256xf32>
    %c2_86 = arith.constant 2 : index
    %c0_87 = arith.constant 0 : index
    %61 = vector.load %arg15[%c2_86, %c0_87] : memref<44x128xbf16, #tpu.memory_space<vmem>>, vector<38x128xbf16>
    %c2_88 = arith.constant 2 : index
    %c0_89 = arith.constant 0 : index
    %c0_90 = arith.constant 0 : index
    %62 = vector.load %arg5[%c2_88, %c0_89, %c0_90] : memref<7x128x256xbf16, #tpu.memory_space<vmem>>, vector<1x128x256xbf16>
    %63 = vector.shape_cast %62 : vector<1x128x256xbf16> to vector<128x256xbf16>
    %cst_91 = arith.constant dense<0.000000e+00> : vector<38x256xf32>
    %64 = tpu.matmul %61, %63, %cst_91 {dimension_numbers = #tpu.dot_dimension_numbers<[1], [0], [0], [1], [0, 0, 1, 1], [], []>} : vector<38x128xbf16>, vector<128x256xbf16>, vector<38x256xf32> -> vector<38x256xf32>
    %65 = arith.addf %60, %64 : vector<38x256xf32>
    %c3_92 = arith.constant 3 : index
    %c0_93 = arith.constant 0 : index
    %66 = vector.load %arg14[%c3_92, %c0_93] : memref<44x16xbf16, #tpu.memory_space<vmem>>, vector<38x16xbf16>
    %c3_94 = arith.constant 3 : index
    %c0_95 = arith.constant 0 : index
    %c0_96 = arith.constant 0 : index
    %67 = vector.load %arg4[%c3_94, %c0_95, %c0_96] : memref<7x16x256xbf16, #tpu.memory_space<vmem>>, vector<1x16x256xbf16>
    %68 = vector.shape_cast %67 : vector<1x16x256xbf16> to vector<16x256xbf16>
    %cst_97 = arith.constant dense<0.000000e+00> : vector<38x256xf32>
    %69 = tpu.matmul %66, %68, %cst_97 {dimension_numbers = #tpu.dot_dimension_numbers<[1], [0], [0], [1], [0, 0, 1, 1], [], []>} : vector<38x16xbf16>, vector<16x256xbf16>, vector<38x256xf32> -> vector<38x256xf32>
    %70 = arith.addf %65, %69 : vector<38x256xf32>
    %c3_98 = arith.constant 3 : index
    %c0_99 = arith.constant 0 : index
    %71 = vector.load %arg15[%c3_98, %c0_99] : memref<44x128xbf16, #tpu.memory_space<vmem>>, vector<38x128xbf16>
    %c3_100 = arith.constant 3 : index
    %c0_101 = arith.constant 0 : index
    %c0_102 = arith.constant 0 : index
    %72 = vector.load %arg5[%c3_100, %c0_101, %c0_102] : memref<7x128x256xbf16, #tpu.memory_space<vmem>>, vector<1x128x256xbf16>
    %73 = vector.shape_cast %72 : vector<1x128x256xbf16> to vector<128x256xbf16>
    %cst_103 = arith.constant dense<0.000000e+00> : vector<38x256xf32>
    %74 = tpu.matmul %71, %73, %cst_103 {dimension_numbers = #tpu.dot_dimension_numbers<[1], [0], [0], [1], [0, 0, 1, 1], [], []>} : vector<38x128xbf16>, vector<128x256xbf16>, vector<38x256xf32> -> vector<38x256xf32>
    %75 = arith.addf %70, %74 : vector<38x256xf32>
    %c4 = arith.constant 4 : index
    %c0_104 = arith.constant 0 : index
    %76 = vector.load %arg14[%c4, %c0_104] : memref<44x16xbf16, #tpu.memory_space<vmem>>, vector<38x16xbf16>
    %c4_105 = arith.constant 4 : index
    %c0_106 = arith.constant 0 : index
    %c0_107 = arith.constant 0 : index
    %77 = vector.load %arg4[%c4_105, %c0_106, %c0_107] : memref<7x16x256xbf16, #tpu.memory_space<vmem>>, vector<1x16x256xbf16>
    %78 = vector.shape_cast %77 : vector<1x16x256xbf16> to vector<16x256xbf16>
    %cst_108 = arith.constant dense<0.000000e+00> : vector<38x256xf32>
    %79 = tpu.matmul %76, %78, %cst_108 {dimension_numbers = #tpu.dot_dimension_numbers<[1], [0], [0], [1], [0, 0, 1, 1], [], []>} : vector<38x16xbf16>, vector<16x256xbf16>, vector<38x256xf32> -> vector<38x256xf32>
    %80 = arith.addf %75, %79 : vector<38x256xf32>
    %c4_109 = arith.constant 4 : index
    %c0_110 = arith.constant 0 : index
    %81 = vector.load %arg15[%c4_109, %c0_110] : memref<44x128xbf16, #tpu.memory_space<vmem>>, vector<38x128xbf16>
    %c4_111 = arith.constant 4 : index
    %c0_112 = arith.constant 0 : index
    %c0_113 = arith.constant 0 : index
    %82 = vector.load %arg5[%c4_111, %c0_112, %c0_113] : memref<7x128x256xbf16, #tpu.memory_space<vmem>>, vector<1x128x256xbf16>
    %83 = vector.shape_cast %82 : vector<1x128x256xbf16> to vector<128x256xbf16>
    %cst_114 = arith.constant dense<0.000000e+00> : vector<38x256xf32>
    %84 = tpu.matmul %81, %83, %cst_114 {dimension_numbers = #tpu.dot_dimension_numbers<[1], [0], [0], [1], [0, 0, 1, 1], [], []>} : vector<38x128xbf16>, vector<128x256xbf16>, vector<38x256xf32> -> vector<38x256xf32>
    %85 = arith.addf %80, %84 : vector<38x256xf32>
    %c5 = arith.constant 5 : index
    %c0_115 = arith.constant 0 : index
    %86 = vector.load %arg14[%c5, %c0_115] : memref<44x16xbf16, #tpu.memory_space<vmem>>, vector<38x16xbf16>
    %c5_116 = arith.constant 5 : index
    %c0_117 = arith.constant 0 : index
    %c0_118 = arith.constant 0 : index
    %87 = vector.load %arg4[%c5_116, %c0_117, %c0_118] : memref<7x16x256xbf16, #tpu.memory_space<vmem>>, vector<1x16x256xbf16>
    %88 = vector.shape_cast %87 : vector<1x16x256xbf16> to vector<16x256xbf16>
    %cst_119 = arith.constant dense<0.000000e+00> : vector<38x256xf32>
    %89 = tpu.matmul %86, %88, %cst_119 {dimension_numbers = #tpu.dot_dimension_numbers<[1], [0], [0], [1], [0, 0, 1, 1], [], []>} : vector<38x16xbf16>, vector<16x256xbf16>, vector<38x256xf32> -> vector<38x256xf32>
    %90 = arith.addf %85, %89 : vector<38x256xf32>
    %c5_120 = arith.constant 5 : index
    %c0_121 = arith.constant 0 : index
    %91 = vector.load %arg15[%c5_120, %c0_121] : memref<44x128xbf16, #tpu.memory_space<vmem>>, vector<38x128xbf16>
    %c5_122 = arith.constant 5 : index
    %c0_123 = arith.constant 0 : index
    %c0_124 = arith.constant 0 : index
    %92 = vector.load %arg5[%c5_122, %c0_123, %c0_124] : memref<7x128x256xbf16, #tpu.memory_space<vmem>>, vector<1x128x256xbf16>
    %93 = vector.shape_cast %92 : vector<1x128x256xbf16> to vector<128x256xbf16>
    %cst_125 = arith.constant dense<0.000000e+00> : vector<38x256xf32>
    %94 = tpu.matmul %91, %93, %cst_125 {dimension_numbers = #tpu.dot_dimension_numbers<[1], [0], [0], [1], [0, 0, 1, 1], [], []>} : vector<38x128xbf16>, vector<128x256xbf16>, vector<38x256xf32> -> vector<38x256xf32>
    %95 = arith.addf %90, %94 : vector<38x256xf32>
    %c6 = arith.constant 6 : index
    %c0_126 = arith.constant 0 : index
    %96 = vector.load %arg14[%c6, %c0_126] : memref<44x16xbf16, #tpu.memory_space<vmem>>, vector<38x16xbf16>
    %c6_127 = arith.constant 6 : index
    %c0_128 = arith.constant 0 : index
    %c0_129 = arith.constant 0 : index
    %97 = vector.load %arg4[%c6_127, %c0_128, %c0_129] : memref<7x16x256xbf16, #tpu.memory_space<vmem>>, vector<1x16x256xbf16>
    %98 = vector.shape_cast %97 : vector<1x16x256xbf16> to vector<16x256xbf16>
    %cst_130 = arith.constant dense<0.000000e+00> : vector<38x256xf32>
    %99 = tpu.matmul %96, %98, %cst_130 {dimension_numbers = #tpu.dot_dimension_numbers<[1], [0], [0], [1], [0, 0, 1, 1], [], []>} : vector<38x16xbf16>, vector<16x256xbf16>, vector<38x256xf32> -> vector<38x256xf32>
    %100 = arith.addf %95, %99 : vector<38x256xf32>
    %c6_131 = arith.constant 6 : index
    %c0_132 = arith.constant 0 : index
    %101 = vector.load %arg15[%c6_131, %c0_132] : memref<44x128xbf16, #tpu.memory_space<vmem>>, vector<38x128xbf16>
    %c6_133 = arith.constant 6 : index
    %c0_134 = arith.constant 0 : index
    %c0_135 = arith.constant 0 : index
    %102 = vector.load %arg5[%c6_133, %c0_134, %c0_135] : memref<7x128x256xbf16, #tpu.memory_space<vmem>>, vector<1x128x256xbf16>
    %103 = vector.shape_cast %102 : vector<1x128x256xbf16> to vector<128x256xbf16>
    %cst_136 = arith.constant dense<0.000000e+00> : vector<38x256xf32>
    %104 = tpu.matmul %101, %103, %cst_136 {dimension_numbers = #tpu.dot_dimension_numbers<[1], [0], [0], [1], [0, 0, 1, 1], [], []>} : vector<38x128xbf16>, vector<128x256xbf16>, vector<38x256xf32> -> vector<38x256xf32>
    %105 = arith.addf %100, %104 : vector<38x256xf32>
    %c0_137 = arith.constant 0 : index
    %c0_138 = arith.constant 0 : index
    %106 = vector.load %arg6[%c0_137, %c0_138] : memref<1x256xf32, #tpu.memory_space<vmem>>, vector<1x256xf32>
    %107 = vector.broadcast %106 : vector<1x256xf32> to vector<38x256xf32>
    %108 = arith.addf %105, %107 : vector<38x256xf32>
    %cst_139 = arith.constant 0.000000e+00 : f32
    %109 = vector.broadcast %cst_139 : f32 to vector<38x256xf32>
    %110 = arith.cmpf oge, %108, %109 : vector<38x256xf32>
    %cst_140 = arith.constant 2.000000e-01 : f32
    %111 = vector.broadcast %cst_140 : f32 to vector<38x256xf32>
    %112 = arith.mulf %111, %108 : vector<38x256xf32>
    %113 = arith.select %110, %108, %112 : vector<38x256xi1>, vector<38x256xf32>
    %114 = vector.extract_strided_slice %113 {offsets = [0, 0], sizes = [16, 256], strides = [1, 1]} : vector<38x256xf32> to vector<16x256xf32>
    %115 = arith.truncf %114 : vector<16x256xf32> to vector<16x256xbf16>
    %c3_141 = arith.constant 3 : index
    %c0_142 = arith.constant 0 : index
    %116 = vector.load %arg16[%c3_141, %c0_142] : memref<44x256xbf16, #tpu.memory_space<vmem>>, vector<16x256xbf16>
    tpu.vector_store %arg16[%c3_141, %c0_142], %115 {strides = array<i32>} : memref<44x256xbf16, #tpu.memory_space<vmem>>, vector<16x256xbf16>,
    %117 = vector.extract_strided_slice %113 {offsets = [22, 0], sizes = [16, 256], strides = [1, 1]} : vector<38x256xf32> to vector<16x256xf32>
    %118 = arith.truncf %117 : vector<16x256xf32> to vector<16x256xbf16>
    %c25_143 = arith.constant 25 : index
    %c0_144 = arith.constant 0 : index
    %119 = vector.load %arg16[%c25_143, %c0_144] : memref<44x256xbf16, #tpu.memory_space<vmem>>, vector<16x256xbf16>
    tpu.vector_store %arg16[%c25_143, %c0_144], %118 {strides = array<i32>} : memref<44x256xbf16, #tpu.memory_space<vmem>>, vector<16x256xbf16>,
    %c2_145 = arith.constant 2 : index
    %c0_146 = arith.constant 0 : index
    %120 = vector.load %arg16[%c2_145, %c0_146] : memref<44x256xbf16, #tpu.memory_space<vmem>>, vector<38x256xbf16>
    %c0_147 = arith.constant 0 : index
    %c0_148 = arith.constant 0 : index
    %c0_149 = arith.constant 0 : index
    %121 = vector.load %arg7[%c0_147, %c0_148, %c0_149] : memref<3x256x128xbf16, #tpu.memory_space<vmem>>, vector<1x256x128xbf16>
    %122 = vector.shape_cast %121 : vector<1x256x128xbf16> to vector<256x128xbf16>
    %cst_150 = arith.constant dense<0.000000e+00> : vector<38x128xf32>
    %123 = tpu.matmul %120, %122, %cst_150 {dimension_numbers = #tpu.dot_dimension_numbers<[1], [0], [0], [1], [0, 0, 1, 1], [], []>} : vector<38x256xbf16>, vector<256x128xbf16>, vector<38x128xf32> -> vector<38x128xf32>
    %c3_151 = arith.constant 3 : index
    %c0_152 = arith.constant 0 : index
    %124 = vector.load %arg16[%c3_151, %c0_152] : memref<44x256xbf16, #tpu.memory_space<vmem>>, vector<38x256xbf16>
    %c1_153 = arith.constant 1 : index
    %c0_154 = arith.constant 0 : index
    %c0_155 = arith.constant 0 : index
    %125 = vector.load %arg7[%c1_153, %c0_154, %c0_155] : memref<3x256x128xbf16, #tpu.memory_space<vmem>>, vector<1x256x128xbf16>
    %126 = vector.shape_cast %125 : vector<1x256x128xbf16> to vector<256x128xbf16>
    %cst_156 = arith.constant dense<0.000000e+00> : vector<38x128xf32>
    %127 = tpu.matmul %124, %126, %cst_156 {dimension_numbers = #tpu.dot_dimension_numbers<[1], [0], [0], [1], [0, 0, 1, 1], [], []>} : vector<38x256xbf16>, vector<256x128xbf16>, vector<38x128xf32> -> vector<38x128xf32>
    %128 = arith.addf %123, %127 : vector<38x128xf32>
    %c4_157 = arith.constant 4 : index
    %c0_158 = arith.constant 0 : index
    %129 = vector.load %arg16[%c4_157, %c0_158] : memref<44x256xbf16, #tpu.memory_space<vmem>>, vector<38x256xbf16>
    %c2_159 = arith.constant 2 : index
    %c0_160 = arith.constant 0 : index
    %c0_161 = arith.constant 0 : index
    %130 = vector.load %arg7[%c2_159, %c0_160, %c0_161] : memref<3x256x128xbf16, #tpu.memory_space<vmem>>, vector<1x256x128xbf16>
    %131 = vector.shape_cast %130 : vector<1x256x128xbf16> to vector<256x128xbf16>
    %cst_162 = arith.constant dense<0.000000e+00> : vector<38x128xf32>
    %132 = tpu.matmul %129, %131, %cst_162 {dimension_numbers = #tpu.dot_dimension_numbers<[1], [0], [0], [1], [0, 0, 1, 1], [], []>} : vector<38x256xbf16>, vector<256x128xbf16>, vector<38x128xf32> -> vector<38x128xf32>
    %133 = arith.addf %128, %132 : vector<38x128xf32>
    %c0_163 = arith.constant 0 : index
    %c0_164 = arith.constant 0 : index
    %134 = vector.load %arg8[%c0_163, %c0_164] : memref<1x128xf32, #tpu.memory_space<vmem>>, vector<1x128xf32>
    %135 = vector.broadcast %134 : vector<1x128xf32> to vector<38x128xf32>
    %136 = arith.addf %133, %135 : vector<38x128xf32>
    %cst_165 = arith.constant 0.000000e+00 : f32
    %137 = vector.broadcast %cst_165 : f32 to vector<38x128xf32>
    %138 = arith.cmpf oge, %136, %137 : vector<38x128xf32>
    %cst_166 = arith.constant 2.000000e-01 : f32
    %139 = vector.broadcast %cst_166 : f32 to vector<38x128xf32>
    %140 = arith.mulf %139, %136 : vector<38x128xf32>
    %141 = arith.select %138, %136, %140 : vector<38x128xi1>, vector<38x128xf32>
    %c0_167 = arith.constant 0 : index
    %c0_168 = arith.constant 0 : index
    %c0_169 = arith.constant 0 : index
    %142 = vector.load %arg3[%c0_167, %c0_168, %c0_169] : memref<2x16x128xbf16, #tpu.memory_space<vmem>>, vector<1x16x128xbf16>
    %143 = vector.shape_cast %142 : vector<1x16x128xbf16> to vector<16x128xbf16>
    %144 = arith.extf %143 : vector<16x128xbf16> to vector<16x128xf32>
    %145 = vector.extract_strided_slice %141 {offsets = [0, 0], sizes = [16, 128], strides = [1, 1]} : vector<38x128xf32> to vector<16x128xf32>
    %146 = arith.mulf %144, %145 : vector<16x128xf32>
    %c3_170 = arith.constant 3 : index
    %c0_171 = arith.constant 0 : index
    %147 = vector.load %arg15[%c3_170, %c0_171] : memref<44x128xbf16, #tpu.memory_space<vmem>>, vector<16x128xbf16>
    %148 = arith.extf %147 : vector<16x128xbf16> to vector<16x128xf32>
    %149 = arith.addf %146, %148 : vector<16x128xf32>
    %150 = arith.truncf %149 : vector<16x128xf32> to vector<16x128xbf16>
    %c3_172 = arith.constant 3 : index
    %c0_173 = arith.constant 0 : index
    %151 = vector.load %arg17[%c3_172, %c0_173] : memref<44x128xbf16, #tpu.memory_space<vmem>>, vector<16x128xbf16>
    tpu.vector_store %arg17[%c3_172, %c0_173], %150 {strides = array<i32>} : memref<44x128xbf16, #tpu.memory_space<vmem>>, vector<16x128xbf16>,
    %c1_174 = arith.constant 1 : index
    %c0_175 = arith.constant 0 : index
    %c0_176 = arith.constant 0 : index
    %152 = vector.load %arg3[%c1_174, %c0_175, %c0_176] : memref<2x16x128xbf16, #tpu.memory_space<vmem>>, vector<1x16x128xbf16>
    %153 = vector.shape_cast %152 : vector<1x16x128xbf16> to vector<16x128xbf16>
    %154 = arith.extf %153 : vector<16x128xbf16> to vector<16x128xf32>
    %155 = vector.extract_strided_slice %141 {offsets = [22, 0], sizes = [16, 128], strides = [1, 1]} : vector<38x128xf32> to vector<16x128xf32>
    %156 = arith.mulf %154, %155 : vector<16x128xf32>
    %c25_177 = arith.constant 25 : index
    %c0_178 = arith.constant 0 : index
    %157 = vector.load %arg15[%c25_177, %c0_178] : memref<44x128xbf16, #tpu.memory_space<vmem>>, vector<16x128xbf16>
    %158 = arith.extf %157 : vector<16x128xbf16> to vector<16x128xf32>
    %159 = arith.addf %156, %158 : vector<16x128xf32>
    %160 = arith.truncf %159 : vector<16x128xf32> to vector<16x128xbf16>
    %c25_179 = arith.constant 25 : index
    %c0_180 = arith.constant 0 : index
    %161 = vector.load %arg17[%c25_179, %c0_180] : memref<44x128xbf16, #tpu.memory_space<vmem>>, vector<16x128xbf16>
    tpu.vector_store %arg17[%c25_179, %c0_180], %160 {strides = array<i32>} : memref<44x128xbf16, #tpu.memory_space<vmem>>, vector<16x128xbf16>,
    %c2_181 = arith.constant 2 : index
    %c0_182 = arith.constant 0 : index
    %162 = vector.load %arg17[%c2_181, %c0_182] : memref<44x128xbf16, #tpu.memory_space<vmem>>, vector<38x128xbf16>
    %c0_183 = arith.constant 0 : index
    %c0_184 = arith.constant 0 : index
    %c0_185 = arith.constant 0 : index
    %163 = vector.load %arg9[%c0_183, %c0_184, %c0_185] : memref<3x128x128xbf16, #tpu.memory_space<vmem>>, vector<1x128x128xbf16>
    %164 = vector.shape_cast %163 : vector<1x128x128xbf16> to vector<128x128xbf16>
    %cst_186 = arith.constant dense<0.000000e+00> : vector<38x128xf32>
    %165 = tpu.matmul %162, %164, %cst_186 {dimension_numbers = #tpu.dot_dimension_numbers<[1], [0], [0], [1], [0, 0, 1, 1], [], []>} : vector<38x128xbf16>, vector<128x128xbf16>, vector<38x128xf32> -> vector<38x128xf32>
    %c3_187 = arith.constant 3 : index
    %c0_188 = arith.constant 0 : index
    %166 = vector.load %arg17[%c3_187, %c0_188] : memref<44x128xbf16, #tpu.memory_space<vmem>>, vector<38x128xbf16>
    %c1_189 = arith.constant 1 : index
    %c0_190 = arith.constant 0 : index
    %c0_191 = arith.constant 0 : index
    %167 = vector.load %arg9[%c1_189, %c0_190, %c0_191] : memref<3x128x128xbf16, #tpu.memory_space<vmem>>, vector<1x128x128xbf16>
    %168 = vector.shape_cast %167 : vector<1x128x128xbf16> to vector<128x128xbf16>
    %cst_192 = arith.constant dense<0.000000e+00> : vector<38x128xf32>
    %169 = tpu.matmul %166, %168, %cst_192 {dimension_numbers = #tpu.dot_dimension_numbers<[1], [0], [0], [1], [0, 0, 1, 1], [], []>} : vector<38x128xbf16>, vector<128x128xbf16>, vector<38x128xf32> -> vector<38x128xf32>
    %170 = arith.addf %165, %169 : vector<38x128xf32>
    %c4_193 = arith.constant 4 : index
    %c0_194 = arith.constant 0 : index
    %171 = vector.load %arg17[%c4_193, %c0_194] : memref<44x128xbf16, #tpu.memory_space<vmem>>, vector<38x128xbf16>
    %c2_195 = arith.constant 2 : index
    %c0_196 = arith.constant 0 : index
    %c0_197 = arith.constant 0 : index
    %172 = vector.load %arg9[%c2_195, %c0_196, %c0_197] : memref<3x128x128xbf16, #tpu.memory_space<vmem>>, vector<1x128x128xbf16>
    %173 = vector.shape_cast %172 : vector<1x128x128xbf16> to vector<128x128xbf16>
    %cst_198 = arith.constant dense<0.000000e+00> : vector<38x128xf32>
    %174 = tpu.matmul %171, %173, %cst_198 {dimension_numbers = #tpu.dot_dimension_numbers<[1], [0], [0], [1], [0, 0, 1, 1], [], []>} : vector<38x128xbf16>, vector<128x128xbf16>, vector<38x128xf32> -> vector<38x128xf32>
    %175 = arith.addf %170, %174 : vector<38x128xf32>
    %c0_199 = arith.constant 0 : index
    %c0_200 = arith.constant 0 : index
    %176 = vector.load %arg10[%c0_199, %c0_200] : memref<1x128xf32, #tpu.memory_space<vmem>>, vector<1x128xf32>
    %177 = vector.broadcast %176 : vector<1x128xf32> to vector<38x128xf32>
    %178 = arith.addf %175, %177 : vector<38x128xf32>
    %cst_201 = arith.constant 0.000000e+00 : f32
    %179 = vector.broadcast %cst_201 : f32 to vector<38x128xf32>
    %180 = arith.maximumf %178, %179 : vector<38x128xf32>
    %181 = vector.extract_strided_slice %180 {offsets = [0, 0], sizes = [16, 128], strides = [1, 1]} : vector<38x128xf32> to vector<16x128xf32>
    %182 = arith.truncf %181 : vector<16x128xf32> to vector<16x128xbf16>
    %c3_202 = arith.constant 3 : index
    %c0_203 = arith.constant 0 : index
    %183 = vector.load %arg18[%c3_202, %c0_203] : memref<44x128xbf16, #tpu.memory_space<vmem>>, vector<16x128xbf16>
    tpu.vector_store %arg18[%c3_202, %c0_203], %182 {strides = array<i32>} : memref<44x128xbf16, #tpu.memory_space<vmem>>, vector<16x128xbf16>,
    %184 = vector.extract_strided_slice %180 {offsets = [22, 0], sizes = [16, 128], strides = [1, 1]} : vector<38x128xf32> to vector<16x128xf32>
    %185 = arith.truncf %184 : vector<16x128xf32> to vector<16x128xbf16>
    %c25_204 = arith.constant 25 : index
    %c0_205 = arith.constant 0 : index
    %186 = vector.load %arg18[%c25_204, %c0_205] : memref<44x128xbf16, #tpu.memory_space<vmem>>, vector<16x128xbf16>
    tpu.vector_store %arg18[%c25_204, %c0_205], %185 {strides = array<i32>} : memref<44x128xbf16, #tpu.memory_space<vmem>>, vector<16x128xbf16>,
    %c2_206 = arith.constant 2 : index
    %c0_207 = arith.constant 0 : index
    %187 = vector.load %arg18[%c2_206, %c0_207] : memref<44x128xbf16, #tpu.memory_space<vmem>>, vector<38x128xbf16>
    %c0_208 = arith.constant 0 : index
    %c0_209 = arith.constant 0 : index
    %c0_210 = arith.constant 0 : index
    %188 = vector.load %arg11[%c0_208, %c0_209, %c0_210] : memref<3x128x128xbf16, #tpu.memory_space<vmem>>, vector<1x128x128xbf16>
    %189 = vector.shape_cast %188 : vector<1x128x128xbf16> to vector<128x128xbf16>
    %cst_211 = arith.constant dense<0.000000e+00> : vector<38x128xf32>
    %190 = tpu.matmul %187, %189, %cst_211 {dimension_numbers = #tpu.dot_dimension_numbers<[1], [0], [0], [1], [0, 0, 1, 1], [], []>} : vector<38x128xbf16>, vector<128x128xbf16>, vector<38x128xf32> -> vector<38x128xf32>
    %c3_212 = arith.constant 3 : index
    %c0_213 = arith.constant 0 : index
    %191 = vector.load %arg18[%c3_212, %c0_213] : memref<44x128xbf16, #tpu.memory_space<vmem>>, vector<38x128xbf16>
    %c1_214 = arith.constant 1 : index
    %c0_215 = arith.constant 0 : index
    %c0_216 = arith.constant 0 : index
    %192 = vector.load %arg11[%c1_214, %c0_215, %c0_216] : memref<3x128x128xbf16, #tpu.memory_space<vmem>>, vector<1x128x128xbf16>
    %193 = vector.shape_cast %192 : vector<1x128x128xbf16> to vector<128x128xbf16>
    %cst_217 = arith.constant dense<0.000000e+00> : vector<38x128xf32>
    %194 = tpu.matmul %191, %193, %cst_217 {dimension_numbers = #tpu.dot_dimension_numbers<[1], [0], [0], [1], [0, 0, 1, 1], [], []>} : vector<38x128xbf16>, vector<128x128xbf16>, vector<38x128xf32> -> vector<38x128xf32>
    %195 = arith.addf %190, %194 : vector<38x128xf32>
    %c4_218 = arith.constant 4 : index
    %c0_219 = arith.constant 0 : index
    %196 = vector.load %arg18[%c4_218, %c0_219] : memref<44x128xbf16, #tpu.memory_space<vmem>>, vector<38x128xbf16>
    %c2_220 = arith.constant 2 : index
    %c0_221 = arith.constant 0 : index
    %c0_222 = arith.constant 0 : index
    %197 = vector.load %arg11[%c2_220, %c0_221, %c0_222] : memref<3x128x128xbf16, #tpu.memory_space<vmem>>, vector<1x128x128xbf16>
    %198 = vector.shape_cast %197 : vector<1x128x128xbf16> to vector<128x128xbf16>
    %cst_223 = arith.constant dense<0.000000e+00> : vector<38x128xf32>
    %199 = tpu.matmul %196, %198, %cst_223 {dimension_numbers = #tpu.dot_dimension_numbers<[1], [0], [0], [1], [0, 0, 1, 1], [], []>} : vector<38x128xbf16>, vector<128x128xbf16>, vector<38x128xf32> -> vector<38x128xf32>
    %200 = arith.addf %195, %199 : vector<38x128xf32>
    %c0_224 = arith.constant 0 : index
    %c0_225 = arith.constant 0 : index
    %201 = vector.load %arg12[%c0_224, %c0_225] : memref<1x128xf32, #tpu.memory_space<vmem>>, vector<1x128xf32>
    %202 = vector.broadcast %201 : vector<1x128xf32> to vector<38x128xf32>
    %203 = arith.addf %200, %202 : vector<38x128xf32>
    %204 = vector.extract_strided_slice %203 {offsets = [0, 0], sizes = [16, 128], strides = [1, 1]} : vector<38x128xf32> to vector<16x128xf32>
    %c3_226 = arith.constant 3 : index
    %c0_227 = arith.constant 0 : index
    %205 = vector.load %arg17[%c3_226, %c0_227] : memref<44x128xbf16, #tpu.memory_space<vmem>>, vector<16x128xbf16>
    %206 = arith.extf %205 : vector<16x128xbf16> to vector<16x128xf32>
    %207 = arith.addf %204, %206 : vector<16x128xf32>
    %c0_228 = arith.constant 0 : index
    %c0_229 = arith.constant 0 : index
    %c0_230 = arith.constant 0 : index
    %208 = vector.load %arg13[%c0_228, %c0_229, %c0_230] : memref<2x16x128xf32, #tpu.memory_space<vmem>>, vector<1x16x128xf32>
    %209 = vector.shape_cast %208 : vector<1x16x128xf32> to vector<16x128xf32>
    %210 = vector.shape_cast %207 : vector<16x128xf32> to vector<1x16x128xf32>
    tpu.vector_store %arg13[%c0_228, %c0_229, %c0_230], %210 {strides = array<i32>} : memref<2x16x128xf32, #tpu.memory_space<vmem>>, vector<1x16x128xf32>,
    %211 = vector.extract_strided_slice %203 {offsets = [22, 0], sizes = [16, 128], strides = [1, 1]} : vector<38x128xf32> to vector<16x128xf32>
    %c25_231 = arith.constant 25 : index
    %c0_232 = arith.constant 0 : index
    %212 = vector.load %arg17[%c25_231, %c0_232] : memref<44x128xbf16, #tpu.memory_space<vmem>>, vector<16x128xbf16>
    %213 = arith.extf %212 : vector<16x128xbf16> to vector<16x128xf32>
    %214 = arith.addf %211, %213 : vector<16x128xf32>
    %c1_233 = arith.constant 1 : index
    %c0_234 = arith.constant 0 : index
    %c0_235 = arith.constant 0 : index
    %215 = vector.load %arg13[%c1_233, %c0_234, %c0_235] : memref<2x16x128xf32, #tpu.memory_space<vmem>>, vector<1x16x128xf32>
    %216 = vector.shape_cast %215 : vector<1x16x128xf32> to vector<16x128xf32>
    %217 = vector.shape_cast %214 : vector<16x128xf32> to vector<1x16x128xf32>
    tpu.vector_store %arg13[%c1_233, %c0_234, %c0_235], %217 {strides = array<i32>} : memref<2x16x128xf32, #tpu.memory_space<vmem>>, vector<1x16x128xf32>,
    return
  }
  func.func @transform_0(%arg0: i32) -> (i32, i32, i32) {
    %c0_i32 = arith.constant 0 : i32
    %c0_i32_0 = arith.constant 0 : i32
    %c0_i32_1 = arith.constant 0 : i32
    return %arg0, %c0_i32, %c0_i32_0 : i32, i32, i32
  }
  func.func @transform_1(%arg0: i32) -> (i32, i32, i32) {
    %c0_i32 = arith.constant 0 : i32
    %c0_i32_0 = arith.constant 0 : i32
    %c0_i32_1 = arith.constant 0 : i32
    return %arg0, %c0_i32, %c0_i32_0 : i32, i32, i32
  }
  func.func @transform_2(%arg0: i32) -> (i32, i32, i32) {
    %c0_i32 = arith.constant 0 : i32
    %c0_i32_0 = arith.constant 0 : i32
    %c0_i32_1 = arith.constant 0 : i32
    return %arg0, %c0_i32, %c0_i32_0 : i32, i32, i32
  }
  func.func @transform_3(%arg0: i32) -> (i32, i32, i32) {
    %c0_i32 = arith.constant 0 : i32
    %c0_i32_0 = arith.constant 0 : i32
    %c0_i32_1 = arith.constant 0 : i32
    %c0_i32_2 = arith.constant 0 : i32
    return %c0_i32, %c0_i32_0, %c0_i32_1 : i32, i32, i32
  }
  func.func @transform_4(%arg0: i32) -> (i32, i32, i32) {
    %c0_i32 = arith.constant 0 : i32
    %c0_i32_0 = arith.constant 0 : i32
    %c0_i32_1 = arith.constant 0 : i32
    %c0_i32_2 = arith.constant 0 : i32
    return %c0_i32, %c0_i32_0, %c0_i32_1 : i32, i32, i32
  }
  func.func @transform_5(%arg0: i32) -> (i32, i32) {
    %c0_i32 = arith.constant 0 : i32
    %c0_i32_0 = arith.constant 0 : i32
    %c0_i32_1 = arith.constant 0 : i32
    return %c0_i32, %c0_i32_0 : i32, i32
  }
  func.func @transform_6(%arg0: i32) -> (i32, i32, i32) {
    %c0_i32 = arith.constant 0 : i32
    %c0_i32_0 = arith.constant 0 : i32
    %c0_i32_1 = arith.constant 0 : i32
    %c0_i32_2 = arith.constant 0 : i32
    return %c0_i32, %c0_i32_0, %c0_i32_1 : i32, i32, i32
  }
  func.func @transform_7(%arg0: i32) -> (i32, i32) {
    %c0_i32 = arith.constant 0 : i32
    %c0_i32_0 = arith.constant 0 : i32
    %c0_i32_1 = arith.constant 0 : i32
    return %c0_i32, %c0_i32_0 : i32, i32
  }
  func.func @transform_8(%arg0: i32) -> (i32, i32, i32) {
    %c0_i32 = arith.constant 0 : i32
    %c0_i32_0 = arith.constant 0 : i32
    %c0_i32_1 = arith.constant 0 : i32
    %c0_i32_2 = arith.constant 0 : i32
    return %c0_i32, %c0_i32_0, %c0_i32_1 : i32, i32, i32
  }
  func.func @transform_9(%arg0: i32) -> (i32, i32) {
    %c0_i32 = arith.constant 0 : i32
    %c0_i32_0 = arith.constant 0 : i32
    %c0_i32_1 = arith.constant 0 : i32
    return %c0_i32, %c0_i32_0 : i32, i32
  }
  func.func @transform_10(%arg0: i32) -> (i32, i32, i32) {
    %c0_i32 = arith.constant 0 : i32
    %c0_i32_0 = arith.constant 0 : i32
    %c0_i32_1 = arith.constant 0 : i32
    %c0_i32_2 = arith.constant 0 : i32
    return %c0_i32, %c0_i32_0, %c0_i32_1 : i32, i32, i32
  }
  func.func @transform_11(%arg0: i32) -> (i32, i32) {
    %c0_i32 = arith.constant 0 : i32
    %c0_i32_0 = arith.constant 0 : i32
    %c0_i32_1 = arith.constant 0 : i32
    return %c0_i32, %c0_i32_0 : i32, i32
  }
  func.func @transform_12(%arg0: i32) -> (i32, i32, i32) {
    %c0_i32 = arith.constant 0 : i32
    %c0_i32_0 = arith.constant 0 : i32
    %c0_i32_1 = arith.constant 0 : i32
    return %arg0, %c0_i32, %c0_i32_0 : i32, i32, i32
  }
}

</mosaic_0001>

<llo_original>
// kernel: af_forward.1
$region0: #{af_forward.1}
  #allocation0 [shape = 'u32[]', space=smem, size = 0x4, offset = 0x4, fixed_abs, tag = 'smem constant byte address 0x4 - core index']
  #allocation1 [shape = 'u32[144,128]{1,0:T(1,128)}', space=vmem, size = 0x12000, scoped, tag = 'internal scratch']
  #allocation2 [shape = 'bf16[44,16]{1,0:T(8,128)(2,1)}', space=vmem, size = 0x3000, scoped, tag = 'scratch operand']
  #allocation3 [shape = 'bf16[44,128]{1,0:T(8,128)(2,1)}', space=vmem, size = 0x3000, scoped, tag = 'scratch operand']
  #allocation4 [shape = 'bf16[44,256]{1,0:T(8,128)(2,1)}', space=vmem, size = 0x6000, scoped, tag = 'scratch operand']
  #allocation5 [shape = 'bf16[44,128]{1,0:T(8,128)(2,1)}', space=vmem, size = 0x3000, scoped, tag = 'scratch operand']
  #allocation6 [shape = 'bf16[44,128]{1,0:T(8,128)(2,1)}', space=vmem, size = 0x3000, scoped, tag = 'scratch operand']
  %s0 = inlined_call_operand.vmem [shape: bf16[2,16,16], index: 0, kind: input, shape index: {}]
  %s1 = inlined_call_operand.vmem [shape: bf16[2,16,128], index: 1, kind: input, shape index: {}]
  %s2 = inlined_call_operand.vmem [shape: bf16[2,16,128], index: 2, kind: input, shape index: {}]
  %s3 = inlined_call_operand.hbm [shape: bf16[7,16,256], index: 3, kind: input, shape index: {}]
  %s4 = inlined_call_operand.vmem [shape: bf16[7,128,256], index: 4, kind: input, shape index: {}]
  %s5 = inlined_call_operand.vmem [shape: f32[1,256], index: 5, kind: input, shape index: {}]
  %s6 = inlined_call_operand.vmem [shape: bf16[3,256,128], index: 6, kind: input, shape index: {}]
  %s7 = inlined_call_operand.vmem [shape: f32[1,128], index: 7, kind: input, shape index: {}]
  %s8 = inlined_call_operand.hbm [shape: bf16[3,128,128], index: 8, kind: input, shape index: {}]
  %s9 = inlined_call_operand.vmem [shape: f32[1,128], index: 9, kind: input, shape index: {}]
  %s10 = inlined_call_operand.hbm [shape: bf16[3,128,128], index: 10, kind: input, shape index: {}]
  %s11 = inlined_call_operand.vmem [shape: f32[1,128], index: 11, kind: input, shape index: {}]
  %s12 = inlined_call_operand.vmem [shape: f32[2,16,128], index: 12, kind: output, shape index: {}]
  %s13 = sld [smem:[#allocation0]]
  $region70: #{af_forward.1} parent=0
    _
  %s15 = ssub.s32 1, %s13
  %s16 = scalar_select 0, %s15, %s13
  $region1: #{af_forward.1} parent=0
    #allocation7 [shape = 'u8[57344]{0}', space=vmem, size = 0xe000, scoped, tag = 'input window, operand 3, single buffered']
    #allocation8 [shape = 's32[1]{0}', space=sflag, size = 0x4, scoped, tag = 'scoped memory for af_forward.1']
    #allocation9 [shape = 'u8[98304]{0}', space=vmem, size = 0x18000, scoped, tag = 'input window, operand 8, single buffered']
    #allocation10 [shape = 's32[1]{0}', space=sflag, size = 0x4, scoped, tag = 'scoped memory for af_forward.1']
    #allocation11 [shape = 'u8[98304]{0}', space=vmem, size = 0x18000, scoped, tag = 'input window, operand 10, single buffered']
    %17 = vsyncpa [#allocation8], 0
    %18 = vsyncpa [#allocation10], 0
    // Predicated region
    $region2: #{af_forward.1} parent=1 // pred_check
      _
    $region3: #{af_forward.1} parent=1 // pred_check_branch
      %20 = sbr.rel (0) target = $region5
    $region4: #{af_forward.1} parent=1 // pred_region
      _
    $region5: #{af_forward.1} parent=1 // pred_fallthru
      _
    // Predicated region
    $region6: #{af_forward.1} parent=1 // pred_check
      _
    $region7: #{af_forward.1} parent=1 // pred_check_branch
      %22 = sbr.rel (0) target = $region9
    $region8: #{af_forward.1} parent=1 // pred_region
      _
    $region9: #{af_forward.1} parent=1 // pred_fallthru
      _
    // Predicated region
    $region10: #{af_forward.1} parent=1 // pred_check
      _
    $region11: #{af_forward.1} parent=1 // pred_check_branch
      %24 = sbr.rel (0) target = $region13
    $region12: #{af_forward.1} parent=1 // pred_region
      _
    $region13: #{af_forward.1} parent=1 // pred_fallthru
      _
    // Predicated region
    $region14: #{af_forward.1} parent=1 // pred_check
      _
    $region15: #{af_forward.1} parent=1 // pred_check_branch
      %26 = sbr.rel (0) target = $region17
    $region16: #{af_forward.1} parent=1 // pred_region
      %s28 = ssub.s32 1792, 1792
      %29 = vsyncadd [#allocation8], %s28
      %s30 = sshll.u32 [#allocation7], 4
      %s31 = int_to_ptr.vmem [resolvable:$true] %s30
      %36 = dma.hbm_to_vmem [thread:$0]  %s3, 1792, %s31, [#allocation8], 128, 128, 8
    $region17: #{af_forward.1} parent=1 // pred_fallthru
      _
    // Predicated region
    $region18: #{af_forward.1} parent=1 // pred_check
      _
    $region19: #{af_forward.1} parent=1 // pred_check_branch
      %38 = sbr.rel (0) target = $region21
    $region20: #{af_forward.1} parent=1 // pred_region
      _
    $region21: #{af_forward.1} parent=1 // pred_fallthru
      _
    // Predicated region
    $region22: #{af_forward.1} parent=1 // pred_check
      _
    $region23: #{af_forward.1} parent=1 // pred_check_branch
      %40 = sbr.rel (0) target = $region25
    $region24: #{af_forward.1} parent=1 // pred_region
      _
    $region25: #{af_forward.1} parent=1 // pred_fallthru
      _
    // Predicated region
    $region26: #{af_forward.1} parent=1 // pred_check
      _
    $region27: #{af_forward.1} parent=1 // pred_check_branch
      %42 = sbr.rel (0) target = $region29
    $region28: #{af_forward.1} parent=1 // pred_region
      _
    $region29: #{af_forward.1} parent=1 // pred_fallthru
      _
    // Predicated region
    $region30: #{af_forward.1} parent=1 // pred_check
      _
    $region31: #{af_forward.1} parent=1 // pred_check_branch
      %44 = sbr.rel (0) target = $region33
    $region32: #{af_forward.1} parent=1 // pred_region
      _
    $region33: #{af_forward.1} parent=1 // pred_fallthru
      _
    // Predicated region
    $region34: #{af_forward.1} parent=1 // pred_check
      _
    $region35: #{af_forward.1} parent=1 // pred_check_branch
      %46 = sbr.rel (0) target = $region37
    $region36: #{af_forward.1} parent=1 // pred_region
      %s48 = ssub.s32 3072, 3072
      %49 = vsyncadd [#allocation10], %s48
      %s50 = sshll.u32 [#allocation9], 4
      %s51 = int_to_ptr.vmem [resolvable:$true] %s50
      %56 = dma.hbm_to_vmem [thread:$0]  %s8, 3072, %s51, [#allocation10], 64, 64, 4
    $region37: #{af_forward.1} parent=1 // pred_fallthru
      _
    // Predicated region
    $region38: #{af_forward.1} parent=1 // pred_check
      _
    $region39: #{af_forward.1} parent=1 // pred_check_branch
      %58 = sbr.rel (0) target = $region41
    $region40: #{af_forward.1} parent=1 // pred_region
      _
    $region41: #{af_forward.1} parent=1 // pred_fallthru
      _
    // Predicated region
    $region42: #{af_forward.1} parent=1 // pred_check
      _
    $region43: #{af_forward.1} parent=1 // pred_check_branch
      %60 = sbr.rel (0) target = $region45
    $region44: #{af_forward.1} parent=1 // pred_region
      %s62 = ssub.s32 3072, 3072
      %63 = vsyncadd [#allocation10], %s62
      %s64 = sshll.u32 [#allocation11], 4
      %s65 = int_to_ptr.vmem [resolvable:$true] %s64
      %70 = dma.hbm_to_vmem [thread:$0]  %s10, 3072, %s65, [#allocation10], 64, 64, 4
    $region45: #{af_forward.1} parent=1 // pred_fallthru
      _
    // Predicated region
    $region46: #{af_forward.1} parent=1 // pred_check
      _
    $region47: #{af_forward.1} parent=1 // pred_check_branch
      %72 = sbr.rel (0) target = $region49
    $region48: #{af_forward.1} parent=1 // pred_region
      _
    $region49: #{af_forward.1} parent=1 // pred_fallthru
      _
    // Predicated region
    $region50: #{af_forward.1} parent=1 // pred_check
      _
    $region51: #{af_forward.1} parent=1 // pred_check_branch
      %74 = sbr.rel (0) target = $region53
    $region52: #{af_forward.1} parent=1 // pred_region
      %75 = dma.done [#allocation8], 1792
    $region53: #{af_forward.1} parent=1 // pred_fallthru
      _
    // Predicated region
    $region54: #{af_forward.1} parent=1 // pred_check
      _
    $region55: #{af_forward.1} parent=1 // pred_check_branch
      %77 = sbr.rel (0) target = $region57
    $region56: #{af_forward.1} parent=1 // pred_region
      %78 = dma.done [#allocation10], 3072
    $region57: #{af_forward.1} parent=1 // pred_fallthru
      _
    // Predicated region
    $region58: #{af_forward.1} parent=1 // pred_check
      _
    $region59: #{af_forward.1} parent=1 // pred_check_branch
      %80 = sbr.rel (0) target = $region61
    $region60: #{af_forward.1} parent=1 // pred_region
      %81 = dma.done [#allocation10], 3072
    $region61: #{af_forward.1} parent=1 // pred_fallthru
      _
    %vm83 = vcmask 123904
    %vm84 = vsmask.f32 1280
    %vm85 = vmand %vm83, %vm84
    %v86 = vld [vmem:[#allocation2] sm:$0x3]
    %v87 = vsel %vm85, 0, %v86
    %88 = vst [vmem:[#allocation2] sm:$0x3] %v87
    %vm89 = vcmask 124929
    %vm90 = vsmask.f32 7942
    %vm91 = vmand %vm89, %vm90
    %v92 = vld [vmem:[#allocation2 + $0x8] sm:$0x6]
    %v93 = vsel %vm91, 0, %v92
    %94 = vst [vmem:[#allocation2 + $0x8] sm:$0x6] %v93
    %vm95 = vcmask 125955
    %96 = vst.msk [vmem:[#allocation2 + $0x8] sm:$0x8] %vm95, 0
    %vm97 = vcmask 122880
    %vm98 = vsmask.f32 256
    %vm99 = vmand %vm97, %vm98
    %v100 = vld [vmem:[#allocation2 + $0xc] sm:$0x1]
    %v101 = vsel %vm99, 0, %v100
    %102 = vst [vmem:[#allocation2 + $0xc] sm:$0x1] %v101
    %vm103 = vsmask.f32 7938
    %vm104 = vmand %vm83, %vm103
    %v105 = vld [vmem:[#allocation2 + $0x14] sm:$0x3]
    %v106 = vsel %vm104, 0, %v105
    %107 = vst [vmem:[#allocation2 + $0x14] sm:$0x3] %v106
    %vm108 = vcmask 1041408
    %vm109 = vmand %vm108, %vm84
    %v110 = vld [vmem:[#allocation3] sm:$0x3]
    %v111 = vsel %vm109, 0, %v110
    %112 = vst [vmem:[#allocation3] sm:$0x3] %v111
    %vm113 = vcmask 1042433
    %vm114 = vmand %vm113, %vm90
    %v115 = vld [vmem:[#allocation3 + $0x8] sm:$0x6]
    %v116 = vsel %vm114, 0, %v115
    %117 = vst [vmem:[#allocation3 + $0x8] sm:$0x6] %v116
    %118 = vst [vmem:[#allocation3 + $0x8] sm:$0x8] 0
    %vm119 = vcmask 1040384
    %vm120 = vmand %vm119, %vm98
    %v121 = vld [vmem:[#allocation3 + $0xc] sm:$0x1]
    %v122 = vsel %vm120, 0, %v121
    %123 = vst [vmem:[#allocation3 + $0xc] sm:$0x1] %v122
    %vm124 = vmand %vm108, %vm103
    %v125 = vld [vmem:[#allocation3 + $0x14] sm:$0x3]
    %v126 = vsel %vm124, 0, %v125
    %127 = vst [vmem:[#allocation3 + $0x14] sm:$0x3] %v126
    %vm128 = vcmask 1045508
    %vm129 = vsmask.f32 5376
    %vm130 = vmand %vm128, %vm129
    %vm131 = vmor %vm130, %vm109
    %v132 = vld [vmem:[#allocation4] sm:$0x33]
    %v133 = vsel %vm131, 0, %v132
    %134 = vst [vmem:[#allocation4] sm:$0x33] %v133
    %vm135 = vcmask 1046533
    %vm136 = vsmask.f32 7958
    %vm137 = vmand %vm135, %vm136
    %vm138 = vmor %vm137, %vm114
    %v139 = vld [vmem:[#allocation4 + $0x10] sm:$0x66]
    %v140 = vsel %vm138, 0, %v139
    %141 = vst [vmem:[#allocation4 + $0x10] sm:$0x66] %v140
    %142 = vst [vmem:[#allocation4 + $0x10] sm:$0x88] 0
    %vm143 = vcmask 1044484
    %vm144 = vsmask.f32 4352
    %vm145 = vmand %vm143, %vm144
    %vm146 = vmor %vm145, %vm120
    %v147 = vld [vmem:[#allocation4 + $0x18] sm:$0x11]
    %v148 = vsel %vm146, 0, %v147
    %149 = vst [vmem:[#allocation4 + $0x18] sm:$0x11] %v148
    %vm150 = vsmask.f32 7954
    %vm151 = vmand %vm128, %vm150
    %vm152 = vmor %vm151, %vm124
    %v153 = vld [vmem:[#allocation4 + $0x28] sm:$0x33]
    %v154 = vsel %vm152, 0, %v153
    %155 = vst [vmem:[#allocation4 + $0x28] sm:$0x33] %v154
    %v156 = vld [vmem:[#allocation5] sm:$0x3]
    %v157 = vsel %vm109, 0, %v156
    %158 = vst [vmem:[#allocation5] sm:$0x3] %v157
    %v159 = vld [vmem:[#allocation5 + $0x8] sm:$0x6]
    %v160 = vsel %vm114, 0, %v159
    %161 = vst [vmem:[#allocation5 + $0x8] sm:$0x6] %v160
    %162 = vst [vmem:[#allocation5 + $0x8] sm:$0x8] 0
    %v163 = vld [vmem:[#allocation5 + $0xc] sm:$0x1]
    %v164 = vsel %vm120, 0, %v163
    %165 = vst [vmem:[#allocation5 + $0xc] sm:$0x1] %v164
    %v166 = vld [vmem:[#allocation5 + $0x14] sm:$0x3]
    %v167 = vsel %vm124, 0, %v166
    %168 = vst [vmem:[#allocation5 + $0x14] sm:$0x3] %v167
    %v169 = vld [vmem:[#allocation6] sm:$0x3]
    %v170 = vsel %vm109, 0, %v169
    %171 = vst [vmem:[#allocation6] sm:$0x3] %v170
    %v172 = vld [vmem:[#allocation6 + $0x8] sm:$0x6]
    %v173 = vsel %vm114, 0, %v172
    %174 = vst [vmem:[#allocation6 + $0x8] sm:$0x6] %v173
    %175 = vst [vmem:[#allocation6 + $0x8] sm:$0x8] 0
    %v176 = vld [vmem:[#allocation6 + $0xc] sm:$0x1]
    %v177 = vsel %vm120, 0, %v176
    %178 = vst [vmem:[#allocation6 + $0xc] sm:$0x1] %v177
    %v179 = vld [vmem:[#allocation6 + $0x14] sm:$0x3]
    %v180 = vsel %vm124, 0, %v179
    %181 = vst [vmem:[#allocation6 + $0x14] sm:$0x3] %v180
    %v182 = vld [vmem:[%s0] sm:$0xf]
    %v183 = vld [vmem:[%s0 + $0x4] sm:$0xf]
    %vm184 = vsmask.f32 5392
    %vm185 = vmor %vm84, %vm184
    %v187 = vshrl.u32 %v182, 16
    %v189 = vrot.slane %v187, 6
    %v190 = vshll.u32 %v182, 16
    %v192 = vrot.slane %v190, 7
    %v193 = vor.u32 %v189, %v192
    %v194 = vrot.slane %v193, 4
    %v196 = vshrl.u32 %v183, 16
    %v198 = vrot.slane %v196, 6
    %v199 = vshll.u32 %v183, 16
    %v201 = vrot.slane %v199, 7
    %v202 = vor.u32 %v198, %v201
    %v203 = vsel %vm185, %v194, %v202
    %v204 = vrot.slane %v202, 4
    %vm208 = vcmask 125953
    %vm209 = vmand %vm208, %vm90
    %v210 = vld [vmem:[#allocation2] sm:$0xe]
    %v211 = vsel %vm209, %v193, %v210
    %212 = vst [vmem:[#allocation2] sm:$0xe] %v211
    %vm213 = vcmask 125952
    %214 = vst.msk [vmem:[#allocation2 + $0x4] sm:$0xf] %vm213, %v203
    %v215 = vld [vmem:[#allocation2 + $0x8] sm:$0x3]
    %v216 = vsel %vm85, %v204, %v215
    %217 = vst [vmem:[#allocation2 + $0x8] sm:$0x3] %v216
    %v218 = vld [vmem:[%s1] sm:$0xf]
    %v219 = vld [vmem:[%s1 + $0x4] sm:$0xf]
    %v221 = vshrl.u32 %v218, 16
    %v223 = vrot.slane %v221, 6
    %v224 = vshll.u32 %v218, 16
    %v226 = vrot.slane %v224, 7
    %v227 = vor.u32 %v223, %v226
    %v228 = vrot.slane %v227, 4
    %v230 = vshrl.u32 %v219, 16
    %v232 = vrot.slane %v230, 6
    %v233 = vshll.u32 %v219, 16
    %v235 = vrot.slane %v233, 7
    %v236 = vor.u32 %v232, %v235
    %v237 = vsel %vm185, %v228, %v236
    %v238 = vrot.slane %v236, 4
    %vm242 = vcmask 1043457
    %vm243 = vmand %vm242, %vm90
    %v244 = vld [vmem:[#allocation3] sm:$0xe]
    %v245 = vsel %vm243, %v227, %v244
    %246 = vst [vmem:[#allocation3] sm:$0xe] %v245
    %247 = vst [vmem:[#allocation3 + $0x4] sm:$0xf] %v237
    %v248 = vld [vmem:[#allocation3 + $0x8] sm:$0x3]
    %v249 = vsel %vm109, %v238, %v248
    %250 = vst [vmem:[#allocation3 + $0x8] sm:$0x3] %v249
    %s251 = scalar_lea.vmem %s0, 8
    %v252 = vld [vmem:[%s251] sm:$0xf]
    %v253 = vld [vmem:[%s251 + $0x4] sm:$0xf]
    %vm254 = vsmask.f32 4368
    %vm255 = vmor %vm98, %vm254
    %v257 = vshrl.u32 %v252, 16
    %v259 = vrot.slane %v257, 7
    %v260 = vshll.u32 %v252, 16
    %v262 = vor.u32 %v259, %v260
    %v263 = vrot.slane %v259, 4
    %v265 = vshrl.u32 %v253, 16
    %v267 = vrot.slane %v265, 7
    %v268 = vshll.u32 %v253, 16
    %v270 = vor.u32 %v267, %v268
    %v271 = vsel %vm255, %v263, %v270
    %v272 = vrot.slane %v267, 4
    %vm276 = vcmask 125952
    %vm277 = vmand %vm276, %vm103
    %v278 = vld [vmem:[#allocation2 + $0xc] sm:$0xf]
    %v279 = vsel %vm277, %v262, %v278
    %280 = vst [vmem:[#allocation2 + $0xc] sm:$0xf] %v279
    %281 = vst.msk [vmem:[#allocation2 + $0x10] sm:$0xf] %vm213, %v271
    %v282 = vld [vmem:[#allocation2 + $0x14] sm:$0x1]
    %v283 = vsel %vm99, %v272, %v282
    %284 = vst [vmem:[#allocation2 + $0x14] sm:$0x1] %v283
    %s285 = scalar_lea.vmem %s1, 8
    %v286 = vld [vmem:[%s285] sm:$0xf]
    %v287 = vld [vmem:[%s285 + $0x4] sm:$0xf]
    %v289 = vshrl.u32 %v286, 16
    %v291 = vrot.slane %v289, 7
    %v292 = vshll.u32 %v286, 16
    %v294 = vor.u32 %v291, %v292
    %v295 = vrot.slane %v291, 4
    %v297 = vshrl.u32 %v287, 16
    %v299 = vrot.slane %v297, 7
    %v300 = vshll.u32 %v287, 16
    %v302 = vor.u32 %v299, %v300
    %v303 = vsel %vm255, %v295, %v302
    %v304 = vrot.slane %v299, 4
    %vm308 = vcmask 1043456
    %vm309 = vmand %vm308, %vm103
    %v310 = vld [vmem:[#allocation3 + $0xc] sm:$0xf]
    %v311 = vsel %vm309, %v294, %v310
    %312 = vst [vmem:[#allocation3 + $0xc] sm:$0xf] %v311
    %313 = vst [vmem:[#allocation3 + $0x10] sm:$0xf] %v303
    %v314 = vld [vmem:[#allocation3 + $0x14] sm:$0x1]
    %v315 = vsel %vm120, %v304, %v314
    %316 = vst [vmem:[#allocation3 + $0x14] sm:$0x1] %v315
    %v317 = vld [vmem:[#allocation2] sm:$0xf]
    %v318 = vld [vmem:[#allocation2 + $0x4] sm:$0xf]
    %v319 = vld [vmem:[#allocation2 + $0x8] sm:$0xf]
    %v320 = vld [vmem:[#allocation2 + $0xc] sm:$0xf]
    %v321 = vld [vmem:[#allocation2 + $0x10] sm:$0x7]
    %v322 = vld [vmem:[#allocation7] sm:$0xff]
    %v323 = vld [vmem:[#allocation7 + $0x8] sm:$0xff]
    %v324 = vld [vmem:[#allocation3] sm:$0xf]
    %v325 = vld [vmem:[#allocation3 + $0x4] sm:$0xf]
    %v326 = vld [vmem:[#allocation3 + $0x8] sm:$0xf]
    %v327 = vld [vmem:[#allocation3 + $0xc] sm:$0xf]
    %v328 = vld [vmem:[#allocation3 + $0x10] sm:$0x7]
    %v329 = vld [vmem:[%s4] sm:$0xff]
    %v330 = vld [vmem:[%s4 + $0x8] sm:$0xff]
    %v331 = vld [vmem:[%s4 + $0x10] sm:$0xff]
    %v332 = vld [vmem:[%s4 + $0x18] sm:$0xff]
    %v333 = vld [vmem:[%s4 + $0x20] sm:$0xff]
    %v334 = vld [vmem:[%s4 + $0x28] sm:$0xff]
    %v335 = vld [vmem:[%s4 + $0x30] sm:$0xff]
    %v336 = vld [vmem:[%s4 + $0x38] sm:$0xff]
    %v337 = vld [vmem:[%s4 + $0x40] sm:$0xff]
    %v338 = vld [vmem:[%s4 + $0x48] sm:$0xff]
    %v339 = vld [vmem:[%s4 + $0x50] sm:$0xff]
    %v340 = vld [vmem:[%s4 + $0x58] sm:$0xff]
    %v341 = vld [vmem:[%s4 + $0x60] sm:$0xff]
    %v342 = vld [vmem:[%s4 + $0x68] sm:$0xff]
    %v343 = vld [vmem:[%s4 + $0x70] sm:$0xff]
    %v344 = vld [vmem:[%s4 + $0x78] sm:$0xff]
    %v350 = vunpack.c.l.b16 %v324
    %v351 = vunpack.c.l.b16 %v325
    %v352 = vunpack.c.l.b16 %v326
    %v353 = vunpack.c.l.b16 %v327
    %v354 = vunpack.c.l.b16 %v328
    %v355 = vpack.c.b16 %v351, %v350
    %v356 = vpack.c.b16 %v353, %v352
    %v357 = vpack.c.b16 %v354, %v354
    %v377 = vunpack.c.l.b16 %v329
    %v378 = vunpack.c.h.b16 %v329
    %v379 = vunpack.c.l.b16 %v330
    %v380 = vunpack.c.h.b16 %v330
    %v381 = vunpack.c.l.b16 %v331
    %v382 = vunpack.c.h.b16 %v331
    %v383 = vunpack.c.l.b16 %v332
    %v384 = vunpack.c.h.b16 %v332
    %v385 = vunpack.c.l.b16 %v333
    %v386 = vunpack.c.h.b16 %v333
    %v387 = vunpack.c.l.b16 %v334
    %v388 = vunpack.c.h.b16 %v334
    %v389 = vunpack.c.l.b16 %v335
    %v390 = vunpack.c.h.b16 %v335
    %v391 = vunpack.c.l.b16 %v336
    %v392 = vunpack.c.h.b16 %v336
    %v393 = vunpack.c.l.b16 %v337
    %v394 = vunpack.c.h.b16 %v337
    %v395 = vunpack.c.l.b16 %v338
    %v396 = vunpack.c.h.b16 %v338
    %v397 = vunpack.c.l.b16 %v339
    %v398 = vunpack.c.h.b16 %v339
    %v399 = vunpack.c.l.b16 %v340
    %v400 = vunpack.c.h.b16 %v340
    %v401 = vunpack.c.l.b16 %v341
    %v402 = vunpack.c.h.b16 %v341
    %v403 = vunpack.c.l.b16 %v342
    %v404 = vunpack.c.h.b16 %v342
    %v405 = vunpack.c.l.b16 %v343
    %v406 = vunpack.c.h.b16 %v343
    %v407 = vunpack.c.l.b16 %v344
    %v408 = vunpack.c.h.b16 %v344
    %v409 = vpack.c.b16 %v379, %v377
    %v410 = vpack.c.b16 %v380, %v378
    %v411 = vpack.c.b16 %v383, %v381
    %v412 = vpack.c.b16 %v384, %v382
    %v413 = vpack.c.b16 %v387, %v385
    %v414 = vpack.c.b16 %v388, %v386
    %v415 = vpack.c.b16 %v391, %v389
    %v416 = vpack.c.b16 %v392, %v390
    %v417 = vpack.c.b16 %v395, %v393
    %v418 = vpack.c.b16 %v396, %v394
    %v419 = vpack.c.b16 %v399, %v397
    %v420 = vpack.c.b16 %v400, %v398
    %v421 = vpack.c.b16 %v403, %v401
    %v422 = vpack.c.b16 %v404, %v402
    %v423 = vpack.c.b16 %v407, %v405
    %v424 = vpack.c.b16 %v408, %v406
    %441 = vmatprep.subr.bf16.mxu0 %v410
    %442 = vmatpush1.bf16.msra.mxu0 %v409
    %443 = vmatprep.subr.bf16.mxu0 %v412
    %444 = vmatpush1.bf16.msra.mxu0 %v411
    %445 = vmatprep.subr.bf16.mxu0 %v414
    %446 = vmatpush1.bf16.msra.mxu0 %v413
    %447 = vmatprep.subr.bf16.mxu0 %v416
    %448 = vmatpush1.bf16.msra.mxu0 %v415
    %449 = vmatprep.subr.bf16.mxu0 %v418
    %450 = vmatpush1.bf16.msra.mxu0 %v417
    %451 = vmatprep.subr.bf16.mxu0 %v420
    %452 = vmatpush1.bf16.msra.mxu0 %v419
    %453 = vmatprep.subr.bf16.mxu0 %v422
    %454 = vmatpush1.bf16.msra.mxu0 %v421
    %455 = vmatprep.subr.bf16.mxu0 %v424
    %456 = vmatpush1.bf16.msra.mxu0 %v423
    %457 = vmatprep.subr.bf16.mxu0 0
    %458 = vmatpush1.bf16.msra.mxu0 0
    %459 = vmatprep.subr.bf16.mxu0 0
    %460 = vmatpush1.bf16.msra.mxu0 0
    %461 = vmatprep.subr.bf16.mxu0 0
    %462 = vmatpush1.bf16.msra.mxu0 0
    %463 = vmatprep.subr.bf16.mxu0 0
    %464 = vmatpush1.bf16.msra.mxu0 0
    %465 = vmatprep.subr.bf16.mxu0 0
    %466 = vmatpush1.bf16.msra.mxu0 0
    %467 = vmatprep.subr.bf16.mxu0 0
    %468 = vmatpush1.bf16.msra.mxu0 0
    %469 = vmatprep.subr.bf16.mxu0 0
    %470 = vmatpush1.bf16.msra.mxu0 0
    %471 = vmatprep.subr.bf16.mxu0 0
    %472 = vmatpush1.bf16.msra.mxu0 0
    %473 = vmatprep.mubr.bf16.mxu0 0
    %474 = vmatmul.mubr.bf16.gmra.mrb[0].mxu0 %v355
    %v475 = vpop.f32.mrb[0].mxu0
    %v476 = vadd.f32 0.0, %v475
    %v477 = vpop.f32.mrb[0].mxu0
    %v478 = vadd.f32 0.0, %v477
    %v479 = vpop.f32.mrb[0].mxu0
    %v480 = vadd.f32 0.0, %v479
    %v481 = vpop.f32.mrb[0].mxu0
    %v482 = vadd.f32 0.0, %v481
    %483 = vmatprep.mubr.bf16.mxu0 0
    %484 = vmatmul.mubr.bf16.gmra.mrb[0].mxu0 %v356
    %v485 = vpop.f32.mrb[0].mxu0
    %v486 = vadd.f32 0.0, %v485
    %v487 = vpop.f32.mrb[0].mxu0
    %v488 = vadd.f32 0.0, %v487
    %v489 = vpop.f32.mrb[0].mxu0
    %v490 = vadd.f32 0.0, %v489
    %v491 = vpop.f32.mrb[0].mxu0
    %v492 = vadd.f32 0.0, %v491
    %493 = vmatprep.mubr.bf16.mxu0 0
    %494 = vmatmul.mubr.bf16.gmra.mrb[0].mxu0 %v357
    %v495 = vpop.f32.mrb[0].mxu0
    %v496 = vadd.f32 0.0, %v495
    %v497 = vpop.f32.mrb[0].mxu0
    %v498 = vadd.f32 0.0, %v497
    %v499 = vpop.f32.mrb[0].mxu0
    %v500 = vpop.f32.mrb[0].mxu0
    %501 = vdwg.mxu0
    %v507 = vunpack.c.l.b16 %v317
    %v508 = vunpack.c.l.b16 %v318
    %v509 = vunpack.c.l.b16 %v319
    %v510 = vunpack.c.l.b16 %v320
    %v511 = vunpack.c.l.b16 %v321
    %v512 = vpack.c.b16 %v508, %v507
    %v513 = vpack.c.b16 %v510, %v509
    %v514 = vpack.c.b16 %v511, %v511
    %v517 = vunpack.c.l.b16 %v322
    %v518 = vunpack.c.h.b16 %v322
    %v519 = vunpack.c.l.b16 %v323
    %v520 = vunpack.c.h.b16 %v323
    %v521 = vpack.c.b16 %v519, %v517
    %v522 = vpack.c.b16 %v520, %v518
    %vm525 = vcmask 130048
    %v527 = vsel %vm525, %v512, 0
    %v530 = vsel %vm525, %v513, 0
    %v533 = vsel %vm525, %v514, 0
    %535 = vmatprep.subr.bf16.mxu0 %v522
    %536 = vmatpush1.bf16.msra.mxu0 %v521
    %537 = vmatprep.subr.bf16.mxu0 0
    %538 = vmatpush1.bf16.msra.mxu0 0
    %539 = vmatprep.subr.bf16.mxu0 0
    %540 = vmatpush1.bf16.msra.mxu0 0
    %541 = vmatprep.subr.bf16.mxu0 0
    %542 = vmatpush1.bf16.msra.mxu0 0
    %543 = vmatprep.subr.bf16.mxu0 0
    %544 = vmatpush1.bf16.msra.mxu0 0
    %545 = vmatprep.subr.bf16.mxu0 0
    %546 = vmatpush1.bf16.msra.mxu0 0
    %547 = vmatprep.subr.bf16.mxu0 0
    %548 = vmatpush1.bf16.msra.mxu0 0
    %549 = vmatprep.subr.bf16.mxu0 0
    %550 = vmatpush1.bf16.msra.mxu0 0
    %551 = vmatprep.subr.bf16.mxu0 0
    %552 = vmatpush1.bf16.msra.mxu0 0
    %553 = vmatprep.subr.bf16.mxu0 0
    %554 = vmatpush1.bf16.msra.mxu0 0
    %555 = vmatprep.subr.bf16.mxu0 0
    %556 = vmatpush1.bf16.msra.mxu0 0
    %557 = vmatprep.subr.bf16.mxu0 0
    %558 = vmatpush1.bf16.msra.mxu0 0
    %559 = vmatprep.subr.bf16.mxu0 0
    %560 = vmatpush1.bf16.msra.mxu0 0
    %561 = vmatprep.subr.bf16.mxu0 0
    %562 = vmatpush1.bf16.msra.mxu0 0
    %563 = vmatprep.subr.bf16.mxu0 0
    %564 = vmatpush1.bf16.msra.mxu0 0
    %565 = vmatprep.subr.bf16.mxu0 0
    %566 = vmatpush1.bf16.msra.mxu0 0
    %567 = vmatprep.mubr.bf16.mxu0 0
    %568 = vmatmul.mubr.bf16.gmra.mrb[0].mxu0 %v527
    %v569 = vpop.f32.mrb[0].mxu0
    %v570 = vadd.f32 %v476, %v569
    %v571 = vpop.f32.mrb[0].mxu0
    %v572 = vadd.f32 %v478, %v571
    %v573 = vpop.f32.mrb[0].mxu0
    %v574 = vadd.f32 %v480, %v573
    %v575 = vpop.f32.mrb[0].mxu0
    %v576 = vadd.f32 %v482, %v575
    %577 = vmatprep.mubr.bf16.mxu0 0
    %578 = vmatmul.mubr.bf16.gmra.mrb[0].mxu0 %v530
    %v579 = vpop.f32.mrb[0].mxu0
    %v580 = vadd.f32 %v486, %v579
    %v581 = vpop.f32.mrb[0].mxu0
    %v582 = vadd.f32 %v488, %v581
    %v583 = vpop.f32.mrb[0].mxu0
    %v584 = vadd.f32 %v490, %v583
    %v585 = vpop.f32.mrb[0].mxu0
    %v586 = vadd.f32 %v492, %v585
    %587 = vmatprep.mubr.bf16.mxu0 0
    %588 = vmatmul.mubr.bf16.gmra.mrb[0].mxu0 %v533
    %v589 = vpop.f32.mrb[0].mxu0
    %v590 = vadd.f32 %v496, %v589
    %v591 = vpop.f32.mrb[0].mxu0
    %v592 = vadd.f32 %v498, %v591
    %v593 = vpop.f32.mrb[0].mxu0
    %v594 = vpop.f32.mrb[0].mxu0
    %595 = vdwg.mxu0
    %v596 = vld [vmem:[#allocation2 + $0x10] sm:$0xf]
    %s597 = scalar_lea.vmem [#allocation7], 16
    %v598 = vld [vmem:[%s597] sm:$0xff]
    %v599 = vld [vmem:[%s597 + $0x8] sm:$0xff]
    %v601 = vunpack.c.l.b16 %v596
    %v602 = vpack.c.b16 %v601, %v601
    %vm603 = vsmask.f32 7424
    %v604 = vshrl.u32 %v512, 16
    %v606 = vshll.u32 %v512, 16
    %v608 = vrot.slane %v606, 1
    %v609 = vor.u32 %v604, %v608
    %v610 = vshll.u32 %v513, 16
    %v612 = vrot.slane %v610, 1
    %v613 = vsel %vm603, %v609, %v612
    %v614 = vshrl.u32 %v513, 16
    %v616 = vor.u32 %v614, %v612
    %v618 = vshll.u32 %v602, 16
    %v620 = vrot.slane %v618, 1
    %v621 = vsel %vm603, %v616, %v620
    %v622 = vshrl.u32 %v602, 16
    %v624 = vor.u32 %v622, %v620
    %v627 = vunpack.c.l.b16 %v598
    %v628 = vunpack.c.h.b16 %v598
    %v629 = vunpack.c.l.b16 %v599
    %v630 = vunpack.c.h.b16 %v599
    %v631 = vpack.c.b16 %v629, %v627
    %v632 = vpack.c.b16 %v630, %v628
    %v636 = vsel %vm525, %v613, 0
    %v639 = vsel %vm525, %v621, 0
    %v642 = vsel %vm525, %v624, 0
    %644 = vmatprep.subr.bf16.mxu0 %v632
    %645 = vmatpush1.bf16.msra.mxu0 %v631
    %646 = vmatprep.subr.bf16.mxu0 0
    %647 = vmatpush1.bf16.msra.mxu0 0
    %648 = vmatprep.subr.bf16.mxu0 0
    %649 = vmatpush1.bf16.msra.mxu0 0
    %650 = vmatprep.subr.bf16.mxu0 0
    %651 = vmatpush1.bf16.msra.mxu0 0
    %652 = vmatprep.subr.bf16.mxu0 0
    %653 = vmatpush1.bf16.msra.mxu0 0
    %654 = vmatprep.subr.bf16.mxu0 0
    %655 = vmatpush1.bf16.msra.mxu0 0
    %656 = vmatprep.subr.bf16.mxu0 0
    %657 = vmatpush1.bf16.msra.mxu0 0
    %658 = vmatprep.subr.bf16.mxu0 0
    %659 = vmatpush1.bf16.msra.mxu0 0
    %660 = vmatprep.subr.bf16.mxu0 0
    %661 = vmatpush1.bf16.msra.mxu0 0
    %662 = vmatprep.subr.bf16.mxu0 0
    %663 = vmatpush1.bf16.msra.mxu0 0
    %664 = vmatprep.subr.bf16.mxu0 0
    %665 = vmatpush1.bf16.msra.mxu0 0
    %666 = vmatprep.subr.bf16.mxu0 0
    %667 = vmatpush1.bf16.msra.mxu0 0
    %668 = vmatprep.subr.bf16.mxu0 0
    %669 = vmatpush1.bf16.msra.mxu0 0
    %670 = vmatprep.subr.bf16.mxu0 0
    %671 = vmatpush1.bf16.msra.mxu0 0
    %672 = vmatprep.subr.bf16.mxu0 0
    %673 = vmatpush1.bf16.msra.mxu0 0
    %674 = vmatprep.subr.bf16.mxu0 0
    %675 = vmatpush1.bf16.msra.mxu0 0
    %676 = vmatprep.mubr.bf16.mxu0 0
    %677 = vmatmul.mubr.bf16.gmra.mrb[0].mxu0 %v636
    %v678 = vpop.f32.mrb[0].mxu0
    %v679 = vadd.f32 0.0, %v678
    %v680 = vpop.f32.mrb[0].mxu0
    %v681 = vadd.f32 0.0, %v680
    %v682 = vpop.f32.mrb[0].mxu0
    %v683 = vadd.f32 0.0, %v682
    %v684 = vpop.f32.mrb[0].mxu0
    %v685 = vadd.f32 0.0, %v684
    %686 = vmatprep.mubr.bf16.mxu0 0
    %687 = vmatmul.mubr.bf16.gmra.mrb[0].mxu0 %v639
    %v688 = vpop.f32.mrb[0].mxu0
    %v689 = vadd.f32 0.0, %v688
    %v690 = vpop.f32.mrb[0].mxu0
    %v691 = vadd.f32 0.0, %v690
    %v692 = vpop.f32.mrb[0].mxu0
    %v693 = vadd.f32 0.0, %v692
    %v694 = vpop.f32.mrb[0].mxu0
    %v695 = vadd.f32 0.0, %v694
    %696 = vmatprep.mubr.bf16.mxu0 0
    %697 = vmatmul.mubr.bf16.gmra.mrb[0].mxu0 %v642
    %v698 = vpop.f32.mrb[0].mxu0
    %v699 = vadd.f32 0.0, %v698
    %v700 = vpop.f32.mrb[0].mxu0
    %v701 = vadd.f32 0.0, %v700
    %v702 = vpop.f32.mrb[0].mxu0
    %v703 = vpop.f32.mrb[0].mxu0
    %704 = vdwg.mxu0
    %v705 = vadd.f32 %v570, %v679
    %v706 = vadd.f32 %v572, %v681
    %v707 = vadd.f32 %v574, %v683
    %v708 = vadd.f32 %v576, %v685
    %v709 = vadd.f32 %v580, %v689
    %v710 = vadd.f32 %v582, %v691
    %v711 = vadd.f32 %v584, %v693
    %v712 = vadd.f32 %v586, %v695
    %v713 = vadd.f32 %v590, %v699
    %v714 = vadd.f32 %v592, %v701
    %v715 = vld [vmem:[#allocation3 + $0x10] sm:$0xf]
    %s716 = scalar_lea.vmem %s4, 128
    %v717 = vld [vmem:[%s716] sm:$0xff]
    %v718 = vld [vmem:[%s716 + $0x8] sm:$0xff]
    %v719 = vld [vmem:[%s716 + $0x10] sm:$0xff]
    %v720 = vld [vmem:[%s716 + $0x18] sm:$0xff]
    %v721 = vld [vmem:[%s716 + $0x20] sm:$0xff]
    %v722 = vld [vmem:[%s716 + $0x28] sm:$0xff]
    %v723 = vld [vmem:[%s716 + $0x30] sm:$0xff]
    %v724 = vld [vmem:[%s716 + $0x38] sm:$0xff]
    %v725 = vld [vmem:[%s716 + $0x40] sm:$0xff]
    %v726 = vld [vmem:[%s716 + $0x48] sm:$0xff]
    %v727 = vld [vmem:[%s716 + $0x50] sm:$0xff]
    %v728 = vld [vmem:[%s716 + $0x58] sm:$0xff]
    %v729 = vld [vmem:[%s716 + $0x60] sm:$0xff]
    %v730 = vld [vmem:[%s716 + $0x68] sm:$0xff]
    %v731 = vld [vmem:[%s716 + $0x70] sm:$0xff]
    %v732 = vld [vmem:[%s716 + $0x78] sm:$0xff]
    %v734 = vunpack.c.l.b16 %v715
    %v735 = vpack.c.b16 %v734, %v734
    %v737 = vshrl.u32 %v355, 16
    %v739 = vshll.u32 %v355, 16
    %v741 = vrot.slane %v739, 1
    %v742 = vor.u32 %v737, %v741
    %v744 = vshll.u32 %v356, 16
    %v746 = vrot.slane %v744, 1
    %v747 = vsel %vm603, %v742, %v746
    %v748 = vshrl.u32 %v356, 16
    %v750 = vor.u32 %v748, %v746
    %v752 = vshll.u32 %v735, 16
    %v754 = vrot.slane %v752, 1
    %v755 = vsel %vm603, %v750, %v754
    %v756 = vshrl.u32 %v735, 16
    %v758 = vor.u32 %v756, %v754
    %v778 = vunpack.c.l.b16 %v717
    %v779 = vunpack.c.h.b16 %v717
    %v780 = vunpack.c.l.b16 %v718
    %v781 = vunpack.c.h.b16 %v718
    %v782 = vunpack.c.l.b16 %v719
    %v783 = vunpack.c.h.b16 %v719
    %v784 = vunpack.c.l.b16 %v720
    %v785 = vunpack.c.h.b16 %v720
    %v786 = vunpack.c.l.b16 %v721
    %v787 = vunpack.c.h.b16 %v721
    %v788 = vunpack.c.l.b16 %v722
    %v789 = vunpack.c.h.b16 %v722
    %v790 = vunpack.c.l.b16 %v723
    %v791 = vunpack.c.h.b16 %v723
    %v792 = vunpack.c.l.b16 %v724
    %v793 = vunpack.c.h.b16 %v724
    %v794 = vunpack.c.l.b16 %v725
    %v795 = vunpack.c.h.b16 %v725
    %v796 = vunpack.c.l.b16 %v726
    %v797 = vunpack.c.h.b16 %v726
    %v798 = vunpack.c.l.b16 %v727
    %v799 = vunpack.c.h.b16 %v727
    %v800 = vunpack.c.l.b16 %v728
    %v801 = vunpack.c.h.b16 %v728
    %v802 = vunpack.c.l.b16 %v729
    %v803 = vunpack.c.h.b16 %v729
    %v804 = vunpack.c.l.b16 %v730
    %v805 = vunpack.c.h.b16 %v730
    %v806 = vunpack.c.l.b16 %v731
    %v807 = vunpack.c.h.b16 %v731
    %v808 = vunpack.c.l.b16 %v732
    %v809 = vunpack.c.h.b16 %v732
    %v810 = vpack.c.b16 %v780, %v778
    %v811 = vpack.c.b16 %v781, %v779
    %v812 = vpack.c.b16 %v784, %v782
    %v813 = vpack.c.b16 %v785, %v783
    %v814 = vpack.c.b16 %v788, %v786
    %v815 = vpack.c.b16 %v789, %v787
    %v816 = vpack.c.b16 %v792, %v790
    %v817 = vpack.c.b16 %v793, %v791
    %v818 = vpack.c.b16 %v796, %v794
    %v819 = vpack.c.b16 %v797, %v795
    %v820 = vpack.c.b16 %v800, %v798
    %v821 = vpack.c.b16 %v801, %v799
    %v822 = vpack.c.b16 %v804, %v802
    %v823 = vpack.c.b16 %v805, %v803
    %v824 = vpack.c.b16 %v808, %v806
    %v825 = vpack.c.b16 %v809, %v807
    %842 = vmatprep.subr.bf16.mxu0 %v811
    %843 = vmatpush1.bf16.msra.mxu0 %v810
    %844 = vmatprep.subr.bf16.mxu0 %v813
    %845 = vmatpush1.bf16.msra.mxu0 %v812
    %846 = vmatprep.subr.bf16.mxu0 %v815
    %847 = vmatpush1.bf16.msra.mxu0 %v814
    %848 = vmatprep.subr.bf16.mxu0 %v817
    %849 = vmatpush1.bf16.msra.mxu0 %v816
    %850 = vmatprep.subr.bf16.mxu0 %v819
    %851 = vmatpush1.bf16.msra.mxu0 %v818
    %852 = vmatprep.subr.bf16.mxu0 %v821
    %853 = vmatpush1.bf16.msra.mxu0 %v820
    %854 = vmatprep.subr.bf16.mxu0 %v823
    %855 = vmatpush1.bf16.msra.mxu0 %v822
    %856 = vmatprep.subr.bf16.mxu0 %v825
    %857 = vmatpush1.bf16.msra.mxu0 %v824
    %858 = vmatprep.subr.bf16.mxu0 0
    %859 = vmatpush1.bf16.msra.mxu0 0
    %860 = vmatprep.subr.bf16.mxu0 0
    %861 = vmatpush1.bf16.msra.mxu0 0
    %862 = vmatprep.subr.bf16.mxu0 0
    %863 = vmatpush1.bf16.msra.mxu0 0
    %864 = vmatprep.subr.bf16.mxu0 0
    %865 = vmatpush1.bf16.msra.mxu0 0
    %866 = vmatprep.subr.bf16.mxu0 0
    %867 = vmatpush1.bf16.msra.mxu0 0
    %868 = vmatprep.subr.bf16.mxu0 0
    %869 = vmatpush1.bf16.msra.mxu0 0
    %870 = vmatprep.subr.bf16.mxu0 0
    %871 = vmatpush1.bf16.msra.mxu0 0
    %872 = vmatprep.subr.bf16.mxu0 0
    %873 = vmatpush1.bf16.msra.mxu0 0
    %874 = vmatprep.mubr.bf16.mxu0 0
    %875 = vmatmul.mubr.bf16.gmra.mrb[0].mxu0 %v747
    %v876 = vpop.f32.mrb[0].mxu0
    %v877 = vadd.f32 0.0, %v876
    %v878 = vpop.f32.mrb[0].mxu0
    %v879 = vadd.f32 0.0, %v878
    %v880 = vpop.f32.mrb[0].mxu0
    %v881 = vadd.f32 0.0, %v880
    %v882 = vpop.f32.mrb[0].mxu0
    %v883 = vadd.f32 0.0, %v882
    %884 = vmatprep.mubr.bf16.mxu0 0
    %885 = vmatmul.mubr.bf16.gmra.mrb[0].mxu0 %v755
    %v886 = vpop.f32.mrb[0].mxu0
    %v887 = vadd.f32 0.0, %v886
    %v888 = vpop.f32.mrb[0].mxu0
    %v889 = vadd.f32 0.0, %v888
    %v890 = vpop.f32.mrb[0].mxu0
    %v891 = vadd.f32 0.0, %v890
    %v892 = vpop.f32.mrb[0].mxu0
    %v893 = vadd.f32 0.0, %v892
    %894 = vmatprep.mubr.bf16.mxu0 0
    %895 = vmatmul.mubr.bf16.gmra.mrb[0].mxu0 %v758
    %v896 = vpop.f32.mrb[0].mxu0
    %v897 = vadd.f32 0.0, %v896
    %v898 = vpop.f32.mrb[0].mxu0
    %v899 = vadd.f32 0.0, %v898
    %v900 = vpop.f32.mrb[0].mxu0
    %v901 = vpop.f32.mrb[0].mxu0
    %902 = vdwg.mxu0
    %v903 = vadd.f32 %v705, %v877
    %v904 = vadd.f32 %v706, %v879
    %v905 = vadd.f32 %v707, %v881
    %v906 = vadd.f32 %v708, %v883
    %v907 = vadd.f32 %v709, %v887
    %v908 = vadd.f32 %v710, %v889
    %v909 = vadd.f32 %v711, %v891
    %v910 = vadd.f32 %v712, %v893
    %v911 = vadd.f32 %v713, %v897
    %v912 = vadd.f32 %v714, %v899
    %v913 = vld [vmem:[#allocation2] sm:$0xe]
    %s914 = scalar_lea.vmem [#allocation7], 32
    %v915 = vld [vmem:[%s914] sm:$0xff]
    %v916 = vld [vmem:[%s914 + $0x8] sm:$0xff]
    %v918 = vunpack.c.l.b16 %v913
    %v919 = vpack.c.b16 %v508, %v918
    %vm920 = vcmask 1046528
    %v921 = vrot.slane %v919, 1
    %v922 = vrot.slane %v513, 1
    %v923 = vsel %vm920, %v921, %v922
    %v924 = vrot.slane %v602, 1
    %v925 = vsel %vm920, %v922, %v924
    %v928 = vunpack.c.l.b16 %v915
    %v929 = vunpack.c.h.b16 %v915
    %v930 = vunpack.c.l.b16 %v916
    %v931 = vunpack.c.h.b16 %v916
    %v932 = vpack.c.b16 %v930, %v928
    %v933 = vpack.c.b16 %v931, %v929
    %v937 = vsel %vm525, %v923, 0
    %v940 = vsel %vm525, %v925, 0
    %v943 = vsel %vm525, %v924, 0
    %945 = vmatprep.subr.bf16.mxu0 %v933
    %946 = vmatpush1.bf16.msra.mxu0 %v932
    %947 = vmatprep.subr.bf16.mxu0 0
    %948 = vmatpush1.bf16.msra.mxu0 0
    %949 = vmatprep.subr.bf16.mxu0 0
    %950 = vmatpush1.bf16.msra.mxu0 0
    %951 = vmatprep.subr.bf16.mxu0 0
    %952 = vmatpush1.bf16.msra.mxu0 0
    %953 = vmatprep.subr.bf16.mxu0 0
    %954 = vmatpush1.bf16.msra.mxu0 0
    %955 = vmatprep.subr.bf16.mxu0 0
    %956 = vmatpush1.bf16.msra.mxu0 0
    %957 = vmatprep.subr.bf16.mxu0 0
    %958 = vmatpush1.bf16.msra.mxu0 0
    %959 = vmatprep.subr.bf16.mxu0 0
    %960 = vmatpush1.bf16.msra.mxu0 0
    %961 = vmatprep.subr.bf16.mxu0 0
    %962 = vmatpush1.bf16.msra.mxu0 0
    %963 = vmatprep.subr.bf16.mxu0 0
    %964 = vmatpush1.bf16.msra.mxu0 0
    %965 = vmatprep.subr.bf16.mxu0 0
    %966 = vmatpush1.bf16.msra.mxu0 0
    %967 = vmatprep.subr.bf16.mxu0 0
    %968 = vmatpush1.bf16.msra.mxu0 0
    %969 = vmatprep.subr.bf16.mxu0 0
    %970 = vmatpush1.bf16.msra.mxu0 0
    %971 = vmatprep.subr.bf16.mxu0 0
    %972 = vmatpush1.bf16.msra.mxu0 0
    %973 = vmatprep.subr.bf16.mxu0 0
    %974 = vmatpush1.bf16.msra.mxu0 0
    %975 = vmatprep.subr.bf16.mxu0 0
    %976 = vmatpush1.bf16.msra.mxu0 0
    %977 = vmatprep.mubr.bf16.mxu0 0
    %978 = vmatmul.mubr.bf16.gmra.mrb[0].mxu0 %v937
    %v979 = vpop.f32.mrb[0].mxu0
    %v980 = vadd.f32 0.0, %v979
    %v981 = vpop.f32.mrb[0].mxu0
    %v982 = vadd.f32 0.0, %v981
    %v983 = vpop.f32.mrb[0].mxu0
    %v984 = vadd.f32 0.0, %v983
    %v985 = vpop.f32.mrb[0].mxu0
    %v986 = vadd.f32 0.0, %v985
    %987 = vmatprep.mubr.bf16.mxu0 0
    %988 = vmatmul.mubr.bf16.gmra.mrb[0].mxu0 %v940
    %v989 = vpop.f32.mrb[0].mxu0
    %v990 = vadd.f32 0.0, %v989
    %v991 = vpop.f32.mrb[0].mxu0
    %v992 = vadd.f32 0.0, %v991
    %v993 = vpop.f32.mrb[0].mxu0
    %v994 = vadd.f32 0.0, %v993
    %v995 = vpop.f32.mrb[0].mxu0
    %v996 = vadd.f32 0.0, %v995
    %997 = vmatprep.mubr.bf16.mxu0 0
    %998 = vmatmul.mubr.bf16.gmra.mrb[0].mxu0 %v943
    %v999 = vpop.f32.mrb[0].mxu0
    %v1000 = vadd.f32 0.0, %v999
    %v1001 = vpop.f32.mrb[0].mxu0
    %v1002 = vadd.f32 0.0, %v1001
    %v1003 = vpop.f32.mrb[0].mxu0
    %v1004 = vpop.f32.mrb[0].mxu0
    %1005 = vdwg.mxu0
    %v1006 = vadd.f32 %v903, %v980
    %v1007 = vadd.f32 %v904, %v982
    %v1008 = vadd.f32 %v905, %v984
    %v1009 = vadd.f32 %v906, %v986
    %v1010 = vadd.f32 %v907, %v990
    %v1011 = vadd.f32 %v908, %v992
    %v1012 = vadd.f32 %v909, %v994
    %v1013 = vadd.f32 %v910, %v996
    %v1014 = vadd.f32 %v911, %v1000
    %v1015 = vadd.f32 %v912, %v1002
    %v1016 = vld [vmem:[#allocation3] sm:$0xe]
    %s1017 = scalar_lea.vmem %s4, 256
    %v1018 = vld [vmem:[%s1017] sm:$0xff]
    %v1019 = vld [vmem:[%s1017 + $0x8] sm:$0xff]
    %v1020 = vld [vmem:[%s1017 + $0x10] sm:$0xff]
    %v1021 = vld [vmem:[%s1017 + $0x18] sm:$0xff]
    %v1022 = vld [vmem:[%s1017 + $0x20] sm:$0xff]
    %v1023 = vld [vmem:[%s1017 + $0x28] sm:$0xff]
    %v1024 = vld [vmem:[%s1017 + $0x30] sm:$0xff]
    %v1025 = vld [vmem:[%s1017 + $0x38] sm:$0xff]
    %v1026 = vld [vmem:[%s1017 + $0x40] sm:$0xff]
    %v1027 = vld [vmem:[%s1017 + $0x48] sm:$0xff]
    %v1028 = vld [vmem:[%s1017 + $0x50] sm:$0xff]
    %v1029 = vld [vmem:[%s1017 + $0x58] sm:$0xff]
    %v1030 = vld [vmem:[%s1017 + $0x60] sm:$0xff]
    %v1031 = vld [vmem:[%s1017 + $0x68] sm:$0xff]
    %v1032 = vld [vmem:[%s1017 + $0x70] sm:$0xff]
    %v1033 = vld [vmem:[%s1017 + $0x78] sm:$0xff]
    %v1035 = vunpack.c.l.b16 %v1016
    %v1036 = vpack.c.b16 %v351, %v1035
    %v1037 = vrot.slane %v1036, 1
    %v1038 = vrot.slane %v356, 1
    %v1039 = vsel %vm920, %v1037, %v1038
    %v1040 = vrot.slane %v735, 1
    %v1041 = vsel %vm920, %v1038, %v1040
    %v1061 = vunpack.c.l.b16 %v1018
    %v1062 = vunpack.c.h.b16 %v1018
    %v1063 = vunpack.c.l.b16 %v1019
    %v1064 = vunpack.c.h.b16 %v1019
    %v1065 = vunpack.c.l.b16 %v1020
    %v1066 = vunpack.c.h.b16 %v1020
    %v1067 = vunpack.c.l.b16 %v1021
    %v1068 = vunpack.c.h.b16 %v1021
    %v1069 = vunpack.c.l.b16 %v1022
    %v1070 = vunpack.c.h.b16 %v1022
    %v1071 = vunpack.c.l.b16 %v1023
    %v1072 = vunpack.c.h.b16 %v1023
    %v1073 = vunpack.c.l.b16 %v1024
    %v1074 = vunpack.c.h.b16 %v1024
    %v1075 = vunpack.c.l.b16 %v1025
    %v1076 = vunpack.c.h.b16 %v1025
    %v1077 = vunpack.c.l.b16 %v1026
    %v1078 = vunpack.c.h.b16 %v1026
    %v1079 = vunpack.c.l.b16 %v1027
    %v1080 = vunpack.c.h.b16 %v1027
    %v1081 = vunpack.c.l.b16 %v1028
    %v1082 = vunpack.c.h.b16 %v1028
    %v1083 = vunpack.c.l.b16 %v1029
    %v1084 = vunpack.c.h.b16 %v1029
    %v1085 = vunpack.c.l.b16 %v1030
    %v1086 = vunpack.c.h.b16 %v1030
    %v1087 = vunpack.c.l.b16 %v1031
    %v1088 = vunpack.c.h.b16 %v1031
    %v1089 = vunpack.c.l.b16 %v1032
    %v1090 = vunpack.c.h.b16 %v1032
    %v1091 = vunpack.c.l.b16 %v1033
    %v1092 = vunpack.c.h.b16 %v1033
    %v1093 = vpack.c.b16 %v1063, %v1061
    %v1094 = vpack.c.b16 %v1064, %v1062
    %v1095 = vpack.c.b16 %v1067, %v1065
    %v1096 = vpack.c.b16 %v1068, %v1066
    %v1097 = vpack.c.b16 %v1071, %v1069
    %v1098 = vpack.c.b16 %v1072, %v1070
    %v1099 = vpack.c.b16 %v1075, %v1073
    %v1100 = vpack.c.b16 %v1076, %v1074
    %v1101 = vpack.c.b16 %v1079, %v1077
    %v1102 = vpack.c.b16 %v1080, %v1078
    %v1103 = vpack.c.b16 %v1083, %v1081
    %v1104 = vpack.c.b16 %v1084, %v1082
    %v1105 = vpack.c.b16 %v1087, %v1085
    %v1106 = vpack.c.b16 %v1088, %v1086
    %v1107 = vpack.c.b16 %v1091, %v1089
    %v1108 = vpack.c.b16 %v1092, %v1090
    %1125 = vmatprep.subr.bf16.mxu0 %v1094
    %1126 = vmatpush1.bf16.msra.mxu0 %v1093
    %1127 = vmatprep.subr.bf16.mxu0 %v1096
    %1128 = vmatpush1.bf16.msra.mxu0 %v1095
    %1129 = vmatprep.subr.bf16.mxu0 %v1098
    %1130 = vmatpush1.bf16.msra.mxu0 %v1097
    %1131 = vmatprep.subr.bf16.mxu0 %v1100
    %1132 = vmatpush1.bf16.msra.mxu0 %v1099
    %1133 = vmatprep.subr.bf16.mxu0 %v1102
    %1134 = vmatpush1.bf16.msra.mxu0 %v1101
    %1135 = vmatprep.subr.bf16.mxu0 %v1104
    %1136 = vmatpush1.bf16.msra.mxu0 %v1103
    %1137 = vmatprep.subr.bf16.mxu0 %v1106
    %1138 = vmatpush1.bf16.msra.mxu0 %v1105
    %1139 = vmatprep.subr.bf16.mxu0 %v1108
    %1140 = vmatpush1.bf16.msra.mxu0 %v1107
    %1141 = vmatprep.subr.bf16.mxu0 0
    %1142 = vmatpush1.bf16.msra.mxu0 0
    %1143 = vmatprep.subr.bf16.mxu0 0
    %1144 = vmatpush1.bf16.msra.mxu0 0
    %1145 = vmatprep.subr.bf16.mxu0 0
    %1146 = vmatpush1.bf16.msra.mxu0 0
    %1147 = vmatprep.subr.bf16.mxu0 0
    %1148 = vmatpush1.bf16.msra.mxu0 0
    %1149 = vmatprep.subr.bf16.mxu0 0
    %1150 = vmatpush1.bf16.msra.mxu0 0
    %1151 = vmatprep.subr.bf16.mxu0 0
    %1152 = vmatpush1.bf16.msra.mxu0 0
    %1153 = vmatprep.subr.bf16.mxu0 0
    %1154 = vmatpush1.bf16.msra.mxu0 0
    %1155 = vmatprep.subr.bf16.mxu0 0
    %1156 = vmatpush1.bf16.msra.mxu0 0
    %1157 = vmatprep.mubr.bf16.mxu0 0
    %1158 = vmatmul.mubr.bf16.gmra.mrb[0].mxu0 %v1039
    %v1159 = vpop.f32.mrb[0].mxu0
    %v1160 = vadd.f32 0.0, %v1159
    %v1161 = vpop.f32.mrb[0].mxu0
    %v1162 = vadd.f32 0.0, %v1161
    %v1163 = vpop.f32.mrb[0].mxu0
    %v1164 = vadd.f32 0.0, %v1163
    %v1165 = vpop.f32.mrb[0].mxu0
    %v1166 = vadd.f32 0.0, %v1165
    %1167 = vmatprep.mubr.bf16.mxu0 0
    %1168 = vmatmul.mubr.bf16.gmra.mrb[0].mxu0 %v1041
    %v1169 = vpop.f32.mrb[0].mxu0
    %v1170 = vadd.f32 0.0, %v1169
    %v1171 = vpop.f32.mrb[0].mxu0
    %v1172 = vadd.f32 0.0, %v1171
    %v1173 = vpop.f32.mrb[0].mxu0
    %v1174 = vadd.f32 0.0, %v1173
    %v1175 = vpop.f32.mrb[0].mxu0
    %v1176 = vadd.f32 0.0, %v1175
    %1177 = vmatprep.mubr.bf16.mxu0 0
    %1178 = vmatmul.mubr.bf16.gmra.mrb[0].mxu0 %v1040
    %v1179 = vpop.f32.mrb[0].mxu0
    %v1180 = vadd.f32 0.0, %v1179
    %v1181 = vpop.f32.mrb[0].mxu0
    %v1182 = vadd.f32 0.0, %v1181
    %v1183 = vpop.f32.mrb[0].mxu0
    %v1184 = vpop.f32.mrb[0].mxu0
    %1185 = vdwg.mxu0
    %v1186 = vadd.f32 %v1006, %v1160
    %v1187 = vadd.f32 %v1007, %v1162
    %v1188 = vadd.f32 %v1008, %v1164
    %v1189 = vadd.f32 %v1009, %v1166
    %v1190 = vadd.f32 %v1010, %v1170
    %v1191 = vadd.f32 %v1011, %v1172
    %v1192 = vadd.f32 %v1012, %v1174
    %v1193 = vadd.f32 %v1013, %v1176
    %v1194 = vadd.f32 %v1014, %v1180
    %v1195 = vadd.f32 %v1015, %v1182
    %v1196 = vld [vmem:[#allocation2] sm:$0xe]
    %v1197 = vld [vmem:[#allocation2 + $0x4] sm:$0xf]
    %v1198 = vld [vmem:[#allocation2 + $0x8] sm:$0xf]
    %v1199 = vld [vmem:[#allocation2 + $0xc] sm:$0xf]
    %v1200 = vld [vmem:[#allocation2 + $0x10] sm:$0xf]
    %v1201 = vld [vmem:[#allocation2 + $0x14] sm:$0x1]
    %s1202 = scalar_lea.vmem [#allocation7], 48
    %v1203 = vld [vmem:[%s1202] sm:$0xff]
    %v1204 = vld [vmem:[%s1202 + $0x8] sm:$0xff]
    %v1211 = vunpack.c.l.b16 %v1196
    %v1212 = vunpack.c.l.b16 %v1197
    %v1213 = vunpack.c.l.b16 %v1198
    %v1214 = vunpack.c.l.b16 %v1199
    %v1215 = vunpack.c.l.b16 %v1200
    %v1216 = vunpack.c.l.b16 %v1201
    %v1217 = vpack.c.b16 %v1212, %v1211
    %v1218 = vpack.c.b16 %v1214, %v1213
    %v1219 = vpack.c.b16 %v1216, %v1215
    %vm1220 = vsmask.f32 6400
    %v1222 = vshrl.u32 %v1217, 16
    %v1224 = vrot.slane %v1222, 1
    %v1225 = vshll.u32 %v1217, 16
    %v1227 = vrot.slane %v1225, 2
    %v1228 = vor.u32 %v1224, %v1227
    %v1230 = vshrl.u32 %v1218, 16
    %v1232 = vrot.slane %v1230, 1
    %v1233 = vshll.u32 %v1218, 16
    %v1235 = vrot.slane %v1233, 2
    %v1236 = vor.u32 %v1232, %v1235
    %v1237 = vsel %vm1220, %v1228, %v1236
    %v1239 = vshrl.u32 %v1219, 16
    %v1241 = vrot.slane %v1239, 1
    %v1242 = vshll.u32 %v1219, 16
    %v1244 = vrot.slane %v1242, 2
    %v1245 = vor.u32 %v1241, %v1244
    %v1246 = vsel %vm1220, %v1236, %v1245
    %v1249 = vunpack.c.l.b16 %v1203
    %v1250 = vunpack.c.h.b16 %v1203
    %v1251 = vunpack.c.l.b16 %v1204
    %v1252 = vunpack.c.h.b16 %v1204
    %v1253 = vpack.c.b16 %v1251, %v1249
    %v1254 = vpack.c.b16 %v1252, %v1250
    %v1258 = vsel %vm525, %v1237, 0
    %v1261 = vsel %vm525, %v1246, 0
    %v1264 = vsel %vm525, %v1245, 0
    %1266 = vmatprep.subr.bf16.mxu0 %v1254
    %1267 = vmatpush1.bf16.msra.mxu0 %v1253
    %1268 = vmatprep.subr.bf16.mxu0 0
    %1269 = vmatpush1.bf16.msra.mxu0 0
    %1270 = vmatprep.subr.bf16.mxu0 0
    %1271 = vmatpush1.bf16.msra.mxu0 0
    %1272 = vmatprep.subr.bf16.mxu0 0
    %1273 = vmatpush1.bf16.msra.mxu0 0
    %1274 = vmatprep.subr.bf16.mxu0 0
    %1275 = vmatpush1.bf16.msra.mxu0 0
    %1276 = vmatprep.subr.bf16.mxu0 0
    %1277 = vmatpush1.bf16.msra.mxu0 0
    %1278 = vmatprep.subr.bf16.mxu0 0
    %1279 = vmatpush1.bf16.msra.mxu0 0
    %1280 = vmatprep.subr.bf16.mxu0 0
    %1281 = vmatpush1.bf16.msra.mxu0 0
    %1282 = vmatprep.subr.bf16.mxu0 0
    %1283 = vmatpush1.bf16.msra.mxu0 0
    %1284 = vmatprep.subr.bf16.mxu0 0
    %1285 = vmatpush1.bf16.msra.mxu0 0
    %1286 = vmatprep.subr.bf16.mxu0 0
    %1287 = vmatpush1.bf16.msra.mxu0 0
    %1288 = vmatprep.subr.bf16.mxu0 0
    %1289 = vmatpush1.bf16.msra.mxu0 0
    %1290 = vmatprep.subr.bf16.mxu0 0
    %1291 = vmatpush1.bf16.msra.mxu0 0
    %1292 = vmatprep.subr.bf16.mxu0 0
    %1293 = vmatpush1.bf16.msra.mxu0 0
    %1294 = vmatprep.subr.bf16.mxu0 0
    %1295 = vmatpush1.bf16.msra.mxu0 0
    %1296 = vmatprep.subr.bf16.mxu0 0
    %1297 = vmatpush1.bf16.msra.mxu0 0
    %1298 = vmatprep.mubr.bf16.mxu0 0
    %1299 = vmatmul.mubr.bf16.gmra.mrb[0].mxu0 %v1258
    %v1300 = vpop.f32.mrb[0].mxu0
    %v1301 = vadd.f32 0.0, %v1300
    %v1302 = vpop.f32.mrb[0].mxu0
    %v1303 = vadd.f32 0.0, %v1302
    %v1304 = vpop.f32.mrb[0].mxu0
    %v1305 = vadd.f32 0.0, %v1304
    %v1306 = vpop.f32.mrb[0].mxu0
    %v1307 = vadd.f32 0.0, %v1306
    %1308 = vmatprep.mubr.bf16.mxu0 0
    %1309 = vmatmul.mubr.bf16.gmra.mrb[0].mxu0 %v1261
    %v1310 = vpop.f32.mrb[0].mxu0
    %v1311 = vadd.f32 0.0, %v1310
    %v1312 = vpop.f32.mrb[0].mxu0
    %v1313 = vadd.f32 0.0, %v1312
    %v1314 = vpop.f32.mrb[0].mxu0
    %v1315 = vadd.f32 0.0, %v1314
    %v1316 = vpop.f32.mrb[0].mxu0
    %v1317 = vadd.f32 0.0, %v1316
    %1318 = vmatprep.mubr.bf16.mxu0 0
    %1319 = vmatmul.mubr.bf16.gmra.mrb[0].mxu0 %v1264
    %v1320 = vpop.f32.mrb[0].mxu0
    %v1321 = vadd.f32 0.0, %v1320
    %v1322 = vpop.f32.mrb[0].mxu0
    %v1323 = vadd.f32 0.0, %v1322
    %v1324 = vpop.f32.mrb[0].mxu0
    %v1325 = vpop.f32.mrb[0].mxu0
    %1326 = vdwg.mxu0
    %v1327 = vadd.f32 %v1186, %v1301
    %v1328 = vadd.f32 %v1187, %v1303
    %v1329 = vadd.f32 %v1188, %v1305
    %v1330 = vadd.f32 %v1189, %v1307
    %v1331 = vadd.f32 %v1190, %v1311
    %v1332 = vadd.f32 %v1191, %v1313
    %v1333 = vadd.f32 %v1192, %v1315
    %v1334 = vadd.f32 %v1193, %v1317
    %v1335 = vadd.f32 %v1194, %v1321
    %v1336 = vadd.f32 %v1195, %v1323
    %v1337 = vld [vmem:[#allocation3] sm:$0xe]
    %v1338 = vld [vmem:[#allocation3 + $0x4] sm:$0xf]
    %v1339 = vld [vmem:[#allocation3 + $0x8] sm:$0xf]
    %v1340 = vld [vmem:[#allocation3 + $0xc] sm:$0xf]
    %v1341 = vld [vmem:[#allocation3 + $0x10] sm:$0xf]
    %v1342 = vld [vmem:[#allocation3 + $0x14] sm:$0x1]
    %s1343 = scalar_lea.vmem %s4, 384
    %v1344 = vld [vmem:[%s1343] sm:$0xff]
    %v1345 = vld [vmem:[%s1343 + $0x8] sm:$0xff]
    %v1346 = vld [vmem:[%s1343 + $0x10] sm:$0xff]
    %v1347 = vld [vmem:[%s1343 + $0x18] sm:$0xff]
    %v1348 = vld [vmem:[%s1343 + $0x20] sm:$0xff]
    %v1349 = vld [vmem:[%s1343 + $0x28] sm:$0xff]
    %v1350 = vld [vmem:[%s1343 + $0x30] sm:$0xff]
    %v1351 = vld [vmem:[%s1343 + $0x38] sm:$0xff]
    %v1352 = vld [vmem:[%s1343 + $0x40] sm:$0xff]
    %v1353 = vld [vmem:[%s1343 + $0x48] sm:$0xff]
    %v1354 = vld [vmem:[%s1343 + $0x50] sm:$0xff]
    %v1355 = vld [vmem:[%s1343 + $0x58] sm:$0xff]
    %v1356 = vld [vmem:[%s1343 + $0x60] sm:$0xff]
    %v1357 = vld [vmem:[%s1343 + $0x68] sm:$0xff]
    %v1358 = vld [vmem:[%s1343 + $0x70] sm:$0xff]
    %v1359 = vld [vmem:[%s1343 + $0x78] sm:$0xff]
    %v1366 = vunpack.c.l.b16 %v1337
    %v1367 = vunpack.c.l.b16 %v1338
    %v1368 = vunpack.c.l.b16 %v1339
    %v1369 = vunpack.c.l.b16 %v1340
    %v1370 = vunpack.c.l.b16 %v1341
    %v1371 = vunpack.c.l.b16 %v1342
    %v1372 = vpack.c.b16 %v1367, %v1366
    %v1373 = vpack.c.b16 %v1369, %v1368
    %v1374 = vpack.c.b16 %v1371, %v1370
    %v1376 = vshrl.u32 %v1372, 16
    %v1378 = vrot.slane %v1376, 1
    %v1379 = vshll.u32 %v1372, 16
    %v1381 = vrot.slane %v1379, 2
    %v1382 = vor.u32 %v1378, %v1381
    %v1384 = vshrl.u32 %v1373, 16
    %v1386 = vrot.slane %v1384, 1
    %v1387 = vshll.u32 %v1373, 16
    %v1389 = vrot.slane %v1387, 2
    %v1390 = vor.u32 %v1386, %v1389
    %v1391 = vsel %vm1220, %v1382, %v1390
    %v1393 = vshrl.u32 %v1374, 16
    %v1395 = vrot.slane %v1393, 1
    %v1396 = vshll.u32 %v1374, 16
    %v1398 = vrot.slane %v1396, 2
    %v1399 = vor.u32 %v1395, %v1398
    %v1400 = vsel %vm1220, %v1390, %v1399
    %v1420 = vunpack.c.l.b16 %v1344
    %v1421 = vunpack.c.h.b16 %v1344
    %v1422 = vunpack.c.l.b16 %v1345
    %v1423 = vunpack.c.h.b16 %v1345
    %v1424 = vunpack.c.l.b16 %v1346
    %v1425 = vunpack.c.h.b16 %v1346
    %v1426 = vunpack.c.l.b16 %v1347
    %v1427 = vunpack.c.h.b16 %v1347
    %v1428 = vunpack.c.l.b16 %v1348
    %v1429 = vunpack.c.h.b16 %v1348
    %v1430 = vunpack.c.l.b16 %v1349
    %v1431 = vunpack.c.h.b16 %v1349
    %v1432 = vunpack.c.l.b16 %v1350
    %v1433 = vunpack.c.h.b16 %v1350
    %v1434 = vunpack.c.l.b16 %v1351
    %v1435 = vunpack.c.h.b16 %v1351
    %v1436 = vunpack.c.l.b16 %v1352
    %v1437 = vunpack.c.h.b16 %v1352
    %v1438 = vunpack.c.l.b16 %v1353
    %v1439 = vunpack.c.h.b16 %v1353
    %v1440 = vunpack.c.l.b16 %v1354
    %v1441 = vunpack.c.h.b16 %v1354
    %v1442 = vunpack.c.l.b16 %v1355
    %v1443 = vunpack.c.h.b16 %v1355
    %v1444 = vunpack.c.l.b16 %v1356
    %v1445 = vunpack.c.h.b16 %v1356
    %v1446 = vunpack.c.l.b16 %v1357
    %v1447 = vunpack.c.h.b16 %v1357
    %v1448 = vunpack.c.l.b16 %v1358
    %v1449 = vunpack.c.h.b16 %v1358
    %v1450 = vunpack.c.l.b16 %v1359
    %v1451 = vunpack.c.h.b16 %v1359
    %v1452 = vpack.c.b16 %v1422, %v1420
    %v1453 = vpack.c.b16 %v1423, %v1421
    %v1454 = vpack.c.b16 %v1426, %v1424
    %v1455 = vpack.c.b16 %v1427, %v1425
    %v1456 = vpack.c.b16 %v1430, %v1428
    %v1457 = vpack.c.b16 %v1431, %v1429
    %v1458 = vpack.c.b16 %v1434, %v1432
    %v1459 = vpack.c.b16 %v1435, %v1433
    %v1460 = vpack.c.b16 %v1438, %v1436
    %v1461 = vpack.c.b16 %v1439, %v1437
    %v1462 = vpack.c.b16 %v1442, %v1440
    %v1463 = vpack.c.b16 %v1443, %v1441
    %v1464 = vpack.c.b16 %v1446, %v1444
    %v1465 = vpack.c.b16 %v1447, %v1445
    %v1466 = vpack.c.b16 %v1450, %v1448
    %v1467 = vpack.c.b16 %v1451, %v1449
    %1484 = vmatprep.subr.bf16.mxu0 %v1453
    %1485 = vmatpush1.bf16.msra.mxu0 %v1452
    %1486 = vmatprep.subr.bf16.mxu0 %v1455
    %1487 = vmatpush1.bf16.msra.mxu0 %v1454
    %1488 = vmatprep.subr.bf16.mxu0 %v1457
    %1489 = vmatpush1.bf16.msra.mxu0 %v1456
    %1490 = vmatprep.subr.bf16.mxu0 %v1459
    %1491 = vmatpush1.bf16.msra.mxu0 %v1458
    %1492 = vmatprep.subr.bf16.mxu0 %v1461
    %1493 = vmatpush1.bf16.msra.mxu0 %v1460
    %1494 = vmatprep.subr.bf16.mxu0 %v1463
    %1495 = vmatpush1.bf16.msra.mxu0 %v1462
    %1496 = vmatprep.subr.bf16.mxu0 %v1465
    %1497 = vmatpush1.bf16.msra.mxu0 %v1464
    %1498 = vmatprep.subr.bf16.mxu0 %v1467
    %1499 = vmatpush1.bf16.msra.mxu0 %v1466
    %1500 = vmatprep.subr.bf16.mxu0 0
    %1501 = vmatpush1.bf16.msra.mxu0 0
    %1502 = vmatprep.subr.bf16.mxu0 0
    %1503 = vmatpush1.bf16.msra.mxu0 0
    %1504 = vmatprep.subr.bf16.mxu0 0
    %1505 = vmatpush1.bf16.msra.mxu0 0
    %1506 = vmatprep.subr.bf16.mxu0 0
    %1507 = vmatpush1.bf16.msra.mxu0 0
    %1508 = vmatprep.subr.bf16.mxu0 0
    %1509 = vmatpush1.bf16.msra.mxu0 0
    %1510 = vmatprep.subr.bf16.mxu0 0
    %1511 = vmatpush1.bf16.msra.mxu0 0
    %1512 = vmatprep.subr.bf16.mxu0 0
    %1513 = vmatpush1.bf16.msra.mxu0 0
    %1514 = vmatprep.subr.bf16.mxu0 0
    %1515 = vmatpush1.bf16.msra.mxu0 0
    %1516 = vmatprep.mubr.bf16.mxu0 0
    %1517 = vmatmul.mubr.bf16.gmra.mrb[0].mxu0 %v1391
    %v1518 = vpop.f32.mrb[0].mxu0
    %v1519 = vadd.f32 0.0, %v1518
    %v1520 = vpop.f32.mrb[0].mxu0
    %v1521 = vadd.f32 0.0, %v1520
    %v1522 = vpop.f32.mrb[0].mxu0
    %v1523 = vadd.f32 0.0, %v1522
    %v1524 = vpop.f32.mrb[0].mxu0
    %v1525 = vadd.f32 0.0, %v1524
    %1526 = vmatprep.mubr.bf16.mxu0 0
    %1527 = vmatmul.mubr.bf16.gmra.mrb[0].mxu0 %v1400
    %v1528 = vpop.f32.mrb[0].mxu0
    %v1529 = vadd.f32 0.0, %v1528
    %v1530 = vpop.f32.mrb[0].mxu0
    %v1531 = vadd.f32 0.0, %v1530
    %v1532 = vpop.f32.mrb[0].mxu0
    %v1533 = vadd.f32 0.0, %v1532
    %v1534 = vpop.f32.mrb[0].mxu0
    %v1535 = vadd.f32 0.0, %v1534
    %1536 = vmatprep.mubr.bf16.mxu0 0
    %1537 = vmatmul.mubr.bf16.gmra.mrb[0].mxu0 %v1399
    %v1538 = vpop.f32.mrb[0].mxu0
    %v1539 = vadd.f32 0.0, %v1538
    %v1540 = vpop.f32.mrb[0].mxu0
    %v1541 = vadd.f32 0.0, %v1540
    %v1542 = vpop.f32.mrb[0].mxu0
    %v1543 = vpop.f32.mrb[0].mxu0
    %1544 = vdwg.mxu0
    %v1545 = vadd.f32 %v1327, %v1519
    %v1546 = vadd.f32 %v1328, %v1521
    %v1547 = vadd.f32 %v1329, %v1523
    %v1548 = vadd.f32 %v1330, %v1525
    %v1549 = vadd.f32 %v1331, %v1529
    %v1550 = vadd.f32 %v1332, %v1531
    %v1551 = vadd.f32 %v1333, %v1533
    %v1552 = vadd.f32 %v1334, %v1535
    %v1553 = vadd.f32 %v1335, %v1539
    %v1554 = vadd.f32 %v1336, %v1541
    %v1555 = vld [vmem:[#allocation2] sm:$0xc]
    %s1556 = scalar_lea.vmem [#allocation7], 64
    %v1557 = vld [vmem:[%s1556] sm:$0xff]
    %v1558 = vld [vmem:[%s1556 + $0x8] sm:$0xff]
    %v1560 = vunpack.c.l.b16 %v1555
    %v1561 = vpack.c.b16 %v1212, %v1560
    %vm1562 = vcmask 1045504
    %v1563 = vrot.slane %v1561, 2
    %v1564 = vrot.slane %v1218, 2
    %v1565 = vsel %vm1562, %v1563, %v1564
    %v1566 = vrot.slane %v1219, 2
    %v1567 = vsel %vm1562, %v1564, %v1566
    %v1570 = vunpack.c.l.b16 %v1557
    %v1571 = vunpack.c.h.b16 %v1557
    %v1572 = vunpack.c.l.b16 %v1558
    %v1573 = vunpack.c.h.b16 %v1558
    %v1574 = vpack.c.b16 %v1572, %v1570
    %v1575 = vpack.c.b16 %v1573, %v1571
    %v1579 = vsel %vm525, %v1565, 0
    %v1582 = vsel %vm525, %v1567, 0
    %v1585 = vsel %vm525, %v1566, 0
    %1587 = vmatprep.subr.bf16.mxu0 %v1575
    %1588 = vmatpush1.bf16.msra.mxu0 %v1574
    %1589 = vmatprep.subr.bf16.mxu0 0
    %1590 = vmatpush1.bf16.msra.mxu0 0
    %1591 = vmatprep.subr.bf16.mxu0 0
    %1592 = vmatpush1.bf16.msra.mxu0 0
    %1593 = vmatprep.subr.bf16.mxu0 0
    %1594 = vmatpush1.bf16.msra.mxu0 0
    %1595 = vmatprep.subr.bf16.mxu0 0
    %1596 = vmatpush1.bf16.msra.mxu0 0
    %1597 = vmatprep.subr.bf16.mxu0 0
    %1598 = vmatpush1.bf16.msra.mxu0 0
    %1599 = vmatprep.subr.bf16.mxu0 0
    %1600 = vmatpush1.bf16.msra.mxu0 0
    %1601 = vmatprep.subr.bf16.mxu0 0
    %1602 = vmatpush1.bf16.msra.mxu0 0
    %1603 = vmatprep.subr.bf16.mxu0 0
    %1604 = vmatpush1.bf16.msra.mxu0 0
    %1605 = vmatprep.subr.bf16.mxu0 0
    %1606 = vmatpush1.bf16.msra.mxu0 0
    %1607 = vmatprep.subr.bf16.mxu0 0
    %1608 = vmatpush1.bf16.msra.mxu0 0
    %1609 = vmatprep.subr.bf16.mxu0 0
    %1610 = vmatpush1.bf16.msra.mxu0 0
    %1611 = vmatprep.subr.bf16.mxu0 0
    %1612 = vmatpush1.bf16.msra.mxu0 0
    %1613 = vmatprep.subr.bf16.mxu0 0
    %1614 = vmatpush1.bf16.msra.mxu0 0
    %1615 = vmatprep.subr.bf16.mxu0 0
    %1616 = vmatpush1.bf16.msra.mxu0 0
    %1617 = vmatprep.subr.bf16.mxu0 0
    %1618 = vmatpush1.bf16.msra.mxu0 0
    %1619 = vmatprep.mubr.bf16.mxu0 0
    %1620 = vmatmul.mubr.bf16.gmra.mrb[0].mxu0 %v1579
    %v1621 = vpop.f32.mrb[0].mxu0
    %v1622 = vadd.f32 0.0, %v1621
    %v1623 = vpop.f32.mrb[0].mxu0
    %v1624 = vadd.f32 0.0, %v1623
    %v1625 = vpop.f32.mrb[0].mxu0
    %v1626 = vadd.f32 0.0, %v1625
    %v1627 = vpop.f32.mrb[0].mxu0
    %v1628 = vadd.f32 0.0, %v1627
    %1629 = vmatprep.mubr.bf16.mxu0 0
    %1630 = vmatmul.mubr.bf16.gmra.mrb[0].mxu0 %v1582
    %v1631 = vpop.f32.mrb[0].mxu0
    %v1632 = vadd.f32 0.0, %v1631
    %v1633 = vpop.f32.mrb[0].mxu0
    %v1634 = vadd.f32 0.0, %v1633
    %v1635 = vpop.f32.mrb[0].mxu0
    %v1636 = vadd.f32 0.0, %v1635
    %v1637 = vpop.f32.mrb[0].mxu0
    %v1638 = vadd.f32 0.0, %v1637
    %1639 = vmatprep.mubr.bf16.mxu0 0
    %1640 = vmatmul.mubr.bf16.gmra.mrb[0].mxu0 %v1585
    %v1641 = vpop.f32.mrb[0].mxu0
    %v1642 = vadd.f32 0.0, %v1641
    %v1643 = vpop.f32.mrb[0].mxu0
    %v1644 = vadd.f32 0.0, %v1643
    %v1645 = vpop.f32.mrb[0].mxu0
    %v1646 = vpop.f32.mrb[0].mxu0
    %1647 = vdwg.mxu0
    %v1648 = vadd.f32 %v1545, %v1622
    %v1649 = vadd.f32 %v1546, %v1624
    %v1650 = vadd.f32 %v1547, %v1626
    %v1651 = vadd.f32 %v1548, %v1628
    %v1652 = vadd.f32 %v1549, %v1632
    %v1653 = vadd.f32 %v1550, %v1634
    %v1654 = vadd.f32 %v1551, %v1636
    %v1655 = vadd.f32 %v1552, %v1638
    %v1656 = vadd.f32 %v1553, %v1642
    %v1657 = vadd.f32 %v1554, %v1644
    %v1658 = vld [vmem:[#allocation3] sm:$0xc]
    %s1659 = scalar_lea.vmem %s4, 512
    %v1660 = vld [vmem:[%s1659] sm:$0xff]
    %v1661 = vld [vmem:[%s1659 + $0x8] sm:$0xff]
    %v1662 = vld [vmem:[%s1659 + $0x10] sm:$0xff]
    %v1663 = vld [vmem:[%s1659 + $0x18] sm:$0xff]
    %v1664 = vld [vmem:[%s1659 + $0x20] sm:$0xff]
    %v1665 = vld [vmem:[%s1659 + $0x28] sm:$0xff]
    %v1666 = vld [vmem:[%s1659 + $0x30] sm:$0xff]
    %v1667 = vld [vmem:[%s1659 + $0x38] sm:$0xff]
    %v1668 = vld [vmem:[%s1659 + $0x40] sm:$0xff]
    %v1669 = vld [vmem:[%s1659 + $0x48] sm:$0xff]
    %v1670 = vld [vmem:[%s1659 + $0x50] sm:$0xff]
    %v1671 = vld [vmem:[%s1659 + $0x58] sm:$0xff]
    %v1672 = vld [vmem:[%s1659 + $0x60] sm:$0xff]
    %v1673 = vld [vmem:[%s1659 + $0x68] sm:$0xff]
    %v1674 = vld [vmem:[%s1659 + $0x70] sm:$0xff]
    %v1675 = vld [vmem:[%s1659 + $0x78] sm:$0xff]
    %v1677 = vunpack.c.l.b16 %v1658
    %v1678 = vpack.c.b16 %v1367, %v1677
    %v1679 = vrot.slane %v1678, 2
    %v1680 = vrot.slane %v1373, 2
    %v1681 = vsel %vm1562, %v1679, %v1680
    %v1682 = vrot.slane %v1374, 2
    %v1683 = vsel %vm1562, %v1680, %v1682
    %v1703 = vunpack.c.l.b16 %v1660
    %v1704 = vunpack.c.h.b16 %v1660
    %v1705 = vunpack.c.l.b16 %v1661
    %v1706 = vunpack.c.h.b16 %v1661
    %v1707 = vunpack.c.l.b16 %v1662
    %v1708 = vunpack.c.h.b16 %v1662
    %v1709 = vunpack.c.l.b16 %v1663
    %v1710 = vunpack.c.h.b16 %v1663
    %v1711 = vunpack.c.l.b16 %v1664
    %v1712 = vunpack.c.h.b16 %v1664
    %v1713 = vunpack.c.l.b16 %v1665
    %v1714 = vunpack.c.h.b16 %v1665
    %v1715 = vunpack.c.l.b16 %v1666
    %v1716 = vunpack.c.h.b16 %v1666
    %v1717 = vunpack.c.l.b16 %v1667
    %v1718 = vunpack.c.h.b16 %v1667
    %v1719 = vunpack.c.l.b16 %v1668
    %v1720 = vunpack.c.h.b16 %v1668
    %v1721 = vunpack.c.l.b16 %v1669
    %v1722 = vunpack.c.h.b16 %v1669
    %v1723 = vunpack.c.l.b16 %v1670
    %v1724 = vunpack.c.h.b16 %v1670
    %v1725 = vunpack.c.l.b16 %v1671
    %v1726 = vunpack.c.h.b16 %v1671
    %v1727 = vunpack.c.l.b16 %v1672
    %v1728 = vunpack.c.h.b16 %v1672
    %v1729 = vunpack.c.l.b16 %v1673
    %v1730 = vunpack.c.h.b16 %v1673
    %v1731 = vunpack.c.l.b16 %v1674
    %v1732 = vunpack.c.h.b16 %v1674
    %v1733 = vunpack.c.l.b16 %v1675
    %v1734 = vunpack.c.h.b16 %v1675
    %v1735 = vpack.c.b16 %v1705, %v1703
    %v1736 = vpack.c.b16 %v1706, %v1704
    %v1737 = vpack.c.b16 %v1709, %v1707
    %v1738 = vpack.c.b16 %v1710, %v1708
    %v1739 = vpack.c.b16 %v1713, %v1711
    %v1740 = vpack.c.b16 %v1714, %v1712
    %v1741 = vpack.c.b16 %v1717, %v1715
    %v1742 = vpack.c.b16 %v1718, %v1716
    %v1743 = vpack.c.b16 %v1721, %v1719
    %v1744 = vpack.c.b16 %v1722, %v1720
    %v1745 = vpack.c.b16 %v1725, %v1723
    %v1746 = vpack.c.b16 %v1726, %v1724
    %v1747 = vpack.c.b16 %v1729, %v1727
    %v1748 = vpack.c.b16 %v1730, %v1728
    %v1749 = vpack.c.b16 %v1733, %v1731
    %v1750 = vpack.c.b16 %v1734, %v1732
    %1767 = vmatprep.subr.bf16.mxu0 %v1736
    %1768 = vmatpush1.bf16.msra.mxu0 %v1735
    %1769 = vmatprep.subr.bf16.mxu0 %v1738
    %1770 = vmatpush1.bf16.msra.mxu0 %v1737
    %1771 = vmatprep.subr.bf16.mxu0 %v1740
    %1772 = vmatpush1.bf16.msra.mxu0 %v1739
    %1773 = vmatprep.subr.bf16.mxu0 %v1742
    %1774 = vmatpush1.bf16.msra.mxu0 %v1741
    %1775 = vmatprep.subr.bf16.mxu0 %v1744
    %1776 = vmatpush1.bf16.msra.mxu0 %v1743
    %1777 = vmatprep.subr.bf16.mxu0 %v1746
    %1778 = vmatpush1.bf16.msra.mxu0 %v1745
    %1779 = vmatprep.subr.bf16.mxu0 %v1748
    %1780 = vmatpush1.bf16.msra.mxu0 %v1747
    %1781 = vmatprep.subr.bf16.mxu0 %v1750
    %1782 = vmatpush1.bf16.msra.mxu0 %v1749
    %1783 = vmatprep.subr.bf16.mxu0 0
    %1784 = vmatpush1.bf16.msra.mxu0 0
    %1785 = vmatprep.subr.bf16.mxu0 0
    %1786 = vmatpush1.bf16.msra.mxu0 0
    %1787 = vmatprep.subr.bf16.mxu0 0
    %1788 = vmatpush1.bf16.msra.mxu0 0
    %1789 = vmatprep.subr.bf16.mxu0 0
    %1790 = vmatpush1.bf16.msra.mxu0 0
    %1791 = vmatprep.subr.bf16.mxu0 0
    %1792 = vmatpush1.bf16.msra.mxu0 0
    %1793 = vmatprep.subr.bf16.mxu0 0
    %1794 = vmatpush1.bf16.msra.mxu0 0
    %1795 = vmatprep.subr.bf16.mxu0 0
    %1796 = vmatpush1.bf16.msra.mxu0 0
    %1797 = vmatprep.subr.bf16.mxu0 0
    %1798 = vmatpush1.bf16.msra.mxu0 0
    %1799 = vmatprep.mubr.bf16.mxu0 0
    %1800 = vmatmul.mubr.bf16.gmra.mrb[0].mxu0 %v1681
    %v1801 = vpop.f32.mrb[0].mxu0
    %v1802 = vadd.f32 0.0, %v1801
    %v1803 = vpop.f32.mrb[0].mxu0
    %v1804 = vadd.f32 0.0, %v1803
    %v1805 = vpop.f32.mrb[0].mxu0
    %v1806 = vadd.f32 0.0, %v1805
    %v1807 = vpop.f32.mrb[0].mxu0
    %v1808 = vadd.f32 0.0, %v1807
    %1809 = vmatprep.mubr.bf16.mxu0 0
    %1810 = vmatmul.mubr.bf16.gmra.mrb[0].mxu0 %v1683
    %v1811 = vpop.f32.mrb[0].mxu0
    %v1812 = vadd.f32 0.0, %v1811
    %v1813 = vpop.f32.mrb[0].mxu0
    %v1814 = vadd.f32 0.0, %v1813
    %v1815 = vpop.f32.mrb[0].mxu0
    %v1816 = vadd.f32 0.0, %v1815
    %v1817 = vpop.f32.mrb[0].mxu0
    %v1818 = vadd.f32 0.0, %v1817
    %1819 = vmatprep.mubr.bf16.mxu0 0
    %1820 = vmatmul.mubr.bf16.gmra.mrb[0].mxu0 %v1682
    %v1821 = vpop.f32.mrb[0].mxu0
    %v1822 = vadd.f32 0.0, %v1821
    %v1823 = vpop.f32.mrb[0].mxu0
    %v1824 = vadd.f32 0.0, %v1823
    %v1825 = vpop.f32.mrb[0].mxu0
    %v1826 = vpop.f32.mrb[0].mxu0
    %1827 = vdwg.mxu0
    %v1828 = vadd.f32 %v1648, %v1802
    %v1829 = vadd.f32 %v1649, %v1804
    %v1830 = vadd.f32 %v1650, %v1806
    %v1831 = vadd.f32 %v1651, %v1808
    %v1832 = vadd.f32 %v1652, %v1812
    %v1833 = vadd.f32 %v1653, %v1814
    %v1834 = vadd.f32 %v1654, %v1816
    %v1835 = vadd.f32 %v1655, %v1818
    %v1836 = vadd.f32 %v1656, %v1822
    %v1837 = vadd.f32 %v1657, %v1824
    %v1838 = vld [vmem:[#allocation2 + $0x14] sm:$0x3]
    %s1839 = scalar_lea.vmem [#allocation7], 80
    %v1840 = vld [vmem:[%s1839] sm:$0xff]
    %v1841 = vld [vmem:[%s1839 + $0x8] sm:$0xff]
    %v1843 = vunpack.c.l.b16 %v1838
    %v1844 = vpack.c.b16 %v1843, %v1215
    %v1846 = vshrl.u32 %v1561, 16
    %v1848 = vrot.slane %v1846, 2
    %v1849 = vshll.u32 %v1561, 16
    %v1851 = vrot.slane %v1849, 3
    %v1852 = vor.u32 %v1848, %v1851
    %v1853 = vrot.slane %v1230, 2
    %v1854 = vrot.slane %v1233, 3
    %v1855 = vor.u32 %v1853, %v1854
    %v1856 = vsel %vm129, %v1852, %v1855
    %v1858 = vshrl.u32 %v1844, 16
    %v1860 = vrot.slane %v1858, 2
    %v1861 = vshll.u32 %v1844, 16
    %v1863 = vrot.slane %v1861, 3
    %v1864 = vor.u32 %v1860, %v1863
    %v1865 = vsel %vm129, %v1855, %v1864
    %v1868 = vunpack.c.l.b16 %v1840
    %v1869 = vunpack.c.h.b16 %v1840
    %v1870 = vunpack.c.l.b16 %v1841
    %v1871 = vunpack.c.h.b16 %v1841
    %v1872 = vpack.c.b16 %v1870, %v1868
    %v1873 = vpack.c.b16 %v1871, %v1869
    %v1877 = vsel %vm525, %v1856, 0
    %v1880 = vsel %vm525, %v1865, 0
    %v1883 = vsel %vm525, %v1864, 0
    %1885 = vmatprep.subr.bf16.mxu0 %v1873
    %1886 = vmatpush1.bf16.msra.mxu0 %v1872
    %1887 = vmatprep.subr.bf16.mxu0 0
    %1888 = vmatpush1.bf16.msra.mxu0 0
    %1889 = vmatprep.subr.bf16.mxu0 0
    %1890 = vmatpush1.bf16.msra.mxu0 0
    %1891 = vmatprep.subr.bf16.mxu0 0
    %1892 = vmatpush1.bf16.msra.mxu0 0
    %1893 = vmatprep.subr.bf16.mxu0 0
    %1894 = vmatpush1.bf16.msra.mxu0 0
    %1895 = vmatprep.subr.bf16.mxu0 0
    %1896 = vmatpush1.bf16.msra.mxu0 0
    %1897 = vmatprep.subr.bf16.mxu0 0
    %1898 = vmatpush1.bf16.msra.mxu0 0
    %1899 = vmatprep.subr.bf16.mxu0 0
    %1900 = vmatpush1.bf16.msra.mxu0 0
    %1901 = vmatprep.subr.bf16.mxu0 0
    %1902 = vmatpush1.bf16.msra.mxu0 0
    %1903 = vmatprep.subr.bf16.mxu0 0
    %1904 = vmatpush1.bf16.msra.mxu0 0
    %1905 = vmatprep.subr.bf16.mxu0 0
    %1906 = vmatpush1.bf16.msra.mxu0 0
    %1907 = vmatprep.subr.bf16.mxu0 0
    %1908 = vmatpush1.bf16.msra.mxu0 0
    %1909 = vmatprep.subr.bf16.mxu0 0
    %1910 = vmatpush1.bf16.msra.mxu0 0
    %1911 = vmatprep.subr.bf16.mxu0 0
    %1912 = vmatpush1.bf16.msra.mxu0 0
    %1913 = vmatprep.subr.bf16.mxu0 0
    %1914 = vmatpush1.bf16.msra.mxu0 0
    %1915 = vmatprep.subr.bf16.mxu0 0
    %1916 = vmatpush1.bf16.msra.mxu0 0
    %1917 = vmatprep.mubr.bf16.mxu0 0
    %1918 = vmatmul.mubr.bf16.gmra.mrb[0].mxu0 %v1877
    %v1919 = vpop.f32.mrb[0].mxu0
    %v1920 = vadd.f32 0.0, %v1919
    %v1921 = vpop.f32.mrb[0].mxu0
    %v1922 = vadd.f32 0.0, %v1921
    %v1923 = vpop.f32.mrb[0].mxu0
    %v1924 = vadd.f32 0.0, %v1923
    %v1925 = vpop.f32.mrb[0].mxu0
    %v1926 = vadd.f32 0.0, %v1925
    %1927 = vmatprep.mubr.bf16.mxu0 0
    %1928 = vmatmul.mubr.bf16.gmra.mrb[0].mxu0 %v1880
    %v1929 = vpop.f32.mrb[0].mxu0
    %v1930 = vadd.f32 0.0, %v1929
    %v1931 = vpop.f32.mrb[0].mxu0
    %v1932 = vadd.f32 0.0, %v1931
    %v1933 = vpop.f32.mrb[0].mxu0
    %v1934 = vadd.f32 0.0, %v1933
    %v1935 = vpop.f32.mrb[0].mxu0
    %v1936 = vadd.f32 0.0, %v1935
    %1937 = vmatprep.mubr.bf16.mxu0 0
    %1938 = vmatmul.mubr.bf16.gmra.mrb[0].mxu0 %v1883
    %v1939 = vpop.f32.mrb[0].mxu0
    %v1940 = vadd.f32 0.0, %v1939
    %v1941 = vpop.f32.mrb[0].mxu0
    %v1942 = vadd.f32 0.0, %v1941
    %v1943 = vpop.f32.mrb[0].mxu0
    %v1944 = vpop.f32.mrb[0].mxu0
    %1945 = vdwg.mxu0
    %v1946 = vadd.f32 %v1828, %v1920
    %v1947 = vadd.f32 %v1829, %v1922
    %v1948 = vadd.f32 %v1830, %v1924
    %v1949 = vadd.f32 %v1831, %v1926
    %v1950 = vadd.f32 %v1832, %v1930
    %v1951 = vadd.f32 %v1833, %v1932
    %v1952 = vadd.f32 %v1834, %v1934
    %v1953 = vadd.f32 %v1835, %v1936
    %v1954 = vadd.f32 %v1836, %v1940
    %v1955 = vadd.f32 %v1837, %v1942
    %v1956 = vld [vmem:[#allocation3 + $0x14] sm:$0x3]
    %s1957 = scalar_lea.vmem %s4, 640
    %v1958 = vld [vmem:[%s1957] sm:$0xff]
    %v1959 = vld [vmem:[%s1957 + $0x8] sm:$0xff]
    %v1960 = vld [vmem:[%s1957 + $0x10] sm:$0xff]
    %v1961 = vld [vmem:[%s1957 + $0x18] sm:$0xff]
    %v1962 = vld [vmem:[%s1957 + $0x20] sm:$0xff]
    %v1963 = vld [vmem:[%s1957 + $0x28] sm:$0xff]
    %v1964 = vld [vmem:[%s1957 + $0x30] sm:$0xff]
    %v1965 = vld [vmem:[%s1957 + $0x38] sm:$0xff]
    %v1966 = vld [vmem:[%s1957 + $0x40] sm:$0xff]
    %v1967 = vld [vmem:[%s1957 + $0x48] sm:$0xff]
    %v1968 = vld [vmem:[%s1957 + $0x50] sm:$0xff]
    %v1969 = vld [vmem:[%s1957 + $0x58] sm:$0xff]
    %v1970 = vld [vmem:[%s1957 + $0x60] sm:$0xff]
    %v1971 = vld [vmem:[%s1957 + $0x68] sm:$0xff]
    %v1972 = vld [vmem:[%s1957 + $0x70] sm:$0xff]
    %v1973 = vld [vmem:[%s1957 + $0x78] sm:$0xff]
    %v1975 = vunpack.c.l.b16 %v1956
    %v1976 = vpack.c.b16 %v1975, %v1370
    %v1978 = vshrl.u32 %v1678, 16
    %v1980 = vrot.slane %v1978, 2
    %v1981 = vshll.u32 %v1678, 16
    %v1983 = vrot.slane %v1981, 3
    %v1984 = vor.u32 %v1980, %v1983
    %v1985 = vrot.slane %v1384, 2
    %v1986 = vrot.slane %v1387, 3
    %v1987 = vor.u32 %v1985, %v1986
    %v1988 = vsel %vm129, %v1984, %v1987
    %v1990 = vshrl.u32 %v1976, 16
    %v1992 = vrot.slane %v1990, 2
    %v1993 = vshll.u32 %v1976, 16
    %v1995 = vrot.slane %v1993, 3
    %v1996 = vor.u32 %v1992, %v1995
    %v1997 = vsel %vm129, %v1987, %v1996
    %v2017 = vunpack.c.l.b16 %v1958
    %v2018 = vunpack.c.h.b16 %v1958
    %v2019 = vunpack.c.l.b16 %v1959
    %v2020 = vunpack.c.h.b16 %v1959
    %v2021 = vunpack.c.l.b16 %v1960
    %v2022 = vunpack.c.h.b16 %v1960
    %v2023 = vunpack.c.l.b16 %v1961
    %v2024 = vunpack.c.h.b16 %v1961
    %v2025 = vunpack.c.l.b16 %v1962
    %v2026 = vunpack.c.h.b16 %v1962
    %v2027 = vunpack.c.l.b16 %v1963
    %v2028 = vunpack.c.h.b16 %v1963
    %v2029 = vunpack.c.l.b16 %v1964
    %v2030 = vunpack.c.h.b16 %v1964
    %v2031 = vunpack.c.l.b16 %v1965
    %v2032 = vunpack.c.h.b16 %v1965
    %v2033 = vunpack.c.l.b16 %v1966
    %v2034 = vunpack.c.h.b16 %v1966
    %v2035 = vunpack.c.l.b16 %v1967
    %v2036 = vunpack.c.h.b16 %v1967
    %v2037 = vunpack.c.l.b16 %v1968
    %v2038 = vunpack.c.h.b16 %v1968
    %v2039 = vunpack.c.l.b16 %v1969
    %v2040 = vunpack.c.h.b16 %v1969
    %v2041 = vunpack.c.l.b16 %v1970
    %v2042 = vunpack.c.h.b16 %v1970
    %v2043 = vunpack.c.l.b16 %v1971
    %v2044 = vunpack.c.h.b16 %v1971
    %v2045 = vunpack.c.l.b16 %v1972
    %v2046 = vunpack.c.h.b16 %v1972
    %v2047 = vunpack.c.l.b16 %v1973
    %v2048 = vunpack.c.h.b16 %v1973
    %v2049 = vpack.c.b16 %v2019, %v2017
    %v2050 = vpack.c.b16 %v2020, %v2018
    %v2051 = vpack.c.b16 %v2023, %v2021
    %v2052 = vpack.c.b16 %v2024, %v2022
    %v2053 = vpack.c.b16 %v2027, %v2025
    %v2054 = vpack.c.b16 %v2028, %v2026
    %v2055 = vpack.c.b16 %v2031, %v2029
    %v2056 = vpack.c.b16 %v2032, %v2030
    %v2057 = vpack.c.b16 %v2035, %v2033
    %v2058 = vpack.c.b16 %v2036, %v2034
    %v2059 = vpack.c.b16 %v2039, %v2037
    %v2060 = vpack.c.b16 %v2040, %v2038
    %v2061 = vpack.c.b16 %v2043, %v2041
    %v2062 = vpack.c.b16 %v2044, %v2042
    %v2063 = vpack.c.b16 %v2047, %v2045
    %v2064 = vpack.c.b16 %v2048, %v2046
    %2081 = vmatprep.subr.bf16.mxu0 %v2050
    %2082 = vmatpush1.bf16.msra.mxu0 %v2049
    %2083 = vmatprep.subr.bf16.mxu0 %v2052
    %2084 = vmatpush1.bf16.msra.mxu0 %v2051
    %2085 = vmatprep.subr.bf16.mxu0 %v2054
    %2086 = vmatpush1.bf16.msra.mxu0 %v2053
    %2087 = vmatprep.subr.bf16.mxu0 %v2056
    %2088 = vmatpush1.bf16.msra.mxu0 %v2055
    %2089 = vmatprep.subr.bf16.mxu0 %v2058
    %2090 = vmatpush1.bf16.msra.mxu0 %v2057
    %2091 = vmatprep.subr.bf16.mxu0 %v2060
    %2092 = vmatpush1.bf16.msra.mxu0 %v2059
    %2093 = vmatprep.subr.bf16.mxu0 %v2062
    %2094 = vmatpush1.bf16.msra.mxu0 %v2061
    %2095 = vmatprep.subr.bf16.mxu0 %v2064
    %2096 = vmatpush1.bf16.msra.mxu0 %v2063
    %2097 = vmatprep.subr.bf16.mxu0 0
    %2098 = vmatpush1.bf16.msra.mxu0 0
    %2099 = vmatprep.subr.bf16.mxu0 0
    %2100 = vmatpush1.bf16.msra.mxu0 0
    %2101 = vmatprep.subr.bf16.mxu0 0
    %2102 = vmatpush1.bf16.msra.mxu0 0
    %2103 = vmatprep.subr.bf16.mxu0 0
    %2104 = vmatpush1.bf16.msra.mxu0 0
    %2105 = vmatprep.subr.bf16.mxu0 0
    %2106 = vmatpush1.bf16.msra.mxu0 0
    %2107 = vmatprep.subr.bf16.mxu0 0
    %2108 = vmatpush1.bf16.msra.mxu0 0
    %2109 = vmatprep.subr.bf16.mxu0 0
    %2110 = vmatpush1.bf16.msra.mxu0 0
    %2111 = vmatprep.subr.bf16.mxu0 0
    %2112 = vmatpush1.bf16.msra.mxu0 0
    %2113 = vmatprep.mubr.bf16.mxu0 0
    %2114 = vmatmul.mubr.bf16.gmra.mrb[0].mxu0 %v1988
    %v2115 = vpop.f32.mrb[0].mxu0
    %v2116 = vadd.f32 0.0, %v2115
    %v2117 = vpop.f32.mrb[0].mxu0
    %v2118 = vadd.f32 0.0, %v2117
    %v2119 = vpop.f32.mrb[0].mxu0
    %v2120 = vadd.f32 0.0, %v2119
    %v2121 = vpop.f32.mrb[0].mxu0
    %v2122 = vadd.f32 0.0, %v2121
    %2123 = vmatprep.mubr.bf16.mxu0 0
    %2124 = vmatmul.mubr.bf16.gmra.mrb[0].mxu0 %v1997
    %v2125 = vpop.f32.mrb[0].mxu0
    %v2126 = vadd.f32 0.0, %v2125
    %v2127 = vpop.f32.mrb[0].mxu0
    %v2128 = vadd.f32 0.0, %v2127
    %v2129 = vpop.f32.mrb[0].mxu0
    %v2130 = vadd.f32 0.0, %v2129
    %v2131 = vpop.f32.mrb[0].mxu0
    %v2132 = vadd.f32 0.0, %v2131
    %2133 = vmatprep.mubr.bf16.mxu0 0
    %2134 = vmatmul.mubr.bf16.gmra.mrb[0].mxu0 %v1996
    %v2135 = vpop.f32.mrb[0].mxu0
    %v2136 = vadd.f32 0.0, %v2135
    %v2137 = vpop.f32.mrb[0].mxu0
    %v2138 = vadd.f32 0.0, %v2137
    %v2139 = vpop.f32.mrb[0].mxu0
    %v2140 = vpop.f32.mrb[0].mxu0
    %2141 = vdwg.mxu0
    %v2142 = vadd.f32 %v1946, %v2116
    %v2143 = vadd.f32 %v1947, %v2118
    %v2144 = vadd.f32 %v1948, %v2120
    %v2145 = vadd.f32 %v1949, %v2122
    %v2146 = vadd.f32 %v1950, %v2126
    %v2147 = vadd.f32 %v1951, %v2128
    %v2148 = vadd.f32 %v1952, %v2130
    %v2149 = vadd.f32 %v1953, %v2132
    %v2150 = vadd.f32 %v1954, %v2136
    %v2151 = vadd.f32 %v1955, %v2138
    %v2152 = vld [vmem:[#allocation2] sm:$0x8]
    %s2153 = scalar_lea.vmem [#allocation7], 96
    %v2154 = vld [vmem:[%s2153] sm:$0xff]
    %v2155 = vld [vmem:[%s2153 + $0x8] sm:$0xff]
    %v2157 = vunpack.c.l.b16 %v2152
    %v2158 = vpack.c.b16 %v1212, %v2157
    %vm2159 = vcmask 1044480
    %v2160 = vrot.slane %v2158, 3
    %v2161 = vrot.slane %v1218, 3
    %v2162 = vsel %vm2159, %v2160, %v2161
    %v2163 = vrot.slane %v1844, 3
    %v2164 = vsel %vm2159, %v2161, %v2163
    %v2167 = vunpack.c.l.b16 %v2154
    %v2168 = vunpack.c.h.b16 %v2154
    %v2169 = vunpack.c.l.b16 %v2155
    %v2170 = vunpack.c.h.b16 %v2155
    %v2171 = vpack.c.b16 %v2169, %v2167
    %v2172 = vpack.c.b16 %v2170, %v2168
    %v2176 = vsel %vm525, %v2162, 0
    %v2179 = vsel %vm525, %v2164, 0
    %v2182 = vsel %vm525, %v2163, 0
    %2184 = vmatprep.subr.bf16.mxu0 %v2172
    %2185 = vmatpush1.bf16.msra.mxu0 %v2171
    %2186 = vmatprep.subr.bf16.mxu0 0
    %2187 = vmatpush1.bf16.msra.mxu0 0
    %2188 = vmatprep.subr.bf16.mxu0 0
    %2189 = vmatpush1.bf16.msra.mxu0 0
    %2190 = vmatprep.subr.bf16.mxu0 0
    %2191 = vmatpush1.bf16.msra.mxu0 0
    %2192 = vmatprep.subr.bf16.mxu0 0
    %2193 = vmatpush1.bf16.msra.mxu0 0
    %2194 = vmatprep.subr.bf16.mxu0 0
    %2195 = vmatpush1.bf16.msra.mxu0 0
    %2196 = vmatprep.subr.bf16.mxu0 0
    %2197 = vmatpush1.bf16.msra.mxu0 0
    %2198 = vmatprep.subr.bf16.mxu0 0
    %2199 = vmatpush1.bf16.msra.mxu0 0
    %2200 = vmatprep.subr.bf16.mxu0 0
    %2201 = vmatpush1.bf16.msra.mxu0 0
    %2202 = vmatprep.subr.bf16.mxu0 0
    %2203 = vmatpush1.bf16.msra.mxu0 0
    %2204 = vmatprep.subr.bf16.mxu0 0
    %2205 = vmatpush1.bf16.msra.mxu0 0
    %2206 = vmatprep.subr.bf16.mxu0 0
    %2207 = vmatpush1.bf16.msra.mxu0 0
    %2208 = vmatprep.subr.bf16.mxu0 0
    %2209 = vmatpush1.bf16.msra.mxu0 0
    %2210 = vmatprep.subr.bf16.mxu0 0
    %2211 = vmatpush1.bf16.msra.mxu0 0
    %2212 = vmatprep.subr.bf16.mxu0 0
    %2213 = vmatpush1.bf16.msra.mxu0 0
    %2214 = vmatprep.subr.bf16.mxu0 0
    %2215 = vmatpush1.bf16.msra.mxu0 0
    %2216 = vmatprep.mubr.bf16.mxu0 0
    %2217 = vmatmul.mubr.bf16.gmra.mrb[0].mxu0 %v2176
    %v2218 = vpop.f32.mrb[0].mxu0
    %v2219 = vadd.f32 0.0, %v2218
    %v2220 = vpop.f32.mrb[0].mxu0
    %v2221 = vadd.f32 0.0, %v2220
    %v2222 = vpop.f32.mrb[0].mxu0
    %v2223 = vadd.f32 0.0, %v2222
    %v2224 = vpop.f32.mrb[0].mxu0
    %v2225 = vadd.f32 0.0, %v2224
    %2226 = vmatprep.mubr.bf16.mxu0 0
    %2227 = vmatmul.mubr.bf16.gmra.mrb[0].mxu0 %v2179
    %v2228 = vpop.f32.mrb[0].mxu0
    %v2229 = vadd.f32 0.0, %v2228
    %v2230 = vpop.f32.mrb[0].mxu0
    %v2231 = vadd.f32 0.0, %v2230
    %v2232 = vpop.f32.mrb[0].mxu0
    %v2233 = vadd.f32 0.0, %v2232
    %v2234 = vpop.f32.mrb[0].mxu0
    %v2235 = vadd.f32 0.0, %v2234
    %2236 = vmatprep.mubr.bf16.mxu0 0
    %2237 = vmatmul.mubr.bf16.gmra.mrb[0].mxu0 %v2182
    %v2238 = vpop.f32.mrb[0].mxu0
    %v2239 = vadd.f32 0.0, %v2238
    %v2240 = vpop.f32.mrb[0].mxu0
    %v2241 = vadd.f32 0.0, %v2240
    %v2242 = vpop.f32.mrb[0].mxu0
    %v2243 = vpop.f32.mrb[0].mxu0
    %2244 = vdwg.mxu0
    %v2245 = vadd.f32 %v2142, %v2219
    %v2246 = vadd.f32 %v2143, %v2221
    %v2247 = vadd.f32 %v2144, %v2223
    %v2248 = vadd.f32 %v2145, %v2225
    %v2249 = vadd.f32 %v2146, %v2229
    %v2250 = vadd.f32 %v2147, %v2231
    %v2251 = vadd.f32 %v2148, %v2233
    %v2252 = vadd.f32 %v2149, %v2235
    %v2253 = vadd.f32 %v2150, %v2239
    %v2254 = vadd.f32 %v2151, %v2241
    %v2255 = vld [vmem:[#allocation3] sm:$0x8]
    %s2256 = scalar_lea.vmem %s4, 768
    %v2257 = vld [vmem:[%s2256] sm:$0xff]
    %v2258 = vld [vmem:[%s2256 + $0x8] sm:$0xff]
    %v2259 = vld [vmem:[%s2256 + $0x10] sm:$0xff]
    %v2260 = vld [vmem:[%s2256 + $0x18] sm:$0xff]
    %v2261 = vld [vmem:[%s2256 + $0x20] sm:$0xff]
    %v2262 = vld [vmem:[%s2256 + $0x28] sm:$0xff]
    %v2263 = vld [vmem:[%s2256 + $0x30] sm:$0xff]
    %v2264 = vld [vmem:[%s2256 + $0x38] sm:$0xff]
    %v2265 = vld [vmem:[%s2256 + $0x40] sm:$0xff]
    %v2266 = vld [vmem:[%s2256 + $0x48] sm:$0xff]
    %v2267 = vld [vmem:[%s2256 + $0x50] sm:$0xff]
    %v2268 = vld [vmem:[%s2256 + $0x58] sm:$0xff]
    %v2269 = vld [vmem:[%s2256 + $0x60] sm:$0xff]
    %v2270 = vld [vmem:[%s2256 + $0x68] sm:$0xff]
    %v2271 = vld [vmem:[%s2256 + $0x70] sm:$0xff]
    %v2272 = vld [vmem:[%s2256 + $0x78] sm:$0xff]
    %v2274 = vunpack.c.l.b16 %v2255
    %v2275 = vpack.c.b16 %v1367, %v2274
    %v2276 = vrot.slane %v2275, 3
    %v2277 = vrot.slane %v1373, 3
    %v2278 = vsel %vm2159, %v2276, %v2277
    %v2279 = vrot.slane %v1976, 3
    %v2280 = vsel %vm2159, %v2277, %v2279
    %v2300 = vunpack.c.l.b16 %v2257
    %v2301 = vunpack.c.h.b16 %v2257
    %v2302 = vunpack.c.l.b16 %v2258
    %v2303 = vunpack.c.h.b16 %v2258
    %v2304 = vunpack.c.l.b16 %v2259
    %v2305 = vunpack.c.h.b16 %v2259
    %v2306 = vunpack.c.l.b16 %v2260
    %v2307 = vunpack.c.h.b16 %v2260
    %v2308 = vunpack.c.l.b16 %v2261
    %v2309 = vunpack.c.h.b16 %v2261
    %v2310 = vunpack.c.l.b16 %v2262
    %v2311 = vunpack.c.h.b16 %v2262
    %v2312 = vunpack.c.l.b16 %v2263
    %v2313 = vunpack.c.h.b16 %v2263
    %v2314 = vunpack.c.l.b16 %v2264
    %v2315 = vunpack.c.h.b16 %v2264
    %v2316 = vunpack.c.l.b16 %v2265
    %v2317 = vunpack.c.h.b16 %v2265
    %v2318 = vunpack.c.l.b16 %v2266
    %v2319 = vunpack.c.h.b16 %v2266
    %v2320 = vunpack.c.l.b16 %v2267
    %v2321 = vunpack.c.h.b16 %v2267
    %v2322 = vunpack.c.l.b16 %v2268
    %v2323 = vunpack.c.h.b16 %v2268
    %v2324 = vunpack.c.l.b16 %v2269
    %v2325 = vunpack.c.h.b16 %v2269
    %v2326 = vunpack.c.l.b16 %v2270
    %v2327 = vunpack.c.h.b16 %v2270
    %v2328 = vunpack.c.l.b16 %v2271
    %v2329 = vunpack.c.h.b16 %v2271
    %v2330 = vunpack.c.l.b16 %v2272
    %v2331 = vunpack.c.h.b16 %v2272
    %v2332 = vpack.c.b16 %v2302, %v2300
    %v2333 = vpack.c.b16 %v2303, %v2301
    %v2334 = vpack.c.b16 %v2306, %v2304
    %v2335 = vpack.c.b16 %v2307, %v2305
    %v2336 = vpack.c.b16 %v2310, %v2308
    %v2337 = vpack.c.b16 %v2311, %v2309
    %v2338 = vpack.c.b16 %v2314, %v2312
    %v2339 = vpack.c.b16 %v2315, %v2313
    %v2340 = vpack.c.b16 %v2318, %v2316
    %v2341 = vpack.c.b16 %v2319, %v2317
    %v2342 = vpack.c.b16 %v2322, %v2320
    %v2343 = vpack.c.b16 %v2323, %v2321
    %v2344 = vpack.c.b16 %v2326, %v2324
    %v2345 = vpack.c.b16 %v2327, %v2325
    %v2346 = vpack.c.b16 %v2330, %v2328
    %v2347 = vpack.c.b16 %v2331, %v2329
    %2364 = vmatprep.subr.bf16.mxu0 %v2333
    %2365 = vmatpush1.bf16.msra.mxu0 %v2332
    %2366 = vmatprep.subr.bf16.mxu0 %v2335
    %2367 = vmatpush1.bf16.msra.mxu0 %v2334
    %2368 = vmatprep.subr.bf16.mxu0 %v2337
    %2369 = vmatpush1.bf16.msra.mxu0 %v2336
    %2370 = vmatprep.subr.bf16.mxu0 %v2339
    %2371 = vmatpush1.bf16.msra.mxu0 %v2338
    %2372 = vmatprep.subr.bf16.mxu0 %v2341
    %2373 = vmatpush1.bf16.msra.mxu0 %v2340
    %2374 = vmatprep.subr.bf16.mxu0 %v2343
    %2375 = vmatpush1.bf16.msra.mxu0 %v2342
    %2376 = vmatprep.subr.bf16.mxu0 %v2345
    %2377 = vmatpush1.bf16.msra.mxu0 %v2344
    %2378 = vmatprep.subr.bf16.mxu0 %v2347
    %2379 = vmatpush1.bf16.msra.mxu0 %v2346
    %2380 = vmatprep.subr.bf16.mxu0 0
    %2381 = vmatpush1.bf16.msra.mxu0 0
    %2382 = vmatprep.subr.bf16.mxu0 0
    %2383 = vmatpush1.bf16.msra.mxu0 0
    %2384 = vmatprep.subr.bf16.mxu0 0
    %2385 = vmatpush1.bf16.msra.mxu0 0
    %2386 = vmatprep.subr.bf16.mxu0 0
    %2387 = vmatpush1.bf16.msra.mxu0 0
    %2388 = vmatprep.subr.bf16.mxu0 0
    %2389 = vmatpush1.bf16.msra.mxu0 0
    %2390 = vmatprep.subr.bf16.mxu0 0
    %2391 = vmatpush1.bf16.msra.mxu0 0
    %2392 = vmatprep.subr.bf16.mxu0 0
    %2393 = vmatpush1.bf16.msra.mxu0 0
    %2394 = vmatprep.subr.bf16.mxu0 0
    %2395 = vmatpush1.bf16.msra.mxu0 0
    %2396 = vmatprep.mubr.bf16.mxu0 0
    %2397 = vmatmul.mubr.bf16.gmra.mrb[0].mxu0 %v2278
    %v2398 = vpop.f32.mrb[0].mxu0
    %v2399 = vadd.f32 0.0, %v2398
    %v2400 = vpop.f32.mrb[0].mxu0
    %v2401 = vadd.f32 0.0, %v2400
    %v2402 = vpop.f32.mrb[0].mxu0
    %v2403 = vadd.f32 0.0, %v2402
    %v2404 = vpop.f32.mrb[0].mxu0
    %v2405 = vadd.f32 0.0, %v2404
    %2406 = vmatprep.mubr.bf16.mxu0 0
    %2407 = vmatmul.mubr.bf16.gmra.mrb[0].mxu0 %v2280
    %v2408 = vpop.f32.mrb[0].mxu0
    %v2409 = vadd.f32 0.0, %v2408
    %v2410 = vpop.f32.mrb[0].mxu0
    %v2411 = vadd.f32 0.0, %v2410
    %v2412 = vpop.f32.mrb[0].mxu0
    %v2413 = vadd.f32 0.0, %v2412
    %v2414 = vpop.f32.mrb[0].mxu0
    %v2415 = vadd.f32 0.0, %v2414
    %2416 = vmatprep.mubr.bf16.mxu0 0
    %2417 = vmatmul.mubr.bf16.gmra.mrb[0].mxu0 %v2279
    %v2418 = vpop.f32.mrb[0].mxu0
    %v2419 = vadd.f32 0.0, %v2418
    %v2420 = vpop.f32.mrb[0].mxu0
    %v2421 = vadd.f32 0.0, %v2420
    %v2422 = vpop.f32.mrb[0].mxu0
    %v2423 = vpop.f32.mrb[0].mxu0
    %2424 = vdwg.mxu0
    %v2425 = vadd.f32 %v2245, %v2399
    %v2426 = vadd.f32 %v2246, %v2401
    %v2427 = vadd.f32 %v2247, %v2403
    %v2428 = vadd.f32 %v2248, %v2405
    %v2429 = vadd.f32 %v2249, %v2409
    %v2430 = vadd.f32 %v2250, %v2411
    %v2431 = vadd.f32 %v2251, %v2413
    %v2432 = vadd.f32 %v2252, %v2415
    %v2433 = vadd.f32 %v2253, %v2419
    %v2434 = vadd.f32 %v2254, %v2421
    %v2435 = vld [vmem:[%s5] sm:$0x3]
    %v2437 = vlaneseq
    %v2438 = vshrl.u32 %v2437, 7
    %v2439 = vsub.s32 0, %v2438
    %v2440 = vrot.slane %v2435, %v2439
    %v2441 = vlaneseq
    %v2442 = vshrl.u32 %v2441, 7
    %v2443 = vsub.s32 1, %v2442
    %v2444 = vrot.slane %v2435, %v2443
    %v2447 = vadd.f32 %v2425, %v2440
    %v2448 = vadd.f32 %v2426, %v2444
    %v2449 = vadd.f32 %v2427, %v2440
    %v2450 = vadd.f32 %v2428, %v2444
    %v2451 = vadd.f32 %v2429, %v2440
    %v2452 = vadd.f32 %v2430, %v2444
    %v2453 = vadd.f32 %v2431, %v2440
    %v2454 = vadd.f32 %v2432, %v2444
    %v2455 = vadd.f32 %v2433, %v2440
    %v2456 = vadd.f32 %v2434, %v2444
    %vm2457 = vcmp.ge.f32.partialorder %v2447, 0.0
    %vm2458 = vcmp.ge.f32.partialorder %v2448, 0.0
    %vm2459 = vcmp.ge.f32.partialorder %v2449, 0.0
    %vm2460 = vcmp.ge.f32.partialorder %v2450, 0.0
    %vm2461 = vcmp.ge.f32.partialorder %v2451, 0.0
    %vm2462 = vcmp.ge.f32.partialorder %v2452, 0.0
    %vm2463 = vcmp.ge.f32.partialorder %v2453, 0.0
    %vm2464 = vcmp.ge.f32.partialorder %v2454, 0.0
    %vm2465 = vcmp.ge.f32.partialorder %v2455, 0.0
    %vm2466 = vcmp.ge.f32.partialorder %v2456, 0.0
    %v2467 = vmul.f32 %v2447, 0.2
    %v2468 = vmul.f32 %v2448, 0.2
    %v2469 = vmul.f32 %v2449, 0.2
    %v2470 = vmul.f32 %v2450, 0.2
    %v2471 = vmul.f32 %v2451, 0.2
    %v2472 = vmul.f32 %v2452, 0.2
    %v2473 = vmul.f32 %v2453, 0.2
    %v2474 = vmul.f32 %v2454, 0.2
    %v2475 = vmul.f32 %v2455, 0.2
    %v2476 = vmul.f32 %v2456, 0.2
    %v2477 = vsel %vm2457, %v2447, %v2467
    %v2478 = vsel %vm2458, %v2448, %v2468
    %v2479 = vsel %vm2459, %v2449, %v2469
    %v2480 = vsel %vm2460, %v2450, %v2470
    %v2481 = vsel %vm2461, %v2451, %v2471
    %v2482 = vsel %vm2462, %v2452, %v2472
    %v2483 = vsel %vm2463, %v2453, %v2473
    %v2484 = vsel %vm2464, %v2454, %v2474
    %v2485 = vsel %vm2465, %v2455, %v2475
    %v2486 = vsel %vm2466, %v2456, %v2476
    %v2487 = vpack.c.bf16 %v2479, %v2477
    %v2488 = vpack.c.bf16 %v2480, %v2478
    %v2491 = vunpack.c.l.b16 %v2487
    %v2492 = vunpack.c.l.b16 %v2488
    %v2493 = vunpack.c.h.b16 %v2487
    %v2494 = vunpack.c.h.b16 %v2488
    %v2495 = vpack.c.b16 %v2492, %v2491
    %v2496 = vpack.c.b16 %v2494, %v2493
    %v2498 = vshrl.u32 %v2495, 16
    %v2500 = vrot.slane %v2498, 6
    %v2501 = vshll.u32 %v2495, 16
    %v2503 = vrot.slane %v2501, 7
    %v2504 = vor.u32 %v2500, %v2503
    %v2505 = vrot.slane %v2504, 4
    %v2507 = vshrl.u32 %v2496, 16
    %v2509 = vrot.slane %v2507, 6
    %v2510 = vshll.u32 %v2496, 16
    %v2512 = vrot.slane %v2510, 7
    %v2513 = vor.u32 %v2509, %v2512
    %v2514 = vsel %vm185, %v2505, %v2513
    %v2515 = vrot.slane %v2513, 4
    %vm2519 = vcmask 1047557
    %vm2520 = vmand %vm2519, %vm136
    %vm2521 = vmor %vm2520, %vm243
    %v2522 = vld [vmem:[#allocation4] sm:$0xee]
    %v2523 = vsel %vm2521, %v2504, %v2522
    %2524 = vst [vmem:[#allocation4] sm:$0xee] %v2523
    %2525 = vst [vmem:[#allocation4 + $0x8] sm:$0xff] %v2514
    %v2526 = vld [vmem:[#allocation4 + $0x10] sm:$0x33]
    %v2527 = vsel %vm131, %v2515, %v2526
    %2528 = vst [vmem:[#allocation4 + $0x10] sm:$0x33] %v2527
    %v2529 = vpack.c.bf16 %v2483, %v2481
    %v2530 = vpack.c.bf16 %v2484, %v2482
    %v2531 = vpack.c.bf16 %v2485, %v2485
    %v2532 = vpack.c.bf16 %v2486, %v2486
    %v2537 = vunpack.c.l.b16 %v2529
    %v2538 = vunpack.c.l.b16 %v2530
    %v2539 = vunpack.c.h.b16 %v2529
    %v2540 = vunpack.c.h.b16 %v2530
    %v2541 = vunpack.c.l.b16 %v2531
    %v2542 = vunpack.c.l.b16 %v2532
    %v2543 = vpack.c.b16 %v2538, %v2537
    %v2544 = vpack.c.b16 %v2540, %v2539
    %v2545 = vpack.c.b16 %v2542, %v2541
    %v2547 = vshrl.u32 %v2543, 16
    %v2549 = vrot.slane %v2547, 6
    %v2550 = vshll.u32 %v2543, 16
    %v2552 = vrot.slane %v2550, 7
    %v2553 = vor.u32 %v2549, %v2552
    %v2554 = vrot.slane %v2553, 4
    %v2556 = vshrl.u32 %v2544, 16
    %v2558 = vrot.slane %v2556, 6
    %v2559 = vshll.u32 %v2544, 16
    %v2561 = vrot.slane %v2559, 7
    %v2562 = vor.u32 %v2558, %v2561
    %v2563 = vsel %vm185, %v2554, %v2562
    %v2564 = vrot.slane %v2562, 4
    %v2566 = vshrl.u32 %v2545, 16
    %v2568 = vrot.slane %v2566, 6
    %v2569 = vshll.u32 %v2545, 16
    %v2571 = vrot.slane %v2569, 7
    %v2572 = vor.u32 %v2568, %v2571
    %v2573 = vsel %vm185, %v2564, %v2572
    %v2574 = vrot.slane %v2568, 4
    %vm2578 = vcmask 1047556
    %vm2579 = vmand %vm2578, %vm150
    %vm2580 = vmor %vm2579, %vm309
    %v2581 = vld [vmem:[#allocation4 + $0x18] sm:$0xff]
    %v2582 = vsel %vm2580, %v2563, %v2581
    %2583 = vst [vmem:[#allocation4 + $0x18] sm:$0xff] %v2582
    %2584 = vst [vmem:[#allocation4 + $0x20] sm:$0xff] %v2573
    %v2585 = vld [vmem:[#allocation4 + $0x28] sm:$0x11]
    %v2586 = vsel %vm146, %v2574, %v2585
    %2587 = vst [vmem:[#allocation4 + $0x28] sm:$0x11] %v2586
    %v2588 = vld [vmem:[#allocation4] sm:$0xee]
    %v2589 = vld [vmem:[#allocation4 + $0x8] sm:$0xff]
    %v2590 = vld [vmem:[#allocation4 + $0x10] sm:$0xff]
    %v2591 = vld [vmem:[#allocation4 + $0x18] sm:$0xff]
    %v2592 = vld [vmem:[#allocation4 + $0x20] sm:$0xff]
    %v2593 = vld [vmem:[%s6] sm:$0xf]
    %v2594 = vld [vmem:[%s6 + $0x4] sm:$0xf]
    %v2595 = vld [vmem:[%s6 + $0x8] sm:$0xf]
    %v2596 = vld [vmem:[%s6 + $0xc] sm:$0xf]
    %v2597 = vld [vmem:[%s6 + $0x10] sm:$0xf]
    %v2598 = vld [vmem:[%s6 + $0x14] sm:$0xf]
    %v2599 = vld [vmem:[%s6 + $0x18] sm:$0xf]
    %v2600 = vld [vmem:[%s6 + $0x1c] sm:$0xf]
    %v2601 = vld [vmem:[%s6 + $0x20] sm:$0xf]
    %v2602 = vld [vmem:[%s6 + $0x24] sm:$0xf]
    %v2603 = vld [vmem:[%s6 + $0x28] sm:$0xf]
    %v2604 = vld [vmem:[%s6 + $0x2c] sm:$0xf]
    %v2605 = vld [vmem:[%s6 + $0x30] sm:$0xf]
    %v2606 = vld [vmem:[%s6 + $0x34] sm:$0xf]
    %v2607 = vld [vmem:[%s6 + $0x38] sm:$0xf]
    %v2608 = vld [vmem:[%s6 + $0x3c] sm:$0xf]
    %v2609 = vld [vmem:[%s6 + $0x40] sm:$0xf]
    %v2610 = vld [vmem:[%s6 + $0x44] sm:$0xf]
    %v2611 = vld [vmem:[%s6 + $0x48] sm:$0xf]
    %v2612 = vld [vmem:[%s6 + $0x4c] sm:$0xf]
    %v2613 = vld [vmem:[%s6 + $0x50] sm:$0xf]
    %v2614 = vld [vmem:[%s6 + $0x54] sm:$0xf]
    %v2615 = vld [vmem:[%s6 + $0x58] sm:$0xf]
    %v2616 = vld [vmem:[%s6 + $0x5c] sm:$0xf]
    %v2617 = vld [vmem:[%s6 + $0x60] sm:$0xf]
    %v2618 = vld [vmem:[%s6 + $0x64] sm:$0xf]
    %v2619 = vld [vmem:[%s6 + $0x68] sm:$0xf]
    %v2620 = vld [vmem:[%s6 + $0x6c] sm:$0xf]
    %v2621 = vld [vmem:[%s6 + $0x70] sm:$0xf]
    %v2622 = vld [vmem:[%s6 + $0x74] sm:$0xf]
    %v2623 = vld [vmem:[%s6 + $0x78] sm:$0xf]
    %v2624 = vld [vmem:[%s6 + $0x7c] sm:$0xf]
    %v2625 = vld [vmem:[#allocation4 + $0x28] sm:$0x11]
    %s2626 = scalar_lea.vmem %s6, 128
    %v2627 = vld [vmem:[%s2626] sm:$0xf]
    %v2628 = vld [vmem:[%s2626 + $0x4] sm:$0xf]
    %v2629 = vld [vmem:[%s2626 + $0x8] sm:$0xf]
    %v2630 = vld [vmem:[%s2626 + $0xc] sm:$0xf]
    %v2631 = vld [vmem:[%s2626 + $0x10] sm:$0xf]
    %v2632 = vld [vmem:[%s2626 + $0x14] sm:$0xf]
    %v2633 = vld [vmem:[%s2626 + $0x18] sm:$0xf]
    %v2634 = vld [vmem:[%s2626 + $0x1c] sm:$0xf]
    %v2635 = vld [vmem:[%s2626 + $0x20] sm:$0xf]
    %v2636 = vld [vmem:[%s2626 + $0x24] sm:$0xf]
    %v2637 = vld [vmem:[%s2626 + $0x28] sm:$0xf]
    %v2638 = vld [vmem:[%s2626 + $0x2c] sm:$0xf]
    %v2639 = vld [vmem:[%s2626 + $0x30] sm:$0xf]
    %v2640 = vld [vmem:[%s2626 + $0x34] sm:$0xf]
    %v2641 = vld [vmem:[%s2626 + $0x38] sm:$0xf]
    %v2642 = vld [vmem:[%s2626 + $0x3c] sm:$0xf]
    %v2643 = vld [vmem:[%s2626 + $0x40] sm:$0xf]
    %v2644 = vld [vmem:[%s2626 + $0x44] sm:$0xf]
    %v2645 = vld [vmem:[%s2626 + $0x48] sm:$0xf]
    %v2646 = vld [vmem:[%s2626 + $0x4c] sm:$0xf]
    %v2647 = vld [vmem:[%s2626 + $0x50] sm:$0xf]
    %v2648 = vld [vmem:[%s2626 + $0x54] sm:$0xf]
    %v2649 = vld [vmem:[%s2626 + $0x58] sm:$0xf]
    %v2650 = vld [vmem:[%s2626 + $0x5c] sm:$0xf]
    %v2651 = vld [vmem:[%s2626 + $0x60] sm:$0xf]
    %v2652 = vld [vmem:[%s2626 + $0x64] sm:$0xf]
    %v2653 = vld [vmem:[%s2626 + $0x68] sm:$0xf]
    %v2654 = vld [vmem:[%s2626 + $0x6c] sm:$0xf]
    %v2655 = vld [vmem:[%s2626 + $0x70] sm:$0xf]
    %v2656 = vld [vmem:[%s2626 + $0x74] sm:$0xf]
    %v2657 = vld [vmem:[%s2626 + $0x78] sm:$0xf]
    %v2658 = vld [vmem:[%s2626 + $0x7c] sm:$0xf]
    %v2665 = vunpack.c.l.b16 %v2588
    %v2666 = vunpack.c.h.b16 %v2588
    %v2667 = vunpack.c.l.b16 %v2589
    %v2668 = vunpack.c.h.b16 %v2589
    %v2669 = vunpack.c.l.b16 %v2590
    %v2670 = vunpack.c.h.b16 %v2590
    %v2671 = vunpack.c.l.b16 %v2591
    %v2672 = vunpack.c.h.b16 %v2591
    %v2673 = vunpack.c.l.b16 %v2592
    %v2674 = vunpack.c.h.b16 %v2592
    %v2675 = vunpack.c.l.b16 %v2625
    %v2676 = vunpack.c.h.b16 %v2625
    %v2677 = vpack.c.b16 %v2667, %v2665
    %v2678 = vpack.c.b16 %v2668, %v2666
    %v2679 = vpack.c.b16 %v2671, %v2669
    %v2680 = vpack.c.b16 %v2672, %v2670
    %v2681 = vpack.c.b16 %v2675, %v2673
    %v2682 = vpack.c.b16 %v2676, %v2674
    %v2684 = vshrl.u32 %v2677, 16
    %v2686 = vrot.slane %v2684, 1
    %v2687 = vshll.u32 %v2677, 16
    %v2689 = vrot.slane %v2687, 2
    %v2690 = vor.u32 %v2686, %v2689
    %v2692 = vshrl.u32 %v2679, 16
    %v2694 = vrot.slane %v2692, 1
    %v2695 = vshll.u32 %v2679, 16
    %v2697 = vrot.slane %v2695, 2
    %v2698 = vor.u32 %v2694, %v2697
    %v2699 = vsel %vm1220, %v2690, %v2698
    %v2701 = vshrl.u32 %v2678, 16
    %v2703 = vrot.slane %v2701, 1
    %v2704 = vshll.u32 %v2678, 16
    %v2706 = vrot.slane %v2704, 2
    %v2707 = vor.u32 %v2703, %v2706
    %v2709 = vshrl.u32 %v2680, 16
    %v2711 = vrot.slane %v2709, 1
    %v2712 = vshll.u32 %v2680, 16
    %v2714 = vrot.slane %v2712, 2
    %v2715 = vor.u32 %v2711, %v2714
    %v2716 = vsel %vm1220, %v2707, %v2715
    %v2718 = vshrl.u32 %v2681, 16
    %v2720 = vrot.slane %v2718, 1
    %v2721 = vshll.u32 %v2681, 16
    %v2723 = vrot.slane %v2721, 2
    %v2724 = vor.u32 %v2720, %v2723
    %v2725 = vsel %vm1220, %v2698, %v2724
    %v2727 = vshrl.u32 %v2682, 16
    %v2729 = vrot.slane %v2727, 1
    %v2730 = vshll.u32 %v2682, 16
    %v2732 = vrot.slane %v2730, 2
    %v2733 = vor.u32 %v2729, %v2732
    %v2734 = vsel %vm1220, %v2715, %v2733
    %v2773 = vunpack.c.l.b16 %v2627
    %v2774 = vunpack.c.l.b16 %v2628
    %v2775 = vunpack.c.l.b16 %v2629
    %v2776 = vunpack.c.l.b16 %v2630
    %v2777 = vunpack.c.l.b16 %v2631
    %v2778 = vunpack.c.l.b16 %v2632
    %v2779 = vunpack.c.l.b16 %v2633
    %v2780 = vunpack.c.l.b16 %v2634
    %v2781 = vunpack.c.l.b16 %v2635
    %v2782 = vunpack.c.l.b16 %v2636
    %v2783 = vunpack.c.l.b16 %v2637
    %v2784 = vunpack.c.l.b16 %v2638
    %v2785 = vunpack.c.l.b16 %v2639
    %v2786 = vunpack.c.l.b16 %v2640
    %v2787 = vunpack.c.l.b16 %v2641
    %v2788 = vunpack.c.l.b16 %v2642
    %v2789 = vunpack.c.l.b16 %v2643
    %v2790 = vunpack.c.l.b16 %v2644
    %v2791 = vunpack.c.l.b16 %v2645
    %v2792 = vunpack.c.l.b16 %v2646
    %v2793 = vunpack.c.l.b16 %v2647
    %v2794 = vunpack.c.l.b16 %v2648
    %v2795 = vunpack.c.l.b16 %v2649
    %v2796 = vunpack.c.l.b16 %v2650
    %v2797 = vunpack.c.l.b16 %v2651
    %v2798 = vunpack.c.l.b16 %v2652
    %v2799 = vunpack.c.l.b16 %v2653
    %v2800 = vunpack.c.l.b16 %v2654
    %v2801 = vunpack.c.l.b16 %v2655
    %v2802 = vunpack.c.l.b16 %v2656
    %v2803 = vunpack.c.l.b16 %v2657
    %v2804 = vunpack.c.l.b16 %v2658
    %v2805 = vpack.c.b16 %v2774, %v2773
    %v2806 = vpack.c.b16 %v2776, %v2775
    %v2807 = vpack.c.b16 %v2778, %v2777
    %v2808 = vpack.c.b16 %v2780, %v2779
    %v2809 = vpack.c.b16 %v2782, %v2781
    %v2810 = vpack.c.b16 %v2784, %v2783
    %v2811 = vpack.c.b16 %v2786, %v2785
    %v2812 = vpack.c.b16 %v2788, %v2787
    %v2813 = vpack.c.b16 %v2790, %v2789
    %v2814 = vpack.c.b16 %v2792, %v2791
    %v2815 = vpack.c.b16 %v2794, %v2793
    %v2816 = vpack.c.b16 %v2796, %v2795
    %v2817 = vpack.c.b16 %v2798, %v2797
    %v2818 = vpack.c.b16 %v2800, %v2799
    %v2819 = vpack.c.b16 %v2802, %v2801
    %v2820 = vpack.c.b16 %v2804, %v2803
    %2837 = vmatprep.subr.bf16.mxu0 0
    %2838 = vmatpush1.bf16.msra.mxu0 %v2805
    %2839 = vmatprep.subr.bf16.mxu0 0
    %2840 = vmatpush1.bf16.msra.mxu0 %v2806
    %2841 = vmatprep.subr.bf16.mxu0 0
    %2842 = vmatpush1.bf16.msra.mxu0 %v2807
    %2843 = vmatprep.subr.bf16.mxu0 0
    %2844 = vmatpush1.bf16.msra.mxu0 %v2808
    %2845 = vmatprep.subr.bf16.mxu0 0
    %2846 = vmatpush1.bf16.msra.mxu0 %v2809
    %2847 = vmatprep.subr.bf16.mxu0 0
    %2848 = vmatpush1.bf16.msra.mxu0 %v2810
    %2849 = vmatprep.subr.bf16.mxu0 0
    %2850 = vmatpush1.bf16.msra.mxu0 %v2811
    %2851 = vmatprep.subr.bf16.mxu0 0
    %2852 = vmatpush1.bf16.msra.mxu0 %v2812
    %2853 = vmatprep.subr.bf16.mxu0 0
    %2854 = vmatpush1.bf16.msra.mxu0 %v2813
    %2855 = vmatprep.subr.bf16.mxu0 0
    %2856 = vmatpush1.bf16.msra.mxu0 %v2814
    %2857 = vmatprep.subr.bf16.mxu0 0
    %2858 = vmatpush1.bf16.msra.mxu0 %v2815
    %2859 = vmatprep.subr.bf16.mxu0 0
    %2860 = vmatpush1.bf16.msra.mxu0 %v2816
    %2861 = vmatprep.subr.bf16.mxu0 0
    %2862 = vmatpush1.bf16.msra.mxu0 %v2817
    %2863 = vmatprep.subr.bf16.mxu0 0
    %2864 = vmatpush1.bf16.msra.mxu0 %v2818
    %2865 = vmatprep.subr.bf16.mxu0 0
    %2866 = vmatpush1.bf16.msra.mxu0 %v2819
    %2867 = vmatprep.subr.bf16.mxu0 0
    %2868 = vmatpush1.bf16.msra.mxu0 %v2820
    %2869 = vmatprep.mubr.bf16.mxu0 %v2716
    %2870 = vmatmul.mubr.bf16.gmra.mrb[0].mxu0 %v2699
    %v2871 = vpop.f32.mrb[0].mxu0
    %v2872 = vadd.f32 0.0, %v2871
    %v2873 = vpop.f32.mrb[0].mxu0
    %v2874 = vpop.f32.mrb[0].mxu0
    %v2875 = vadd.f32 0.0, %v2874
    %v2876 = vpop.f32.mrb[0].mxu0
    %2877 = vmatprep.mubr.bf16.mxu0 %v2734
    %2878 = vmatmul.mubr.bf16.gmra.mrb[0].mxu0 %v2725
    %v2879 = vpop.f32.mrb[0].mxu0
    %v2880 = vadd.f32 0.0, %v2879
    %v2881 = vpop.f32.mrb[0].mxu0
    %v2882 = vpop.f32.mrb[0].mxu0
    %v2883 = vadd.f32 0.0, %v2882
    %v2884 = vpop.f32.mrb[0].mxu0
    %2885 = vmatprep.mubr.bf16.mxu0 %v2733
    %2886 = vmatmul.mubr.bf16.gmra.mrb[0].mxu0 %v2724
    %v2887 = vpop.f32.mrb[0].mxu0
    %v2888 = vadd.f32 0.0, %v2887
    %v2889 = vpop.f32.mrb[0].mxu0
    %v2890 = vpop.f32.mrb[0].mxu0
    %v2891 = vpop.f32.mrb[0].mxu0
    %2892 = vdwg.mxu0
    %v2893 = vpack.c.b16 %v2673, %v2673
    %v2894 = vpack.c.b16 %v2674, %v2674
    %v2895 = vrot.slane %v2677, 1
    %v2896 = vrot.slane %v2679, 1
    %v2897 = vsel %vm920, %v2895, %v2896
    %v2898 = vrot.slane %v2678, 1
    %v2899 = vrot.slane %v2680, 1
    %v2900 = vsel %vm920, %v2898, %v2899
    %v2901 = vrot.slane %v2893, 1
    %v2902 = vsel %vm920, %v2896, %v2901
    %v2903 = vrot.slane %v2894, 1
    %v2904 = vsel %vm920, %v2899, %v2903
    %v2943 = vunpack.c.l.b16 %v2593
    %v2944 = vunpack.c.l.b16 %v2594
    %v2945 = vunpack.c.l.b16 %v2595
    %v2946 = vunpack.c.l.b16 %v2596
    %v2947 = vunpack.c.l.b16 %v2597
    %v2948 = vunpack.c.l.b16 %v2598
    %v2949 = vunpack.c.l.b16 %v2599
    %v2950 = vunpack.c.l.b16 %v2600
    %v2951 = vunpack.c.l.b16 %v2601
    %v2952 = vunpack.c.l.b16 %v2602
    %v2953 = vunpack.c.l.b16 %v2603
    %v2954 = vunpack.c.l.b16 %v2604
    %v2955 = vunpack.c.l.b16 %v2605
    %v2956 = vunpack.c.l.b16 %v2606
    %v2957 = vunpack.c.l.b16 %v2607
    %v2958 = vunpack.c.l.b16 %v2608
    %v2959 = vunpack.c.l.b16 %v2609
    %v2960 = vunpack.c.l.b16 %v2610
    %v2961 = vunpack.c.l.b16 %v2611
    %v2962 = vunpack.c.l.b16 %v2612
    %v2963 = vunpack.c.l.b16 %v2613
    %v2964 = vunpack.c.l.b16 %v2614
    %v2965 = vunpack.c.l.b16 %v2615
    %v2966 = vunpack.c.l.b16 %v2616
    %v2967 = vunpack.c.l.b16 %v2617
    %v2968 = vunpack.c.l.b16 %v2618
    %v2969 = vunpack.c.l.b16 %v2619
    %v2970 = vunpack.c.l.b16 %v2620
    %v2971 = vunpack.c.l.b16 %v2621
    %v2972 = vunpack.c.l.b16 %v2622
    %v2973 = vunpack.c.l.b16 %v2623
    %v2974 = vunpack.c.l.b16 %v2624
    %v2975 = vpack.c.b16 %v2944, %v2943
    %v2976 = vpack.c.b16 %v2946, %v2945
    %v2977 = vpack.c.b16 %v2948, %v2947
    %v2978 = vpack.c.b16 %v2950, %v2949
    %v2979 = vpack.c.b16 %v2952, %v2951
    %v2980 = vpack.c.b16 %v2954, %v2953
    %v2981 = vpack.c.b16 %v2956, %v2955
    %v2982 = vpack.c.b16 %v2958, %v2957
    %v2983 = vpack.c.b16 %v2960, %v2959
    %v2984 = vpack.c.b16 %v2962, %v2961
    %v2985 = vpack.c.b16 %v2964, %v2963
    %v2986 = vpack.c.b16 %v2966, %v2965
    %v2987 = vpack.c.b16 %v2968, %v2967
    %v2988 = vpack.c.b16 %v2970, %v2969
    %v2989 = vpack.c.b16 %v2972, %v2971
    %v2990 = vpack.c.b16 %v2974, %v2973
    %3007 = vmatprep.subr.bf16.mxu0 0
    %3008 = vmatpush1.bf16.msra.mxu0 %v2975
    %3009 = vmatprep.subr.bf16.mxu0 0
    %3010 = vmatpush1.bf16.msra.mxu0 %v2976
    %3011 = vmatprep.subr.bf16.mxu0 0
    %3012 = vmatpush1.bf16.msra.mxu0 %v2977
    %3013 = vmatprep.subr.bf16.mxu0 0
    %3014 = vmatpush1.bf16.msra.mxu0 %v2978
    %3015 = vmatprep.subr.bf16.mxu0 0
    %3016 = vmatpush1.bf16.msra.mxu0 %v2979
    %3017 = vmatprep.subr.bf16.mxu0 0
    %3018 = vmatpush1.bf16.msra.mxu0 %v2980
    %3019 = vmatprep.subr.bf16.mxu0 0
    %3020 = vmatpush1.bf16.msra.mxu0 %v2981
    %3021 = vmatprep.subr.bf16.mxu0 0
    %3022 = vmatpush1.bf16.msra.mxu0 %v2982
    %3023 = vmatprep.subr.bf16.mxu0 0
    %3024 = vmatpush1.bf16.msra.mxu0 %v2983
    %3025 = vmatprep.subr.bf16.mxu0 0
    %3026 = vmatpush1.bf16.msra.mxu0 %v2984
    %3027 = vmatprep.subr.bf16.mxu0 0
    %3028 = vmatpush1.bf16.msra.mxu0 %v2985
    %3029 = vmatprep.subr.bf16.mxu0 0
    %3030 = vmatpush1.bf16.msra.mxu0 %v2986
    %3031 = vmatprep.subr.bf16.mxu0 0
    %3032 = vmatpush1.bf16.msra.mxu0 %v2987
    %3033 = vmatprep.subr.bf16.mxu0 0
    %3034 = vmatpush1.bf16.msra.mxu0 %v2988
    %3035 = vmatprep.subr.bf16.mxu0 0
    %3036 = vmatpush1.bf16.msra.mxu0 %v2989
    %3037 = vmatprep.subr.bf16.mxu0 0
    %3038 = vmatpush1.bf16.msra.mxu0 %v2990
    %3039 = vmatprep.mubr.bf16.mxu0 %v2900
    %3040 = vmatmul.mubr.bf16.gmra.mrb[0].mxu0 %v2897
    %v3041 = vpop.f32.mrb[0].mxu0
    %v3042 = vadd.f32 %v2872, %v3041
    %v3043 = vpop.f32.mrb[0].mxu0
    %v3044 = vpop.f32.mrb[0].mxu0
    %v3045 = vadd.f32 %v2875, %v3044
    %v3046 = vpop.f32.mrb[0].mxu0
    %3047 = vmatprep.mubr.bf16.mxu0 %v2904
    %3048 = vmatmul.mubr.bf16.gmra.mrb[0].mxu0 %v2902
    %v3049 = vpop.f32.mrb[0].mxu0
    %v3050 = vadd.f32 %v2880, %v3049
    %v3051 = vpop.f32.mrb[0].mxu0
    %v3052 = vpop.f32.mrb[0].mxu0
    %v3053 = vadd.f32 %v2883, %v3052
    %v3054 = vpop.f32.mrb[0].mxu0
    %3055 = vmatprep.mubr.bf16.mxu0 %v2903
    %3056 = vmatmul.mubr.bf16.gmra.mrb[0].mxu0 %v2901
    %v3057 = vpop.f32.mrb[0].mxu0
    %v3058 = vadd.f32 %v2888, %v3057
    %v3059 = vpop.f32.mrb[0].mxu0
    %v3060 = vpop.f32.mrb[0].mxu0
    %v3061 = vpop.f32.mrb[0].mxu0
    %3062 = vdwg.mxu0
    %v3063 = vld [vmem:[#allocation4] sm:$0xcc]
    %s3064 = scalar_lea.vmem %s6, 256
    %v3065 = vld [vmem:[%s3064] sm:$0xf]
    %v3066 = vld [vmem:[%s3064 + $0x4] sm:$0xf]
    %v3067 = vld [vmem:[%s3064 + $0x8] sm:$0xf]
    %v3068 = vld [vmem:[%s3064 + $0xc] sm:$0xf]
    %v3069 = vld [vmem:[%s3064 + $0x10] sm:$0xf]
    %v3070 = vld [vmem:[%s3064 + $0x14] sm:$0xf]
    %v3071 = vld [vmem:[%s3064 + $0x18] sm:$0xf]
    %v3072 = vld [vmem:[%s3064 + $0x1c] sm:$0xf]
    %v3073 = vld [vmem:[%s3064 + $0x20] sm:$0xf]
    %v3074 = vld [vmem:[%s3064 + $0x24] sm:$0xf]
    %v3075 = vld [vmem:[%s3064 + $0x28] sm:$0xf]
    %v3076 = vld [vmem:[%s3064 + $0x2c] sm:$0xf]
    %v3077 = vld [vmem:[%s3064 + $0x30] sm:$0xf]
    %v3078 = vld [vmem:[%s3064 + $0x34] sm:$0xf]
    %v3079 = vld [vmem:[%s3064 + $0x38] sm:$0xf]
    %v3080 = vld [vmem:[%s3064 + $0x3c] sm:$0xf]
    %v3081 = vld [vmem:[%s3064 + $0x40] sm:$0xf]
    %v3082 = vld [vmem:[%s3064 + $0x44] sm:$0xf]
    %v3083 = vld [vmem:[%s3064 + $0x48] sm:$0xf]
    %v3084 = vld [vmem:[%s3064 + $0x4c] sm:$0xf]
    %v3085 = vld [vmem:[%s3064 + $0x50] sm:$0xf]
    %v3086 = vld [vmem:[%s3064 + $0x54] sm:$0xf]
    %v3087 = vld [vmem:[%s3064 + $0x58] sm:$0xf]
    %v3088 = vld [vmem:[%s3064 + $0x5c] sm:$0xf]
    %v3089 = vld [vmem:[%s3064 + $0x60] sm:$0xf]
    %v3090 = vld [vmem:[%s3064 + $0x64] sm:$0xf]
    %v3091 = vld [vmem:[%s3064 + $0x68] sm:$0xf]
    %v3092 = vld [vmem:[%s3064 + $0x6c] sm:$0xf]
    %v3093 = vld [vmem:[%s3064 + $0x70] sm:$0xf]
    %v3094 = vld [vmem:[%s3064 + $0x74] sm:$0xf]
    %v3095 = vld [vmem:[%s3064 + $0x78] sm:$0xf]
    %v3096 = vld [vmem:[%s3064 + $0x7c] sm:$0xf]
    %v3098 = vunpack.c.l.b16 %v3063
    %v3099 = vunpack.c.h.b16 %v3063
    %v3100 = vpack.c.b16 %v2667, %v3098
    %v3101 = vpack.c.b16 %v2668, %v3099
    %v3102 = vrot.slane %v3100, 2
    %v3103 = vrot.slane %v2679, 2
    %v3104 = vsel %vm1562, %v3102, %v3103
    %v3105 = vrot.slane %v3101, 2
    %v3106 = vrot.slane %v2680, 2
    %v3107 = vsel %vm1562, %v3105, %v3106
    %v3108 = vrot.slane %v2681, 2
    %v3109 = vsel %vm1562, %v3103, %v3108
    %v3110 = vrot.slane %v2682, 2
    %v3111 = vsel %vm1562, %v3106, %v3110
    %v3150 = vunpack.c.l.b16 %v3065
    %v3151 = vunpack.c.l.b16 %v3066
    %v3152 = vunpack.c.l.b16 %v3067
    %v3153 = vunpack.c.l.b16 %v3068
    %v3154 = vunpack.c.l.b16 %v3069
    %v3155 = vunpack.c.l.b16 %v3070
    %v3156 = vunpack.c.l.b16 %v3071
    %v3157 = vunpack.c.l.b16 %v3072
    %v3158 = vunpack.c.l.b16 %v3073
    %v3159 = vunpack.c.l.b16 %v3074
    %v3160 = vunpack.c.l.b16 %v3075
    %v3161 = vunpack.c.l.b16 %v3076
    %v3162 = vunpack.c.l.b16 %v3077
    %v3163 = vunpack.c.l.b16 %v3078
    %v3164 = vunpack.c.l.b16 %v3079
    %v3165 = vunpack.c.l.b16 %v3080
    %v3166 = vunpack.c.l.b16 %v3081
    %v3167 = vunpack.c.l.b16 %v3082
    %v3168 = vunpack.c.l.b16 %v3083
    %v3169 = vunpack.c.l.b16 %v3084
    %v3170 = vunpack.c.l.b16 %v3085
    %v3171 = vunpack.c.l.b16 %v3086
    %v3172 = vunpack.c.l.b16 %v3087
    %v3173 = vunpack.c.l.b16 %v3088
    %v3174 = vunpack.c.l.b16 %v3089
    %v3175 = vunpack.c.l.b16 %v3090
    %v3176 = vunpack.c.l.b16 %v3091
    %v3177 = vunpack.c.l.b16 %v3092
    %v3178 = vunpack.c.l.b16 %v3093
    %v3179 = vunpack.c.l.b16 %v3094
    %v3180 = vunpack.c.l.b16 %v3095
    %v3181 = vunpack.c.l.b16 %v3096
    %v3182 = vpack.c.b16 %v3151, %v3150
    %v3183 = vpack.c.b16 %v3153, %v3152
    %v3184 = vpack.c.b16 %v3155, %v3154
    %v3185 = vpack.c.b16 %v3157, %v3156
    %v3186 = vpack.c.b16 %v3159, %v3158
    %v3187 = vpack.c.b16 %v3161, %v3160
    %v3188 = vpack.c.b16 %v3163, %v3162
    %v3189 = vpack.c.b16 %v3165, %v3164
    %v3190 = vpack.c.b16 %v3167, %v3166
    %v3191 = vpack.c.b16 %v3169, %v3168
    %v3192 = vpack.c.b16 %v3171, %v3170
    %v3193 = vpack.c.b16 %v3173, %v3172
    %v3194 = vpack.c.b16 %v3175, %v3174
    %v3195 = vpack.c.b16 %v3177, %v3176
    %v3196 = vpack.c.b16 %v3179, %v3178
    %v3197 = vpack.c.b16 %v3181, %v3180
    %3214 = vmatprep.subr.bf16.mxu0 0
    %3215 = vmatpush1.bf16.msra.mxu0 %v3182
    %3216 = vmatprep.subr.bf16.mxu0 0
    %3217 = vmatpush1.bf16.msra.mxu0 %v3183
    %3218 = vmatprep.subr.bf16.mxu0 0
    %3219 = vmatpush1.bf16.msra.mxu0 %v3184
    %3220 = vmatprep.subr.bf16.mxu0 0
    %3221 = vmatpush1.bf16.msra.mxu0 %v3185
    %3222 = vmatprep.subr.bf16.mxu0 0
    %3223 = vmatpush1.bf16.msra.mxu0 %v3186
    %3224 = vmatprep.subr.bf16.mxu0 0
    %3225 = vmatpush1.bf16.msra.mxu0 %v3187
    %3226 = vmatprep.subr.bf16.mxu0 0
    %3227 = vmatpush1.bf16.msra.mxu0 %v3188
    %3228 = vmatprep.subr.bf16.mxu0 0
    %3229 = vmatpush1.bf16.msra.mxu0 %v3189
    %3230 = vmatprep.subr.bf16.mxu0 0
    %3231 = vmatpush1.bf16.msra.mxu0 %v3190
    %3232 = vmatprep.subr.bf16.mxu0 0
    %3233 = vmatpush1.bf16.msra.mxu0 %v3191
    %3234 = vmatprep.subr.bf16.mxu0 0
    %3235 = vmatpush1.bf16.msra.mxu0 %v3192
    %3236 = vmatprep.subr.bf16.mxu0 0
    %3237 = vmatpush1.bf16.msra.mxu0 %v3193
    %3238 = vmatprep.subr.bf16.mxu0 0
    %3239 = vmatpush1.bf16.msra.mxu0 %v3194
    %3240 = vmatprep.subr.bf16.mxu0 0
    %3241 = vmatpush1.bf16.msra.mxu0 %v3195
    %3242 = vmatprep.subr.bf16.mxu0 0
    %3243 = vmatpush1.bf16.msra.mxu0 %v3196
    %3244 = vmatprep.subr.bf16.mxu0 0
    %3245 = vmatpush1.bf16.msra.mxu0 %v3197
    %3246 = vmatprep.mubr.bf16.mxu0 %v3107
    %3247 = vmatmul.mubr.bf16.gmra.mrb[0].mxu0 %v3104
    %v3248 = vpop.f32.mrb[0].mxu0
    %v3249 = vadd.f32 0.0, %v3248
    %v3250 = vpop.f32.mrb[0].mxu0
    %v3251 = vpop.f32.mrb[0].mxu0
    %v3252 = vadd.f32 0.0, %v3251
    %v3253 = vpop.f32.mrb[0].mxu0
    %3254 = vmatprep.mubr.bf16.mxu0 %v3111
    %3255 = vmatmul.mubr.bf16.gmra.mrb[0].mxu0 %v3109
    %v3256 = vpop.f32.mrb[0].mxu0
    %v3257 = vadd.f32 0.0, %v3256
    %v3258 = vpop.f32.mrb[0].mxu0
    %v3259 = vpop.f32.mrb[0].mxu0
    %v3260 = vadd.f32 0.0, %v3259
    %v3261 = vpop.f32.mrb[0].mxu0
    %3262 = vmatprep.mubr.bf16.mxu0 %v3110
    %3263 = vmatmul.mubr.bf16.gmra.mrb[0].mxu0 %v3108
    %v3264 = vpop.f32.mrb[0].mxu0
    %v3265 = vadd.f32 0.0, %v3264
    %v3266 = vpop.f32.mrb[0].mxu0
    %v3267 = vpop.f32.mrb[0].mxu0
    %v3268 = vpop.f32.mrb[0].mxu0
    %3269 = vdwg.mxu0
    %v3270 = vadd.f32 %v3042, %v3249
    %v3271 = vadd.f32 %v3045, %v3252
    %v3272 = vadd.f32 %v3050, %v3257
    %v3273 = vadd.f32 %v3053, %v3260
    %v3274 = vadd.f32 %v3058, %v3265
    %v3275 = vld [vmem:[%s7] sm:$0x1]
    %v3277 = vlaneseq
    %v3278 = vshrl.u32 %v3277, 7
    %v3279 = vsub.s32 0, %v3278
    %v3280 = vrot.slane %v3275, %v3279
    %v3282 = vadd.f32 %v3270, %v3280
    %v3283 = vadd.f32 %v3271, %v3280
    %v3284 = vadd.f32 %v3272, %v3280
    %v3285 = vadd.f32 %v3273, %v3280
    %v3286 = vadd.f32 %v3274, %v3280
    %vm3287 = vcmp.ge.f32.partialorder %v3282, 0.0
    %vm3288 = vcmp.ge.f32.partialorder %v3283, 0.0
    %vm3289 = vcmp.ge.f32.partialorder %v3284, 0.0
    %vm3290 = vcmp.ge.f32.partialorder %v3285, 0.0
    %vm3291 = vcmp.ge.f32.partialorder %v3286, 0.0
    %v3292 = vmul.f32 %v3282, 0.2
    %v3293 = vmul.f32 %v3283, 0.2
    %v3294 = vmul.f32 %v3284, 0.2
    %v3295 = vmul.f32 %v3285, 0.2
    %v3296 = vmul.f32 %v3286, 0.2
    %v3297 = vsel %vm3287, %v3282, %v3292
    %v3298 = vsel %vm3288, %v3283, %v3293
    %v3299 = vsel %vm3289, %v3284, %v3294
    %v3300 = vsel %vm3290, %v3285, %v3295
    %v3301 = vsel %vm3291, %v3286, %v3296
    %v3302 = vld [vmem:[%s2] sm:$0xf]
    %v3303 = vld [vmem:[%s2 + $0x4] sm:$0xf]
    %v3304 = vunpack.c.l.bf16 %v3302
    %v3305 = vunpack.c.l.bf16 %v3303
    %v3306 = vmul.f32 %v3304, %v3297
    %v3307 = vmul.f32 %v3305, %v3298
    %v3308 = vld [vmem:[#allocation3] sm:$0xe]
    %v3309 = vld [vmem:[#allocation3 + $0x4] sm:$0xf]
    %v3310 = vld [vmem:[#allocation3 + $0x8] sm:$0x3]
    %v3311 = vunpack.c.l.bf16 %v3308
    %v3312 = vunpack.c.l.bf16 %v3309
    %v3313 = vunpack.c.l.bf16 %v3310
    %vm3317 = vcmask 1044480
    %v3318 = vrot.slane %v3311, 3
    %v3319 = vrot.slane %v3312, 3
    %v3320 = vsel %vm3317, %v3318, %v3319
    %v3321 = vrot.slane %v3313, 3
    %v3322 = vsel %vm3317, %v3319, %v3321
    %v3325 = vadd.f32 %v3306, %v3320
    %v3326 = vadd.f32 %v3307, %v3322
    %v3327 = vpack.c.bf16 %v3326, %v3325
    %v3329 = vunpack.c.l.b16 %v3327
    %v3330 = vunpack.c.h.b16 %v3327
    %v3331 = vpack.c.b16 %v3329, %v3329
    %v3332 = vpack.c.b16 %v3330, %v3330
    %v3334 = vshrl.u32 %v3331, 16
    %v3336 = vrot.slane %v3334, 6
    %v3337 = vshll.u32 %v3331, 16
    %v3339 = vrot.slane %v3337, 7
    %v3340 = vor.u32 %v3336, %v3339
    %v3341 = vrot.slane %v3340, 4
    %v3343 = vshrl.u32 %v3332, 16
    %v3345 = vrot.slane %v3343, 6
    %v3346 = vshll.u32 %v3332, 16
    %v3348 = vrot.slane %v3346, 7
    %v3349 = vor.u32 %v3345, %v3348
    %v3350 = vsel %vm185, %v3341, %v3349
    %v3351 = vrot.slane %v3349, 4
    %v3355 = vld [vmem:[#allocation5] sm:$0xe]
    %v3356 = vsel %vm243, %v3340, %v3355
    %3357 = vst [vmem:[#allocation5] sm:$0xe] %v3356
    %3358 = vst [vmem:[#allocation5 + $0x4] sm:$0xf] %v3350
    %v3359 = vld [vmem:[#allocation5 + $0x8] sm:$0x3]
    %v3360 = vsel %vm109, %v3351, %v3359
    %3361 = vst [vmem:[#allocation5 + $0x8] sm:$0x3] %v3360
    %s3362 = scalar_lea.vmem %s2, 8
    %v3363 = vld [vmem:[%s3362] sm:$0xf]
    %v3364 = vld [vmem:[%s3362 + $0x4] sm:$0xf]
    %v3365 = vunpack.c.l.bf16 %v3363
    %v3366 = vunpack.c.l.bf16 %v3364
    %vm3370 = vcmask 1041408
    %v3371 = vrot.slane %v3299, 6
    %v3372 = vrot.slane %v3300, 6
    %v3373 = vsel %vm3370, %v3371, %v3372
    %v3374 = vrot.slane %v3301, 6
    %v3375 = vsel %vm3370, %v3372, %v3374
    %v3378 = vmul.f32 %v3365, %v3373
    %v3379 = vmul.f32 %v3366, %v3375
    %v3380 = vld [vmem:[#allocation3 + $0xc] sm:$0xf]
    %v3381 = vld [vmem:[#allocation3 + $0x10] sm:$0xf]
    %v3382 = vld [vmem:[#allocation3 + $0x14] sm:$0x1]
    %v3383 = vunpack.c.l.bf16 %v3380
    %v3384 = vunpack.c.l.bf16 %v3381
    %v3385 = vunpack.c.l.bf16 %v3382
    %vm3389 = vcmask 1046528
    %v3390 = vrot.slane %v3383, 1
    %v3391 = vrot.slane %v3384, 1
    %v3392 = vsel %vm3389, %v3390, %v3391
    %v3393 = vrot.slane %v3385, 1
    %v3394 = vsel %vm3389, %v3391, %v3393
    %v3397 = vadd.f32 %v3378, %v3392
    %v3398 = vadd.f32 %v3379, %v3394
    %v3399 = vpack.c.bf16 %v3398, %v3397
    %v3401 = vunpack.c.l.b16 %v3399
    %v3402 = vunpack.c.h.b16 %v3399
    %v3403 = vpack.c.b16 %v3401, %v3401
    %v3404 = vpack.c.b16 %v3402, %v3402
    %v3406 = vshrl.u32 %v3403, 16
    %v3408 = vrot.slane %v3406, 7
    %v3409 = vshll.u32 %v3403, 16
    %v3411 = vor.u32 %v3408, %v3409
    %v3412 = vrot.slane %v3408, 4
    %v3414 = vshrl.u32 %v3404, 16
    %v3416 = vrot.slane %v3414, 7
    %v3417 = vshll.u32 %v3404, 16
    %v3419 = vor.u32 %v3416, %v3417
    %v3420 = vsel %vm255, %v3412, %v3419
    %v3421 = vrot.slane %v3416, 4
    %v3425 = vld [vmem:[#allocation5 + $0xc] sm:$0xf]
    %v3426 = vsel %vm309, %v3411, %v3425
    %3427 = vst [vmem:[#allocation5 + $0xc] sm:$0xf] %v3426
    %3428 = vst [vmem:[#allocation5 + $0x10] sm:$0xf] %v3420
    %v3429 = vld [vmem:[#allocation5 + $0x14] sm:$0x1]
    %v3430 = vsel %vm120, %v3421, %v3429
    %3431 = vst [vmem:[#allocation5 + $0x14] sm:$0x1] %v3430
    %v3432 = vld [vmem:[#allocation5] sm:$0xe]
    %v3433 = vld [vmem:[#allocation5 + $0x4] sm:$0xf]
    %v3434 = vld [vmem:[#allocation5 + $0x8] sm:$0xf]
    %v3435 = vld [vmem:[#allocation5 + $0xc] sm:$0xf]
    %v3436 = vld [vmem:[#allocation5 + $0x10] sm:$0xf]
    %v3437 = vld [vmem:[#allocation9] sm:$0xf]
    %v3438 = vld [vmem:[#allocation9 + $0x4] sm:$0xf]
    %v3439 = vld [vmem:[#allocation9 + $0x8] sm:$0xf]
    %v3440 = vld [vmem:[#allocation9 + $0xc] sm:$0xf]
    %v3441 = vld [vmem:[#allocation9 + $0x10] sm:$0xf]
    %v3442 = vld [vmem:[#allocation9 + $0x14] sm:$0xf]
    %v3443 = vld [vmem:[#allocation9 + $0x18] sm:$0xf]
    %v3444 = vld [vmem:[#allocation9 + $0x1c] sm:$0xf]
    %v3445 = vld [vmem:[#allocation9 + $0x20] sm:$0xf]
    %v3446 = vld [vmem:[#allocation9 + $0x24] sm:$0xf]
    %v3447 = vld [vmem:[#allocation9 + $0x28] sm:$0xf]
    %v3448 = vld [vmem:[#allocation9 + $0x2c] sm:$0xf]
    %v3449 = vld [vmem:[#allocation9 + $0x30] sm:$0xf]
    %v3450 = vld [vmem:[#allocation9 + $0x34] sm:$0xf]
    %v3451 = vld [vmem:[#allocation9 + $0x38] sm:$0xf]
    %v3452 = vld [vmem:[#allocation9 + $0x3c] sm:$0xf]
    %v3453 = vld [vmem:[#allocation5 + $0x14] sm:$0x1]
    %s3454 = scalar_lea.vmem [#allocation9], 64
    %v3455 = vld [vmem:[%s3454] sm:$0xf]
    %v3456 = vld [vmem:[%s3454 + $0x4] sm:$0xf]
    %v3457 = vld [vmem:[%s3454 + $0x8] sm:$0xf]
    %v3458 = vld [vmem:[%s3454 + $0xc] sm:$0xf]
    %v3459 = vld [vmem:[%s3454 + $0x10] sm:$0xf]
    %v3460 = vld [vmem:[%s3454 + $0x14] sm:$0xf]
    %v3461 = vld [vmem:[%s3454 + $0x18] sm:$0xf]
    %v3462 = vld [vmem:[%s3454 + $0x1c] sm:$0xf]
    %v3463 = vld [vmem:[%s3454 + $0x20] sm:$0xf]
    %v3464 = vld [vmem:[%s3454 + $0x24] sm:$0xf]
    %v3465 = vld [vmem:[%s3454 + $0x28] sm:$0xf]
    %v3466 = vld [vmem:[%s3454 + $0x2c] sm:$0xf]
    %v3467 = vld [vmem:[%s3454 + $0x30] sm:$0xf]
    %v3468 = vld [vmem:[%s3454 + $0x34] sm:$0xf]
    %v3469 = vld [vmem:[%s3454 + $0x38] sm:$0xf]
    %v3470 = vld [vmem:[%s3454 + $0x3c] sm:$0xf]
    %v3477 = vunpack.c.l.b16 %v3432
    %v3478 = vunpack.c.l.b16 %v3433
    %v3479 = vunpack.c.l.b16 %v3434
    %v3480 = vunpack.c.l.b16 %v3435
    %v3481 = vunpack.c.l.b16 %v3436
    %v3482 = vunpack.c.l.b16 %v3453
    %v3483 = vpack.c.b16 %v3478, %v3477
    %v3484 = vpack.c.b16 %v3480, %v3479
    %v3485 = vpack.c.b16 %v3482, %v3481
    %v3487 = vshrl.u32 %v3483, 16
    %v3489 = vrot.slane %v3487, 1
    %v3490 = vshll.u32 %v3483, 16
    %v3492 = vrot.slane %v3490, 2
    %v3493 = vor.u32 %v3489, %v3492
    %v3495 = vshrl.u32 %v3484, 16
    %v3497 = vrot.slane %v3495, 1
    %v3498 = vshll.u32 %v3484, 16
    %v3500 = vrot.slane %v3498, 2
    %v3501 = vor.u32 %v3497, %v3500
    %v3502 = vsel %vm1220, %v3493, %v3501
    %v3504 = vshrl.u32 %v3485, 16
    %v3506 = vrot.slane %v3504, 1
    %v3507 = vshll.u32 %v3485, 16
    %v3509 = vrot.slane %v3507, 2
    %v3510 = vor.u32 %v3506, %v3509
    %v3511 = vsel %vm1220, %v3501, %v3510
    %v3531 = vunpack.c.l.b16 %v3455
    %v3532 = vunpack.c.l.b16 %v3456
    %v3533 = vunpack.c.l.b16 %v3457
    %v3534 = vunpack.c.l.b16 %v3458
    %v3535 = vunpack.c.l.b16 %v3459
    %v3536 = vunpack.c.l.b16 %v3460
    %v3537 = vunpack.c.l.b16 %v3461
    %v3538 = vunpack.c.l.b16 %v3462
    %v3539 = vunpack.c.l.b16 %v3463
    %v3540 = vunpack.c.l.b16 %v3464
    %v3541 = vunpack.c.l.b16 %v3465
    %v3542 = vunpack.c.l.b16 %v3466
    %v3543 = vunpack.c.l.b16 %v3467
    %v3544 = vunpack.c.l.b16 %v3468
    %v3545 = vunpack.c.l.b16 %v3469
    %v3546 = vunpack.c.l.b16 %v3470
    %v3547 = vpack.c.b16 %v3532, %v3531
    %v3548 = vpack.c.b16 %v3534, %v3533
    %v3549 = vpack.c.b16 %v3536, %v3535
    %v3550 = vpack.c.b16 %v3538, %v3537
    %v3551 = vpack.c.b16 %v3540, %v3539
    %v3552 = vpack.c.b16 %v3542, %v3541
    %v3553 = vpack.c.b16 %v3544, %v3543
    %v3554 = vpack.c.b16 %v3546, %v3545
    %3563 = vmatprep.subr.bf16.mxu0 0
    %3564 = vmatpush1.bf16.msra.mxu0 %v3547
    %3565 = vmatprep.subr.bf16.mxu0 0
    %3566 = vmatpush1.bf16.msra.mxu0 %v3548
    %3567 = vmatprep.subr.bf16.mxu0 0
    %3568 = vmatpush1.bf16.msra.mxu0 %v3549
    %3569 = vmatprep.subr.bf16.mxu0 0
    %3570 = vmatpush1.bf16.msra.mxu0 %v3550
    %3571 = vmatprep.subr.bf16.mxu0 0
    %3572 = vmatpush1.bf16.msra.mxu0 %v3551
    %3573 = vmatprep.subr.bf16.mxu0 0
    %3574 = vmatpush1.bf16.msra.mxu0 %v3552
    %3575 = vmatprep.subr.bf16.mxu0 0
    %3576 = vmatpush1.bf16.msra.mxu0 %v3553
    %3577 = vmatprep.subr.bf16.mxu0 0
    %3578 = vmatpush1.bf16.msra.mxu0 %v3554
    %3579 = vmatprep.subr.bf16.mxu0 0
    %3580 = vmatpush1.bf16.msra.mxu0 0
    %3581 = vmatprep.subr.bf16.mxu0 0
    %3582 = vmatpush1.bf16.msra.mxu0 0
    %3583 = vmatprep.subr.bf16.mxu0 0
    %3584 = vmatpush1.bf16.msra.mxu0 0
    %3585 = vmatprep.subr.bf16.mxu0 0
    %3586 = vmatpush1.bf16.msra.mxu0 0
    %3587 = vmatprep.subr.bf16.mxu0 0
    %3588 = vmatpush1.bf16.msra.mxu0 0
    %3589 = vmatprep.subr.bf16.mxu0 0
    %3590 = vmatpush1.bf16.msra.mxu0 0
    %3591 = vmatprep.subr.bf16.mxu0 0
    %3592 = vmatpush1.bf16.msra.mxu0 0
    %3593 = vmatprep.subr.bf16.mxu0 0
    %3594 = vmatpush1.bf16.msra.mxu0 0
    %3595 = vmatprep.mubr.bf16.mxu0 0
    %3596 = vmatmul.mubr.bf16.gmra.mrb[0].mxu0 %v3502
    %v3597 = vpop.f32.mrb[0].mxu0
    %v3598 = vadd.f32 0.0, %v3597
    %v3599 = vpop.f32.mrb[0].mxu0
    %v3600 = vpop.f32.mrb[0].mxu0
    %v3601 = vadd.f32 0.0, %v3600
    %v3602 = vpop.f32.mrb[0].mxu0
    %3603 = vmatprep.mubr.bf16.mxu0 0
    %3604 = vmatmul.mubr.bf16.gmra.mrb[0].mxu0 %v3511
    %v3605 = vpop.f32.mrb[0].mxu0
    %v3606 = vadd.f32 0.0, %v3605
    %v3607 = vpop.f32.mrb[0].mxu0
    %v3608 = vpop.f32.mrb[0].mxu0
    %v3609 = vadd.f32 0.0, %v3608
    %v3610 = vpop.f32.mrb[0].mxu0
    %3611 = vmatprep.mubr.bf16.mxu0 0
    %3612 = vmatmul.mubr.bf16.gmra.mrb[0].mxu0 %v3510
    %v3613 = vpop.f32.mrb[0].mxu0
    %v3614 = vadd.f32 0.0, %v3613
    %v3615 = vpop.f32.mrb[0].mxu0
    %v3616 = vpop.f32.mrb[0].mxu0
    %v3617 = vpop.f32.mrb[0].mxu0
    %3618 = vdwg.mxu0
    %v3619 = vpack.c.b16 %v3481, %v3481
    %v3620 = vrot.slane %v3483, 1
    %v3621 = vrot.slane %v3484, 1
    %v3622 = vsel %vm920, %v3620, %v3621
    %v3623 = vrot.slane %v3619, 1
    %v3624 = vsel %vm920, %v3621, %v3623
    %v3644 = vunpack.c.l.b16 %v3437
    %v3645 = vunpack.c.l.b16 %v3438
    %v3646 = vunpack.c.l.b16 %v3439
    %v3647 = vunpack.c.l.b16 %v3440
    %v3648 = vunpack.c.l.b16 %v3441
    %v3649 = vunpack.c.l.b16 %v3442
    %v3650 = vunpack.c.l.b16 %v3443
    %v3651 = vunpack.c.l.b16 %v3444
    %v3652 = vunpack.c.l.b16 %v3445
    %v3653 = vunpack.c.l.b16 %v3446
    %v3654 = vunpack.c.l.b16 %v3447
    %v3655 = vunpack.c.l.b16 %v3448
    %v3656 = vunpack.c.l.b16 %v3449
    %v3657 = vunpack.c.l.b16 %v3450
    %v3658 = vunpack.c.l.b16 %v3451
    %v3659 = vunpack.c.l.b16 %v3452
    %v3660 = vpack.c.b16 %v3645, %v3644
    %v3661 = vpack.c.b16 %v3647, %v3646
    %v3662 = vpack.c.b16 %v3649, %v3648
    %v3663 = vpack.c.b16 %v3651, %v3650
    %v3664 = vpack.c.b16 %v3653, %v3652
    %v3665 = vpack.c.b16 %v3655, %v3654
    %v3666 = vpack.c.b16 %v3657, %v3656
    %v3667 = vpack.c.b16 %v3659, %v3658
    %3676 = vmatprep.subr.bf16.mxu0 0
    %3677 = vmatpush1.bf16.msra.mxu0 %v3660
    %3678 = vmatprep.subr.bf16.mxu0 0
    %3679 = vmatpush1.bf16.msra.mxu0 %v3661
    %3680 = vmatprep.subr.bf16.mxu0 0
    %3681 = vmatpush1.bf16.msra.mxu0 %v3662
    %3682 = vmatprep.subr.bf16.mxu0 0
    %3683 = vmatpush1.bf16.msra.mxu0 %v3663
    %3684 = vmatprep.subr.bf16.mxu0 0
    %3685 = vmatpush1.bf16.msra.mxu0 %v3664
    %3686 = vmatprep.subr.bf16.mxu0 0
    %3687 = vmatpush1.bf16.msra.mxu0 %v3665
    %3688 = vmatprep.subr.bf16.mxu0 0
    %3689 = vmatpush1.bf16.msra.mxu0 %v3666
    %3690 = vmatprep.subr.bf16.mxu0 0
    %3691 = vmatpush1.bf16.msra.mxu0 %v3667
    %3692 = vmatprep.subr.bf16.mxu0 0
    %3693 = vmatpush1.bf16.msra.mxu0 0
    %3694 = vmatprep.subr.bf16.mxu0 0
    %3695 = vmatpush1.bf16.msra.mxu0 0
    %3696 = vmatprep.subr.bf16.mxu0 0
    %3697 = vmatpush1.bf16.msra.mxu0 0
    %3698 = vmatprep.subr.bf16.mxu0 0
    %3699 = vmatpush1.bf16.msra.mxu0 0
    %3700 = vmatprep.subr.bf16.mxu0 0
    %3701 = vmatpush1.bf16.msra.mxu0 0
    %3702 = vmatprep.subr.bf16.mxu0 0
    %3703 = vmatpush1.bf16.msra.mxu0 0
    %3704 = vmatprep.subr.bf16.mxu0 0
    %3705 = vmatpush1.bf16.msra.mxu0 0
    %3706 = vmatprep.subr.bf16.mxu0 0
    %3707 = vmatpush1.bf16.msra.mxu0 0
    %3708 = vmatprep.mubr.bf16.mxu0 0
    %3709 = vmatmul.mubr.bf16.gmra.mrb[0].mxu0 %v3622
    %v3710 = vpop.f32.mrb[0].mxu0
    %v3711 = vadd.f32 %v3598, %v3710
    %v3712 = vpop.f32.mrb[0].mxu0
    %v3713 = vpop.f32.mrb[0].mxu0
    %v3714 = vadd.f32 %v3601, %v3713
    %v3715 = vpop.f32.mrb[0].mxu0
    %3716 = vmatprep.mubr.bf16.mxu0 0
    %3717 = vmatmul.mubr.bf16.gmra.mrb[0].mxu0 %v3624
    %v3718 = vpop.f32.mrb[0].mxu0
    %v3719 = vadd.f32 %v3606, %v3718
    %v3720 = vpop.f32.mrb[0].mxu0
    %v3721 = vpop.f32.mrb[0].mxu0
    %v3722 = vadd.f32 %v3609, %v3721
    %v3723 = vpop.f32.mrb[0].mxu0
    %3724 = vmatprep.mubr.bf16.mxu0 0
    %3725 = vmatmul.mubr.bf16.gmra.mrb[0].mxu0 %v3623
    %v3726 = vpop.f32.mrb[0].mxu0
    %v3727 = vadd.f32 %v3614, %v3726
    %v3728 = vpop.f32.mrb[0].mxu0
    %v3729 = vpop.f32.mrb[0].mxu0
    %v3730 = vpop.f32.mrb[0].mxu0
    %3731 = vdwg.mxu0
    %v3732 = vld [vmem:[#allocation5] sm:$0xc]
    %s3733 = scalar_lea.vmem [#allocation9], 128
    %v3734 = vld [vmem:[%s3733] sm:$0xf]
    %v3735 = vld [vmem:[%s3733 + $0x4] sm:$0xf]
    %v3736 = vld [vmem:[%s3733 + $0x8] sm:$0xf]
    %v3737 = vld [vmem:[%s3733 + $0xc] sm:$0xf]
    %v3738 = vld [vmem:[%s3733 + $0x10] sm:$0xf]
    %v3739 = vld [vmem:[%s3733 + $0x14] sm:$0xf]
    %v3740 = vld [vmem:[%s3733 + $0x18] sm:$0xf]
    %v3741 = vld [vmem:[%s3733 + $0x1c] sm:$0xf]
    %v3742 = vld [vmem:[%s3733 + $0x20] sm:$0xf]
    %v3743 = vld [vmem:[%s3733 + $0x24] sm:$0xf]
    %v3744 = vld [vmem:[%s3733 + $0x28] sm:$0xf]
    %v3745 = vld [vmem:[%s3733 + $0x2c] sm:$0xf]
    %v3746 = vld [vmem:[%s3733 + $0x30] sm:$0xf]
    %v3747 = vld [vmem:[%s3733 + $0x34] sm:$0xf]
    %v3748 = vld [vmem:[%s3733 + $0x38] sm:$0xf]
    %v3749 = vld [vmem:[%s3733 + $0x3c] sm:$0xf]
    %v3751 = vunpack.c.l.b16 %v3732
    %v3752 = vpack.c.b16 %v3478, %v3751
    %v3753 = vrot.slane %v3752, 2
    %v3754 = vrot.slane %v3484, 2
    %v3755 = vsel %vm1562, %v3753, %v3754
    %v3756 = vrot.slane %v3485, 2
    %v3757 = vsel %vm1562, %v3754, %v3756
    %v3777 = vunpack.c.l.b16 %v3734
    %v3778 = vunpack.c.l.b16 %v3735
    %v3779 = vunpack.c.l.b16 %v3736
    %v3780 = vunpack.c.l.b16 %v3737
    %v3781 = vunpack.c.l.b16 %v3738
    %v3782 = vunpack.c.l.b16 %v3739
    %v3783 = vunpack.c.l.b16 %v3740
    %v3784 = vunpack.c.l.b16 %v3741
    %v3785 = vunpack.c.l.b16 %v3742
    %v3786 = vunpack.c.l.b16 %v3743
    %v3787 = vunpack.c.l.b16 %v3744
    %v3788 = vunpack.c.l.b16 %v3745
    %v3789 = vunpack.c.l.b16 %v3746
    %v3790 = vunpack.c.l.b16 %v3747
    %v3791 = vunpack.c.l.b16 %v3748
    %v3792 = vunpack.c.l.b16 %v3749
    %v3793 = vpack.c.b16 %v3778, %v3777
    %v3794 = vpack.c.b16 %v3780, %v3779
    %v3795 = vpack.c.b16 %v3782, %v3781
    %v3796 = vpack.c.b16 %v3784, %v3783
    %v3797 = vpack.c.b16 %v3786, %v3785
    %v3798 = vpack.c.b16 %v3788, %v3787
    %v3799 = vpack.c.b16 %v3790, %v3789
    %v3800 = vpack.c.b16 %v3792, %v3791
    %3809 = vmatprep.subr.bf16.mxu0 0
    %3810 = vmatpush1.bf16.msra.mxu0 %v3793
    %3811 = vmatprep.subr.bf16.mxu0 0
    %3812 = vmatpush1.bf16.msra.mxu0 %v3794
    %3813 = vmatprep.subr.bf16.mxu0 0
    %3814 = vmatpush1.bf16.msra.mxu0 %v3795
    %3815 = vmatprep.subr.bf16.mxu0 0
    %3816 = vmatpush1.bf16.msra.mxu0 %v3796
    %3817 = vmatprep.subr.bf16.mxu0 0
    %3818 = vmatpush1.bf16.msra.mxu0 %v3797
    %3819 = vmatprep.subr.bf16.mxu0 0
    %3820 = vmatpush1.bf16.msra.mxu0 %v3798
    %3821 = vmatprep.subr.bf16.mxu0 0
    %3822 = vmatpush1.bf16.msra.mxu0 %v3799
    %3823 = vmatprep.subr.bf16.mxu0 0
    %3824 = vmatpush1.bf16.msra.mxu0 %v3800
    %3825 = vmatprep.subr.bf16.mxu0 0
    %3826 = vmatpush1.bf16.msra.mxu0 0
    %3827 = vmatprep.subr.bf16.mxu0 0
    %3828 = vmatpush1.bf16.msra.mxu0 0
    %3829 = vmatprep.subr.bf16.mxu0 0
    %3830 = vmatpush1.bf16.msra.mxu0 0
    %3831 = vmatprep.subr.bf16.mxu0 0
    %3832 = vmatpush1.bf16.msra.mxu0 0
    %3833 = vmatprep.subr.bf16.mxu0 0
    %3834 = vmatpush1.bf16.msra.mxu0 0
    %3835 = vmatprep.subr.bf16.mxu0 0
    %3836 = vmatpush1.bf16.msra.mxu0 0
    %3837 = vmatprep.subr.bf16.mxu0 0
    %3838 = vmatpush1.bf16.msra.mxu0 0
    %3839 = vmatprep.subr.bf16.mxu0 0
    %3840 = vmatpush1.bf16.msra.mxu0 0
    %3841 = vmatprep.mubr.bf16.mxu0 0
    %3842 = vmatmul.mubr.bf16.gmra.mrb[0].mxu0 %v3755
    %v3843 = vpop.f32.mrb[0].mxu0
    %v3844 = vadd.f32 0.0, %v3843
    %v3845 = vpop.f32.mrb[0].mxu0
    %v3846 = vpop.f32.mrb[0].mxu0
    %v3847 = vadd.f32 0.0, %v3846
    %v3848 = vpop.f32.mrb[0].mxu0
    %3849 = vmatprep.mubr.bf16.mxu0 0
    %3850 = vmatmul.mubr.bf16.gmra.mrb[0].mxu0 %v3757
    %v3851 = vpop.f32.mrb[0].mxu0
    %v3852 = vadd.f32 0.0, %v3851
    %v3853 = vpop.f32.mrb[0].mxu0
    %v3854 = vpop.f32.mrb[0].mxu0
    %v3855 = vadd.f32 0.0, %v3854
    %v3856 = vpop.f32.mrb[0].mxu0
    %3857 = vmatprep.mubr.bf16.mxu0 0
    %3858 = vmatmul.mubr.bf16.gmra.mrb[0].mxu0 %v3756
    %v3859 = vpop.f32.mrb[0].mxu0
    %v3860 = vadd.f32 0.0, %v3859
    %v3861 = vpop.f32.mrb[0].mxu0
    %v3862 = vpop.f32.mrb[0].mxu0
    %v3863 = vpop.f32.mrb[0].mxu0
    %3864 = vdwg.mxu0
    %v3865 = vadd.f32 %v3711, %v3844
    %v3866 = vadd.f32 %v3714, %v3847
    %v3867 = vadd.f32 %v3719, %v3852
    %v3868 = vadd.f32 %v3722, %v3855
    %v3869 = vadd.f32 %v3727, %v3860
    %v3870 = vld [vmem:[%s9] sm:$0x1]
    %v3872 = vlaneseq
    %v3873 = vshrl.u32 %v3872, 7
    %v3874 = vsub.s32 0, %v3873
    %v3875 = vrot.slane %v3870, %v3874
    %v3877 = vadd.f32 %v3865, %v3875
    %v3878 = vadd.f32 %v3866, %v3875
    %v3879 = vadd.f32 %v3867, %v3875
    %v3880 = vadd.f32 %v3868, %v3875
    %v3881 = vadd.f32 %v3869, %v3875
    %v3882 = vmax.f32 %v3877, 0.0
    %v3883 = vmax.f32 %v3878, 0.0
    %v3884 = vmax.f32 %v3879, 0.0
    %v3885 = vmax.f32 %v3880, 0.0
    %v3886 = vmax.f32 %v3881, 0.0
    %v3887 = vpack.c.bf16 %v3883, %v3882
    %v3889 = vunpack.c.l.b16 %v3887
    %v3890 = vunpack.c.h.b16 %v3887
    %v3891 = vpack.c.b16 %v3889, %v3889
    %v3892 = vpack.c.b16 %v3890, %v3890
    %v3894 = vshrl.u32 %v3891, 16
    %v3896 = vrot.slane %v3894, 6
    %v3897 = vshll.u32 %v3891, 16
    %v3899 = vrot.slane %v3897, 7
    %v3900 = vor.u32 %v3896, %v3899
    %v3901 = vrot.slane %v3900, 4
    %v3903 = vshrl.u32 %v3892, 16
    %v3905 = vrot.slane %v3903, 6
    %v3906 = vshll.u32 %v3892, 16
    %v3908 = vrot.slane %v3906, 7
    %v3909 = vor.u32 %v3905, %v3908
    %v3910 = vsel %vm185, %v3901, %v3909
    %v3911 = vrot.slane %v3909, 4
    %v3915 = vld [vmem:[#allocation6] sm:$0xe]
    %v3916 = vsel %vm243, %v3900, %v3915
    %3917 = vst [vmem:[#allocation6] sm:$0xe] %v3916
    %3918 = vst [vmem:[#allocation6 + $0x4] sm:$0xf] %v3910
    %v3919 = vld [vmem:[#allocation6 + $0x8] sm:$0x3]
    %v3920 = vsel %vm109, %v3911, %v3919
    %3921 = vst [vmem:[#allocation6 + $0x8] sm:$0x3] %v3920
    %v3922 = vpack.c.bf16 %v3885, %v3884
    %v3923 = vpack.c.bf16 %v3886, %v3886
    %v3926 = vunpack.c.l.b16 %v3922
    %v3927 = vunpack.c.h.b16 %v3922
    %v3928 = vunpack.c.l.b16 %v3923
    %v3929 = vpack.c.b16 %v3926, %v3926
    %v3930 = vpack.c.b16 %v3927, %v3927
    %v3931 = vpack.c.b16 %v3928, %v3928
    %v3933 = vshrl.u32 %v3929, 16
    %v3935 = vrot.slane %v3933, 6
    %v3936 = vshll.u32 %v3929, 16
    %v3938 = vrot.slane %v3936, 7
    %v3939 = vor.u32 %v3935, %v3938
    %v3940 = vrot.slane %v3939, 4
    %v3942 = vshrl.u32 %v3930, 16
    %v3944 = vrot.slane %v3942, 6
    %v3945 = vshll.u32 %v3930, 16
    %v3947 = vrot.slane %v3945, 7
    %v3948 = vor.u32 %v3944, %v3947
    %v3949 = vsel %vm185, %v3940, %v3948
    %v3950 = vrot.slane %v3948, 4
    %v3952 = vshrl.u32 %v3931, 16
    %v3954 = vrot.slane %v3952, 6
    %v3955 = vshll.u32 %v3931, 16
    %v3957 = vrot.slane %v3955, 7
    %v3958 = vor.u32 %v3954, %v3957
    %v3959 = vsel %vm185, %v3950, %v3958
    %v3960 = vrot.slane %v3954, 4
    %v3964 = vld [vmem:[#allocation6 + $0xc] sm:$0xf]
    %v3965 = vsel %vm309, %v3949, %v3964
    %3966 = vst [vmem:[#allocation6 + $0xc] sm:$0xf] %v3965
    %3967 = vst [vmem:[#allocation6 + $0x10] sm:$0xf] %v3959
    %v3968 = vld [vmem:[#allocation6 + $0x14] sm:$0x1]
    %v3969 = vsel %vm120, %v3960, %v3968
    %3970 = vst [vmem:[#allocation6 + $0x14] sm:$0x1] %v3969
    %v3971 = vld [vmem:[#allocation6] sm:$0xe]
    %v3972 = vld [vmem:[#allocation6 + $0x4] sm:$0xf]
    %v3973 = vld [vmem:[#allocation6 + $0x8] sm:$0xf]
    %v3974 = vld [vmem:[#allocation6 + $0xc] sm:$0xf]
    %v3975 = vld [vmem:[#allocation6 + $0x10] sm:$0xf]
    %v3976 = vld [vmem:[#allocation11] sm:$0xf]
    %v3977 = vld [vmem:[#allocation11 + $0x4] sm:$0xf]
    %v3978 = vld [vmem:[#allocation11 + $0x8] sm:$0xf]
    %v3979 = vld [vmem:[#allocation11 + $0xc] sm:$0xf]
    %v3980 = vld [vmem:[#allocation11 + $0x10] sm:$0xf]
    %v3981 = vld [vmem:[#allocation11 + $0x14] sm:$0xf]
    %v3982 = vld [vmem:[#allocation11 + $0x18] sm:$0xf]
    %v3983 = vld [vmem:[#allocation11 + $0x1c] sm:$0xf]
    %v3984 = vld [vmem:[#allocation11 + $0x20] sm:$0xf]
    %v3985 = vld [vmem:[#allocation11 + $0x24] sm:$0xf]
    %v3986 = vld [vmem:[#allocation11 + $0x28] sm:$0xf]
    %v3987 = vld [vmem:[#allocation11 + $0x2c] sm:$0xf]
    %v3988 = vld [vmem:[#allocation11 + $0x30] sm:$0xf]
    %v3989 = vld [vmem:[#allocation11 + $0x34] sm:$0xf]
    %v3990 = vld [vmem:[#allocation11 + $0x38] sm:$0xf]
    %v3991 = vld [vmem:[#allocation11 + $0x3c] sm:$0xf]
    %v3992 = vld [vmem:[#allocation6 + $0x14] sm:$0x1]
    %s3993 = scalar_lea.vmem [#allocation11], 64
    %v3994 = vld [vmem:[%s3993] sm:$0xf]
    %v3995 = vld [vmem:[%s3993 + $0x4] sm:$0xf]
    %v3996 = vld [vmem:[%s3993 + $0x8] sm:$0xf]
    %v3997 = vld [vmem:[%s3993 + $0xc] sm:$0xf]
    %v3998 = vld [vmem:[%s3993 + $0x10] sm:$0xf]
    %v3999 = vld [vmem:[%s3993 + $0x14] sm:$0xf]
    %v4000 = vld [vmem:[%s3993 + $0x18] sm:$0xf]
    %v4001 = vld [vmem:[%s3993 + $0x1c] sm:$0xf]
    %v4002 = vld [vmem:[%s3993 + $0x20] sm:$0xf]
    %v4003 = vld [vmem:[%s3993 + $0x24] sm:$0xf]
    %v4004 = vld [vmem:[%s3993 + $0x28] sm:$0xf]
    %v4005 = vld [vmem:[%s3993 + $0x2c] sm:$0xf]
    %v4006 = vld [vmem:[%s3993 + $0x30] sm:$0xf]
    %v4007 = vld [vmem:[%s3993 + $0x34] sm:$0xf]
    %v4008 = vld [vmem:[%s3993 + $0x38] sm:$0xf]
    %v4009 = vld [vmem:[%s3993 + $0x3c] sm:$0xf]
    %v4016 = vunpack.c.l.b16 %v3971
    %v4017 = vunpack.c.l.b16 %v3972
    %v4018 = vunpack.c.l.b16 %v3973
    %v4019 = vunpack.c.l.b16 %v3974
    %v4020 = vunpack.c.l.b16 %v3975
    %v4021 = vunpack.c.l.b16 %v3992
    %v4022 = vpack.c.b16 %v4017, %v4016
    %v4023 = vpack.c.b16 %v4019, %v4018
    %v4024 = vpack.c.b16 %v4021, %v4020
    %v4026 = vshrl.u32 %v4022, 16
    %v4028 = vrot.slane %v4026, 1
    %v4029 = vshll.u32 %v4022, 16
    %v4031 = vrot.slane %v4029, 2
    %v4032 = vor.u32 %v4028, %v4031
    %v4034 = vshrl.u32 %v4023, 16
    %v4036 = vrot.slane %v4034, 1
    %v4037 = vshll.u32 %v4023, 16
    %v4039 = vrot.slane %v4037, 2
    %v4040 = vor.u32 %v4036, %v4039
    %v4041 = vsel %vm1220, %v4032, %v4040
    %v4043 = vshrl.u32 %v4024, 16
    %v4045 = vrot.slane %v4043, 1
    %v4046 = vshll.u32 %v4024, 16
    %v4048 = vrot.slane %v4046, 2
    %v4049 = vor.u32 %v4045, %v4048
    %v4050 = vsel %vm1220, %v4040, %v4049
    %v4070 = vunpack.c.l.b16 %v3994
    %v4071 = vunpack.c.l.b16 %v3995
    %v4072 = vunpack.c.l.b16 %v3996
    %v4073 = vunpack.c.l.b16 %v3997
    %v4074 = vunpack.c.l.b16 %v3998
    %v4075 = vunpack.c.l.b16 %v3999
    %v4076 = vunpack.c.l.b16 %v4000
    %v4077 = vunpack.c.l.b16 %v4001
    %v4078 = vunpack.c.l.b16 %v4002
    %v4079 = vunpack.c.l.b16 %v4003
    %v4080 = vunpack.c.l.b16 %v4004
    %v4081 = vunpack.c.l.b16 %v4005
    %v4082 = vunpack.c.l.b16 %v4006
    %v4083 = vunpack.c.l.b16 %v4007
    %v4084 = vunpack.c.l.b16 %v4008
    %v4085 = vunpack.c.l.b16 %v4009
    %v4086 = vpack.c.b16 %v4071, %v4070
    %v4087 = vpack.c.b16 %v4073, %v4072
    %v4088 = vpack.c.b16 %v4075, %v4074
    %v4089 = vpack.c.b16 %v4077, %v4076
    %v4090 = vpack.c.b16 %v4079, %v4078
    %v4091 = vpack.c.b16 %v4081, %v4080
    %v4092 = vpack.c.b16 %v4083, %v4082
    %v4093 = vpack.c.b16 %v4085, %v4084
    %4102 = vmatprep.subr.bf16.mxu0 0
    %4103 = vmatpush1.bf16.msra.mxu0 %v4086
    %4104 = vmatprep.subr.bf16.mxu0 0
    %4105 = vmatpush1.bf16.msra.mxu0 %v4087
    %4106 = vmatprep.subr.bf16.mxu0 0
    %4107 = vmatpush1.bf16.msra.mxu0 %v4088
    %4108 = vmatprep.subr.bf16.mxu0 0
    %4109 = vmatpush1.bf16.msra.mxu0 %v4089
    %4110 = vmatprep.subr.bf16.mxu0 0
    %4111 = vmatpush1.bf16.msra.mxu0 %v4090
    %4112 = vmatprep.subr.bf16.mxu0 0
    %4113 = vmatpush1.bf16.msra.mxu0 %v4091
    %4114 = vmatprep.subr.bf16.mxu0 0
    %4115 = vmatpush1.bf16.msra.mxu0 %v4092
    %4116 = vmatprep.subr.bf16.mxu0 0
    %4117 = vmatpush1.bf16.msra.mxu0 %v4093
    %4118 = vmatprep.subr.bf16.mxu0 0
    %4119 = vmatpush1.bf16.msra.mxu0 0
    %4120 = vmatprep.subr.bf16.mxu0 0
    %4121 = vmatpush1.bf16.msra.mxu0 0
    %4122 = vmatprep.subr.bf16.mxu0 0
    %4123 = vmatpush1.bf16.msra.mxu0 0
    %4124 = vmatprep.subr.bf16.mxu0 0
    %4125 = vmatpush1.bf16.msra.mxu0 0
    %4126 = vmatprep.subr.bf16.mxu0 0
    %4127 = vmatpush1.bf16.msra.mxu0 0
    %4128 = vmatprep.subr.bf16.mxu0 0
    %4129 = vmatpush1.bf16.msra.mxu0 0
    %4130 = vmatprep.subr.bf16.mxu0 0
    %4131 = vmatpush1.bf16.msra.mxu0 0
    %4132 = vmatprep.subr.bf16.mxu0 0
    %4133 = vmatpush1.bf16.msra.mxu0 0
    %4134 = vmatprep.mubr.bf16.mxu0 0
    %4135 = vmatmul.mubr.bf16.gmra.mrb[0].mxu0 %v4041
    %v4136 = vpop.f32.mrb[0].mxu0
    %v4137 = vadd.f32 0.0, %v4136
    %v4138 = vpop.f32.mrb[0].mxu0
    %v4139 = vpop.f32.mrb[0].mxu0
    %v4140 = vadd.f32 0.0, %v4139
    %v4141 = vpop.f32.mrb[0].mxu0
    %4142 = vmatprep.mubr.bf16.mxu0 0
    %4143 = vmatmul.mubr.bf16.gmra.mrb[0].mxu0 %v4050
    %v4144 = vpop.f32.mrb[0].mxu0
    %v4145 = vadd.f32 0.0, %v4144
    %v4146 = vpop.f32.mrb[0].mxu0
    %v4147 = vpop.f32.mrb[0].mxu0
    %v4148 = vadd.f32 0.0, %v4147
    %v4149 = vpop.f32.mrb[0].mxu0
    %4150 = vmatprep.mubr.bf16.mxu0 0
    %4151 = vmatmul.mubr.bf16.gmra.mrb[0].mxu0 %v4049
    %v4152 = vpop.f32.mrb[0].mxu0
    %v4153 = vadd.f32 0.0, %v4152
    %v4154 = vpop.f32.mrb[0].mxu0
    %v4155 = vpop.f32.mrb[0].mxu0
    %v4156 = vpop.f32.mrb[0].mxu0
    %4157 = vdwg.mxu0
    %v4158 = vpack.c.b16 %v4020, %v4020
    %v4159 = vrot.slane %v4022, 1
    %v4160 = vrot.slane %v4023, 1
    %v4161 = vsel %vm920, %v4159, %v4160
    %v4162 = vrot.slane %v4158, 1
    %v4163 = vsel %vm920, %v4160, %v4162
    %v4183 = vunpack.c.l.b16 %v3976
    %v4184 = vunpack.c.l.b16 %v3977
    %v4185 = vunpack.c.l.b16 %v3978
    %v4186 = vunpack.c.l.b16 %v3979
    %v4187 = vunpack.c.l.b16 %v3980
    %v4188 = vunpack.c.l.b16 %v3981
    %v4189 = vunpack.c.l.b16 %v3982
    %v4190 = vunpack.c.l.b16 %v3983
    %v4191 = vunpack.c.l.b16 %v3984
    %v4192 = vunpack.c.l.b16 %v3985
    %v4193 = vunpack.c.l.b16 %v3986
    %v4194 = vunpack.c.l.b16 %v3987
    %v4195 = vunpack.c.l.b16 %v3988
    %v4196 = vunpack.c.l.b16 %v3989
    %v4197 = vunpack.c.l.b16 %v3990
    %v4198 = vunpack.c.l.b16 %v3991
    %v4199 = vpack.c.b16 %v4184, %v4183
    %v4200 = vpack.c.b16 %v4186, %v4185
    %v4201 = vpack.c.b16 %v4188, %v4187
    %v4202 = vpack.c.b16 %v4190, %v4189
    %v4203 = vpack.c.b16 %v4192, %v4191
    %v4204 = vpack.c.b16 %v4194, %v4193
    %v4205 = vpack.c.b16 %v4196, %v4195
    %v4206 = vpack.c.b16 %v4198, %v4197
    %4215 = vmatprep.subr.bf16.mxu0 0
    %4216 = vmatpush1.bf16.msra.mxu0 %v4199
    %4217 = vmatprep.subr.bf16.mxu0 0
    %4218 = vmatpush1.bf16.msra.mxu0 %v4200
    %4219 = vmatprep.subr.bf16.mxu0 0
    %4220 = vmatpush1.bf16.msra.mxu0 %v4201
    %4221 = vmatprep.subr.bf16.mxu0 0
    %4222 = vmatpush1.bf16.msra.mxu0 %v4202
    %4223 = vmatprep.subr.bf16.mxu0 0
    %4224 = vmatpush1.bf16.msra.mxu0 %v4203
    %4225 = vmatprep.subr.bf16.mxu0 0
    %4226 = vmatpush1.bf16.msra.mxu0 %v4204
    %4227 = vmatprep.subr.bf16.mxu0 0
    %4228 = vmatpush1.bf16.msra.mxu0 %v4205
    %4229 = vmatprep.subr.bf16.mxu0 0
    %4230 = vmatpush1.bf16.msra.mxu0 %v4206
    %4231 = vmatprep.subr.bf16.mxu0 0
    %4232 = vmatpush1.bf16.msra.mxu0 0
    %4233 = vmatprep.subr.bf16.mxu0 0
    %4234 = vmatpush1.bf16.msra.mxu0 0
    %4235 = vmatprep.subr.bf16.mxu0 0
    %4236 = vmatpush1.bf16.msra.mxu0 0
    %4237 = vmatprep.subr.bf16.mxu0 0
    %4238 = vmatpush1.bf16.msra.mxu0 0
    %4239 = vmatprep.subr.bf16.mxu0 0
    %4240 = vmatpush1.bf16.msra.mxu0 0
    %4241 = vmatprep.subr.bf16.mxu0 0
    %4242 = vmatpush1.bf16.msra.mxu0 0
    %4243 = vmatprep.subr.bf16.mxu0 0
    %4244 = vmatpush1.bf16.msra.mxu0 0
    %4245 = vmatprep.subr.bf16.mxu0 0
    %4246 = vmatpush1.bf16.msra.mxu0 0
    %4247 = vmatprep.mubr.bf16.mxu0 0
    %4248 = vmatmul.mubr.bf16.gmra.mrb[0].mxu0 %v4161
    %v4249 = vpop.f32.mrb[0].mxu0
    %v4250 = vadd.f32 %v4137, %v4249
    %v4251 = vpop.f32.mrb[0].mxu0
    %v4252 = vpop.f32.mrb[0].mxu0
    %v4253 = vadd.f32 %v4140, %v4252
    %v4254 = vpop.f32.mrb[0].mxu0
    %4255 = vmatprep.mubr.bf16.mxu0 0
    %4256 = vmatmul.mubr.bf16.gmra.mrb[0].mxu0 %v4163
    %v4257 = vpop.f32.mrb[0].mxu0
    %v4258 = vadd.f32 %v4145, %v4257
    %v4259 = vpop.f32.mrb[0].mxu0
    %v4260 = vpop.f32.mrb[0].mxu0
    %v4261 = vadd.f32 %v4148, %v4260
    %v4262 = vpop.f32.mrb[0].mxu0
    %4263 = vmatprep.mubr.bf16.mxu0 0
    %4264 = vmatmul.mubr.bf16.gmra.mrb[0].mxu0 %v4162
    %v4265 = vpop.f32.mrb[0].mxu0
    %v4266 = vadd.f32 %v4153, %v4265
    %v4267 = vpop.f32.mrb[0].mxu0
    %v4268 = vpop.f32.mrb[0].mxu0
    %v4269 = vpop.f32.mrb[0].mxu0
    %4270 = vdwg.mxu0
    %v4271 = vld [vmem:[#allocation6] sm:$0xc]
    %s4272 = scalar_lea.vmem [#allocation11], 128
    %v4273 = vld [vmem:[%s4272] sm:$0xf]
    %v4274 = vld [vmem:[%s4272 + $0x4] sm:$0xf]
    %v4275 = vld [vmem:[%s4272 + $0x8] sm:$0xf]
    %v4276 = vld [vmem:[%s4272 + $0xc] sm:$0xf]
    %v4277 = vld [vmem:[%s4272 + $0x10] sm:$0xf]
    %v4278 = vld [vmem:[%s4272 + $0x14] sm:$0xf]
    %v4279 = vld [vmem:[%s4272 + $0x18] sm:$0xf]
    %v4280 = vld [vmem:[%s4272 + $0x1c] sm:$0xf]
    %v4281 = vld [vmem:[%s4272 + $0x20] sm:$0xf]
    %v4282 = vld [vmem:[%s4272 + $0x24] sm:$0xf]
    %v4283 = vld [vmem:[%s4272 + $0x28] sm:$0xf]
    %v4284 = vld [vmem:[%s4272 + $0x2c] sm:$0xf]
    %v4285 = vld [vmem:[%s4272 + $0x30] sm:$0xf]
    %v4286 = vld [vmem:[%s4272 + $0x34] sm:$0xf]
    %v4287 = vld [vmem:[%s4272 + $0x38] sm:$0xf]
    %v4288 = vld [vmem:[%s4272 + $0x3c] sm:$0xf]
    %v4290 = vunpack.c.l.b16 %v4271
    %v4291 = vpack.c.b16 %v4017, %v4290
    %v4292 = vrot.slane %v4291, 2
    %v4293 = vrot.slane %v4023, 2
    %v4294 = vsel %vm1562, %v4292, %v4293
    %v4295 = vrot.slane %v4024, 2
    %v4296 = vsel %vm1562, %v4293, %v4295
    %v4316 = vunpack.c.l.b16 %v4273
    %v4317 = vunpack.c.l.b16 %v4274
    %v4318 = vunpack.c.l.b16 %v4275
    %v4319 = vunpack.c.l.b16 %v4276
    %v4320 = vunpack.c.l.b16 %v4277
    %v4321 = vunpack.c.l.b16 %v4278
    %v4322 = vunpack.c.l.b16 %v4279
    %v4323 = vunpack.c.l.b16 %v4280
    %v4324 = vunpack.c.l.b16 %v4281
    %v4325 = vunpack.c.l.b16 %v4282
    %v4326 = vunpack.c.l.b16 %v4283
    %v4327 = vunpack.c.l.b16 %v4284
    %v4328 = vunpack.c.l.b16 %v4285
    %v4329 = vunpack.c.l.b16 %v4286
    %v4330 = vunpack.c.l.b16 %v4287
    %v4331 = vunpack.c.l.b16 %v4288
    %v4332 = vpack.c.b16 %v4317, %v4316
    %v4333 = vpack.c.b16 %v4319, %v4318
    %v4334 = vpack.c.b16 %v4321, %v4320
    %v4335 = vpack.c.b16 %v4323, %v4322
    %v4336 = vpack.c.b16 %v4325, %v4324
    %v4337 = vpack.c.b16 %v4327, %v4326
    %v4338 = vpack.c.b16 %v4329, %v4328
    %v4339 = vpack.c.b16 %v4331, %v4330
    %4348 = vmatprep.subr.bf16.mxu0 0
    %4349 = vmatpush1.bf16.msra.mxu0 %v4332
    %4350 = vmatprep.subr.bf16.mxu0 0
    %4351 = vmatpush1.bf16.msra.mxu0 %v4333
    %4352 = vmatprep.subr.bf16.mxu0 0
    %4353 = vmatpush1.bf16.msra.mxu0 %v4334
    %4354 = vmatprep.subr.bf16.mxu0 0
    %4355 = vmatpush1.bf16.msra.mxu0 %v4335
    %4356 = vmatprep.subr.bf16.mxu0 0
    %4357 = vmatpush1.bf16.msra.mxu0 %v4336
    %4358 = vmatprep.subr.bf16.mxu0 0
    %4359 = vmatpush1.bf16.msra.mxu0 %v4337
    %4360 = vmatprep.subr.bf16.mxu0 0
    %4361 = vmatpush1.bf16.msra.mxu0 %v4338
    %4362 = vmatprep.subr.bf16.mxu0 0
    %4363 = vmatpush1.bf16.msra.mxu0 %v4339
    %4364 = vmatprep.subr.bf16.mxu0 0
    %4365 = vmatpush1.bf16.msra.mxu0 0
    %4366 = vmatprep.subr.bf16.mxu0 0
    %4367 = vmatpush1.bf16.msra.mxu0 0
    %4368 = vmatprep.subr.bf16.mxu0 0
    %4369 = vmatpush1.bf16.msra.mxu0 0
    %4370 = vmatprep.subr.bf16.mxu0 0
    %4371 = vmatpush1.bf16.msra.mxu0 0
    %4372 = vmatprep.subr.bf16.mxu0 0
    %4373 = vmatpush1.bf16.msra.mxu0 0
    %4374 = vmatprep.subr.bf16.mxu0 0
    %4375 = vmatpush1.bf16.msra.mxu0 0
    %4376 = vmatprep.subr.bf16.mxu0 0
    %4377 = vmatpush1.bf16.msra.mxu0 0
    %4378 = vmatprep.subr.bf16.mxu0 0
    %4379 = vmatpush1.bf16.msra.mxu0 0
    %4380 = vmatprep.mubr.bf16.mxu0 0
    %4381 = vmatmul.mubr.bf16.gmra.mrb[0].mxu0 %v4294
    %v4382 = vpop.f32.mrb[0].mxu0
    %v4383 = vadd.f32 0.0, %v4382
    %v4384 = vpop.f32.mrb[0].mxu0
    %v4385 = vpop.f32.mrb[0].mxu0
    %v4386 = vadd.f32 0.0, %v4385
    %v4387 = vpop.f32.mrb[0].mxu0
    %4388 = vmatprep.mubr.bf16.mxu0 0
    %4389 = vmatmul.mubr.bf16.gmra.mrb[0].mxu0 %v4296
    %v4390 = vpop.f32.mrb[0].mxu0
    %v4391 = vadd.f32 0.0, %v4390
    %v4392 = vpop.f32.mrb[0].mxu0
    %v4393 = vpop.f32.mrb[0].mxu0
    %v4394 = vadd.f32 0.0, %v4393
    %v4395 = vpop.f32.mrb[0].mxu0
    %4396 = vmatprep.mubr.bf16.mxu0 0
    %4397 = vmatmul.mubr.bf16.gmra.mrb[0].mxu0 %v4295
    %v4398 = vpop.f32.mrb[0].mxu0
    %v4399 = vadd.f32 0.0, %v4398
    %v4400 = vpop.f32.mrb[0].mxu0
    %v4401 = vpop.f32.mrb[0].mxu0
    %v4402 = vpop.f32.mrb[0].mxu0
    %4403 = vdwg.mxu0
    %v4404 = vadd.f32 %v4250, %v4383
    %v4405 = vadd.f32 %v4253, %v4386
    %v4406 = vadd.f32 %v4258, %v4391
    %v4407 = vadd.f32 %v4261, %v4394
    %v4408 = vadd.f32 %v4266, %v4399
    %v4409 = vld [vmem:[%s11] sm:$0x1]
    %v4411 = vlaneseq
    %v4412 = vshrl.u32 %v4411, 7
    %v4413 = vsub.s32 0, %v4412
    %v4414 = vrot.slane %v4409, %v4413
    %v4416 = vadd.f32 %v4404, %v4414
    %v4417 = vadd.f32 %v4405, %v4414
    %v4418 = vadd.f32 %v4406, %v4414
    %v4419 = vadd.f32 %v4407, %v4414
    %v4420 = vadd.f32 %v4408, %v4414
    %v4421 = vld [vmem:[#allocation5] sm:$0xe]
    %v4422 = vld [vmem:[#allocation5 + $0x4] sm:$0xf]
    %v4423 = vld [vmem:[#allocation5 + $0x8] sm:$0x3]
    %v4424 = vunpack.c.l.bf16 %v4421
    %v4425 = vunpack.c.l.bf16 %v4422
    %v4426 = vunpack.c.l.bf16 %v4423
    %v4430 = vrot.slane %v4424, 3
    %v4431 = vrot.slane %v4425, 3
    %v4432 = vsel %vm3317, %v4430, %v4431
    %v4433 = vrot.slane %v4426, 3
    %v4434 = vsel %vm3317, %v4431, %v4433
    %v4437 = vadd.f32 %v4416, %v4432
    %v4438 = vadd.f32 %v4417, %v4434
    %4439 = vst [vmem:[%s12] sm:$0xff] %v4437
    %4440 = vst [vmem:[%s12 + $0x8] sm:$0xff] %v4438
    %v4441 = vld [vmem:[#allocation5 + $0xc] sm:$0xf]
    %v4442 = vld [vmem:[#allocation5 + $0x10] sm:$0xf]
    %v4443 = vld [vmem:[#allocation5 + $0x14] sm:$0x1]
    %v4444 = vunpack.c.l.bf16 %v4441
    %v4445 = vunpack.c.l.bf16 %v4442
    %v4446 = vunpack.c.l.bf16 %v4443
    %v4450 = vrot.slane %v4444, 3
    %v4451 = vrot.slane %v4445, 3
    %v4452 = vsel %vm3317, %v4450, %v4451
    %v4453 = vrot.slane %v4446, 3
    %v4454 = vsel %vm3317, %v4451, %v4453
    %v4458 = vadd.f32 %v4418, %v4450
    %v4459 = vadd.f32 %v4419, %v4452
    %v4460 = vadd.f32 %v4420, %v4454
    %s4461 = scalar_lea.vmem %s12, 16
    %4462 = vst [vmem:[%s4461 - $0x6] sm:$0xc0] %v4458
    %4463 = vst [vmem:[%s4461 + $0x2] sm:$0xff] %v4459
    %4464 = vst [vmem:[%s4461 + $0xa] sm:$0x3f] %v4460
    // Predicated region
    $region62: #{af_forward.1} parent=1 // pred_check
      _
    $region63: #{af_forward.1} parent=1 // pred_check_branch
      %4466 = sbr.rel (0) target = $region65
    $region64: #{af_forward.1} parent=1 // pred_region
      _
    $region65: #{af_forward.1} parent=1 // pred_fallthru
      _
    // Predicated region
    $region66: #{af_forward.1} parent=1 // pred_check
      _
    $region67: #{af_forward.1} parent=1 // pred_check_branch
      %4468 = sbr.rel (0) target = $region69
    $region68: #{af_forward.1} parent=1 // pred_region
      _
    $region69: #{af_forward.1} parent=1 // pred_fallthru
      _
    %4469 = vsyncpa [#allocation8], 1
    %4470 = vsyncpa [#allocation10], 1

// kernel: af_forward.1
$region0: #{af_forward.1}
  #allocation0 [shape = 'u32[]', space=smem, size = 0x4, offset = 0x4, fixed_abs, tag = 'smem constant byte address 0x4 - core index']
  #allocation1 [shape = 'u32[144,128]{1,0:T(1,128)}', space=vmem, size = 0x12000, scoped, tag = 'internal scratch']
  #allocation2 [shape = 'bf16[44,16]{1,0:T(8,128)(2,1)}', space=vmem, size = 0x3000, scoped, tag = 'scratch operand']
  #allocation3 [shape = 'bf16[44,128]{1,0:T(8,128)(2,1)}', space=vmem, size = 0x3000, scoped, tag = 'scratch operand']
  #allocation4 [shape = 'bf16[44,256]{1,0:T(8,128)(2,1)}', space=vmem, size = 0x6000, scoped, tag = 'scratch operand']
  #allocation5 [shape = 'bf16[44,128]{1,0:T(8,128)(2,1)}', space=vmem, size = 0x3000, scoped, tag = 'scratch operand']
  #allocation6 [shape = 'bf16[44,128]{1,0:T(8,128)(2,1)}', space=vmem, size = 0x3000, scoped, tag = 'scratch operand']
  %s0 = inlined_call_operand.vmem [shape: bf16[2,16,16], index: 0, kind: input, shape index: {}]
  %s1 = inlined_call_operand.vmem [shape: bf16[2,16,128], index: 1, kind: input, shape index: {}]
  %s2 = inlined_call_operand.vmem [shape: bf16[2,16,128], index: 2, kind: input, shape index: {}]
  %s3 = inlined_call_operand.hbm [shape: bf16[7,16,256], index: 3, kind: input, shape index: {}]
  %s4 = inlined_call_operand.vmem [shape: bf16[7,128,256], index: 4, kind: input, shape index: {}]
  %s5 = inlined_call_operand.vmem [shape: f32[1,256], index: 5, kind: input, shape index: {}]
  %s6 = inlined_call_operand.vmem [shape: bf16[3,256,128], index: 6, kind: input, shape index: {}]
  %s7 = inlined_call_operand.vmem [shape: f32[1,128], index: 7, kind: input, shape index: {}]
  %s8 = inlined_call_operand.hbm [shape: bf16[3,128,128], index: 8, kind: input, shape index: {}]
  %s9 = inlined_call_operand.vmem [shape: f32[1,128], index: 9, kind: input, shape index: {}]
  %s10 = inlined_call_operand.hbm [shape: bf16[3,128,128], index: 10, kind: input, shape index: {}]
  %s11 = inlined_call_operand.vmem [shape: f32[1,128], index: 11, kind: input, shape index: {}]
  %s12 = inlined_call_operand.vmem [shape: f32[2,16,128], index: 12, kind: output, shape index: {}]
  %s13 = sld [smem:[#allocation0]]
  $region70: #{af_forward.1} parent=0
    _
  %s15 = ssub.s32 1, %s13
  %s16 = scalar_select 0, %s15, %s13
  $region1: #{af_forward.1} parent=0
    #allocation7 [shape = 'u8[57344]{0}', space=vmem, size = 0xe000, scoped, tag = 'input window, operand 3, single buffered']
    #allocation8 [shape = 's32[1]{0}', space=sflag, size = 0x4, scoped, tag = 'scoped memory for af_forward.1']
    #allocation9 [shape = 'u8[98304]{0}', space=vmem, size = 0x18000, scoped, tag = 'input window, operand 8, single buffered']
    #allocation10 [shape = 's32[1]{0}', space=sflag, size = 0x4, scoped, tag = 'scoped memory for af_forward.1']
    #allocation11 [shape = 'u8[98304]{0}', space=vmem, size = 0x18000, scoped, tag = 'input window, operand 10, single buffered']
    %17 = vsyncpa [#allocation8], 0
    %18 = vsyncpa [#allocation10], 0
    // Predicated region
    $region2: #{af_forward.1} parent=1 // pred_check
      _
    $region3: #{af_forward.1} parent=1 // pred_check_branch
      %20 = sbr.rel (0) target = $region5
    $region4: #{af_forward.1} parent=1 // pred_region
      _
    $region5: #{af_forward.1} parent=1 // pred_fallthru
      _
    // Predicated region
    $region6: #{af_forward.1} parent=1 // pred_check
      _
    $region7: #{af_forward.1} parent=1 // pred_check_branch
      %22 = sbr.rel (0) target = $region9
    $region8: #{af_forward.1} parent=1 // pred_region
      _
    $region9: #{af_forward.1} parent=1 // pred_fallthru
      _
    // Predicated region
    $region10: #{af_forward.1} parent=1 // pred_check
      _
    $region11: #{af_forward.1} parent=1 // pred_check_branch
      %24 = sbr.rel (0) target = $region13
    $region12: #{af_forward.1} parent=1 // pred_region
      _
    $region13: #{af_forward.1} parent=1 // pred_fallthru
      _
    // Predicated region
    $region14: #{af_forward.1} parent=1 // pred_check
      _
    $region15: #{af_forward.1} parent=1 // pred_check_branch
      %26 = sbr.rel (0) target = $region17
    $region16: #{af_forward.1} parent=1 // pred_region
      %s28 = ssub.s32 1792, 1792
      %29 = vsyncadd [#allocation8], %s28
      %s30 = sshll.u32 [#allocation7], 4
      %s31 = int_to_ptr.vmem [resolvable:$true] %s30
      %36 = dma.hbm_to_vmem [thread:$0]  %s3, 1792, %s31, [#allocation8], 128, 128, 8
    $region17: #{af_forward.1} parent=1 // pred_fallthru
      _
    // Predicated region
    $region18: #{af_forward.1} parent=1 // pred_check
      _
    $region19: #{af_forward.1} parent=1 // pred_check_branch
      %38 = sbr.rel (0) target = $region21
    $region20: #{af_forward.1} parent=1 // pred_region
      _
    $region21: #{af_forward.1} parent=1 // pred_fallthru
      _
    // Predicated region
    $region22: #{af_forward.1} parent=1 // pred_check
      _
    $region23: #{af_forward.1} parent=1 // pred_check_branch
      %40 = sbr.rel (0) target = $region25
    $region24: #{af_forward.1} parent=1 // pred_region
      _
    $region25: #{af_forward.1} parent=1 // pred_fallthru
      _
    // Predicated region
    $region26: #{af_forward.1} parent=1 // pred_check
      _
    $region27: #{af_forward.1} parent=1 // pred_check_branch
      %42 = sbr.rel (0) target = $region29
    $region28: #{af_forward.1} parent=1 // pred_region
      _
    $region29: #{af_forward.1} parent=1 // pred_fallthru
      _
    // Predicated region
    $region30: #{af_forward.1} parent=1 // pred_check
      _
    $region31: #{af_forward.1} parent=1 // pred_check_branch
      %44 = sbr.rel (0) target = $region33
    $region32: #{af_forward.1} parent=1 // pred_region
      _
    $region33: #{af_forward.1} parent=1 // pred_fallthru
      _
    // Predicated region
    $region34: #{af_forward.1} parent=1 // pred_check
      _
    $region35: #{af_forward.1} parent=1 // pred_check_branch
      %46 = sbr.rel (0) target = $region37
    $region36: #{af_forward.1} parent=1 // pred_region
      %s48 = ssub.s32 3072, 3072
      %49 = vsyncadd [#allocation10], %s48
      %s50 = sshll.u32 [#allocation9], 4
      %s51 = int_to_ptr.vmem [resolvable:$true] %s50
      %56 = dma.hbm_to_vmem [thread:$0]  %s8, 3072, %s51, [#allocation10], 64, 64, 4
    $region37: #{af_forward.1} parent=1 // pred_fallthru
      _
    // Predicated region
    $region38: #{af_forward.1} parent=1 // pred_check
      _
    $region39: #{af_forward.1} parent=1 // pred_check_branch
      %58 = sbr.rel (0) target = $region41
    $region40: #{af_forward.1} parent=1 // pred_region
      _
    $region41: #{af_forward.1} parent=1 // pred_fallthru
      _
    // Predicated region
    $region42: #{af_forward.1} parent=1 // pred_check
      _
    $region43: #{af_forward.1} parent=1 // pred_check_branch
      %60 = sbr.rel (0) target = $region45
    $region44: #{af_forward.1} parent=1 // pred_region
      %s62 = ssub.s32 3072, 3072
      %63 = vsyncadd [#allocation10], %s62
      %s64 = sshll.u32 [#allocation11], 4
      %s65 = int_to_ptr.vmem [resolvable:$true] %s64
      %70 = dma.hbm_to_vmem [thread:$0]  %s10, 3072, %s65, [#allocation10], 64, 64, 4
    $region45: #{af_forward.1} parent=1 // pred_fallthru
      _
    // Predicated region
    $region46: #{af_forward.1} parent=1 // pred_check
      _
    $region47: #{af_forward.1} parent=1 // pred_check_branch
      %72 = sbr.rel (0) target = $region49
    $region48: #{af_forward.1} parent=1 // pred_region
      _
    $region49: #{af_forward.1} parent=1 // pred_fallthru
      _
    // Predicated region
    $region50: #{af_forward.1} parent=1 // pred_check
      _
    $region51: #{af_forward.1} parent=1 // pred_check_branch
      %74 = sbr.rel (0) target = $region53
    $region52: #{af_forward.1} parent=1 // pred_region
      %75 = dma.done [#allocation8], 1792
    $region53: #{af_forward.1} parent=1 // pred_fallthru
      _
    // Predicated region
    $region54: #{af_forward.1} parent=1 // pred_check
      _
    $region55: #{af_forward.1} parent=1 // pred_check_branch
      %77 = sbr.rel (0) target = $region57
    $region56: #{af_forward.1} parent=1 // pred_region
      %78 = dma.done [#allocation10], 3072
    $region57: #{af_forward.1} parent=1 // pred_fallthru
      _
    // Predicated region
    $region58: #{af_forward.1} parent=1 // pred_check
      _
    $region59: #{af_forward.1} parent=1 // pred_check_branch
      %80 = sbr.rel (0) target = $region61
    $region60: #{af_forward.1} parent=1 // pred_region
      %81 = dma.done [#allocation10], 3072
    $region61: #{af_forward.1} parent=1 // pred_fallthru
      _
    %vm83 = vcmask 123904
    %vm84 = vsmask.f32 1280
    %vm85 = vmand %vm83, %vm84
    %v86 = vld [vmem:[#allocation2] sm:$0x3]
    %v87 = vsel %vm85, 0, %v86
    %88 = vst [vmem:[#allocation2] sm:$0x3] %v87
    %vm89 = vcmask 124929
    %vm90 = vsmask.f32 7942
    %vm91 = vmand %vm89, %vm90
    %v92 = vld [vmem:[#allocation2 + $0x8] sm:$0x6]
    %v93 = vsel %vm91, 0, %v92
    %94 = vst [vmem:[#allocation2 + $0x8] sm:$0x6] %v93
    %vm95 = vcmask 125955
    %96 = vst.msk [vmem:[#allocation2 + $0x8] sm:$0x8] %vm95, 0
    %vm97 = vcmask 122880
    %vm98 = vsmask.f32 256
    %vm99 = vmand %vm97, %vm98
    %v100 = vld [vmem:[#allocation2 + $0xc] sm:$0x1]
    %v101 = vsel %vm99, 0, %v100
    %102 = vst [vmem:[#allocation2 + $0xc] sm:$0x1] %v101
    %vm103 = vsmask.f32 7938
    %vm104 = vmand %vm83, %vm103
    %v105 = vld [vmem:[#allocation2 + $0x14] sm:$0x3]
    %v106 = vsel %vm104, 0, %v105
    %107 = vst [vmem:[#allocation2 + $0x14] sm:$0x3] %v106
    %vm108 = vcmask 1041408
    %vm109 = vmand %vm108, %vm84
    %v110 = vld [vmem:[#allocation3] sm:$0x3]
    %v111 = vsel %vm109, 0, %v110
    %112 = vst [vmem:[#allocation3] sm:$0x3] %v111
    %vm113 = vcmask 1042433
    %vm114 = vmand %vm113, %vm90
    %v115 = vld [vmem:[#allocation3 + $0x8] sm:$0x6]
    %v116 = vsel %vm114, 0, %v115
    %117 = vst [vmem:[#allocation3 + $0x8] sm:$0x6] %v116
    %118 = vst [vmem:[#allocation3 + $0x8] sm:$0x8] 0
    %vm119 = vcmask 1040384
    %vm120 = vmand %vm119, %vm98
    %v121 = vld [vmem:[#allocation3 + $0xc] sm:$0x1]
    %v122 = vsel %vm120, 0, %v121
    %123 = vst [vmem:[#allocation3 + $0xc] sm:$0x1] %v122
    %vm124 = vmand %vm108, %vm103
    %v125 = vld [vmem:[#allocation3 + $0x14] sm:$0x3]
    %v126 = vsel %vm124, 0, %v125
    %127 = vst [vmem:[#allocation3 + $0x14] sm:$0x3] %v126
    %vm128 = vcmask 1045508
    %vm129 = vsmask.f32 5376
    %vm130 = vmand %vm128, %vm129
    %vm131 = vmor %vm130, %vm109
    %v132 = vld [vmem:[#allocation4] sm:$0x33]
    %v133 = vsel %vm131, 0, %v132
    %134 = vst [vmem:[#allocation4] sm:$0x33] %v133
    %vm135 = vcmask 1046533
    %vm136 = vsmask.f32 7958
    %vm137 = vmand %vm135, %vm136
    %vm138 = vmor %vm137, %vm114
    %v139 = vld [vmem:[#allocation4 + $0x10] sm:$0x66]
    %v140 = vsel %vm138, 0, %v139
    %141 = vst [vmem:[#allocation4 + $0x10] sm:$0x66] %v140
    %142 = vst [vmem:[#allocation4 + $0x10] sm:$0x88] 0
    %vm143 = vcmask 1044484
    %vm144 = vsmask.f32 4352
    %vm145 = vmand %vm143, %vm144
    %vm146 = vmor %vm145, %vm120
    %v147 = vld [vmem:[#allocation4 + $0x18] sm:$0x11]
    %v148 = vsel %vm146, 0, %v147
    %149 = vst [vmem:[#allocation4 + $0x18] sm:$0x11] %v148
    %vm150 = vsmask.f32 7954
    %vm151 = vmand %vm128, %vm150
    %vm152 = vmor %vm151, %vm124
    %v153 = vld [vmem:[#allocation4 + $0x28] sm:$0x33]
    %v154 = vsel %vm152, 0, %v153
    %155 = vst [vmem:[#allocation4 + $0x28] sm:$0x33] %v154
    %v156 = vld [vmem:[#allocation5] sm:$0x3]
    %v157 = vsel %vm109, 0, %v156
    %158 = vst [vmem:[#allocation5] sm:$0x3] %v157
    %v159 = vld [vmem:[#allocation5 + $0x8] sm:$0x6]
    %v160 = vsel %vm114, 0, %v159
    %161 = vst [vmem:[#allocation5 + $0x8] sm:$0x6] %v160
    %162 = vst [vmem:[#allocation5 + $0x8] sm:$0x8] 0
    %v163 = vld [vmem:[#allocation5 + $0xc] sm:$0x1]
    %v164 = vsel %vm120, 0, %v163
    %165 = vst [vmem:[#allocation5 + $0xc] sm:$0x1] %v164
    %v166 = vld [vmem:[#allocation5 + $0x14] sm:$0x3]
    %v167 = vsel %vm124, 0, %v166
    %168 = vst [vmem:[#allocation5 + $0x14] sm:$0x3] %v167
    %v169 = vld [vmem:[#allocation6] sm:$0x3]
    %v170 = vsel %vm109, 0, %v169
    %171 = vst [vmem:[#allocation6] sm:$0x3] %v170
    %v172 = vld [vmem:[#allocation6 + $0x8] sm:$0x6]
    %v173 = vsel %vm114, 0, %v172
    %174 = vst [vmem:[#allocation6 + $0x8] sm:$0x6] %v173
    %175 = vst [vmem:[#allocation6 + $0x8] sm:$0x8] 0
    %v176 = vld [vmem:[#allocation6 + $0xc] sm:$0x1]
    %v177 = vsel %vm120, 0, %v176
    %178 = vst [vmem:[#allocation6 + $0xc] sm:$0x1] %v177
    %v179 = vld [vmem:[#allocation6 + $0x14] sm:$0x3]
    %v180 = vsel %vm124, 0, %v179
    %181 = vst [vmem:[#allocation6 + $0x14] sm:$0x3] %v180
    %v182 = vld [vmem:[%s0] sm:$0xf]
    %v183 = vld [vmem:[%s0 + $0x4] sm:$0xf]
    %vm184 = vsmask.f32 5392
    %vm185 = vmor %vm84, %vm184
    %v187 = vshrl.u32 %v182, 16
    %v189 = vrot.slane %v187, 6
    %v190 = vshll.u32 %v182, 16
    %v192 = vrot.slane %v190, 7
    %v193 = vor.u32 %v189, %v192
    %v194 = vrot.slane %v193, 4
    %v196 = vshrl.u32 %v183, 16
    %v198 = vrot.slane %v196, 6
    %v199 = vshll.u32 %v183, 16
    %v201 = vrot.slane %v199, 7
    %v202 = vor.u32 %v198, %v201
    %v203 = vsel %vm185, %v194, %v202
    %v204 = vrot.slane %v202, 4
    %vm208 = vcmask 125953
    %vm209 = vmand %vm208, %vm90
    %v210 = vld [vmem:[#allocation2] sm:$0xe]
    %v211 = vsel %vm209, %v193, %v210
    %212 = vst [vmem:[#allocation2] sm:$0xe] %v211
    %vm213 = vcmask 125952
    %214 = vst.msk [vmem:[#allocation2 + $0x4] sm:$0xf] %vm213, %v203
    %v215 = vld [vmem:[#allocation2 + $0x8] sm:$0x3]
    %v216 = vsel %vm85, %v204, %v215
    %217 = vst [vmem:[#allocation2 + $0x8] sm:$0x3] %v216
    %v218 = vld [vmem:[%s1] sm:$0xf]
    %v219 = vld [vmem:[%s1 + $0x4] sm:$0xf]
    %v221 = vshrl.u32 %v218, 16
    %v223 = vrot.slane %v221, 6
    %v224 = vshll.u32 %v218, 16
    %v226 = vrot.slane %v224, 7
    %v227 = vor.u32 %v223, %v226
    %v228 = vrot.slane %v227, 4
    %v230 = vshrl.u32 %v219, 16
    %v232 = vrot.slane %v230, 6
    %v233 = vshll.u32 %v219, 16
    %v235 = vrot.slane %v233, 7
    %v236 = vor.u32 %v232, %v235
    %v237 = vsel %vm185, %v228, %v236
    %v238 = vrot.slane %v236, 4
    %vm242 = vcmask 1043457
    %vm243 = vmand %vm242, %vm90
    %v244 = vld [vmem:[#allocation3] sm:$0xe]
    %v245 = vsel %vm243, %v227, %v244
    %246 = vst [vmem:[#allocation3] sm:$0xe] %v245
    %247 = vst [vmem:[#allocation3 + $0x4] sm:$0xf] %v237
    %v248 = vld [vmem:[#allocation3 + $0x8] sm:$0x3]
    %v249 = vsel %vm109, %v238, %v248
    %250 = vst [vmem:[#allocation3 + $0x8] sm:$0x3] %v249
    %s251 = scalar_lea.vmem %s0, 8
    %v252 = vld [vmem:[%s251] sm:$0xf]
    %v253 = vld [vmem:[%s251 + $0x4] sm:$0xf]
    %vm254 = vsmask.f32 4368
    %vm255 = vmor %vm98, %vm254
    %v257 = vshrl.u32 %v252, 16
    %v259 = vrot.slane %v257, 7
    %v260 = vshll.u32 %v252, 16
    %v262 = vor.u32 %v259, %v260
    %v263 = vrot.slane %v259, 4
    %v265 = vshrl.u32 %v253, 16
    %v267 = vrot.slane %v265, 7
    %v268 = vshll.u32 %v253, 16
    %v270 = vor.u32 %v267, %v268
    %v271 = vsel %vm255, %v263, %v270
    %v272 = vrot.slane %v267, 4
    %vm276 = vcmask 125952
    %vm277 = vmand %vm276, %vm103
    %v278 = vld [vmem:[#allocation2 + $0xc] sm:$0xf]
    %v279 = vsel %vm277, %v262, %v278
    %280 = vst [vmem:[#allocation2 + $0xc] sm:$0xf] %v279
    %281 = vst.msk [vmem:[#allocation2 + $0x10] sm:$0xf] %vm213, %v271
    %v282 = vld [vmem:[#allocation2 + $0x14] sm:$0x1]
    %v283 = vsel %vm99, %v272, %v282
    %284 = vst [vmem:[#allocation2 + $0x14] sm:$0x1] %v283
    %s285 = scalar_lea.vmem %s1, 8
    %v286 = vld [vmem:[%s285] sm:$0xf]
    %v287 = vld [vmem:[%s285 + $0x4] sm:$0xf]
    %v289 = vshrl.u32 %v286, 16
    %v291 = vrot.slane %v289, 7
    %v292 = vshll.u32 %v286, 16
    %v294 = vor.u32 %v291, %v292
    %v295 = vrot.slane %v291, 4
    %v297 = vshrl.u32 %v287, 16
    %v299 = vrot.slane %v297, 7
    %v300 = vshll.u32 %v287, 16
    %v302 = vor.u32 %v299, %v300
    %v303 = vsel %vm255, %v295, %v302
    %v304 = vrot.slane %v299, 4
    %vm308 = vcmask 1043456
    %vm309 = vmand %vm308, %vm103
    %v310 = vld [vmem:[#allocation3 + $0xc] sm:$0xf]
    %v311 = vsel %vm309, %v294, %v310
    %312 = vst [vmem:[#allocation3 + $0xc] sm:$0xf] %v311
    %313 = vst [vmem:[#allocation3 + $0x10] sm:$0xf] %v303
    %v314 = vld [vmem:[#allocation3 + $0x14] sm:$0x1]
    %v315 = vsel %vm120, %v304, %v314
    %316 = vst [vmem:[#allocation3 + $0x14] sm:$0x1] %v315
    %v317 = vld [vmem:[#allocation2] sm:$0xf]
    %v318 = vld [vmem:[#allocation2 + $0x4] sm:$0xf]
    %v319 = vld [vmem:[#allocation2 + $0x8] sm:$0xf]
    %v320 = vld [vmem:[#allocation2 + $0xc] sm:$0xf]
    %v321 = vld [vmem:[#allocation2 + $0x10] sm:$0x7]
    %v322 = vld [vmem:[#allocation7] sm:$0xff]
    %v323 = vld [vmem:[#allocation7 + $0x8] sm:$0xff]
    %v324 = vld [vmem:[#allocation3] sm:$0xf]
    %v325 = vld [vmem:[#allocation3 + $0x4] sm:$0xf]
    %v326 = vld [vmem:[#allocation3 + $0x8] sm:$0xf]
    %v327 = vld [vmem:[#allocation3 + $0xc] sm:$0xf]
    %v328 = vld [vmem:[#allocation3 + $0x10] sm:$0x7]
    %v329 = vld [vmem:[%s4] sm:$0xff]
    %v330 = vld [vmem:[%s4 + $0x8] sm:$0xff]
    %v331 = vld [vmem:[%s4 + $0x10] sm:$0xff]
    %v332 = vld [vmem:[%s4 + $0x18] sm:$0xff]
    %v333 = vld [vmem:[%s4 + $0x20] sm:$0xff]
    %v334 = vld [vmem:[%s4 + $0x28] sm:$0xff]
    %v335 = vld [vmem:[%s4 + $0x30] sm:$0xff]
    %v336 = vld [vmem:[%s4 + $0x38] sm:$0xff]
    %v337 = vld [vmem:[%s4 + $0x40] sm:$0xff]
    %v338 = vld [vmem:[%s4 + $0x48] sm:$0xff]
    %v339 = vld [vmem:[%s4 + $0x50] sm:$0xff]
    %v340 = vld [vmem:[%s4 + $0x58] sm:$0xff]
    %v341 = vld [vmem:[%s4 + $0x60] sm:$0xff]
    %v342 = vld [vmem:[%s4 + $0x68] sm:$0xff]
    %v343 = vld [vmem:[%s4 + $0x70] sm:$0xff]
    %v344 = vld [vmem:[%s4 + $0x78] sm:$0xff]
    %v350 = vunpack.c.l.b16 %v324
    %v351 = vunpack.c.l.b16 %v325
    %v352 = vunpack.c.l.b16 %v326
    %v353 = vunpack.c.l.b16 %v327
    %v354 = vunpack.c.l.b16 %v328
    %v355 = vpack.c.b16 %v351, %v350
    %v356 = vpack.c.b16 %v353, %v352
    %v357 = vpack.c.b16 %v354, %v354
    %v377 = vunpack.c.l.b16 %v329
    %v378 = vunpack.c.h.b16 %v329
    %v379 = vunpack.c.l.b16 %v330
    %v380 = vunpack.c.h.b16 %v330
    %v381 = vunpack.c.l.b16 %v331
    %v382 = vunpack.c.h.b16 %v331
    %v383 = vunpack.c.l.b16 %v332
    %v384 = vunpack.c.h.b16 %v332
    %v385 = vunpack.c.l.b16 %v333
    %v386 = vunpack.c.h.b16 %v333
    %v387 = vunpack.c.l.b16 %v334
    %v388 = vunpack.c.h.b16 %v334
    %v389 = vunpack.c.l.b16 %v335
    %v390 = vunpack.c.h.b16 %v335
    %v391 = vunpack.c.l.b16 %v336
    %v392 = vunpack.c.h.b16 %v336
    %v393 = vunpack.c.l.b16 %v337
    %v394 = vunpack.c.h.b16 %v337
    %v395 = vunpack.c.l.b16 %v338
    %v396 = vunpack.c.h.b16 %v338
    %v397 = vunpack.c.l.b16 %v339
    %v398 = vunpack.c.h.b16 %v339
    %v399 = vunpack.c.l.b16 %v340
    %v400 = vunpack.c.h.b16 %v340
    %v401 = vunpack.c.l.b16 %v341
    %v402 = vunpack.c.h.b16 %v341
    %v403 = vunpack.c.l.b16 %v342
    %v404 = vunpack.c.h.b16 %v342
    %v405 = vunpack.c.l.b16 %v343
    %v406 = vunpack.c.h.b16 %v343
    %v407 = vunpack.c.l.b16 %v344
    %v408 = vunpack.c.h.b16 %v344
    %v409 = vpack.c.b16 %v379, %v377
    %v410 = vpack.c.b16 %v380, %v378
    %v411 = vpack.c.b16 %v383, %v381
    %v412 = vpack.c.b16 %v384, %v382
    %v413 = vpack.c.b16 %v387, %v385
    %v414 = vpack.c.b16 %v388, %v386
    %v415 = vpack.c.b16 %v391, %v389
    %v416 = vpack.c.b16 %v392, %v390
    %v417 = vpack.c.b16 %v395, %v393
    %v418 = vpack.c.b16 %v396, %v394
    %v419 = vpack.c.b16 %v399, %v397
    %v420 = vpack.c.b16 %v400, %v398
    %v421 = vpack.c.b16 %v403, %v401
    %v422 = vpack.c.b16 %v404, %v402
    %v423 = vpack.c.b16 %v407, %v405
    %v424 = vpack.c.b16 %v408, %v406
    %441 = vmatprep.subr.bf16.mxu0 %v410
    %442 = vmatpush1.bf16.msra.mxu0 %v409
    %443 = vmatprep.subr.bf16.mxu0 %v412
    %444 = vmatpush1.bf16.msra.mxu0 %v411
    %445 = vmatprep.subr.bf16.mxu0 %v414
    %446 = vmatpush1.bf16.msra.mxu0 %v413
    %447 = vmatprep.subr.bf16.mxu0 %v416
    %448 = vmatpush1.bf16.msra.mxu0 %v415
    %449 = vmatprep.subr.bf16.mxu0 %v418
    %450 = vmatpush1.bf16.msra.mxu0 %v417
    %451 = vmatprep.subr.bf16.mxu0 %v420
    %452 = vmatpush1.bf16.msra.mxu0 %v419
    %453 = vmatprep.subr.bf16.mxu0 %v422
    %454 = vmatpush1.bf16.msra.mxu0 %v421
    %455 = vmatprep.subr.bf16.mxu0 %v424
    %456 = vmatpush1.bf16.msra.mxu0 %v423
    %457 = vmatprep.subr.bf16.mxu0 0
    %458 = vmatpush1.bf16.msra.mxu0 0
    %459 = vmatprep.subr.bf16.mxu0 0
    %460 = vmatpush1.bf16.msra.mxu0 0
    %461 = vmatprep.subr.bf16.mxu0 0
    %462 = vmatpush1.bf16.msra.mxu0 0
    %463 = vmatprep.subr.bf16.mxu0 0
    %464 = vmatpush1.bf16.msra.mxu0 0
    %465 = vmatprep.subr.bf16.mxu0 0
    %466 = vmatpush1.bf16.msra.mxu0 0
    %467 = vmatprep.subr.bf16.mxu0 0
    %468 = vmatpush1.bf16.msra.mxu0 0
    %469 = vmatprep.subr.bf16.mxu0 0
    %470 = vmatpush1.bf16.msra.mxu0 0
    %471 = vmatprep.subr.bf16.mxu0 0
    %472 = vmatpush1.bf16.msra.mxu0 0
    %473 = vmatprep.mubr.bf16.mxu0 0
    %474 = vmatmul.mubr.bf16.gmra.mrb[0].mxu0 %v355
    %v475 = vpop.f32.mrb[0].mxu0
    %v476 = vadd.f32 0.0, %v475
    %v477 = vpop.f32.mrb[0].mxu0
    %v478 = vadd.f32 0.0, %v477
    %v479 = vpop.f32.mrb[0].mxu0
    %v480 = vadd.f32 0.0, %v479
    %v481 = vpop.f32.mrb[0].mxu0
    %v482 = vadd.f32 0.0, %v481
    %483 = vmatprep.mubr.bf16.mxu0 0
    %484 = vmatmul.mubr.bf16.gmra.mrb[0].mxu0 %v356
    %v485 = vpop.f32.mrb[0].mxu0
    %v486 = vadd.f32 0.0, %v485
    %v487 = vpop.f32.mrb[0].mxu0
    %v488 = vadd.f32 0.0, %v487
    %v489 = vpop.f32.mrb[0].mxu0
    %v490 = vadd.f32 0.0, %v489
    %v491 = vpop.f32.mrb[0].mxu0
    %v492 = vadd.f32 0.0, %v491
    %493 = vmatprep.mubr.bf16.mxu0 0
    %494 = vmatmul.mubr.bf16.gmra.mrb[0].mxu0 %v357
    %v495 = vpop.f32.mrb[0].mxu0
    %v496 = vadd.f32 0.0, %v495
    %v497 = vpop.f32.mrb[0].mxu0
    %v498 = vadd.f32 0.0, %v497
    %v499 = vpop.f32.mrb[0].mxu0
    %v500 = vpop.f32.mrb[0].mxu0
    %501 = vdwg.mxu0
    %v507 = vunpack.c.l.b16 %v317
    %v508 = vunpack.c.l.b16 %v318
    %v509 = vunpack.c.l.b16 %v319
    %v510 = vunpack.c.l.b16 %v320
    %v511 = vunpack.c.l.b16 %v321
    %v512 = vpack.c.b16 %v508, %v507
    %v513 = vpack.c.b16 %v510, %v509
    %v514 = vpack.c.b16 %v511, %v511
    %v517 = vunpack.c.l.b16 %v322
    %v518 = vunpack.c.h.b16 %v322
    %v519 = vunpack.c.l.b16 %v323
    %v520 = vunpack.c.h.b16 %v323
    %v521 = vpack.c.b16 %v519, %v517
    %v522 = vpack.c.b16 %v520, %v518
    %vm525 = vcmask 130048
    %v527 = vsel %vm525, %v512, 0
    %v530 = vsel %vm525, %v513, 0
    %v533 = vsel %vm525, %v514, 0
    %535 = vmatprep.subr.bf16.mxu0 %v522
    %536 = vmatpush1.bf16.msra.mxu0 %v521
    %537 = vmatprep.subr.bf16.mxu0 0
    %538 = vmatpush1.bf16.msra.mxu0 0
    %539 = vmatprep.subr.bf16.mxu0 0
    %540 = vmatpush1.bf16.msra.mxu0 0
    %541 = vmatprep.subr.bf16.mxu0 0
    %542 = vmatpush1.bf16.msra.mxu0 0
    %543 = vmatprep.subr.bf16.mxu0 0
    %544 = vmatpush1.bf16.msra.mxu0 0
    %545 = vmatprep.subr.bf16.mxu0 0
    %546 = vmatpush1.bf16.msra.mxu0 0
    %547 = vmatprep.subr.bf16.mxu0 0
    %548 = vmatpush1.bf16.msra.mxu0 0
    %549 = vmatprep.subr.bf16.mxu0 0
    %550 = vmatpush1.bf16.msra.mxu0 0
    %551 = vmatprep.subr.bf16.mxu0 0
    %552 = vmatpush1.bf16.msra.mxu0 0
    %553 = vmatprep.subr.bf16.mxu0 0
    %554 = vmatpush1.bf16.msra.mxu0 0
    %555 = vmatprep.subr.bf16.mxu0 0
    %556 = vmatpush1.bf16.msra.mxu0 0
    %557 = vmatprep.subr.bf16.mxu0 0
    %558 = vmatpush1.bf16.msra.mxu0 0
    %559 = vmatprep.subr.bf16.mxu0 0
    %560 = vmatpush1.bf16.msra.mxu0 0
    %561 = vmatprep.subr.bf16.mxu0 0
    %562 = vmatpush1.bf16.msra.mxu0 0
    %563 = vmatprep.subr.bf16.mxu0 0
    %564 = vmatpush1.bf16.msra.mxu0 0
    %565 = vmatprep.subr.bf16.mxu0 0
    %566 = vmatpush1.bf16.msra.mxu0 0
    %567 = vmatprep.mubr.bf16.mxu0 0
    %568 = vmatmul.mubr.bf16.gmra.mrb[0].mxu0 %v527
    %v569 = vpop.f32.mrb[0].mxu0
    %v570 = vadd.f32 %v476, %v569
    %v571 = vpop.f32.mrb[0].mxu0
    %v572 = vadd.f32 %v478, %v571
    %v573 = vpop.f32.mrb[0].mxu0
    %v574 = vadd.f32 %v480, %v573
    %v575 = vpop.f32.mrb[0].mxu0
    %v576 = vadd.f32 %v482, %v575
    %577 = vmatprep.mubr.bf16.mxu0 0
    %578 = vmatmul.mubr.bf16.gmra.mrb[0].mxu0 %v530
    %v579 = vpop.f32.mrb[0].mxu0
    %v580 = vadd.f32 %v486, %v579
    %v581 = vpop.f32.mrb[0].mxu0
    %v582 = vadd.f32 %v488, %v581
    %v583 = vpop.f32.mrb[0].mxu0
    %v584 = vadd.f32 %v490, %v583
    %v585 = vpop.f32.mrb[0].mxu0
    %v586 = vadd.f32 %v492, %v585
    %587 = vmatprep.mubr.bf16.mxu0 0
    %588 = vmatmul.mubr.bf16.gmra.mrb[0].mxu0 %v533
    %v589 = vpop.f32.mrb[0].mxu0
    %v590 = vadd.f32 %v496, %v589
    %v591 = vpop.f32.mrb[0].mxu0
    %v592 = vadd.f32 %v498, %v591
    %v593 = vpop.f32.mrb[0].mxu0
    %v594 = vpop.f32.mrb[0].mxu0
    %595 = vdwg.mxu0
    %v596 = vld [vmem:[#allocation2 + $0x10] sm:$0xf]
    %s597 = scalar_lea.vmem [#allocation7], 16
    %v598 = vld [vmem:[%s597] sm:$0xff]
    %v599 = vld [vmem:[%s597 + $0x8] sm:$0xff]
    %v601 = vunpack.c.l.b16 %v596
    %v602 = vpack.c.b16 %v601, %v601
    %vm603 = vsmask.f32 7424
    %v604 = vshrl.u32 %v512, 16
    %v606 = vshll.u32 %v512, 16
    %v608 = vrot.slane %v606, 1
    %v609 = vor.u32 %v604, %v608
    %v610 = vshll.u32 %v513, 16
    %v612 = vrot.slane %v610, 1
    %v613 = vsel %vm603, %v609, %v612
    %v614 = vshrl.u32 %v513, 16
    %v616 = vor.u32 %v614, %v612
    %v618 = vshll.u32 %v602, 16
    %v620 = vrot.slane %v618, 1
    %v621 = vsel %vm603, %v616, %v620
    %v622 = vshrl.u32 %v602, 16
    %v624 = vor.u32 %v622, %v620
    %v627 = vunpack.c.l.b16 %v598
    %v628 = vunpack.c.h.b16 %v598
    %v629 = vunpack.c.l.b16 %v599
    %v630 = vunpack.c.h.b16 %v599
    %v631 = vpack.c.b16 %v629, %v627
    %v632 = vpack.c.b16 %v630, %v628
    %v636 = vsel %vm525, %v613, 0
    %v639 = vsel %vm525, %v621, 0
    %v642 = vsel %vm525, %v624, 0
    %644 = vmatprep.subr.bf16.mxu0 %v632
    %645 = vmatpush1.bf16.msra.mxu0 %v631
    %646 = vmatprep.subr.bf16.mxu0 0
    %647 = vmatpush1.bf16.msra.mxu0 0
    %648 = vmatprep.subr.bf16.mxu0 0
    %649 = vmatpush1.bf16.msra.mxu0 0
    %650 = vmatprep.subr.bf16.mxu0 0
    %651 = vmatpush1.bf16.msra.mxu0 0
    %652 = vmatprep.subr.bf16.mxu0 0
    %653 = vmatpush1.bf16.msra.mxu0 0
    %654 = vmatprep.subr.bf16.mxu0 0
    %655 = vmatpush1.bf16.msra.mxu0 0
    %656 = vmatprep.subr.bf16.mxu0 0
    %657 = vmatpush1.bf16.msra.mxu0 0
    %658 = vmatprep.subr.bf16.mxu0 0
    %659 = vmatpush1.bf16.msra.mxu0 0
    %660 = vmatprep.subr.bf16.mxu0 0
    %661 = vmatpush1.bf16.msra.mxu0 0
    %662 = vmatprep.subr.bf16.mxu0 0
    %663 = vmatpush1.bf16.msra.mxu0 0
    %664 = vmatprep.subr.bf16.mxu0 0
    %665 = vmatpush1.bf16.msra.mxu0 0
    %666 = vmatprep.subr.bf16.mxu0 0
    %667 = vmatpush1.bf16.msra.mxu0 0
    %668 = vmatprep.subr.bf16.mxu0 0
    %669 = vmatpush1.bf16.msra.mxu0 0
    %670 = vmatprep.subr.bf16.mxu0 0
    %671 = vmatpush1.bf16.msra.mxu0 0
    %672 = vmatprep.subr.bf16.mxu0 0
    %673 = vmatpush1.bf16.msra.mxu0 0
    %674 = vmatprep.subr.bf16.mxu0 0
    %675 = vmatpush1.bf16.msra.mxu0 0
    %676 = vmatprep.mubr.bf16.mxu0 0
    %677 = vmatmul.mubr.bf16.gmra.mrb[0].mxu0 %v636
    %v678 = vpop.f32.mrb[0].mxu0
    %v679 = vadd.f32 0.0, %v678
    %v680 = vpop.f32.mrb[0].mxu0
    %v681 = vadd.f32 0.0, %v680
    %v682 = vpop.f32.mrb[0].mxu0
    %v683 = vadd.f32 0.0, %v682
    %v684 = vpop.f32.mrb[0].mxu0
    %v685 = vadd.f32 0.0, %v684
    %686 = vmatprep.mubr.bf16.mxu0 0
    %687 = vmatmul.mubr.bf16.gmra.mrb[0].mxu0 %v639
    %v688 = vpop.f32.mrb[0].mxu0
    %v689 = vadd.f32 0.0, %v688
    %v690 = vpop.f32.mrb[0].mxu0
    %v691 = vadd.f32 0.0, %v690
    %v692 = vpop.f32.mrb[0].mxu0
    %v693 = vadd.f32 0.0, %v692
    %v694 = vpop.f32.mrb[0].mxu0
    %v695 = vadd.f32 0.0, %v694
    %696 = vmatprep.mubr.bf16.mxu0 0
    %697 = vmatmul.mubr.bf16.gmra.mrb[0].mxu0 %v642
    %v698 = vpop.f32.mrb[0].mxu0
    %v699 = vadd.f32 0.0, %v698
    %v700 = vpop.f32.mrb[0].mxu0
    %v701 = vadd.f32 0.0, %v700
    %v702 = vpop.f32.mrb[0].mxu0
    %v703 = vpop.f32.mrb[0].mxu0
    %704 = vdwg.mxu0
    %v705 = vadd.f32 %v570, %v679
    %v706 = vadd.f32 %v572, %v681
    %v707 = vadd.f32 %v574, %v683
    %v708 = vadd.f32 %v576, %v685
    %v709 = vadd.f32 %v580, %v689
    %v710 = vadd.f32 %v582, %v691
    %v711 = vadd.f32 %v584, %v693
    %v712 = vadd.f32 %v586, %v695
    %v713 = vadd.f32 %v590, %v699
    %v714 = vadd.f32 %v592, %v701
    %v715 = vld [vmem:[#allocation3 + $0x10] sm:$0xf]
    %s716 = scalar_lea.vmem %s4, 128
    %v717 = vld [vmem:[%s716] sm:$0xff]
    %v718 = vld [vmem:[%s716 + $0x8] sm:$0xff]
    %v719 = vld [vmem:[%s716 + $0x10] sm:$0xff]
    %v720 = vld [vmem:[%s716 + $0x18] sm:$0xff]
    %v721 = vld [vmem:[%s716 + $0x20] sm:$0xff]
    %v722 = vld [vmem:[%s716 + $0x28] sm:$0xff]
    %v723 = vld [vmem:[%s716 + $0x30] sm:$0xff]
    %v724 = vld [vmem:[%s716 + $0x38] sm:$0xff]
    %v725 = vld [vmem:[%s716 + $0x40] sm:$0xff]
    %v726 = vld [vmem:[%s716 + $0x48] sm:$0xff]
    %v727 = vld [vmem:[%s716 + $0x50] sm:$0xff]
    %v728 = vld [vmem:[%s716 + $0x58] sm:$0xff]
    %v729 = vld [vmem:[%s716 + $0x60] sm:$0xff]
    %v730 = vld [vmem:[%s716 + $0x68] sm:$0xff]
    %v731 = vld [vmem:[%s716 + $0x70] sm:$0xff]
    %v732 = vld [vmem:[%s716 + $0x78] sm:$0xff]
    %v734 = vunpack.c.l.b16 %v715
    %v735 = vpack.c.b16 %v734, %v734
    %v737 = vshrl.u32 %v355, 16
    %v739 = vshll.u32 %v355, 16
    %v741 = vrot.slane %v739, 1
    %v742 = vor.u32 %v737, %v741
    %v744 = vshll.u32 %v356, 16
    %v746 = vrot.slane %v744, 1
    %v747 = vsel %vm603, %v742, %v746
    %v748 = vshrl.u32 %v356, 16
    %v750 = vor.u32 %v748, %v746
    %v752 = vshll.u32 %v735, 16
    %v754 = vrot.slane %v752, 1
    %v755 = vsel %vm603, %v750, %v754
    %v756 = vshrl.u32 %v735, 16
    %v758 = vor.u32 %v756, %v754
    %v778 = vunpack.c.l.b16 %v717
    %v779 = vunpack.c.h.b16 %v717
    %v780 = vunpack.c.l.b16 %v718
    %v781 = vunpack.c.h.b16 %v718
    %v782 = vunpack.c.l.b16 %v719
    %v783 = vunpack.c.h.b16 %v719
    %v784 = vunpack.c.l.b16 %v720
    %v785 = vunpack.c.h.b16 %v720
    %v786 = vunpack.c.l.b16 %v721
    %v787 = vunpack.c.h.b16 %v721
    %v788 = vunpack.c.l.b16 %v722
    %v789 = vunpack.c.h.b16 %v722
    %v790 = vunpack.c.l.b16 %v723
    %v791 = vunpack.c.h.b16 %v723
    %v792 = vunpack.c.l.b16 %v724
    %v793 = vunpack.c.h.b16 %v724
    %v794 = vunpack.c.l.b16 %v725
    %v795 = vunpack.c.h.b16 %v725
    %v796 = vunpack.c.l.b16 %v726
    %v797 = vunpack.c.h.b16 %v726
    %v798 = vunpack.c.l.b16 %v727
    %v799 = vunpack.c.h.b16 %v727
    %v800 = vunpack.c.l.b16 %v728
    %v801 = vunpack.c.h.b16 %v728
    %v802 = vunpack.c.l.b16 %v729
    %v803 = vunpack.c.h.b16 %v729
    %v804 = vunpack.c.l.b16 %v730
    %v805 = vunpack.c.h.b16 %v730
    %v806 = vunpack.c.l.b16 %v731
    %v807 = vunpack.c.h.b16 %v731
    %v808 = vunpack.c.l.b16 %v732
    %v809 = vunpack.c.h.b16 %v732
    %v810 = vpack.c.b16 %v780, %v778
    %v811 = vpack.c.b16 %v781, %v779
    %v812 = vpack.c.b16 %v784, %v782
    %v813 = vpack.c.b16 %v785, %v783
    %v814 = vpack.c.b16 %v788, %v786
    %v815 = vpack.c.b16 %v789, %v787
    %v816 = vpack.c.b16 %v792, %v790
    %v817 = vpack.c.b16 %v793, %v791
    %v818 = vpack.c.b16 %v796, %v794
    %v819 = vpack.c.b16 %v797, %v795
    %v820 = vpack.c.b16 %v800, %v798
    %v821 = vpack.c.b16 %v801, %v799
    %v822 = vpack.c.b16 %v804, %v802
    %v823 = vpack.c.b16 %v805, %v803
    %v824 = vpack.c.b16 %v808, %v806
    %v825 = vpack.c.b16 %v809, %v807
    %842 = vmatprep.subr.bf16.mxu0 %v811
    %843 = vmatpush1.bf16.msra.mxu0 %v810
    %844 = vmatprep.subr.bf16.mxu0 %v813
    %845 = vmatpush1.bf16.msra.mxu0 %v812
    %846 = vmatprep.subr.bf16.mxu0 %v815
    %847 = vmatpush1.bf16.msra.mxu0 %v814
    %848 = vmatprep.subr.bf16.mxu0 %v817
    %849 = vmatpush1.bf16.msra.mxu0 %v816
    %850 = vmatprep.subr.bf16.mxu0 %v819
    %851 = vmatpush1.bf16.msra.mxu0 %v818
    %852 = vmatprep.subr.bf16.mxu0 %v821
    %853 = vmatpush1.bf16.msra.mxu0 %v820
    %854 = vmatprep.subr.bf16.mxu0 %v823
    %855 = vmatpush1.bf16.msra.mxu0 %v822
    %856 = vmatprep.subr.bf16.mxu0 %v825
    %857 = vmatpush1.bf16.msra.mxu0 %v824
    %858 = vmatprep.subr.bf16.mxu0 0
    %859 = vmatpush1.bf16.msra.mxu0 0
    %860 = vmatprep.subr.bf16.mxu0 0
    %861 = vmatpush1.bf16.msra.mxu0 0
    %862 = vmatprep.subr.bf16.mxu0 0
    %863 = vmatpush1.bf16.msra.mxu0 0
    %864 = vmatprep.subr.bf16.mxu0 0
    %865 = vmatpush1.bf16.msra.mxu0 0
    %866 = vmatprep.subr.bf16.mxu0 0
    %867 = vmatpush1.bf16.msra.mxu0 0
    %868 = vmatprep.subr.bf16.mxu0 0
    %869 = vmatpush1.bf16.msra.mxu0 0
    %870 = vmatprep.subr.bf16.mxu0 0
    %871 = vmatpush1.bf16.msra.mxu0 0
    %872 = vmatprep.subr.bf16.mxu0 0
    %873 = vmatpush1.bf16.msra.mxu0 0
    %874 = vmatprep.mubr.bf16.mxu0 0
    %875 = vmatmul.mubr.bf16.gmra.mrb[0].mxu0 %v747
    %v876 = vpop.f32.mrb[0].mxu0
    %v877 = vadd.f32 0.0, %v876
    %v878 = vpop.f32.mrb[0].mxu0
    %v879 = vadd.f32 0.0, %v878
    %v880 = vpop.f32.mrb[0].mxu0
    %v881 = vadd.f32 0.0, %v880
    %v882 = vpop.f32.mrb[0].mxu0
    %v883 = vadd.f32 0.0, %v882
    %884 = vmatprep.mubr.bf16.mxu0 0
    %885 = vmatmul.mubr.bf16.gmra.mrb[0].mxu0 %v755
    %v886 = vpop.f32.mrb[0].mxu0
    %v887 = vadd.f32 0.0, %v886
    %v888 = vpop.f32.mrb[0].mxu0
    %v889 = vadd.f32 0.0, %v888
    %v890 = vpop.f32.mrb[0].mxu0
    %v891 = vadd.f32 0.0, %v890
    %v892 = vpop.f32.mrb[0].mxu0
    %v893 = vadd.f32 0.0, %v892
    %894 = vmatprep.mubr.bf16.mxu0 0
    %895 = vmatmul.mubr.bf16.gmra.mrb[0].mxu0 %v758
    %v896 = vpop.f32.mrb[0].mxu0
    %v897 = vadd.f32 0.0, %v896
    %v898 = vpop.f32.mrb[0].mxu0
    %v899 = vadd.f32 0.0, %v898
    %v900 = vpop.f32.mrb[0].mxu0
    %v901 = vpop.f32.mrb[0].mxu0
    %902 = vdwg.mxu0
    %v903 = vadd.f32 %v705, %v877
    %v904 = vadd.f32 %v706, %v879
    %v905 = vadd.f32 %v707, %v881
    %v906 = vadd.f32 %v708, %v883
    %v907 = vadd.f32 %v709, %v887
    %v908 = vadd.f32 %v710, %v889
    %v909 = vadd.f32 %v711, %v891
    %v910 = vadd.f32 %v712, %v893
    %v911 = vadd.f32 %v713, %v897
    %v912 = vadd.f32 %v714, %v899
    %v913 = vld [vmem:[#allocation2] sm:$0xe]
    %s914 = scalar_lea.vmem [#allocation7], 32
    %v915 = vld [vmem:[%s914] sm:$0xff]
    %v916 = vld [vmem:[%s914 + $0x8] sm:$0xff]
    %v918 = vunpack.c.l.b16 %v913
    %v919 = vpack.c.b16 %v508, %v918
    %vm920 = vcmask 1046528
    %v921 = vrot.slane %v919, 1
    %v922 = vrot.slane %v513, 1
    %v923 = vsel %vm920, %v921, %v922
    %v924 = vrot.slane %v602, 1
    %v925 = vsel %vm920, %v922, %v924
    %v928 = vunpack.c.l.b16 %v915
    %v929 = vunpack.c.h.b16 %v915
    %v930 = vunpack.c.l.b16 %v916
    %v931 = vunpack.c.h.b16 %v916
    %v932 = vpack.c.b16 %v930, %v928
    %v933 = vpack.c.b16 %v931, %v929
    %v937 = vsel %vm525, %v923, 0
    %v940 = vsel %vm525, %v925, 0
    %v943 = vsel %vm525, %v924, 0
    %945 = vmatprep.subr.bf16.mxu0 %v933
    %946 = vmatpush1.bf16.msra.mxu0 %v932
    %947 = vmatprep.subr.bf16.mxu0 0
    %948 = vmatpush1.bf16.msra.mxu0 0
    %949 = vmatprep.subr.bf16.mxu0 0
    %950 = vmatpush1.bf16.msra.mxu0 0
    %951 = vmatprep.subr.bf16.mxu0 0
    %952 = vmatpush1.bf16.msra.mxu0 0
    %953 = vmatprep.subr.bf16.mxu0 0
    %954 = vmatpush1.bf16.msra.mxu0 0
    %955 = vmatprep.subr.bf16.mxu0 0
    %956 = vmatpush1.bf16.msra.mxu0 0
    %957 = vmatprep.subr.bf16.mxu0 0
    %958 = vmatpush1.bf16.msra.mxu0 0
    %959 = vmatprep.subr.bf16.mxu0 0
    %960 = vmatpush1.bf16.msra.mxu0 0
    %961 = vmatprep.subr.bf16.mxu0 0
    %962 = vmatpush1.bf16.msra.mxu0 0
    %963 = vmatprep.subr.bf16.mxu0 0
    %964 = vmatpush1.bf16.msra.mxu0 0
    %965 = vmatprep.subr.bf16.mxu0 0
    %966 = vmatpush1.bf16.msra.mxu0 0
    %967 = vmatprep.subr.bf16.mxu0 0
    %968 = vmatpush1.bf16.msra.mxu0 0
    %969 = vmatprep.subr.bf16.mxu0 0
    %970 = vmatpush1.bf16.msra.mxu0 0
    %971 = vmatprep.subr.bf16.mxu0 0
    %972 = vmatpush1.bf16.msra.mxu0 0
    %973 = vmatprep.subr.bf16.mxu0 0
    %974 = vmatpush1.bf16.msra.mxu0 0
    %975 = vmatprep.subr.bf16.mxu0 0
    %976 = vmatpush1.bf16.msra.mxu0 0
    %977 = vmatprep.mubr.bf16.mxu0 0
    %978 = vmatmul.mubr.bf16.gmra.mrb[0].mxu0 %v937
    %v979 = vpop.f32.mrb[0].mxu0
    %v980 = vadd.f32 0.0, %v979
    %v981 = vpop.f32.mrb[0].mxu0
    %v982 = vadd.f32 0.0, %v981
    %v983 = vpop.f32.mrb[0].mxu0
    %v984 = vadd.f32 0.0, %v983
    %v985 = vpop.f32.mrb[0].mxu0
    %v986 = vadd.f32 0.0, %v985
    %987 = vmatprep.mubr.bf16.mxu0 0
    %988 = vmatmul.mubr.bf16.gmra.mrb[0].mxu0 %v940
    %v989 = vpop.f32.mrb[0].mxu0
    %v990 = vadd.f32 0.0, %v989
    %v991 = vpop.f32.mrb[0].mxu0
    %v992 = vadd.f32 0.0, %v991
    %v993 = vpop.f32.mrb[0].mxu0
    %v994 = vadd.f32 0.0, %v993
    %v995 = vpop.f32.mrb[0].mxu0
    %v996 = vadd.f32 0.0, %v995
    %997 = vmatprep.mubr.bf16.mxu0 0
    %998 = vmatmul.mubr.bf16.gmra.mrb[0].mxu0 %v943
    %v999 = vpop.f32.mrb[0].mxu0
    %v1000 = vadd.f32 0.0, %v999
    %v1001 = vpop.f32.mrb[0].mxu0
    %v1002 = vadd.f32 0.0, %v1001
    %v1003 = vpop.f32.mrb[0].mxu0
    %v1004 = vpop.f32.mrb[0].mxu0
    %1005 = vdwg.mxu0
    %v1006 = vadd.f32 %v903, %v980
    %v1007 = vadd.f32 %v904, %v982
    %v1008 = vadd.f32 %v905, %v984
    %v1009 = vadd.f32 %v906, %v986
    %v1010 = vadd.f32 %v907, %v990
    %v1011 = vadd.f32 %v908, %v992
    %v1012 = vadd.f32 %v909, %v994
    %v1013 = vadd.f32 %v910, %v996
    %v1014 = vadd.f32 %v911, %v1000
    %v1015 = vadd.f32 %v912, %v1002
    %v1016 = vld [vmem:[#allocation3] sm:$0xe]
    %s1017 = scalar_lea.vmem %s4, 256
    %v1018 = vld [vmem:[%s1017] sm:$0xff]
    %v1019 = vld [vmem:[%s1017 + $0x8] sm:$0xff]
    %v1020 = vld [vmem:[%s1017 + $0x10] sm:$0xff]
    %v1021 = vld [vmem:[%s1017 + $0x18] sm:$0xff]
    %v1022 = vld [vmem:[%s1017 + $0x20] sm:$0xff]
    %v1023 = vld [vmem:[%s1017 + $0x28] sm:$0xff]
    %v1024 = vld [vmem:[%s1017 + $0x30] sm:$0xff]
    %v1025 = vld [vmem:[%s1017 + $0x38] sm:$0xff]
    %v1026 = vld [vmem:[%s1017 + $0x40] sm:$0xff]
    %v1027 = vld [vmem:[%s1017 + $0x48] sm:$0xff]
    %v1028 = vld [vmem:[%s1017 + $0x50] sm:$0xff]
    %v1029 = vld [vmem:[%s1017 + $0x58] sm:$0xff]
    %v1030 = vld [vmem:[%s1017 + $0x60] sm:$0xff]
    %v1031 = vld [vmem:[%s1017 + $0x68] sm:$0xff]
    %v1032 = vld [vmem:[%s1017 + $0x70] sm:$0xff]
    %v1033 = vld [vmem:[%s1017 + $0x78] sm:$0xff]
    %v1035 = vunpack.c.l.b16 %v1016
    %v1036 = vpack.c.b16 %v351, %v1035
    %v1037 = vrot.slane %v1036, 1
    %v1038 = vrot.slane %v356, 1
    %v1039 = vsel %vm920, %v1037, %v1038
    %v1040 = vrot.slane %v735, 1
    %v1041 = vsel %vm920, %v1038, %v1040
    %v1061 = vunpack.c.l.b16 %v1018
    %v1062 = vunpack.c.h.b16 %v1018
    %v1063 = vunpack.c.l.b16 %v1019
    %v1064 = vunpack.c.h.b16 %v1019
    %v1065 = vunpack.c.l.b16 %v1020
    %v1066 = vunpack.c.h.b16 %v1020
    %v1067 = vunpack.c.l.b16 %v1021
    %v1068 = vunpack.c.h.b16 %v1021
    %v1069 = vunpack.c.l.b16 %v1022
    %v1070 = vunpack.c.h.b16 %v1022
    %v1071 = vunpack.c.l.b16 %v1023
    %v1072 = vunpack.c.h.b16 %v1023
    %v1073 = vunpack.c.l.b16 %v1024
    %v1074 = vunpack.c.h.b16 %v1024
    %v1075 = vunpack.c.l.b16 %v1025
    %v1076 = vunpack.c.h.b16 %v1025
    %v1077 = vunpack.c.l.b16 %v1026
    %v1078 = vunpack.c.h.b16 %v1026
    %v1079 = vunpack.c.l.b16 %v1027
    %v1080 = vunpack.c.h.b16 %v1027
    %v1081 = vunpack.c.l.b16 %v1028
    %v1082 = vunpack.c.h.b16 %v1028
    %v1083 = vunpack.c.l.b16 %v1029
    %v1084 = vunpack.c.h.b16 %v1029
    %v1085 = vunpack.c.l.b16 %v1030
    %v1086 = vunpack.c.h.b16 %v1030
    %v1087 = vunpack.c.l.b16 %v1031
    %v1088 = vunpack.c.h.b16 %v1031
    %v1089 = vunpack.c.l.b16 %v1032
    %v1090 = vunpack.c.h.b16 %v1032
    %v1091 = vunpack.c.l.b16 %v1033
    %v1092 = vunpack.c.h.b16 %v1033
    %v1093 = vpack.c.b16 %v1063, %v1061
    %v1094 = vpack.c.b16 %v1064, %v1062
    %v1095 = vpack.c.b16 %v1067, %v1065
    %v1096 = vpack.c.b16 %v1068, %v1066
    %v1097 = vpack.c.b16 %v1071, %v1069
    %v1098 = vpack.c.b16 %v1072, %v1070
    %v1099 = vpack.c.b16 %v1075, %v1073
    %v1100 = vpack.c.b16 %v1076, %v1074
    %v1101 = vpack.c.b16 %v1079, %v1077
    %v1102 = vpack.c.b16 %v1080, %v1078
    %v1103 = vpack.c.b16 %v1083, %v1081
    %v1104 = vpack.c.b16 %v1084, %v1082
    %v1105 = vpack.c.b16 %v1087, %v1085
    %v1106 = vpack.c.b16 %v1088, %v1086
    %v1107 = vpack.c.b16 %v1091, %v1089
    %v1108 = vpack.c.b16 %v1092, %v1090
    %1125 = vmatprep.subr.bf16.mxu0 %v1094
    %1126 = vmatpush1.bf16.msra.mxu0 %v1093
    %1127 = vmatprep.subr.bf16.mxu0 %v1096
    %1128 = vmatpush1.bf16.msra.mxu0 %v1095
    %1129 = vmatprep.subr.bf16.mxu0 %v1098
    %1130 = vmatpush1.bf16.msra.mxu0 %v1097
    %1131 = vmatprep.subr.bf16.mxu0 %v1100
    %1132 = vmatpush1.bf16.msra.mxu0 %v1099
    %1133 = vmatprep.subr.bf16.mxu0 %v1102
    %1134 = vmatpush1.bf16.msra.mxu0 %v1101
    %1135 = vmatprep.subr.bf16.mxu0 %v1104
    %1136 = vmatpush1.bf16.msra.mxu0 %v1103
    %1137 = vmatprep.subr.bf16.mxu0 %v1106
    %1138 = vmatpush1.bf16.msra.mxu0 %v1105
    %1139 = vmatprep.subr.bf16.mxu0 %v1108
    %1140 = vmatpush1.bf16.msra.mxu0 %v1107
    %1141 = vmatprep.subr.bf16.mxu0 0
    %1142 = vmatpush1.bf16.msra.mxu0 0
    %1143 = vmatprep.subr.bf16.mxu0 0
    %1144 = vmatpush1.bf16.msra.mxu0 0
    %1145 = vmatprep.subr.bf16.mxu0 0
    %1146 = vmatpush1.bf16.msra.mxu0 0
    %1147 = vmatprep.subr.bf16.mxu0 0
    %1148 = vmatpush1.bf16.msra.mxu0 0
    %1149 = vmatprep.subr.bf16.mxu0 0
    %1150 = vmatpush1.bf16.msra.mxu0 0
    %1151 = vmatprep.subr.bf16.mxu0 0
    %1152 = vmatpush1.bf16.msra.mxu0 0
    %1153 = vmatprep.subr.bf16.mxu0 0
    %1154 = vmatpush1.bf16.msra.mxu0 0
    %1155 = vmatprep.subr.bf16.mxu0 0
    %1156 = vmatpush1.bf16.msra.mxu0 0
    %1157 = vmatprep.mubr.bf16.mxu0 0
    %1158 = vmatmul.mubr.bf16.gmra.mrb[0].mxu0 %v1039
    %v1159 = vpop.f32.mrb[0].mxu0
    %v1160 = vadd.f32 0.0, %v1159
    %v1161 = vpop.f32.mrb[0].mxu0
    %v1162 = vadd.f32 0.0, %v1161
    %v1163 = vpop.f32.mrb[0].mxu0
    %v1164 = vadd.f32 0.0, %v1163
    %v1165 = vpop.f32.mrb[0].mxu0
    %v1166 = vadd.f32 0.0, %v1165
    %1167 = vmatprep.mubr.bf16.mxu0 0
    %1168 = vmatmul.mubr.bf16.gmra.mrb[0].mxu0 %v1041
    %v1169 = vpop.f32.mrb[0].mxu0
    %v1170 = vadd.f32 0.0, %v1169
    %v1171 = vpop.f32.mrb[0].mxu0
    %v1172 = vadd.f32 0.0, %v1171
    %v1173 = vpop.f32.mrb[0].mxu0
    %v1174 = vadd.f32 0.0, %v1173
    %v1175 = vpop.f32.mrb[0].mxu0
    %v1176 = vadd.f32 0.0, %v1175
    %1177 = vmatprep.mubr.bf16.mxu0 0
    %1178 = vmatmul.mubr.bf16.gmra.mrb[0].mxu0 %v1040
    %v1179 = vpop.f32.mrb[0].mxu0
    %v1180 = vadd.f32 0.0, %v1179
    %v1181 = vpop.f32.mrb[0].mxu0
    %v1182 = vadd.f32 0.0, %v1181
    %v1183 = vpop.f32.mrb[0].mxu0
    %v1184 = vpop.f32.mrb[0].mxu0
    %1185 = vdwg.mxu0
    %v1186 = vadd.f32 %v1006, %v1160
    %v1187 = vadd.f32 %v1007, %v1162
    %v1188 = vadd.f32 %v1008, %v1164
    %v1189 = vadd.f32 %v1009, %v1166
    %v1190 = vadd.f32 %v1010, %v1170
    %v1191 = vadd.f32 %v1011, %v1172
    %v1192 = vadd.f32 %v1012, %v1174
    %v1193 = vadd.f32 %v1013, %v1176
    %v1194 = vadd.f32 %v1014, %v1180
    %v1195 = vadd.f32 %v1015, %v1182
    %v1196 = vld [vmem:[#allocation2] sm:$0xe]
    %v1197 = vld [vmem:[#allocation2 + $0x4] sm:$0xf]
    %v1198 = vld [vmem:[#allocation2 + $0x8] sm:$0xf]
    %v1199 = vld [vmem:[#allocation2 + $0xc] sm:$0xf]
    %v1200 = vld [vmem:[#allocation2 + $0x10] sm:$0xf]
    %v1201 = vld [vmem:[#allocation2 + $0x14] sm:$0x1]
    %s1202 = scalar_lea.vmem [#allocation7], 48
    %v1203 = vld [vmem:[%s1202] sm:$0xff]
    %v1204 = vld [vmem:[%s1202 + $0x8] sm:$0xff]
    %v1211 = vunpack.c.l.b16 %v1196
    %v1212 = vunpack.c.l.b16 %v1197
    %v1213 = vunpack.c.l.b16 %v1198
    %v1214 = vunpack.c.l.b16 %v1199
    %v1215 = vunpack.c.l.b16 %v1200
    %v1216 = vunpack.c.l.b16 %v1201
    %v1217 = vpack.c.b16 %v1212, %v1211
    %v1218 = vpack.c.b16 %v1214, %v1213
    %v1219 = vpack.c.b16 %v1216, %v1215
    %vm1220 = vsmask.f32 6400
    %v1222 = vshrl.u32 %v1217, 16
    %v1224 = vrot.slane %v1222, 1
    %v1225 = vshll.u32 %v1217, 16
    %v1227 = vrot.slane %v1225, 2
    %v1228 = vor.u32 %v1224, %v1227
    %v1230 = vshrl.u32 %v1218, 16
    %v1232 = vrot.slane %v1230, 1
    %v1233 = vshll.u32 %v1218, 16
    %v1235 = vrot.slane %v1233, 2
    %v1236 = vor.u32 %v1232, %v1235
    %v1237 = vsel %vm1220, %v1228, %v1236
    %v1239 = vshrl.u32 %v1219, 16
    %v1241 = vrot.slane %v1239, 1
    %v1242 = vshll.u32 %v1219, 16
    %v1244 = vrot.slane %v1242, 2
    %v1245 = vor.u32 %v1241, %v1244
    %v1246 = vsel %vm1220, %v1236, %v1245
    %v1249 = vunpack.c.l.b16 %v1203
    %v1250 = vunpack.c.h.b16 %v1203
    %v1251 = vunpack.c.l.b16 %v1204
    %v1252 = vunpack.c.h.b16 %v1204
    %v1253 = vpack.c.b16 %v1251, %v1249
    %v1254 = vpack.c.b16 %v1252, %v1250
    %v1258 = vsel %vm525, %v1237, 0
    %v1261 = vsel %vm525, %v1246, 0
    %v1264 = vsel %vm525, %v1245, 0
    %1266 = vmatprep.subr.bf16.mxu0 %v1254
    %1267 = vmatpush1.bf16.msra.mxu0 %v1253
    %1268 = vmatprep.subr.bf16.mxu0 0
    %1269 = vmatpush1.bf16.msra.mxu0 0
    %1270 = vmatprep.subr.bf16.mxu0 0
    %1271 = vmatpush1.bf16.msra.mxu0 0
    %1272 = vmatprep.subr.bf16.mxu0 0
    %1273 = vmatpush1.bf16.msra.mxu0 0
    %1274 = vmatprep.subr.bf16.mxu0 0
    %1275 = vmatpush1.bf16.msra.mxu0 0
    %1276 = vmatprep.subr.bf16.mxu0 0
    %1277 = vmatpush1.bf16.msra.mxu0 0
    %1278 = vmatprep.subr.bf16.mxu0 0
    %1279 = vmatpush1.bf16.msra.mxu0 0
    %1280 = vmatprep.subr.bf16.mxu0 0
    %1281 = vmatpush1.bf16.msra.mxu0 0
    %1282 = vmatprep.subr.bf16.mxu0 0
    %1283 = vmatpush1.bf16.msra.mxu0 0
    %1284 = vmatprep.subr.bf16.mxu0 0
    %1285 = vmatpush1.bf16.msra.mxu0 0
    %1286 = vmatprep.subr.bf16.mxu0 0
    %1287 = vmatpush1.bf16.msra.mxu0 0
    %1288 = vmatprep.subr.bf16.mxu0 0
    %1289 = vmatpush1.bf16.msra.mxu0 0
    %1290 = vmatprep.subr.bf16.mxu0 0
    %1291 = vmatpush1.bf16.msra.mxu0 0
    %1292 = vmatprep.subr.bf16.mxu0 0
    %1293 = vmatpush1.bf16.msra.mxu0 0
    %1294 = vmatprep.subr.bf16.mxu0 0
    %1295 = vmatpush1.bf16.msra.mxu0 0
    %1296 = vmatprep.subr.bf16.mxu0 0
    %1297 = vmatpush1.bf16.msra.mxu0 0
    %1298 = vmatprep.mubr.bf16.mxu0 0
    %1299 = vmatmul.mubr.bf16.gmra.mrb[0].mxu0 %v1258
    %v1300 = vpop.f32.mrb[0].mxu0
    %v1301 = vadd.f32 0.0, %v1300
    %v1302 = vpop.f32.mrb[0].mxu0
    %v1303 = vadd.f32 0.0, %v1302
    %v1304 = vpop.f32.mrb[0].mxu0
    %v1305 = vadd.f32 0.0, %v1304
    %v1306 = vpop.f32.mrb[0].mxu0
    %v1307 = vadd.f32 0.0, %v1306
    %1308 = vmatprep.mubr.bf16.mxu0 0
    %1309 = vmatmul.mubr.bf16.gmra.mrb[0].mxu0 %v1261
    %v1310 = vpop.f32.mrb[0].mxu0
    %v1311 = vadd.f32 0.0, %v1310
    %v1312 = vpop.f32.mrb[0].mxu0
    %v1313 = vadd.f32 0.0, %v1312
    %v1314 = vpop.f32.mrb[0].mxu0
    %v1315 = vadd.f32 0.0, %v1314
    %v1316 = vpop.f32.mrb[0].mxu0
    %v1317 = vadd.f32 0.0, %v1316
    %1318 = vmatprep.mubr.bf16.mxu0 0
    %1319 = vmatmul.mubr.bf16.gmra.mrb[0].mxu0 %v1264
    %v1320 = vpop.f32.mrb[0].mxu0
    %v1321 = vadd.f32 0.0, %v1320
    %v1322 = vpop.f32.mrb[0].mxu0
    %v1323 = vadd.f32 0.0, %v1322
    %v1324 = vpop.f32.mrb[0].mxu0
    %v1325 = vpop.f32.mrb[0].mxu0
    %1326 = vdwg.mxu0
    %v1327 = vadd.f32 %v1186, %v1301
    %v1328 = vadd.f32 %v1187, %v1303
    %v1329 = vadd.f32 %v1188, %v1305
    %v1330 = vadd.f32 %v1189, %v1307
    %v1331 = vadd.f32 %v1190, %v1311
    %v1332 = vadd.f32 %v1191, %v1313
    %v1333 = vadd.f32 %v1192, %v1315
    %v1334 = vadd.f32 %v1193, %v1317
    %v1335 = vadd.f32 %v1194, %v1321
    %v1336 = vadd.f32 %v1195, %v1323
    %v1337 = vld [vmem:[#allocation3] sm:$0xe]
    %v1338 = vld [vmem:[#allocation3 + $0x4] sm:$0xf]
    %v1339 = vld [vmem:[#allocation3 + $0x8] sm:$0xf]
    %v1340 = vld [vmem:[#allocation3 + $0xc] sm:$0xf]
    %v1341 = vld [vmem:[#allocation3 + $0x10] sm:$0xf]
    %v1342 = vld [vmem:[#allocation3 + $0x14] sm:$0x1]
    %s1343 = scalar_lea.vmem %s4, 384
    %v1344 = vld [vmem:[%s1343] sm:$0xff]
    %v1345 = vld [vmem:[%s1343 + $0x8] sm:$0xff]
    %v1346 = vld [vmem:[%s1343 + $0x10] sm:$0xff]
    %v1347 = vld [vmem:[%s1343 + $0x18] sm:$0xff]
    %v1348 = vld [vmem:[%s1343 + $0x20] sm:$0xff]
    %v1349 = vld [vmem:[%s1343 + $0x28] sm:$0xff]
    %v1350 = vld [vmem:[%s1343 + $0x30] sm:$0xff]
    %v1351 = vld [vmem:[%s1343 + $0x38] sm:$0xff]
    %v1352 = vld [vmem:[%s1343 + $0x40] sm:$0xff]
    %v1353 = vld [vmem:[%s1343 + $0x48] sm:$0xff]
    %v1354 = vld [vmem:[%s1343 + $0x50] sm:$0xff]
    %v1355 = vld [vmem:[%s1343 + $0x58] sm:$0xff]
    %v1356 = vld [vmem:[%s1343 + $0x60] sm:$0xff]
    %v1357 = vld [vmem:[%s1343 + $0x68] sm:$0xff]
    %v1358 = vld [vmem:[%s1343 + $0x70] sm:$0xff]
    %v1359 = vld [vmem:[%s1343 + $0x78] sm:$0xff]
    %v1366 = vunpack.c.l.b16 %v1337
    %v1367 = vunpack.c.l.b16 %v1338
    %v1368 = vunpack.c.l.b16 %v1339
    %v1369 = vunpack.c.l.b16 %v1340
    %v1370 = vunpack.c.l.b16 %v1341
    %v1371 = vunpack.c.l.b16 %v1342
    %v1372 = vpack.c.b16 %v1367, %v1366
    %v1373 = vpack.c.b16 %v1369, %v1368
    %v1374 = vpack.c.b16 %v1371, %v1370
    %v1376 = vshrl.u32 %v1372, 16
    %v1378 = vrot.slane %v1376, 1
    %v1379 = vshll.u32 %v1372, 16
    %v1381 = vrot.slane %v1379, 2
    %v1382 = vor.u32 %v1378, %v1381
    %v1384 = vshrl.u32 %v1373, 16
    %v1386 = vrot.slane %v1384, 1
    %v1387 = vshll.u32 %v1373, 16
    %v1389 = vrot.slane %v1387, 2
    %v1390 = vor.u32 %v1386, %v1389
    %v1391 = vsel %vm1220, %v1382, %v1390
    %v1393 = vshrl.u32 %v1374, 16
    %v1395 = vrot.slane %v1393, 1
    %v1396 = vshll.u32 %v1374, 16
    %v1398 = vrot.slane %v1396, 2
    %v1399 = vor.u32 %v1395, %v1398
    %v1400 = vsel %vm1220, %v1390, %v1399
    %v1420 = vunpack.c.l.b16 %v1344
    %v1421 = vunpack.c.h.b16 %v1344
    %v1422 = vunpack.c.l.b16 %v1345
    %v1423 = vunpack.c.h.b16 %v1345
    %v1424 = vunpack.c.l.b16 %v1346
    %v1425 = vunpack.c.h.b16 %v1346
    %v1426 = vunpack.c.l.b16 %v1347
    %v1427 = vunpack.c.h.b16 %v1347
    %v1428 = vunpack.c.l.b16 %v1348
    %v1429 = vunpack.c.h.b16 %v1348
    %v1430 = vunpack.c.l.b16 %v1349
    %v1431 = vunpack.c.h.b16 %v1349
    %v1432 = vunpack.c.l.b16 %v1350
    %v1433 = vunpack.c.h.b16 %v1350
    %v1434 = vunpack.c.l.b16 %v1351
    %v1435 = vunpack.c.h.b16 %v1351
    %v1436 = vunpack.c.l.b16 %v1352
    %v1437 = vunpack.c.h.b16 %v1352
    %v1438 = vunpack.c.l.b16 %v1353
    %v1439 = vunpack.c.h.b16 %v1353
    %v1440 = vunpack.c.l.b16 %v1354
    %v1441 = vunpack.c.h.b16 %v1354
    %v1442 = vunpack.c.l.b16 %v1355
    %v1443 = vunpack.c.h.b16 %v1355
    %v1444 = vunpack.c.l.b16 %v1356
    %v1445 = vunpack.c.h.b16 %v1356
    %v1446 = vunpack.c.l.b16 %v1357
    %v1447 = vunpack.c.h.b16 %v1357
    %v1448 = vunpack.c.l.b16 %v1358
    %v1449 = vunpack.c.h.b16 %v1358
    %v1450 = vunpack.c.l.b16 %v1359
    %v1451 = vunpack.c.h.b16 %v1359
    %v1452 = vpack.c.b16 %v1422, %v1420
    %v1453 = vpack.c.b16 %v1423, %v1421
    %v1454 = vpack.c.b16 %v1426, %v1424
    %v1455 = vpack.c.b16 %v1427, %v1425
    %v1456 = vpack.c.b16 %v1430, %v1428
    %v1457 = vpack.c.b16 %v1431, %v1429
    %v1458 = vpack.c.b16 %v1434, %v1432
    %v1459 = vpack.c.b16 %v1435, %v1433
    %v1460 = vpack.c.b16 %v1438, %v1436
    %v1461 = vpack.c.b16 %v1439, %v1437
    %v1462 = vpack.c.b16 %v1442, %v1440
    %v1463 = vpack.c.b16 %v1443, %v1441
    %v1464 = vpack.c.b16 %v1446, %v1444
    %v1465 = vpack.c.b16 %v1447, %v1445
    %v1466 = vpack.c.b16 %v1450, %v1448
    %v1467 = vpack.c.b16 %v1451, %v1449
    %1484 = vmatprep.subr.bf16.mxu0 %v1453
    %1485 = vmatpush1.bf16.msra.mxu0 %v1452
    %1486 = vmatprep.subr.bf16.mxu0 %v1455
    %1487 = vmatpush1.bf16.msra.mxu0 %v1454
    %1488 = vmatprep.subr.bf16.mxu0 %v1457
    %1489 = vmatpush1.bf16.msra.mxu0 %v1456
    %1490 = vmatprep.subr.bf16.mxu0 %v1459
    %1491 = vmatpush1.bf16.msra.mxu0 %v1458
    %1492 = vmatprep.subr.bf16.mxu0 %v1461
    %1493 = vmatpush1.bf16.msra.mxu0 %v1460
    %1494 = vmatprep.subr.bf16.mxu0 %v1463
    %1495 = vmatpush1.bf16.msra.mxu0 %v1462
    %1496 = vmatprep.subr.bf16.mxu0 %v1465
    %1497 = vmatpush1.bf16.msra.mxu0 %v1464
    %1498 = vmatprep.subr.bf16.mxu0 %v1467
    %1499 = vmatpush1.bf16.msra.mxu0 %v1466
    %1500 = vmatprep.subr.bf16.mxu0 0
    %1501 = vmatpush1.bf16.msra.mxu0 0
    %1502 = vmatprep.subr.bf16.mxu0 0
    %1503 = vmatpush1.bf16.msra.mxu0 0
    %1504 = vmatprep.subr.bf16.mxu0 0
    %1505 = vmatpush1.bf16.msra.mxu0 0
    %1506 = vmatprep.subr.bf16.mxu0 0
    %1507 = vmatpush1.bf16.msra.mxu0 0
    %1508 = vmatprep.subr.bf16.mxu0 0
    %1509 = vmatpush1.bf16.msra.mxu0 0
    %1510 = vmatprep.subr.bf16.mxu0 0
    %1511 = vmatpush1.bf16.msra.mxu0 0
    %1512 = vmatprep.subr.bf16.mxu0 0
    %1513 = vmatpush1.bf16.msra.mxu0 0
    %1514 = vmatprep.subr.bf16.mxu0 0
    %1515 = vmatpush1.bf16.msra.mxu0 0
    %1516 = vmatprep.mubr.bf16.mxu0 0
    %1517 = vmatmul.mubr.bf16.gmra.mrb[0].mxu0 %v1391
    %v1518 = vpop.f32.mrb[0].mxu0
    %v1519 = vadd.f32 0.0, %v1518
    %v1520 = vpop.f32.mrb[0].mxu0
    %v1521 = vadd.f32 0.0, %v1520
    %v1522 = vpop.f32.mrb[0].mxu0
    %v1523 = vadd.f32 0.0, %v1522
    %v1524 = vpop.f32.mrb[0].mxu0
    %v1525 = vadd.f32 0.0, %v1524
    %1526 = vmatprep.mubr.bf16.mxu0 0
    %1527 = vmatmul.mubr.bf16.gmra.mrb[0].mxu0 %v1400
    %v1528 = vpop.f32.mrb[0].mxu0
    %v1529 = vadd.f32 0.0, %v1528
    %v1530 = vpop.f32.mrb[0].mxu0
    %v1531 = vadd.f32 0.0, %v1530
    %v1532 = vpop.f32.mrb[0].mxu0
    %v1533 = vadd.f32 0.0, %v1532
    %v1534 = vpop.f32.mrb[0].mxu0
    %v1535 = vadd.f32 0.0, %v1534
    %1536 = vmatprep.mubr.bf16.mxu0 0
    %1537 = vmatmul.mubr.bf16.gmra.mrb[0].mxu0 %v1399
    %v1538 = vpop.f32.mrb[0].mxu0
    %v1539 = vadd.f32 0.0, %v1538
    %v1540 = vpop.f32.mrb[0].mxu0
    %v1541 = vadd.f32 0.0, %v1540
    %v1542 = vpop.f32.mrb[0].mxu0
    %v1543 = vpop.f32.mrb[0].mxu0
    %1544 = vdwg.mxu0
    %v1545 = vadd.f32 %v1327, %v1519
    %v1546 = vadd.f32 %v1328, %v1521
    %v1547 = vadd.f32 %v1329, %v1523
    %v1548 = vadd.f32 %v1330, %v1525
    %v1549 = vadd.f32 %v1331, %v1529
    %v1550 = vadd.f32 %v1332, %v1531
    %v1551 = vadd.f32 %v1333, %v1533
    %v1552 = vadd.f32 %v1334, %v1535
    %v1553 = vadd.f32 %v1335, %v1539
    %v1554 = vadd.f32 %v1336, %v1541
    %v1555 = vld [vmem:[#allocation2] sm:$0xc]
    %s1556 = scalar_lea.vmem [#allocation7], 64
    %v1557 = vld [vmem:[%s1556] sm:$0xff]
    %v1558 = vld [vmem:[%s1556 + $0x8] sm:$0xff]
    %v1560 = vunpack.c.l.b16 %v1555
    %v1561 = vpack.c.b16 %v1212, %v1560
    %vm1562 = vcmask 1045504
    %v1563 = vrot.slane %v1561, 2
    %v1564 = vrot.slane %v1218, 2
    %v1565 = vsel %vm1562, %v1563, %v1564
    %v1566 = vrot.slane %v1219, 2
    %v1567 = vsel %vm1562, %v1564, %v1566
    %v1570 = vunpack.c.l.b16 %v1557
    %v1571 = vunpack.c.h.b16 %v1557
    %v1572 = vunpack.c.l.b16 %v1558
    %v1573 = vunpack.c.h.b16 %v1558
    %v1574 = vpack.c.b16 %v1572, %v1570
    %v1575 = vpack.c.b16 %v1573, %v1571
    %v1579 = vsel %vm525, %v1565, 0
    %v1582 = vsel %vm525, %v1567, 0
    %v1585 = vsel %vm525, %v1566, 0
    %1587 = vmatprep.subr.bf16.mxu0 %v1575
    %1588 = vmatpush1.bf16.msra.mxu0 %v1574
    %1589 = vmatprep.subr.bf16.mxu0 0
    %1590 = vmatpush1.bf16.msra.mxu0 0
    %1591 = vmatprep.subr.bf16.mxu0 0
    %1592 = vmatpush1.bf16.msra.mxu0 0
    %1593 = vmatprep.subr.bf16.mxu0 0
    %1594 = vmatpush1.bf16.msra.mxu0 0
    %1595 = vmatprep.subr.bf16.mxu0 0
    %1596 = vmatpush1.bf16.msra.mxu0 0
    %1597 = vmatprep.subr.bf16.mxu0 0
    %1598 = vmatpush1.bf16.msra.mxu0 0
    %1599 = vmatprep.subr.bf16.mxu0 0
    %1600 = vmatpush1.bf16.msra.mxu0 0
    %1601 = vmatprep.subr.bf16.mxu0 0
    %1602 = vmatpush1.bf16.msra.mxu0 0
    %1603 = vmatprep.subr.bf16.mxu0 0
    %1604 = vmatpush1.bf16.msra.mxu0 0
    %1605 = vmatprep.subr.bf16.mxu0 0
    %1606 = vmatpush1.bf16.msra.mxu0 0
    %1607 = vmatprep.subr.bf16.mxu0 0
    %1608 = vmatpush1.bf16.msra.mxu0 0
    %1609 = vmatprep.subr.bf16.mxu0 0
    %1610 = vmatpush1.bf16.msra.mxu0 0
    %1611 = vmatprep.subr.bf16.mxu0 0
    %1612 = vmatpush1.bf16.msra.mxu0 0
    %1613 = vmatprep.subr.bf16.mxu0 0
    %1614 = vmatpush1.bf16.msra.mxu0 0
    %1615 = vmatprep.subr.bf16.mxu0 0
    %1616 = vmatpush1.bf16.msra.mxu0 0
    %1617 = vmatprep.subr.bf16.mxu0 0
    %1618 = vmatpush1.bf16.msra.mxu0 0
    %1619 = vmatprep.mubr.bf16.mxu0 0
    %1620 = vmatmul.mubr.bf16.gmra.mrb[0].mxu0 %v1579
    %v1621 = vpop.f32.mrb[0].mxu0
    %v1622 = vadd.f32 0.0, %v1621
    %v1623 = vpop.f32.mrb[0].mxu0
    %v1624 = vadd.f32 0.0, %v1623
    %v1625 = vpop.f32.mrb[0].mxu0
    %v1626 = vadd.f32 0.0, %v1625
    %v1627 = vpop.f32.mrb[0].mxu0
    %v1628 = vadd.f32 0.0, %v1627
    %1629 = vmatprep.mubr.bf16.mxu0 0
    %1630 = vmatmul.mubr.bf16.gmra.mrb[0].mxu0 %v1582
    %v1631 = vpop.f32.mrb[0].mxu0
    %v1632 = vadd.f32 0.0, %v1631
    %v1633 = vpop.f32.mrb[0].mxu0
    %v1634 = vadd.f32 0.0, %v1633
    %v1635 = vpop.f32.mrb[0].mxu0
    %v1636 = vadd.f32 0.0, %v1635
    %v1637 = vpop.f32.mrb[0].mxu0
    %v1638 = vadd.f32 0.0, %v1637
    %1639 = vmatprep.mubr.bf16.mxu0 0
    %1640 = vmatmul.mubr.bf16.gmra.mrb[0].mxu0 %v1585
    %v1641 = vpop.f32.mrb[0].mxu0
    %v1642 = vadd.f32 0.0, %v1641
    %v1643 = vpop.f32.mrb[0].mxu0
    %v1644 = vadd.f32 0.0, %v1643
    %v1645 = vpop.f32.mrb[0].mxu0
    %v1646 = vpop.f32.mrb[0].mxu0
    %1647 = vdwg.mxu0
    %v1648 = vadd.f32 %v1545, %v1622
    %v1649 = vadd.f32 %v1546, %v1624
    %v1650 = vadd.f32 %v1547, %v1626
    %v1651 = vadd.f32 %v1548, %v1628
    %v1652 = vadd.f32 %v1549, %v1632
    %v1653 = vadd.f32 %v1550, %v1634
    %v1654 = vadd.f32 %v1551, %v1636
    %v1655 = vadd.f32 %v1552, %v1638
    %v1656 = vadd.f32 %v1553, %v1642
    %v1657 = vadd.f32 %v1554, %v1644
    %v1658 = vld [vmem:[#allocation3] sm:$0xc]
    %s1659 = scalar_lea.vmem %s4, 512
    %v1660 = vld [vmem:[%s1659] sm:$0xff]
    %v1661 = vld [vmem:[%s1659 + $0x8] sm:$0xff]
    %v1662 = vld [vmem:[%s1659 + $0x10] sm:$0xff]
    %v1663 = vld [vmem:[%s1659 + $0x18] sm:$0xff]
    %v1664 = vld [vmem:[%s1659 + $0x20] sm:$0xff]
    %v1665 = vld [vmem:[%s1659 + $0x28] sm:$0xff]
    %v1666 = vld [vmem:[%s1659 + $0x30] sm:$0xff]
    %v1667 = vld [vmem:[%s1659 + $0x38] sm:$0xff]
    %v1668 = vld [vmem:[%s1659 + $0x40] sm:$0xff]
    %v1669 = vld [vmem:[%s1659 + $0x48] sm:$0xff]
    %v1670 = vld [vmem:[%s1659 + $0x50] sm:$0xff]
    %v1671 = vld [vmem:[%s1659 + $0x58] sm:$0xff]
    %v1672 = vld [vmem:[%s1659 + $0x60] sm:$0xff]
    %v1673 = vld [vmem:[%s1659 + $0x68] sm:$0xff]
    %v1674 = vld [vmem:[%s1659 + $0x70] sm:$0xff]
    %v1675 = vld [vmem:[%s1659 + $0x78] sm:$0xff]
    %v1677 = vunpack.c.l.b16 %v1658
    %v1678 = vpack.c.b16 %v1367, %v1677
    %v1679 = vrot.slane %v1678, 2
    %v1680 = vrot.slane %v1373, 2
    %v1681 = vsel %vm1562, %v1679, %v1680
    %v1682 = vrot.slane %v1374, 2
    %v1683 = vsel %vm1562, %v1680, %v1682
    %v1703 = vunpack.c.l.b16 %v1660
    %v1704 = vunpack.c.h.b16 %v1660
    %v1705 = vunpack.c.l.b16 %v1661
    %v1706 = vunpack.c.h.b16 %v1661
    %v1707 = vunpack.c.l.b16 %v1662
    %v1708 = vunpack.c.h.b16 %v1662
    %v1709 = vunpack.c.l.b16 %v1663
    %v1710 = vunpack.c.h.b16 %v1663
    %v1711 = vunpack.c.l.b16 %v1664
    %v1712 = vunpack.c.h.b16 %v1664
    %v1713 = vunpack.c.l.b16 %v1665
    %v1714 = vunpack.c.h.b16 %v1665
    %v1715 = vunpack.c.l.b16 %v1666
    %v1716 = vunpack.c.h.b16 %v1666
    %v1717 = vunpack.c.l.b16 %v1667
    %v1718 = vunpack.c.h.b16 %v1667
    %v1719 = vunpack.c.l.b16 %v1668
    %v1720 = vunpack.c.h.b16 %v1668
    %v1721 = vunpack.c.l.b16 %v1669
    %v1722 = vunpack.c.h.b16 %v1669
    %v1723 = vunpack.c.l.b16 %v1670
    %v1724 = vunpack.c.h.b16 %v1670
    %v1725 = vunpack.c.l.b16 %v1671
    %v1726 = vunpack.c.h.b16 %v1671
    %v1727 = vunpack.c.l.b16 %v1672
    %v1728 = vunpack.c.h.b16 %v1672
    %v1729 = vunpack.c.l.b16 %v1673
    %v1730 = vunpack.c.h.b16 %v1673
    %v1731 = vunpack.c.l.b16 %v1674
    %v1732 = vunpack.c.h.b16 %v1674
    %v1733 = vunpack.c.l.b16 %v1675
    %v1734 = vunpack.c.h.b16 %v1675
    %v1735 = vpack.c.b16 %v1705, %v1703
    %v1736 = vpack.c.b16 %v1706, %v1704
    %v1737 = vpack.c.b16 %v1709, %v1707
    %v1738 = vpack.c.b16 %v1710, %v1708
    %v1739 = vpack.c.b16 %v1713, %v1711
    %v1740 = vpack.c.b16 %v1714, %v1712
    %v1741 = vpack.c.b16 %v1717, %v1715
    %v1742 = vpack.c.b16 %v1718, %v1716
    %v1743 = vpack.c.b16 %v1721, %v1719
    %v1744 = vpack.c.b16 %v1722, %v1720
    %v1745 = vpack.c.b16 %v1725, %v1723
    %v1746 = vpack.c.b16 %v1726, %v1724
    %v1747 = vpack.c.b16 %v1729, %v1727
    %v1748 = vpack.c.b16 %v1730, %v1728
    %v1749 = vpack.c.b16 %v1733, %v1731
    %v1750 = vpack.c.b16 %v1734, %v1732
    %1767 = vmatprep.subr.bf16.mxu0 %v1736
    %1768 = vmatpush1.bf16.msra.mxu0 %v1735
    %1769 = vmatprep.subr.bf16.mxu0 %v1738
    %1770 = vmatpush1.bf16.msra.mxu0 %v1737
    %1771 = vmatprep.subr.bf16.mxu0 %v1740
    %1772 = vmatpush1.bf16.msra.mxu0 %v1739
    %1773 = vmatprep.subr.bf16.mxu0 %v1742
    %1774 = vmatpush1.bf16.msra.mxu0 %v1741
    %1775 = vmatprep.subr.bf16.mxu0 %v1744
    %1776 = vmatpush1.bf16.msra.mxu0 %v1743
    %1777 = vmatprep.subr.bf16.mxu0 %v1746
    %1778 = vmatpush1.bf16.msra.mxu0 %v1745
    %1779 = vmatprep.subr.bf16.mxu0 %v1748
    %1780 = vmatpush1.bf16.msra.mxu0 %v1747
    %1781 = vmatprep.subr.bf16.mxu0 %v1750
    %1782 = vmatpush1.bf16.msra.mxu0 %v1749
    %1783 = vmatprep.subr.bf16.mxu0 0
    %1784 = vmatpush1.bf16.msra.mxu0 0
    %1785 = vmatprep.subr.bf16.mxu0 0
    %1786 = vmatpush1.bf16.msra.mxu0 0
    %1787 = vmatprep.subr.bf16.mxu0 0
    %1788 = vmatpush1.bf16.msra.mxu0 0
    %1789 = vmatprep.subr.bf16.mxu0 0
    %1790 = vmatpush1.bf16.msra.mxu0 0
    %1791 = vmatprep.subr.bf16.mxu0 0
    %1792 = vmatpush1.bf16.msra.mxu0 0
    %1793 = vmatprep.subr.bf16.mxu0 0
    %1794 = vmatpush1.bf16.msra.mxu0 0
    %1795 = vmatprep.subr.bf16.mxu0 0
    %1796 = vmatpush1.bf16.msra.mxu0 0
    %1797 = vmatprep.subr.bf16.mxu0 0
    %1798 = vmatpush1.bf16.msra.mxu0 0
    %1799 = vmatprep.mubr.bf16.mxu0 0
    %1800 = vmatmul.mubr.bf16.gmra.mrb[0].mxu0 %v1681
    %v1801 = vpop.f32.mrb[0].mxu0
    %v1802 = vadd.f32 0.0, %v1801
    %v1803 = vpop.f32.mrb[0].mxu0
    %v1804 = vadd.f32 0.0, %v1803
    %v1805 = vpop.f32.mrb[0].mxu0
    %v1806 = vadd.f32 0.0, %v1805
    %v1807 = vpop.f32.mrb[0].mxu0
    %v1808 = vadd.f32 0.0, %v1807
    %1809 = vmatprep.mubr.bf16.mxu0 0
    %1810 = vmatmul.mubr.bf16.gmra.mrb[0].mxu0 %v1683
    %v1811 = vpop.f32.mrb[0].mxu0
    %v1812 = vadd.f32 0.0, %v1811
    %v1813 = vpop.f32.mrb[0].mxu0
    %v1814 = vadd.f32 0.0, %v1813
    %v1815 = vpop.f32.mrb[0].mxu0
    %v1816 = vadd.f32 0.0, %v1815
    %v1817 = vpop.f32.mrb[0].mxu0
    %v1818 = vadd.f32 0.0, %v1817
    %1819 = vmatprep.mubr.bf16.mxu0 0
    %1820 = vmatmul.mubr.bf16.gmra.mrb[0].mxu0 %v1682
    %v1821 = vpop.f32.mrb[0].mxu0
    %v1822 = vadd.f32 0.0, %v1821
    %v1823 = vpop.f32.mrb[0].mxu0
    %v1824 = vadd.f32 0.0, %v1823
    %v1825 = vpop.f32.mrb[0].mxu0
    %v1826 = vpop.f32.mrb[0].mxu0
    %1827 = vdwg.mxu0
    %v1828 = vadd.f32 %v1648, %v1802
    %v1829 = vadd.f32 %v1649, %v1804
    %v1830 = vadd.f32 %v1650, %v1806
    %v1831 = vadd.f32 %v1651, %v1808
    %v1832 = vadd.f32 %v1652, %v1812
    %v1833 = vadd.f32 %v1653, %v1814
    %v1834 = vadd.f32 %v1654, %v1816
    %v1835 = vadd.f32 %v1655, %v1818
    %v1836 = vadd.f32 %v1656, %v1822
    %v1837 = vadd.f32 %v1657, %v1824
    %v1838 = vld [vmem:[#allocation2 + $0x14] sm:$0x3]
    %s1839 = scalar_lea.vmem [#allocation7], 80
    %v1840 = vld [vmem:[%s1839] sm:$0xff]
    %v1841 = vld [vmem:[%s1839 + $0x8] sm:$0xff]
    %v1843 = vunpack.c.l.b16 %v1838
    %v1844 = vpack.c.b16 %v1843, %v1215
    %v1846 = vshrl.u32 %v1561, 16
    %v1848 = vrot.slane %v1846, 2
    %v1849 = vshll.u32 %v1561, 16
    %v1851 = vrot.slane %v1849, 3
    %v1852 = vor.u32 %v1848, %v1851
    %v1853 = vrot.slane %v1230, 2
    %v1854 = vrot.slane %v1233, 3
    %v1855 = vor.u32 %v1853, %v1854
    %v1856 = vsel %vm129, %v1852, %v1855
    %v1858 = vshrl.u32 %v1844, 16
    %v1860 = vrot.slane %v1858, 2
    %v1861 = vshll.u32 %v1844, 16
    %v1863 = vrot.slane %v1861, 3
    %v1864 = vor.u32 %v1860, %v1863
    %v1865 = vsel %vm129, %v1855, %v1864
    %v1868 = vunpack.c.l.b16 %v1840
    %v1869 = vunpack.c.h.b16 %v1840
    %v1870 = vunpack.c.l.b16 %v1841
    %v1871 = vunpack.c.h.b16 %v1841
    %v1872 = vpack.c.b16 %v1870, %v1868
    %v1873 = vpack.c.b16 %v1871, %v1869
    %v1877 = vsel %vm525, %v1856, 0
    %v1880 = vsel %vm525, %v1865, 0
    %v1883 = vsel %vm525, %v1864, 0
    %1885 = vmatprep.subr.bf16.mxu0 %v1873
    %1886 = vmatpush1.bf16.msra.mxu0 %v1872
    %1887 = vmatprep.subr.bf16.mxu0 0
    %1888 = vmatpush1.bf16.msra.mxu0 0
    %1889 = vmatprep.subr.bf16.mxu0 0
    %1890 = vmatpush1.bf16.msra.mxu0 0
    %1891 = vmatprep.subr.bf16.mxu0 0
    %1892 = vmatpush1.bf16.msra.mxu0 0
    %1893 = vmatprep.subr.bf16.mxu0 0
    %1894 = vmatpush1.bf16.msra.mxu0 0
    %1895 = vmatprep.subr.bf16.mxu0 0
    %1896 = vmatpush1.bf16.msra.mxu0 0
    %1897 = vmatprep.subr.bf16.mxu0 0
    %1898 = vmatpush1.bf16.msra.mxu0 0
    %1899 = vmatprep.subr.bf16.mxu0 0
    %1900 = vmatpush1.bf16.msra.mxu0 0
    %1901 = vmatprep.subr.bf16.mxu0 0
    %1902 = vmatpush1.bf16.msra.mxu0 0
    %1903 = vmatprep.subr.bf16.mxu0 0
    %1904 = vmatpush1.bf16.msra.mxu0 0
    %1905 = vmatprep.subr.bf16.mxu0 0
    %1906 = vmatpush1.bf16.msra.mxu0 0
    %1907 = vmatprep.subr.bf16.mxu0 0
    %1908 = vmatpush1.bf16.msra.mxu0 0
    %1909 = vmatprep.subr.bf16.mxu0 0
    %1910 = vmatpush1.bf16.msra.mxu0 0
    %1911 = vmatprep.subr.bf16.mxu0 0
    %1912 = vmatpush1.bf16.msra.mxu0 0
    %1913 = vmatprep.subr.bf16.mxu0 0
    %1914 = vmatpush1.bf16.msra.mxu0 0
    %1915 = vmatprep.subr.bf16.mxu0 0
    %1916 = vmatpush1.bf16.msra.mxu0 0
    %1917 = vmatprep.mubr.bf16.mxu0 0
    %1918 = vmatmul.mubr.bf16.gmra.mrb[0].mxu0 %v1877
    %v1919 = vpop.f32.mrb[0].mxu0
    %v1920 = vadd.f32 0.0, %v1919
    %v1921 = vpop.f32.mrb[0].mxu0
    %v1922 = vadd.f32 0.0, %v1921
    %v1923 = vpop.f32.mrb[0].mxu0
    %v1924 = vadd.f32 0.0, %v1923
    %v1925 = vpop.f32.mrb[0].mxu0
    %v1926 = vadd.f32 0.0, %v1925
    %1927 = vmatprep.mubr.bf16.mxu0 0
    %1928 = vmatmul.mubr.bf16.gmra.mrb[0].mxu0 %v1880
    %v1929 = vpop.f32.mrb[0].mxu0
    %v1930 = vadd.f32 0.0, %v1929
    %v1931 = vpop.f32.mrb[0].mxu0
    %v1932 = vadd.f32 0.0, %v1931
    %v1933 = vpop.f32.mrb[0].mxu0
    %v1934 = vadd.f32 0.0, %v1933
    %v1935 = vpop.f32.mrb[0].mxu0
    %v1936 = vadd.f32 0.0, %v1935
    %1937 = vmatprep.mubr.bf16.mxu0 0
    %1938 = vmatmul.mubr.bf16.gmra.mrb[0].mxu0 %v1883
    %v1939 = vpop.f32.mrb[0].mxu0
    %v1940 = vadd.f32 0.0, %v1939
    %v1941 = vpop.f32.mrb[0].mxu0
    %v1942 = vadd.f32 0.0, %v1941
    %v1943 = vpop.f32.mrb[0].mxu0
    %v1944 = vpop.f32.mrb[0].mxu0
    %1945 = vdwg.mxu0
    %v1946 = vadd.f32 %v1828, %v1920
    %v1947 = vadd.f32 %v1829, %v1922
    %v1948 = vadd.f32 %v1830, %v1924
    %v1949 = vadd.f32 %v1831, %v1926
    %v1950 = vadd.f32 %v1832, %v1930
    %v1951 = vadd.f32 %v1833, %v1932
    %v1952 = vadd.f32 %v1834, %v1934
    %v1953 = vadd.f32 %v1835, %v1936
    %v1954 = vadd.f32 %v1836, %v1940
    %v1955 = vadd.f32 %v1837, %v1942
    %v1956 = vld [vmem:[#allocation3 + $0x14] sm:$0x3]
    %s1957 = scalar_lea.vmem %s4, 640
    %v1958 = vld [vmem:[%s1957] sm:$0xff]
    %v1959 = vld [vmem:[%s1957 + $0x8] sm:$0xff]
    %v1960 = vld [vmem:[%s1957 + $0x10] sm:$0xff]
    %v1961 = vld [vmem:[%s1957 + $0x18] sm:$0xff]
    %v1962 = vld [vmem:[%s1957 + $0x20] sm:$0xff]
    %v1963 = vld [vmem:[%s1957 + $0x28] sm:$0xff]
    %v1964 = vld [vmem:[%s1957 + $0x30] sm:$0xff]
    %v1965 = vld [vmem:[%s1957 + $0x38] sm:$0xff]
    %v1966 = vld [vmem:[%s1957 + $0x40] sm:$0xff]
    %v1967 = vld [vmem:[%s1957 + $0x48] sm:$0xff]
    %v1968 = vld [vmem:[%s1957 + $0x50] sm:$0xff]
    %v1969 = vld [vmem:[%s1957 + $0x58] sm:$0xff]
    %v1970 = vld [vmem:[%s1957 + $0x60] sm:$0xff]
    %v1971 = vld [vmem:[%s1957 + $0x68] sm:$0xff]
    %v1972 = vld [vmem:[%s1957 + $0x70] sm:$0xff]
    %v1973 = vld [vmem:[%s1957 + $0x78] sm:$0xff]
    %v1975 = vunpack.c.l.b16 %v1956
    %v1976 = vpack.c.b16 %v1975, %v1370
    %v1978 = vshrl.u32 %v1678, 16
    %v1980 = vrot.slane %v1978, 2
    %v1981 = vshll.u32 %v1678, 16
    %v1983 = vrot.slane %v1981, 3
    %v1984 = vor.u32 %v1980, %v1983
    %v1985 = vrot.slane %v1384, 2
    %v1986 = vrot.slane %v1387, 3
    %v1987 = vor.u32 %v1985, %v1986
    %v1988 = vsel %vm129, %v1984, %v1987
    %v1990 = vshrl.u32 %v1976, 16
    %v1992 = vrot.slane %v1990, 2
    %v1993 = vshll.u32 %v1976, 16
    %v1995 = vrot.slane %v1993, 3
    %v1996 = vor.u32 %v1992, %v1995
    %v1997 = vsel %vm129, %v1987, %v1996
    %v2017 = vunpack.c.l.b16 %v1958
    %v2018 = vunpack.c.h.b16 %v1958
    %v2019 = vunpack.c.l.b16 %v1959
    %v2020 = vunpack.c.h.b16 %v1959
    %v2021 = vunpack.c.l.b16 %v1960
    %v2022 = vunpack.c.h.b16 %v1960
    %v2023 = vunpack.c.l.b16 %v1961
    %v2024 = vunpack.c.h.b16 %v1961
    %v2025 = vunpack.c.l.b16 %v1962
    %v2026 = vunpack.c.h.b16 %v1962
    %v2027 = vunpack.c.l.b16 %v1963
    %v2028 = vunpack.c.h.b16 %v1963
    %v2029 = vunpack.c.l.b16 %v1964
    %v2030 = vunpack.c.h.b16 %v1964
    %v2031 = vunpack.c.l.b16 %v1965
    %v2032 = vunpack.c.h.b16 %v1965
    %v2033 = vunpack.c.l.b16 %v1966
    %v2034 = vunpack.c.h.b16 %v1966
    %v2035 = vunpack.c.l.b16 %v1967
    %v2036 = vunpack.c.h.b16 %v1967
    %v2037 = vunpack.c.l.b16 %v1968
    %v2038 = vunpack.c.h.b16 %v1968
    %v2039 = vunpack.c.l.b16 %v1969
    %v2040 = vunpack.c.h.b16 %v1969
    %v2041 = vunpack.c.l.b16 %v1970
    %v2042 = vunpack.c.h.b16 %v1970
    %v2043 = vunpack.c.l.b16 %v1971
    %v2044 = vunpack.c.h.b16 %v1971
    %v2045 = vunpack.c.l.b16 %v1972
    %v2046 = vunpack.c.h.b16 %v1972
    %v2047 = vunpack.c.l.b16 %v1973
    %v2048 = vunpack.c.h.b16 %v1973
    %v2049 = vpack.c.b16 %v2019, %v2017
    %v2050 = vpack.c.b16 %v2020, %v2018
    %v2051 = vpack.c.b16 %v2023, %v2021
    %v2052 = vpack.c.b16 %v2024, %v2022
    %v2053 = vpack.c.b16 %v2027, %v2025
    %v2054 = vpack.c.b16 %v2028, %v2026
    %v2055 = vpack.c.b16 %v2031, %v2029
    %v2056 = vpack.c.b16 %v2032, %v2030
    %v2057 = vpack.c.b16 %v2035, %v2033
    %v2058 = vpack.c.b16 %v2036, %v2034
    %v2059 = vpack.c.b16 %v2039, %v2037
    %v2060 = vpack.c.b16 %v2040, %v2038
    %v2061 = vpack.c.b16 %v2043, %v2041
    %v2062 = vpack.c.b16 %v2044, %v2042
    %v2063 = vpack.c.b16 %v2047, %v2045
    %v2064 = vpack.c.b16 %v2048, %v2046
    %2081 = vmatprep.subr.bf16.mxu0 %v2050
    %2082 = vmatpush1.bf16.msra.mxu0 %v2049
    %2083 = vmatprep.subr.bf16.mxu0 %v2052
    %2084 = vmatpush1.bf16.msra.mxu0 %v2051
    %2085 = vmatprep.subr.bf16.mxu0 %v2054
    %2086 = vmatpush1.bf16.msra.mxu0 %v2053
    %2087 = vmatprep.subr.bf16.mxu0 %v2056
    %2088 = vmatpush1.bf16.msra.mxu0 %v2055
    %2089 = vmatprep.subr.bf16.mxu0 %v2058
    %2090 = vmatpush1.bf16.msra.mxu0 %v2057
    %2091 = vmatprep.subr.bf16.mxu0 %v2060
    %2092 = vmatpush1.bf16.msra.mxu0 %v2059
    %2093 = vmatprep.subr.bf16.mxu0 %v2062
    %2094 = vmatpush1.bf16.msra.mxu0 %v2061
    %2095 = vmatprep.subr.bf16.mxu0 %v2064
    %2096 = vmatpush1.bf16.msra.mxu0 %v2063
    %2097 = vmatprep.subr.bf16.mxu0 0
    %2098 = vmatpush1.bf16.msra.mxu0 0
    %2099 = vmatprep.subr.bf16.mxu0 0
    %2100 = vmatpush1.bf16.msra.mxu0 0
    %2101 = vmatprep.subr.bf16.mxu0 0
    %2102 = vmatpush1.bf16.msra.mxu0 0
    %2103 = vmatprep.subr.bf16.mxu0 0
    %2104 = vmatpush1.bf16.msra.mxu0 0
    %2105 = vmatprep.subr.bf16.mxu0 0
    %2106 = vmatpush1.bf16.msra.mxu0 0
    %2107 = vmatprep.subr.bf16.mxu0 0
    %2108 = vmatpush1.bf16.msra.mxu0 0
    %2109 = vmatprep.subr.bf16.mxu0 0
    %2110 = vmatpush1.bf16.msra.mxu0 0
    %2111 = vmatprep.subr.bf16.mxu0 0
    %2112 = vmatpush1.bf16.msra.mxu0 0
    %2113 = vmatprep.mubr.bf16.mxu0 0
    %2114 = vmatmul.mubr.bf16.gmra.mrb[0].mxu0 %v1988
    %v2115 = vpop.f32.mrb[0].mxu0
    %v2116 = vadd.f32 0.0, %v2115
    %v2117 = vpop.f32.mrb[0].mxu0
    %v2118 = vadd.f32 0.0, %v2117
    %v2119 = vpop.f32.mrb[0].mxu0
    %v2120 = vadd.f32 0.0, %v2119
    %v2121 = vpop.f32.mrb[0].mxu0
    %v2122 = vadd.f32 0.0, %v2121
    %2123 = vmatprep.mubr.bf16.mxu0 0
    %2124 = vmatmul.mubr.bf16.gmra.mrb[0].mxu0 %v1997
    %v2125 = vpop.f32.mrb[0].mxu0
    %v2126 = vadd.f32 0.0, %v2125
    %v2127 = vpop.f32.mrb[0].mxu0
    %v2128 = vadd.f32 0.0, %v2127
    %v2129 = vpop.f32.mrb[0].mxu0
    %v2130 = vadd.f32 0.0, %v2129
    %v2131 = vpop.f32.mrb[0].mxu0
    %v2132 = vadd.f32 0.0, %v2131
    %2133 = vmatprep.mubr.bf16.mxu0 0
    %2134 = vmatmul.mubr.bf16.gmra.mrb[0].mxu0 %v1996
    %v2135 = vpop.f32.mrb[0].mxu0
    %v2136 = vadd.f32 0.0, %v2135
    %v2137 = vpop.f32.mrb[0].mxu0
    %v2138 = vadd.f32 0.0, %v2137
    %v2139 = vpop.f32.mrb[0].mxu0
    %v2140 = vpop.f32.mrb[0].mxu0
    %2141 = vdwg.mxu0
    %v2142 = vadd.f32 %v1946, %v2116
    %v2143 = vadd.f32 %v1947, %v2118
    %v2144 = vadd.f32 %v1948, %v2120
    %v2145 = vadd.f32 %v1949, %v2122
    %v2146 = vadd.f32 %v1950, %v2126
    %v2147 = vadd.f32 %v1951, %v2128
    %v2148 = vadd.f32 %v1952, %v2130
    %v2149 = vadd.f32 %v1953, %v2132
    %v2150 = vadd.f32 %v1954, %v2136
    %v2151 = vadd.f32 %v1955, %v2138
    %v2152 = vld [vmem:[#allocation2] sm:$0x8]
    %s2153 = scalar_lea.vmem [#allocation7], 96
    %v2154 = vld [vmem:[%s2153] sm:$0xff]
    %v2155 = vld [vmem:[%s2153 + $0x8] sm:$0xff]
    %v2157 = vunpack.c.l.b16 %v2152
    %v2158 = vpack.c.b16 %v1212, %v2157
    %vm2159 = vcmask 1044480
    %v2160 = vrot.slane %v2158, 3
    %v2161 = vrot.slane %v1218, 3
    %v2162 = vsel %vm2159, %v2160, %v2161
    %v2163 = vrot.slane %v1844, 3
    %v2164 = vsel %vm2159, %v2161, %v2163
    %v2167 = vunpack.c.l.b16 %v2154
    %v2168 = vunpack.c.h.b16 %v2154
    %v2169 = vunpack.c.l.b16 %v2155
    %v2170 = vunpack.c.h.b16 %v2155
    %v2171 = vpack.c.b16 %v2169, %v2167
    %v2172 = vpack.c.b16 %v2170, %v2168
    %v2176 = vsel %vm525, %v2162, 0
    %v2179 = vsel %vm525, %v2164, 0
    %v2182 = vsel %vm525, %v2163, 0
    %2184 = vmatprep.subr.bf16.mxu0 %v2172
    %2185 = vmatpush1.bf16.msra.mxu0 %v2171
    %2186 = vmatprep.subr.bf16.mxu0 0
    %2187 = vmatpush1.bf16.msra.mxu0 0
    %2188 = vmatprep.subr.bf16.mxu0 0
    %2189 = vmatpush1.bf16.msra.mxu0 0
    %2190 = vmatprep.subr.bf16.mxu0 0
    %2191 = vmatpush1.bf16.msra.mxu0 0
    %2192 = vmatprep.subr.bf16.mxu0 0
    %2193 = vmatpush1.bf16.msra.mxu0 0
    %2194 = vmatprep.subr.bf16.mxu0 0
    %2195 = vmatpush1.bf16.msra.mxu0 0
    %2196 = vmatprep.subr.bf16.mxu0 0
    %2197 = vmatpush1.bf16.msra.mxu0 0
    %2198 = vmatprep.subr.bf16.mxu0 0
    %2199 = vmatpush1.bf16.msra.mxu0 0
    %2200 = vmatprep.subr.bf16.mxu0 0
    %2201 = vmatpush1.bf16.msra.mxu0 0
    %2202 = vmatprep.subr.bf16.mxu0 0
    %2203 = vmatpush1.bf16.msra.mxu0 0
    %2204 = vmatprep.subr.bf16.mxu0 0
    %2205 = vmatpush1.bf16.msra.mxu0 0
    %2206 = vmatprep.subr.bf16.mxu0 0
    %2207 = vmatpush1.bf16.msra.mxu0 0
    %2208 = vmatprep.subr.bf16.mxu0 0
    %2209 = vmatpush1.bf16.msra.mxu0 0
    %2210 = vmatprep.subr.bf16.mxu0 0
    %2211 = vmatpush1.bf16.msra.mxu0 0
    %2212 = vmatprep.subr.bf16.mxu0 0
    %2213 = vmatpush1.bf16.msra.mxu0 0
    %2214 = vmatprep.subr.bf16.mxu0 0
    %2215 = vmatpush1.bf16.msra.mxu0 0
    %2216 = vmatprep.mubr.bf16.mxu0 0
    %2217 = vmatmul.mubr.bf16.gmra.mrb[0].mxu0 %v2176
    %v2218 = vpop.f32.mrb[0].mxu0
    %v2219 = vadd.f32 0.0, %v2218
    %v2220 = vpop.f32.mrb[0].mxu0
    %v2221 = vadd.f32 0.0, %v2220
    %v2222 = vpop.f32.mrb[0].mxu0
    %v2223 = vadd.f32 0.0, %v2222
    %v2224 = vpop.f32.mrb[0].mxu0
    %v2225 = vadd.f32 0.0, %v2224
    %2226 = vmatprep.mubr.bf16.mxu0 0
    %2227 = vmatmul.mubr.bf16.gmra.mrb[0].mxu0 %v2179
    %v2228 = vpop.f32.mrb[0].mxu0
    %v2229 = vadd.f32 0.0, %v2228
    %v2230 = vpop.f32.mrb[0].mxu0
    %v2231 = vadd.f32 0.0, %v2230
    %v2232 = vpop.f32.mrb[0].mxu0
    %v2233 = vadd.f32 0.0, %v2232
    %v2234 = vpop.f32.mrb[0].mxu0
    %v2235 = vadd.f32 0.0, %v2234
    %2236 = vmatprep.mubr.bf16.mxu0 0
    %2237 = vmatmul.mubr.bf16.gmra.mrb[0].mxu0 %v2182
    %v2238 = vpop.f32.mrb[0].mxu0
    %v2239 = vadd.f32 0.0, %v2238
    %v2240 = vpop.f32.mrb[0].mxu0
    %v2241 = vadd.f32 0.0, %v2240
    %v2242 = vpop.f32.mrb[0].mxu0
    %v2243 = vpop.f32.mrb[0].mxu0
    %2244 = vdwg.mxu0
    %v2245 = vadd.f32 %v2142, %v2219
    %v2246 = vadd.f32 %v2143, %v2221
    %v2247 = vadd.f32 %v2144, %v2223
    %v2248 = vadd.f32 %v2145, %v2225
    %v2249 = vadd.f32 %v2146, %v2229
    %v2250 = vadd.f32 %v2147, %v2231
    %v2251 = vadd.f32 %v2148, %v2233
    %v2252 = vadd.f32 %v2149, %v2235
    %v2253 = vadd.f32 %v2150, %v2239
    %v2254 = vadd.f32 %v2151, %v2241
    %v2255 = vld [vmem:[#allocation3] sm:$0x8]
    %s2256 = scalar_lea.vmem %s4, 768
    %v2257 = vld [vmem:[%s2256] sm:$0xff]
    %v2258 = vld [vmem:[%s2256 + $0x8] sm:$0xff]
    %v2259 = vld [vmem:[%s2256 + $0x10] sm:$0xff]
    %v2260 = vld [vmem:[%s2256 + $0x18] sm:$0xff]
    %v2261 = vld [vmem:[%s2256 + $0x20] sm:$0xff]
    %v2262 = vld [vmem:[%s2256 + $0x28] sm:$0xff]
    %v2263 = vld [vmem:[%s2256 + $0x30] sm:$0xff]
    %v2264 = vld [vmem:[%s2256 + $0x38] sm:$0xff]
    %v2265 = vld [vmem:[%s2256 + $0x40] sm:$0xff]
    %v2266 = vld [vmem:[%s2256 + $0x48] sm:$0xff]
    %v2267 = vld [vmem:[%s2256 + $0x50] sm:$0xff]
    %v2268 = vld [vmem:[%s2256 + $0x58] sm:$0xff]
    %v2269 = vld [vmem:[%s2256 + $0x60] sm:$0xff]
    %v2270 = vld [vmem:[%s2256 + $0x68] sm:$0xff]
    %v2271 = vld [vmem:[%s2256 + $0x70] sm:$0xff]
    %v2272 = vld [vmem:[%s2256 + $0x78] sm:$0xff]
    %v2274 = vunpack.c.l.b16 %v2255
    %v2275 = vpack.c.b16 %v1367, %v2274
    %v2276 = vrot.slane %v2275, 3
    %v2277 = vrot.slane %v1373, 3
    %v2278 = vsel %vm2159, %v2276, %v2277
    %v2279 = vrot.slane %v1976, 3
    %v2280 = vsel %vm2159, %v2277, %v2279
    %v2300 = vunpack.c.l.b16 %v2257
    %v2301 = vunpack.c.h.b16 %v2257
    %v2302 = vunpack.c.l.b16 %v2258
    %v2303 = vunpack.c.h.b16 %v2258
    %v2304 = vunpack.c.l.b16 %v2259
    %v2305 = vunpack.c.h.b16 %v2259
    %v2306 = vunpack.c.l.b16 %v2260
    %v2307 = vunpack.c.h.b16 %v2260
    %v2308 = vunpack.c.l.b16 %v2261
    %v2309 = vunpack.c.h.b16 %v2261
    %v2310 = vunpack.c.l.b16 %v2262
    %v2311 = vunpack.c.h.b16 %v2262
    %v2312 = vunpack.c.l.b16 %v2263
    %v2313 = vunpack.c.h.b16 %v2263
    %v2314 = vunpack.c.l.b16 %v2264
    %v2315 = vunpack.c.h.b16 %v2264
    %v2316 = vunpack.c.l.b16 %v2265
    %v2317 = vunpack.c.h.b16 %v2265
    %v2318 = vunpack.c.l.b16 %v2266
    %v2319 = vunpack.c.h.b16 %v2266
    %v2320 = vunpack.c.l.b16 %v2267
    %v2321 = vunpack.c.h.b16 %v2267
    %v2322 = vunpack.c.l.b16 %v2268
    %v2323 = vunpack.c.h.b16 %v2268
    %v2324 = vunpack.c.l.b16 %v2269
    %v2325 = vunpack.c.h.b16 %v2269
    %v2326 = vunpack.c.l.b16 %v2270
    %v2327 = vunpack.c.h.b16 %v2270
    %v2328 = vunpack.c.l.b16 %v2271
    %v2329 = vunpack.c.h.b16 %v2271
    %v2330 = vunpack.c.l.b16 %v2272
    %v2331 = vunpack.c.h.b16 %v2272
    %v2332 = vpack.c.b16 %v2302, %v2300
    %v2333 = vpack.c.b16 %v2303, %v2301
    %v2334 = vpack.c.b16 %v2306, %v2304
    %v2335 = vpack.c.b16 %v2307, %v2305
    %v2336 = vpack.c.b16 %v2310, %v2308
    %v2337 = vpack.c.b16 %v2311, %v2309
    %v2338 = vpack.c.b16 %v2314, %v2312
    %v2339 = vpack.c.b16 %v2315, %v2313
    %v2340 = vpack.c.b16 %v2318, %v2316
    %v2341 = vpack.c.b16 %v2319, %v2317
    %v2342 = vpack.c.b16 %v2322, %v2320
    %v2343 = vpack.c.b16 %v2323, %v2321
    %v2344 = vpack.c.b16 %v2326, %v2324
    %v2345 = vpack.c.b16 %v2327, %v2325
    %v2346 = vpack.c.b16 %v2330, %v2328
    %v2347 = vpack.c.b16 %v2331, %v2329
    %2364 = vmatprep.subr.bf16.mxu0 %v2333
    %2365 = vmatpush1.bf16.msra.mxu0 %v2332
    %2366 = vmatprep.subr.bf16.mxu0 %v2335
    %2367 = vmatpush1.bf16.msra.mxu0 %v2334
    %2368 = vmatprep.subr.bf16.mxu0 %v2337
    %2369 = vmatpush1.bf16.msra.mxu0 %v2336
    %2370 = vmatprep.subr.bf16.mxu0 %v2339
    %2371 = vmatpush1.bf16.msra.mxu0 %v2338
    %2372 = vmatprep.subr.bf16.mxu0 %v2341
    %2373 = vmatpush1.bf16.msra.mxu0 %v2340
    %2374 = vmatprep.subr.bf16.mxu0 %v2343
    %2375 = vmatpush1.bf16.msra.mxu0 %v2342
    %2376 = vmatprep.subr.bf16.mxu0 %v2345
    %2377 = vmatpush1.bf16.msra.mxu0 %v2344
    %2378 = vmatprep.subr.bf16.mxu0 %v2347
    %2379 = vmatpush1.bf16.msra.mxu0 %v2346
    %2380 = vmatprep.subr.bf16.mxu0 0
    %2381 = vmatpush1.bf16.msra.mxu0 0
    %2382 = vmatprep.subr.bf16.mxu0 0
    %2383 = vmatpush1.bf16.msra.mxu0 0
    %2384 = vmatprep.subr.bf16.mxu0 0
    %2385 = vmatpush1.bf16.msra.mxu0 0
    %2386 = vmatprep.subr.bf16.mxu0 0
    %2387 = vmatpush1.bf16.msra.mxu0 0
    %2388 = vmatprep.subr.bf16.mxu0 0
    %2389 = vmatpush1.bf16.msra.mxu0 0
    %2390 = vmatprep.subr.bf16.mxu0 0
    %2391 = vmatpush1.bf16.msra.mxu0 0
    %2392 = vmatprep.subr.bf16.mxu0 0
    %2393 = vmatpush1.bf16.msra.mxu0 0
    %2394 = vmatprep.subr.bf16.mxu0 0
    %2395 = vmatpush1.bf16.msra.mxu0 0
    %2396 = vmatprep.mubr.bf16.mxu0 0
    %2397 = vmatmul.mubr.bf16.gmra.mrb[0].mxu0 %v2278
    %v2398 = vpop.f32.mrb[0].mxu0
    %v2399 = vadd.f32 0.0, %v2398
    %v2400 = vpop.f32.mrb[0].mxu0
    %v2401 = vadd.f32 0.0, %v2400
    %v2402 = vpop.f32.mrb[0].mxu0
    %v2403 = vadd.f32 0.0, %v2402
    %v2404 = vpop.f32.mrb[0].mxu0
    %v2405 = vadd.f32 0.0, %v2404
    %2406 = vmatprep.mubr.bf16.mxu0 0
    %2407 = vmatmul.mubr.bf16.gmra.mrb[0].mxu0 %v2280
    %v2408 = vpop.f32.mrb[0].mxu0
    %v2409 = vadd.f32 0.0, %v2408
    %v2410 = vpop.f32.mrb[0].mxu0
    %v2411 = vadd.f32 0.0, %v2410
    %v2412 = vpop.f32.mrb[0].mxu0
    %v2413 = vadd.f32 0.0, %v2412
    %v2414 = vpop.f32.mrb[0].mxu0
    %v2415 = vadd.f32 0.0, %v2414
    %2416 = vmatprep.mubr.bf16.mxu0 0
    %2417 = vmatmul.mubr.bf16.gmra.mrb[0].mxu0 %v2279
    %v2418 = vpop.f32.mrb[0].mxu0
    %v2419 = vadd.f32 0.0, %v2418
    %v2420 = vpop.f32.mrb[0].mxu0
    %v2421 = vadd.f32 0.0, %v2420
    %v2422 = vpop.f32.mrb[0].mxu0
    %v2423 = vpop.f32.mrb[0].mxu0
    %2424 = vdwg.mxu0
    %v2425 = vadd.f32 %v2245, %v2399
    %v2426 = vadd.f32 %v2246, %v2401
    %v2427 = vadd.f32 %v2247, %v2403
    %v2428 = vadd.f32 %v2248, %v2405
    %v2429 = vadd.f32 %v2249, %v2409
    %v2430 = vadd.f32 %v2250, %v2411
    %v2431 = vadd.f32 %v2251, %v2413
    %v2432 = vadd.f32 %v2252, %v2415
    %v2433 = vadd.f32 %v2253, %v2419
    %v2434 = vadd.f32 %v2254, %v2421
    %v2435 = vld [vmem:[%s5] sm:$0x3]
    %v2437 = vlaneseq
    %v2438 = vshrl.u32 %v2437, 7
    %v2439 = vsub.s32 0, %v2438
    %v2440 = vrot.slane %v2435, %v2439
    %v2441 = vlaneseq
    %v2442 = vshrl.u32 %v2441, 7
    %v2443 = vsub.s32 1, %v2442
    %v2444 = vrot.slane %v2435, %v2443
    %v2447 = vadd.f32 %v2425, %v2440
    %v2448 = vadd.f32 %v2426, %v2444
    %v2449 = vadd.f32 %v2427, %v2440
    %v2450 = vadd.f32 %v2428, %v2444
    %v2451 = vadd.f32 %v2429, %v2440
    %v2452 = vadd.f32 %v2430, %v2444
    %v2453 = vadd.f32 %v2431, %v2440
    %v2454 = vadd.f32 %v2432, %v2444
    %v2455 = vadd.f32 %v2433, %v2440
    %v2456 = vadd.f32 %v2434, %v2444
    %vm2457 = vcmp.ge.f32.partialorder %v2447, 0.0
    %vm2458 = vcmp.ge.f32.partialorder %v2448, 0.0
    %vm2459 = vcmp.ge.f32.partialorder %v2449, 0.0
    %vm2460 = vcmp.ge.f32.partialorder %v2450, 0.0
    %vm2461 = vcmp.ge.f32.partialorder %v2451, 0.0
    %vm2462 = vcmp.ge.f32.partialorder %v2452, 0.0
    %vm2463 = vcmp.ge.f32.partialorder %v2453, 0.0
    %vm2464 = vcmp.ge.f32.partialorder %v2454, 0.0
    %vm2465 = vcmp.ge.f32.partialorder %v2455, 0.0
    %vm2466 = vcmp.ge.f32.partialorder %v2456, 0.0
    %v2467 = vmul.f32 %v2447, 0.2
    %v2468 = vmul.f32 %v2448, 0.2
    %v2469 = vmul.f32 %v2449, 0.2
    %v2470 = vmul.f32 %v2450, 0.2
    %v2471 = vmul.f32 %v2451, 0.2
    %v2472 = vmul.f32 %v2452, 0.2
    %v2473 = vmul.f32 %v2453, 0.2
    %v2474 = vmul.f32 %v2454, 0.2
    %v2475 = vmul.f32 %v2455, 0.2
    %v2476 = vmul.f32 %v2456, 0.2
    %v2477 = vsel %vm2457, %v2447, %v2467
    %v2478 = vsel %vm2458, %v2448, %v2468
    %v2479 = vsel %vm2459, %v2449, %v2469
    %v2480 = vsel %vm2460, %v2450, %v2470
    %v2481 = vsel %vm2461, %v2451, %v2471
    %v2482 = vsel %vm2462, %v2452, %v2472
    %v2483 = vsel %vm2463, %v2453, %v2473
    %v2484 = vsel %vm2464, %v2454, %v2474
    %v2485 = vsel %vm2465, %v2455, %v2475
    %v2486 = vsel %vm2466, %v2456, %v2476
    %v2487 = vpack.c.bf16 %v2479, %v2477
    %v2488 = vpack.c.bf16 %v2480, %v2478
    %v2491 = vunpack.c.l.b16 %v2487
    %v2492 = vunpack.c.l.b16 %v2488
    %v2493 = vunpack.c.h.b16 %v2487
    %v2494 = vunpack.c.h.b16 %v2488
    %v2495 = vpack.c.b16 %v2492, %v2491
    %v2496 = vpack.c.b16 %v2494, %v2493
    %v2498 = vshrl.u32 %v2495, 16
    %v2500 = vrot.slane %v2498, 6
    %v2501 = vshll.u32 %v2495, 16
    %v2503 = vrot.slane %v2501, 7
    %v2504 = vor.u32 %v2500, %v2503
    %v2505 = vrot.slane %v2504, 4
    %v2507 = vshrl.u32 %v2496, 16
    %v2509 = vrot.slane %v2507, 6
    %v2510 = vshll.u32 %v2496, 16
    %v2512 = vrot.slane %v2510, 7
    %v2513 = vor.u32 %v2509, %v2512
    %v2514 = vsel %vm185, %v2505, %v2513
    %v2515 = vrot.slane %v2513, 4
    %vm2519 = vcmask 1047557
    %vm2520 = vmand %vm2519, %vm136
    %vm2521 = vmor %vm2520, %vm243
    %v2522 = vld [vmem:[#allocation4] sm:$0xee]
    %v2523 = vsel %vm2521, %v2504, %v2522
    %2524 = vst [vmem:[#allocation4] sm:$0xee] %v2523
    %2525 = vst [vmem:[#allocation4 + $0x8] sm:$0xff] %v2514
    %v2526 = vld [vmem:[#allocation4 + $0x10] sm:$0x33]
    %v2527 = vsel %vm131, %v2515, %v2526
    %2528 = vst [vmem:[#allocation4 + $0x10] sm:$0x33] %v2527
    %v2529 = vpack.c.bf16 %v2483, %v2481
    %v2530 = vpack.c.bf16 %v2484, %v2482
    %v2531 = vpack.c.bf16 %v2485, %v2485
    %v2532 = vpack.c.bf16 %v2486, %v2486
    %v2537 = vunpack.c.l.b16 %v2529
    %v2538 = vunpack.c.l.b16 %v2530
    %v2539 = vunpack.c.h.b16 %v2529
    %v2540 = vunpack.c.h.b16 %v2530
    %v2541 = vunpack.c.l.b16 %v2531
    %v2542 = vunpack.c.l.b16 %v2532
    %v2543 = vpack.c.b16 %v2538, %v2537
    %v2544 = vpack.c.b16 %v2540, %v2539
    %v2545 = vpack.c.b16 %v2542, %v2541
    %v2547 = vshrl.u32 %v2543, 16
    %v2549 = vrot.slane %v2547, 6
    %v2550 = vshll.u32 %v2543, 16
    %v2552 = vrot.slane %v2550, 7
    %v2553 = vor.u32 %v2549, %v2552
    %v2554 = vrot.slane %v2553, 4
    %v2556 = vshrl.u32 %v2544, 16
    %v2558 = vrot.slane %v2556, 6
    %v2559 = vshll.u32 %v2544, 16
    %v2561 = vrot.slane %v2559, 7
    %v2562 = vor.u32 %v2558, %v2561
    %v2563 = vsel %vm185, %v2554, %v2562
    %v2564 = vrot.slane %v2562, 4
    %v2566 = vshrl.u32 %v2545, 16
    %v2568 = vrot.slane %v2566, 6
    %v2569 = vshll.u32 %v2545, 16
    %v2571 = vrot.slane %v2569, 7
    %v2572 = vor.u32 %v2568, %v2571
    %v2573 = vsel %vm185, %v2564, %v2572
    %v2574 = vrot.slane %v2568, 4
    %vm2578 = vcmask 1047556
    %vm2579 = vmand %vm2578, %vm150
    %vm2580 = vmor %vm2579, %vm309
    %v2581 = vld [vmem:[#allocation4 + $0x18] sm:$0xff]
    %v2582 = vsel %vm2580, %v2563, %v2581
    %2583 = vst [vmem:[#allocation4 + $0x18] sm:$0xff] %v2582
    %2584 = vst [vmem:[#allocation4 + $0x20] sm:$0xff] %v2573
    %v2585 = vld [vmem:[#allocation4 + $0x28] sm:$0x11]
    %v2586 = vsel %vm146, %v2574, %v2585
    %2587 = vst [vmem:[#allocation4 + $0x28] sm:$0x11] %v2586
    %v2588 = vld [vmem:[#allocation4] sm:$0xee]
    %v2589 = vld [vmem:[#allocation4 + $0x8] sm:$0xff]
    %v2590 = vld [vmem:[#allocation4 + $0x10] sm:$0xff]
    %v2591 = vld [vmem:[#allocation4 + $0x18] sm:$0xff]
    %v2592 = vld [vmem:[#allocation4 + $0x20] sm:$0xff]
    %v2593 = vld [vmem:[%s6] sm:$0xf]
    %v2594 = vld [vmem:[%s6 + $0x4] sm:$0xf]
    %v2595 = vld [vmem:[%s6 + $0x8] sm:$0xf]
    %v2596 = vld [vmem:[%s6 + $0xc] sm:$0xf]
    %v2597 = vld [vmem:[%s6 + $0x10] sm:$0xf]
    %v2598 = vld [vmem:[%s6 + $0x14] sm:$0xf]
    %v2599 = vld [vmem:[%s6 + $0x18] sm:$0xf]
    %v2600 = vld [vmem:[%s6 + $0x1c] sm:$0xf]
    %v2601 = vld [vmem:[%s6 + $0x20] sm:$0xf]
    %v2602 = vld [vmem:[%s6 + $0x24] sm:$0xf]
    %v2603 = vld [vmem:[%s6 + $0x28] sm:$0xf]
    %v2604 = vld [vmem:[%s6 + $0x2c] sm:$0xf]
    %v2605 = vld [vmem:[%s6 + $0x30] sm:$0xf]
    %v2606 = vld [vmem:[%s6 + $0x34] sm:$0xf]
    %v2607 = vld [vmem:[%s6 + $0x38] sm:$0xf]
    %v2608 = vld [vmem:[%s6 + $0x3c] sm:$0xf]
    %v2609 = vld [vmem:[%s6 + $0x40] sm:$0xf]
    %v2610 = vld [vmem:[%s6 + $0x44] sm:$0xf]
    %v2611 = vld [vmem:[%s6 + $0x48] sm:$0xf]
    %v2612 = vld [vmem:[%s6 + $0x4c] sm:$0xf]
    %v2613 = vld [vmem:[%s6 + $0x50] sm:$0xf]
    %v2614 = vld [vmem:[%s6 + $0x54] sm:$0xf]
    %v2615 = vld [vmem:[%s6 + $0x58] sm:$0xf]
    %v2616 = vld [vmem:[%s6 + $0x5c] sm:$0xf]
    %v2617 = vld [vmem:[%s6 + $0x60] sm:$0xf]
    %v2618 = vld [vmem:[%s6 + $0x64] sm:$0xf]
    %v2619 = vld [vmem:[%s6 + $0x68] sm:$0xf]
    %v2620 = vld [vmem:[%s6 + $0x6c] sm:$0xf]
    %v2621 = vld [vmem:[%s6 + $0x70] sm:$0xf]
    %v2622 = vld [vmem:[%s6 + $0x74] sm:$0xf]
    %v2623 = vld [vmem:[%s6 + $0x78] sm:$0xf]
    %v2624 = vld [vmem:[%s6 + $0x7c] sm:$0xf]
    %v2625 = vld [vmem:[#allocation4 + $0x28] sm:$0x11]
    %s2626 = scalar_lea.vmem %s6, 128
    %v2627 = vld [vmem:[%s2626] sm:$0xf]
    %v2628 = vld [vmem:[%s2626 + $0x4] sm:$0xf]
    %v2629 = vld [vmem:[%s2626 + $0x8] sm:$0xf]
    %v2630 = vld [vmem:[%s2626 + $0xc] sm:$0xf]
    %v2631 = vld [vmem:[%s2626 + $0x10] sm:$0xf]
    %v2632 = vld [vmem:[%s2626 + $0x14] sm:$0xf]
    %v2633 = vld [vmem:[%s2626 + $0x18] sm:$0xf]
    %v2634 = vld [vmem:[%s2626 + $0x1c] sm:$0xf]
    %v2635 = vld [vmem:[%s2626 + $0x20] sm:$0xf]
    %v2636 = vld [vmem:[%s2626 + $0x24] sm:$0xf]
    %v2637 = vld [vmem:[%s2626 + $0x28] sm:$0xf]
    %v2638 = vld [vmem:[%s2626 + $0x2c] sm:$0xf]
    %v2639 = vld [vmem:[%s2626 + $0x30] sm:$0xf]
    %v2640 = vld [vmem:[%s2626 + $0x34] sm:$0xf]
    %v2641 = vld [vmem:[%s2626 + $0x38] sm:$0xf]
    %v2642 = vld [vmem:[%s2626 + $0x3c] sm:$0xf]
    %v2643 = vld [vmem:[%s2626 + $0x40] sm:$0xf]
    %v2644 = vld [vmem:[%s2626 + $0x44] sm:$0xf]
    %v2645 = vld [vmem:[%s2626 + $0x48] sm:$0xf]
    %v2646 = vld [vmem:[%s2626 + $0x4c] sm:$0xf]
    %v2647 = vld [vmem:[%s2626 + $0x50] sm:$0xf]
    %v2648 = vld [vmem:[%s2626 + $0x54] sm:$0xf]
    %v2649 = vld [vmem:[%s2626 + $0x58] sm:$0xf]
    %v2650 = vld [vmem:[%s2626 + $0x5c] sm:$0xf]
    %v2651 = vld [vmem:[%s2626 + $0x60] sm:$0xf]
    %v2652 = vld [vmem:[%s2626 + $0x64] sm:$0xf]
    %v2653 = vld [vmem:[%s2626 + $0x68] sm:$0xf]
    %v2654 = vld [vmem:[%s2626 + $0x6c] sm:$0xf]
    %v2655 = vld [vmem:[%s2626 + $0x70] sm:$0xf]
    %v2656 = vld [vmem:[%s2626 + $0x74] sm:$0xf]
    %v2657 = vld [vmem:[%s2626 + $0x78] sm:$0xf]
    %v2658 = vld [vmem:[%s2626 + $0x7c] sm:$0xf]
    %v2665 = vunpack.c.l.b16 %v2588
    %v2666 = vunpack.c.h.b16 %v2588
    %v2667 = vunpack.c.l.b16 %v2589
    %v2668 = vunpack.c.h.b16 %v2589
    %v2669 = vunpack.c.l.b16 %v2590
    %v2670 = vunpack.c.h.b16 %v2590
    %v2671 = vunpack.c.l.b16 %v2591
    %v2672 = vunpack.c.h.b16 %v2591
    %v2673 = vunpack.c.l.b16 %v2592
    %v2674 = vunpack.c.h.b16 %v2592
    %v2675 = vunpack.c.l.b16 %v2625
    %v2676 = vunpack.c.h.b16 %v2625
    %v2677 = vpack.c.b16 %v2667, %v2665
    %v2678 = vpack.c.b16 %v2668, %v2666
    %v2679 = vpack.c.b16 %v2671, %v2669
    %v2680 = vpack.c.b16 %v2672, %v2670
    %v2681 = vpack.c.b16 %v2675, %v2673
    %v2682 = vpack.c.b16 %v2676, %v2674
    %v2684 = vshrl.u32 %v2677, 16
    %v2686 = vrot.slane %v2684, 1
    %v2687 = vshll.u32 %v2677, 16
    %v2689 = vrot.slane %v2687, 2
    %v2690 = vor.u32 %v2686, %v2689
    %v2692 = vshrl.u32 %v2679, 16
    %v2694 = vrot.slane %v2692, 1
    %v2695 = vshll.u32 %v2679, 16
    %v2697 = vrot.slane %v2695, 2
    %v2698 = vor.u32 %v2694, %v2697
    %v2699 = vsel %vm1220, %v2690, %v2698
    %v2701 = vshrl.u32 %v2678, 16
    %v2703 = vrot.slane %v2701, 1
    %v2704 = vshll.u32 %v2678, 16
    %v2706 = vrot.slane %v2704, 2
    %v2707 = vor.u32 %v2703, %v2706
    %v2709 = vshrl.u32 %v2680, 16
    %v2711 = vrot.slane %v2709, 1
    %v2712 = vshll.u32 %v2680, 16
    %v2714 = vrot.slane %v2712, 2
    %v2715 = vor.u32 %v2711, %v2714
    %v2716 = vsel %vm1220, %v2707, %v2715
    %v2718 = vshrl.u32 %v2681, 16
    %v2720 = vrot.slane %v2718, 1
    %v2721 = vshll.u32 %v2681, 16
    %v2723 = vrot.slane %v2721, 2
    %v2724 = vor.u32 %v2720, %v2723
    %v2725 = vsel %vm1220, %v2698, %v2724
    %v2727 = vshrl.u32 %v2682, 16
    %v2729 = vrot.slane %v2727, 1
    %v2730 = vshll.u32 %v2682, 16
    %v2732 = vrot.slane %v2730, 2
    %v2733 = vor.u32 %v2729, %v2732
    %v2734 = vsel %vm1220, %v2715, %v2733
    %v2773 = vunpack.c.l.b16 %v2627
    %v2774 = vunpack.c.l.b16 %v2628
    %v2775 = vunpack.c.l.b16 %v2629
    %v2776 = vunpack.c.l.b16 %v2630
    %v2777 = vunpack.c.l.b16 %v2631
    %v2778 = vunpack.c.l.b16 %v2632
    %v2779 = vunpack.c.l.b16 %v2633
    %v2780 = vunpack.c.l.b16 %v2634
    %v2781 = vunpack.c.l.b16 %v2635
    %v2782 = vunpack.c.l.b16 %v2636
    %v2783 = vunpack.c.l.b16 %v2637
    %v2784 = vunpack.c.l.b16 %v2638
    %v2785 = vunpack.c.l.b16 %v2639
    %v2786 = vunpack.c.l.b16 %v2640
    %v2787 = vunpack.c.l.b16 %v2641
    %v2788 = vunpack.c.l.b16 %v2642
    %v2789 = vunpack.c.l.b16 %v2643
    %v2790 = vunpack.c.l.b16 %v2644
    %v2791 = vunpack.c.l.b16 %v2645
    %v2792 = vunpack.c.l.b16 %v2646
    %v2793 = vunpack.c.l.b16 %v2647
    %v2794 = vunpack.c.l.b16 %v2648
    %v2795 = vunpack.c.l.b16 %v2649
    %v2796 = vunpack.c.l.b16 %v2650
    %v2797 = vunpack.c.l.b16 %v2651
    %v2798 = vunpack.c.l.b16 %v2652
    %v2799 = vunpack.c.l.b16 %v2653
    %v2800 = vunpack.c.l.b16 %v2654
    %v2801 = vunpack.c.l.b16 %v2655
    %v2802 = vunpack.c.l.b16 %v2656
    %v2803 = vunpack.c.l.b16 %v2657
    %v2804 = vunpack.c.l.b16 %v2658
    %v2805 = vpack.c.b16 %v2774, %v2773
    %v2806 = vpack.c.b16 %v2776, %v2775
    %v2807 = vpack.c.b16 %v2778, %v2777
    %v2808 = vpack.c.b16 %v2780, %v2779
    %v2809 = vpack.c.b16 %v2782, %v2781
    %v2810 = vpack.c.b16 %v2784, %v2783
    %v2811 = vpack.c.b16 %v2786, %v2785
    %v2812 = vpack.c.b16 %v2788, %v2787
    %v2813 = vpack.c.b16 %v2790, %v2789
    %v2814 = vpack.c.b16 %v2792, %v2791
    %v2815 = vpack.c.b16 %v2794, %v2793
    %v2816 = vpack.c.b16 %v2796, %v2795
    %v2817 = vpack.c.b16 %v2798, %v2797
    %v2818 = vpack.c.b16 %v2800, %v2799
    %v2819 = vpack.c.b16 %v2802, %v2801
    %v2820 = vpack.c.b16 %v2804, %v2803
    %2837 = vmatprep.subr.bf16.mxu0 0
    %2838 = vmatpush1.bf16.msra.mxu0 %v2805
    %2839 = vmatprep.subr.bf16.mxu0 0
    %2840 = vmatpush1.bf16.msra.mxu0 %v2806
    %2841 = vmatprep.subr.bf16.mxu0 0
    %2842 = vmatpush1.bf16.msra.mxu0 %v2807
    %2843 = vmatprep.subr.bf16.mxu0 0
    %2844 = vmatpush1.bf16.msra.mxu0 %v2808
    %2845 = vmatprep.subr.bf16.mxu0 0
    %2846 = vmatpush1.bf16.msra.mxu0 %v2809
    %2847 = vmatprep.subr.bf16.mxu0 0
    %2848 = vmatpush1.bf16.msra.mxu0 %v2810
    %2849 = vmatprep.subr.bf16.mxu0 0
    %2850 = vmatpush1.bf16.msra.mxu0 %v2811
    %2851 = vmatprep.subr.bf16.mxu0 0
    %2852 = vmatpush1.bf16.msra.mxu0 %v2812
    %2853 = vmatprep.subr.bf16.mxu0 0
    %2854 = vmatpush1.bf16.msra.mxu0 %v2813
    %2855 = vmatprep.subr.bf16.mxu0 0
    %2856 = vmatpush1.bf16.msra.mxu0 %v2814
    %2857 = vmatprep.subr.bf16.mxu0 0
    %2858 = vmatpush1.bf16.msra.mxu0 %v2815
    %2859 = vmatprep.subr.bf16.mxu0 0
    %2860 = vmatpush1.bf16.msra.mxu0 %v2816
    %2861 = vmatprep.subr.bf16.mxu0 0
    %2862 = vmatpush1.bf16.msra.mxu0 %v2817
    %2863 = vmatprep.subr.bf16.mxu0 0
    %2864 = vmatpush1.bf16.msra.mxu0 %v2818
    %2865 = vmatprep.subr.bf16.mxu0 0
    %2866 = vmatpush1.bf16.msra.mxu0 %v2819
    %2867 = vmatprep.subr.bf16.mxu0 0
    %2868 = vmatpush1.bf16.msra.mxu0 %v2820
    %2869 = vmatprep.mubr.bf16.mxu0 %v2716
    %2870 = vmatmul.mubr.bf16.gmra.mrb[0].mxu0 %v2699
    %v2871 = vpop.f32.mrb[0].mxu0
    %v2872 = vadd.f32 0.0, %v2871
    %v2873 = vpop.f32.mrb[0].mxu0
    %v2874 = vpop.f32.mrb[0].mxu0
    %v2875 = vadd.f32 0.0, %v2874
    %v2876 = vpop.f32.mrb[0].mxu0
    %2877 = vmatprep.mubr.bf16.mxu0 %v2734
    %2878 = vmatmul.mubr.bf16.gmra.mrb[0].mxu0 %v2725
    %v2879 = vpop.f32.mrb[0].mxu0
    %v2880 = vadd.f32 0.0, %v2879
    %v2881 = vpop.f32.mrb[0].mxu0
    %v2882 = vpop.f32.mrb[0].mxu0
    %v2883 = vadd.f32 0.0, %v2882
    %v2884 = vpop.f32.mrb[0].mxu0
    %2885 = vmatprep.mubr.bf16.mxu0 %v2733
    %2886 = vmatmul.mubr.bf16.gmra.mrb[0].mxu0 %v2724
    %v2887 = vpop.f32.mrb[0].mxu0
    %v2888 = vadd.f32 0.0, %v2887
    %v2889 = vpop.f32.mrb[0].mxu0
    %v2890 = vpop.f32.mrb[0].mxu0
    %v2891 = vpop.f32.mrb[0].mxu0
    %2892 = vdwg.mxu0
    %v2893 = vpack.c.b16 %v2673, %v2673
    %v2894 = vpack.c.b16 %v2674, %v2674
    %v2895 = vrot.slane %v2677, 1
    %v2896 = vrot.slane %v2679, 1
    %v2897 = vsel %vm920, %v2895, %v2896
    %v2898 = vrot.slane %v2678, 1
    %v2899 = vrot.slane %v2680, 1
    %v2900 = vsel %vm920, %v2898, %v2899
    %v2901 = vrot.slane %v2893, 1
    %v2902 = vsel %vm920, %v2896, %v2901
    %v2903 = vrot.slane %v2894, 1
    %v2904 = vsel %vm920, %v2899, %v2903
    %v2943 = vunpack.c.l.b16 %v2593
    %v2944 = vunpack.c.l.b16 %v2594
    %v2945 = vunpack.c.l.b16 %v2595
    %v2946 = vunpack.c.l.b16 %v2596
    %v2947 = vunpack.c.l.b16 %v2597
    %v2948 = vunpack.c.l.b16 %v2598
    %v2949 = vunpack.c.l.b16 %v2599
    %v2950 = vunpack.c.l.b16 %v2600
    %v2951 = vunpack.c.l.b16 %v2601
    %v2952 = vunpack.c.l.b16 %v2602
    %v2953 = vunpack.c.l.b16 %v2603
    %v2954 = vunpack.c.l.b16 %v2604
    %v2955 = vunpack.c.l.b16 %v2605
    %v2956 = vunpack.c.l.b16 %v2606
    %v2957 = vunpack.c.l.b16 %v2607
    %v2958 = vunpack.c.l.b16 %v2608
    %v2959 = vunpack.c.l.b16 %v2609
    %v2960 = vunpack.c.l.b16 %v2610
    %v2961 = vunpack.c.l.b16 %v2611
    %v2962 = vunpack.c.l.b16 %v2612
    %v2963 = vunpack.c.l.b16 %v2613
    %v2964 = vunpack.c.l.b16 %v2614
    %v2965 = vunpack.c.l.b16 %v2615
    %v2966 = vunpack.c.l.b16 %v2616
    %v2967 = vunpack.c.l.b16 %v2617
    %v2968 = vunpack.c.l.b16 %v2618
    %v2969 = vunpack.c.l.b16 %v2619
    %v2970 = vunpack.c.l.b16 %v2620
    %v2971 = vunpack.c.l.b16 %v2621
    %v2972 = vunpack.c.l.b16 %v2622
    %v2973 = vunpack.c.l.b16 %v2623
    %v2974 = vunpack.c.l.b16 %v2624
    %v2975 = vpack.c.b16 %v2944, %v2943
    %v2976 = vpack.c.b16 %v2946, %v2945
    %v2977 = vpack.c.b16 %v2948, %v2947
    %v2978 = vpack.c.b16 %v2950, %v2949
    %v2979 = vpack.c.b16 %v2952, %v2951
    %v2980 = vpack.c.b16 %v2954, %v2953
    %v2981 = vpack.c.b16 %v2956, %v2955
    %v2982 = vpack.c.b16 %v2958, %v2957
    %v2983 = vpack.c.b16 %v2960, %v2959
    %v2984 = vpack.c.b16 %v2962, %v2961
    %v2985 = vpack.c.b16 %v2964, %v2963
    %v2986 = vpack.c.b16 %v2966, %v2965
    %v2987 = vpack.c.b16 %v2968, %v2967
    %v2988 = vpack.c.b16 %v2970, %v2969
    %v2989 = vpack.c.b16 %v2972, %v2971
    %v2990 = vpack.c.b16 %v2974, %v2973
    %3007 = vmatprep.subr.bf16.mxu0 0
    %3008 = vmatpush1.bf16.msra.mxu0 %v2975
    %3009 = vmatprep.subr.bf16.mxu0 0
    %3010 = vmatpush1.bf16.msra.mxu0 %v2976
    %3011 = vmatprep.subr.bf16.mxu0 0
    %3012 = vmatpush1.bf16.msra.mxu0 %v2977
    %3013 = vmatprep.subr.bf16.mxu0 0
    %3014 = vmatpush1.bf16.msra.mxu0 %v2978
    %3015 = vmatprep.subr.bf16.mxu0 0
    %3016 = vmatpush1.bf16.msra.mxu0 %v2979
    %3017 = vmatprep.subr.bf16.mxu0 0
    %3018 = vmatpush1.bf16.msra.mxu0 %v2980
    %3019 = vmatprep.subr.bf16.mxu0 0
    %3020 = vmatpush1.bf16.msra.mxu0 %v2981
    %3021 = vmatprep.subr.bf16.mxu0 0
    %3022 = vmatpush1.bf16.msra.mxu0 %v2982
    %3023 = vmatprep.subr.bf16.mxu0 0
    %3024 = vmatpush1.bf16.msra.mxu0 %v2983
    %3025 = vmatprep.subr.bf16.mxu0 0
    %3026 = vmatpush1.bf16.msra.mxu0 %v2984
    %3027 = vmatprep.subr.bf16.mxu0 0
    %3028 = vmatpush1.bf16.msra.mxu0 %v2985
    %3029 = vmatprep.subr.bf16.mxu0 0
    %3030 = vmatpush1.bf16.msra.mxu0 %v2986
    %3031 = vmatprep.subr.bf16.mxu0 0
    %3032 = vmatpush1.bf16.msra.mxu0 %v2987
    %3033 = vmatprep.subr.bf16.mxu0 0
    %3034 = vmatpush1.bf16.msra.mxu0 %v2988
    %3035 = vmatprep.subr.bf16.mxu0 0
    %3036 = vmatpush1.bf16.msra.mxu0 %v2989
    %3037 = vmatprep.subr.bf16.mxu0 0
    %3038 = vmatpush1.bf16.msra.mxu0 %v2990
    %3039 = vmatprep.mubr.bf16.mxu0 %v2900
    %3040 = vmatmul.mubr.bf16.gmra.mrb[0].mxu0 %v2897
    %v3041 = vpop.f32.mrb[0].mxu0
    %v3042 = vadd.f32 %v2872, %v3041
    %v3043 = vpop.f32.mrb[0].mxu0
    %v3044 = vpop.f32.mrb[0].mxu0
    %v3045 = vadd.f32 %v2875, %v3044
    %v3046 = vpop.f32.mrb[0].mxu0
    %3047 = vmatprep.mubr.bf16.mxu0 %v2904
    %3048 = vmatmul.mubr.bf16.gmra.mrb[0].mxu0 %v2902
    %v3049 = vpop.f32.mrb[0].mxu0
    %v3050 = vadd.f32 %v2880, %v3049
    %v3051 = vpop.f32.mrb[0].mxu0
    %v3052 = vpop.f32.mrb[0].mxu0
    %v3053 = vadd.f32 %v2883, %v3052
    %v3054 = vpop.f32.mrb[0].mxu0
    %3055 = vmatprep.mubr.bf16.mxu0 %v2903
    %3056 = vmatmul.mubr.bf16.gmra.mrb[0].mxu0 %v2901
    %v3057 = vpop.f32.mrb[0].mxu0
    %v3058 = vadd.f32 %v2888, %v3057
    %v3059 = vpop.f32.mrb[0].mxu0
    %v3060 = vpop.f32.mrb[0].mxu0
    %v3061 = vpop.f32.mrb[0].mxu0
    %3062 = vdwg.mxu0
    %v3063 = vld [vmem:[#allocation4] sm:$0xcc]
    %s3064 = scalar_lea.vmem %s6, 256
    %v3065 = vld [vmem:[%s3064] sm:$0xf]
    %v3066 = vld [vmem:[%s3064 + $0x4] sm:$0xf]
    %v3067 = vld [vmem:[%s3064 + $0x8] sm:$0xf]
    %v3068 = vld [vmem:[%s3064 + $0xc] sm:$0xf]
    %v3069 = vld [vmem:[%s3064 + $0x10] sm:$0xf]
    %v3070 = vld [vmem:[%s3064 + $0x14] sm:$0xf]
    %v3071 = vld [vmem:[%s3064 + $0x18] sm:$0xf]
    %v3072 = vld [vmem:[%s3064 + $0x1c] sm:$0xf]
    %v3073 = vld [vmem:[%s3064 + $0x20] sm:$0xf]
    %v3074 = vld [vmem:[%s3064 + $0x24] sm:$0xf]
    %v3075 = vld [vmem:[%s3064 + $0x28] sm:$0xf]
    %v3076 = vld [vmem:[%s3064 + $0x2c] sm:$0xf]
    %v3077 = vld [vmem:[%s3064 + $0x30] sm:$0xf]
    %v3078 = vld [vmem:[%s3064 + $0x34] sm:$0xf]
    %v3079 = vld [vmem:[%s3064 + $0x38] sm:$0xf]
    %v3080 = vld [vmem:[%s3064 + $0x3c] sm:$0xf]
    %v3081 = vld [vmem:[%s3064 + $0x40] sm:$0xf]
    %v3082 = vld [vmem:[%s3064 + $0x44] sm:$0xf]
    %v3083 = vld [vmem:[%s3064 + $0x48] sm:$0xf]
    %v3084 = vld [vmem:[%s3064 + $0x4c] sm:$0xf]
    %v3085 = vld [vmem:[%s3064 + $0x50] sm:$0xf]
    %v3086 = vld [vmem:[%s3064 + $0x54] sm:$0xf]
    %v3087 = vld [vmem:[%s3064 + $0x58] sm:$0xf]
    %v3088 = vld [vmem:[%s3064 + $0x5c] sm:$0xf]
    %v3089 = vld [vmem:[%s3064 + $0x60] sm:$0xf]
    %v3090 = vld [vmem:[%s3064 + $0x64] sm:$0xf]
    %v3091 = vld [vmem:[%s3064 + $0x68] sm:$0xf]
    %v3092 = vld [vmem:[%s3064 + $0x6c] sm:$0xf]
    %v3093 = vld [vmem:[%s3064 + $0x70] sm:$0xf]
    %v3094 = vld [vmem:[%s3064 + $0x74] sm:$0xf]
    %v3095 = vld [vmem:[%s3064 + $0x78] sm:$0xf]
    %v3096 = vld [vmem:[%s3064 + $0x7c] sm:$0xf]
    %v3098 = vunpack.c.l.b16 %v3063
    %v3099 = vunpack.c.h.b16 %v3063
    %v3100 = vpack.c.b16 %v2667, %v3098
    %v3101 = vpack.c.b16 %v2668, %v3099
    %v3102 = vrot.slane %v3100, 2
    %v3103 = vrot.slane %v2679, 2
    %v3104 = vsel %vm1562, %v3102, %v3103
    %v3105 = vrot.slane %v3101, 2
    %v3106 = vrot.slane %v2680, 2
    %v3107 = vsel %vm1562, %v3105, %v3106
    %v3108 = vrot.slane %v2681, 2
    %v3109 = vsel %vm1562, %v3103, %v3108
    %v3110 = vrot.slane %v2682, 2
    %v3111 = vsel %vm1562, %v3106, %v3110
    %v3150 = vunpack.c.l.b16 %v3065
    %v3151 = vunpack.c.l.b16 %v3066
    %v3152 = vunpack.c.l.b16 %v3067
    %v3153 = vunpack.c.l.b16 %v3068
    %v3154 = vunpack.c.l.b16 %v3069
    %v3155 = vunpack.c.l.b16 %v3070
    %v3156 = vunpack.c.l.b16 %v3071
    %v3157 = vunpack.c.l.b16 %v3072
    %v3158 = vunpack.c.l.b16 %v3073
    %v3159 = vunpack.c.l.b16 %v3074
    %v3160 = vunpack.c.l.b16 %v3075
    %v3161 = vunpack.c.l.b16 %v3076
    %v3162 = vunpack.c.l.b16 %v3077
    %v3163 = vunpack.c.l.b16 %v3078
    %v3164 = vunpack.c.l.b16 %v3079
    %v3165 = vunpack.c.l.b16 %v3080
    %v3166 = vunpack.c.l.b16 %v3081
    %v3167 = vunpack.c.l.b16 %v3082
    %v3168 = vunpack.c.l.b16 %v3083
    %v3169 = vunpack.c.l.b16 %v3084
    %v3170 = vunpack.c.l.b16 %v3085
    %v3171 = vunpack.c.l.b16 %v3086
    %v3172 = vunpack.c.l.b16 %v3087
    %v3173 = vunpack.c.l.b16 %v3088
    %v3174 = vunpack.c.l.b16 %v3089
    %v3175 = vunpack.c.l.b16 %v3090
    %v3176 = vunpack.c.l.b16 %v3091
    %v3177 = vunpack.c.l.b16 %v3092
    %v3178 = vunpack.c.l.b16 %v3093
    %v3179 = vunpack.c.l.b16 %v3094
    %v3180 = vunpack.c.l.b16 %v3095
    %v3181 = vunpack.c.l.b16 %v3096
    %v3182 = vpack.c.b16 %v3151, %v3150
    %v3183 = vpack.c.b16 %v3153, %v3152
    %v3184 = vpack.c.b16 %v3155, %v3154
    %v3185 = vpack.c.b16 %v3157, %v3156
    %v3186 = vpack.c.b16 %v3159, %v3158
    %v3187 = vpack.c.b16 %v3161, %v3160
    %v3188 = vpack.c.b16 %v3163, %v3162
    %v3189 = vpack.c.b16 %v3165, %v3164
    %v3190 = vpack.c.b16 %v3167, %v3166
    %v3191 = vpack.c.b16 %v3169, %v3168
    %v3192 = vpack.c.b16 %v3171, %v3170
    %v3193 = vpack.c.b16 %v3173, %v3172
    %v3194 = vpack.c.b16 %v3175, %v3174
    %v3195 = vpack.c.b16 %v3177, %v3176
    %v3196 = vpack.c.b16 %v3179, %v3178
    %v3197 = vpack.c.b16 %v3181, %v3180
    %3214 = vmatprep.subr.bf16.mxu0 0
    %3215 = vmatpush1.bf16.msra.mxu0 %v3182
    %3216 = vmatprep.subr.bf16.mxu0 0
    %3217 = vmatpush1.bf16.msra.mxu0 %v3183
    %3218 = vmatprep.subr.bf16.mxu0 0
    %3219 = vmatpush1.bf16.msra.mxu0 %v3184
    %3220 = vmatprep.subr.bf16.mxu0 0
    %3221 = vmatpush1.bf16.msra.mxu0 %v3185
    %3222 = vmatprep.subr.bf16.mxu0 0
    %3223 = vmatpush1.bf16.msra.mxu0 %v3186
    %3224 = vmatprep.subr.bf16.mxu0 0
    %3225 = vmatpush1.bf16.msra.mxu0 %v3187
    %3226 = vmatprep.subr.bf16.mxu0 0
    %3227 = vmatpush1.bf16.msra.mxu0 %v3188
    %3228 = vmatprep.subr.bf16.mxu0 0
    %3229 = vmatpush1.bf16.msra.mxu0 %v3189
    %3230 = vmatprep.subr.bf16.mxu0 0
    %3231 = vmatpush1.bf16.msra.mxu0 %v3190
    %3232 = vmatprep.subr.bf16.mxu0 0
    %3233 = vmatpush1.bf16.msra.mxu0 %v3191
    %3234 = vmatprep.subr.bf16.mxu0 0
    %3235 = vmatpush1.bf16.msra.mxu0 %v3192
    %3236 = vmatprep.subr.bf16.mxu0 0
    %3237 = vmatpush1.bf16.msra.mxu0 %v3193
    %3238 = vmatprep.subr.bf16.mxu0 0
    %3239 = vmatpush1.bf16.msra.mxu0 %v3194
    %3240 = vmatprep.subr.bf16.mxu0 0
    %3241 = vmatpush1.bf16.msra.mxu0 %v3195
    %3242 = vmatprep.subr.bf16.mxu0 0
    %3243 = vmatpush1.bf16.msra.mxu0 %v3196
    %3244 = vmatprep.subr.bf16.mxu0 0
    %3245 = vmatpush1.bf16.msra.mxu0 %v3197
    %3246 = vmatprep.mubr.bf16.mxu0 %v3107
    %3247 = vmatmul.mubr.bf16.gmra.mrb[0].mxu0 %v3104
    %v3248 = vpop.f32.mrb[0].mxu0
    %v3249 = vadd.f32 0.0, %v3248
    %v3250 = vpop.f32.mrb[0].mxu0
    %v3251 = vpop.f32.mrb[0].mxu0
    %v3252 = vadd.f32 0.0, %v3251
    %v3253 = vpop.f32.mrb[0].mxu0
    %3254 = vmatprep.mubr.bf16.mxu0 %v3111
    %3255 = vmatmul.mubr.bf16.gmra.mrb[0].mxu0 %v3109
    %v3256 = vpop.f32.mrb[0].mxu0
    %v3257 = vadd.f32 0.0, %v3256
    %v3258 = vpop.f32.mrb[0].mxu0
    %v3259 = vpop.f32.mrb[0].mxu0
    %v3260 = vadd.f32 0.0, %v3259
    %v3261 = vpop.f32.mrb[0].mxu0
    %3262 = vmatprep.mubr.bf16.mxu0 %v3110
    %3263 = vmatmul.mubr.bf16.gmra.mrb[0].mxu0 %v3108
    %v3264 = vpop.f32.mrb[0].mxu0
    %v3265 = vadd.f32 0.0, %v3264
    %v3266 = vpop.f32.mrb[0].mxu0
    %v3267 = vpop.f32.mrb[0].mxu0
    %v3268 = vpop.f32.mrb[0].mxu0
    %3269 = vdwg.mxu0
    %v3270 = vadd.f32 %v3042, %v3249
    %v3271 = vadd.f32 %v3045, %v3252
    %v3272 = vadd.f32 %v3050, %v3257
    %v3273 = vadd.f32 %v3053, %v3260
    %v3274 = vadd.f32 %v3058, %v3265
    %v3275 = vld [vmem:[%s7] sm:$0x1]
    %v3277 = vlaneseq
    %v3278 = vshrl.u32 %v3277, 7
    %v3279 = vsub.s32 0, %v3278
    %v3280 = vrot.slane %v3275, %v3279
    %v3282 = vadd.f32 %v3270, %v3280
    %v3283 = vadd.f32 %v3271, %v3280
    %v3284 = vadd.f32 %v3272, %v3280
    %v3285 = vadd.f32 %v3273, %v3280
    %v3286 = vadd.f32 %v3274, %v3280
    %vm3287 = vcmp.ge.f32.partialorder %v3282, 0.0
    %vm3288 = vcmp.ge.f32.partialorder %v3283, 0.0
    %vm3289 = vcmp.ge.f32.partialorder %v3284, 0.0
    %vm3290 = vcmp.ge.f32.partialorder %v3285, 0.0
    %vm3291 = vcmp.ge.f32.partialorder %v3286, 0.0
    %v3292 = vmul.f32 %v3282, 0.2
    %v3293 = vmul.f32 %v3283, 0.2
    %v3294 = vmul.f32 %v3284, 0.2
    %v3295 = vmul.f32 %v3285, 0.2
    %v3296 = vmul.f32 %v3286, 0.2
    %v3297 = vsel %vm3287, %v3282, %v3292
    %v3298 = vsel %vm3288, %v3283, %v3293
    %v3299 = vsel %vm3289, %v3284, %v3294
    %v3300 = vsel %vm3290, %v3285, %v3295
    %v3301 = vsel %vm3291, %v3286, %v3296
    %v3302 = vld [vmem:[%s2] sm:$0xf]
    %v3303 = vld [vmem:[%s2 + $0x4] sm:$0xf]
    %v3304 = vunpack.c.l.bf16 %v3302
    %v3305 = vunpack.c.l.bf16 %v3303
    %v3306 = vmul.f32 %v3304, %v3297
    %v3307 = vmul.f32 %v3305, %v3298
    %v3308 = vld [vmem:[#allocation3] sm:$0xe]
    %v3309 = vld [vmem:[#allocation3 + $0x4] sm:$0xf]
    %v3310 = vld [vmem:[#allocation3 + $0x8] sm:$0x3]
    %v3311 = vunpack.c.l.bf16 %v3308
    %v3312 = vunpack.c.l.bf16 %v3309
    %v3313 = vunpack.c.l.bf16 %v3310
    %vm3317 = vcmask 1044480
    %v3318 = vrot.slane %v3311, 3
    %v3319 = vrot.slane %v3312, 3
    %v3320 = vsel %vm3317, %v3318, %v3319
    %v3321 = vrot.slane %v3313, 3
    %v3322 = vsel %vm3317, %v3319, %v3321
    %v3325 = vadd.f32 %v3306, %v3320
    %v3326 = vadd.f32 %v3307, %v3322
    %v3327 = vpack.c.bf16 %v3326, %v3325
    %v3329 = vunpack.c.l.b16 %v3327
    %v3330 = vunpack.c.h.b16 %v3327
    %v3331 = vpack.c.b16 %v3329, %v3329
    %v3332 = vpack.c.b16 %v3330, %v3330
    %v3334 = vshrl.u32 %v3331, 16
    %v3336 = vrot.slane %v3334, 6
    %v3337 = vshll.u32 %v3331, 16
    %v3339 = vrot.slane %v3337, 7
    %v3340 = vor.u32 %v3336, %v3339
    %v3341 = vrot.slane %v3340, 4
    %v3343 = vshrl.u32 %v3332, 16
    %v3345 = vrot.slane %v3343, 6
    %v3346 = vshll.u32 %v3332, 16
    %v3348 = vrot.slane %v3346, 7
    %v3349 = vor.u32 %v3345, %v3348
    %v3350 = vsel %vm185, %v3341, %v3349
    %v3351 = vrot.slane %v3349, 4
    %v3355 = vld [vmem:[#allocation5] sm:$0xe]
    %v3356 = vsel %vm243, %v3340, %v3355
    %3357 = vst [vmem:[#allocation5] sm:$0xe] %v3356
    %3358 = vst [vmem:[#allocation5 + $0x4] sm:$0xf] %v3350
    %v3359 = vld [vmem:[#allocation5 + $0x8] sm:$0x3]
    %v3360 = vsel %vm109, %v3351, %v3359
    %3361 = vst [vmem:[#allocation5 + $0x8] sm:$0x3] %v3360
    %s3362 = scalar_lea.vmem %s2, 8
    %v3363 = vld [vmem:[%s3362] sm:$0xf]
    %v3364 = vld [vmem:[%s3362 + $0x4] sm:$0xf]
    %v3365 = vunpack.c.l.bf16 %v3363
    %v3366 = vunpack.c.l.bf16 %v3364
    %vm3370 = vcmask 1041408
    %v3371 = vrot.slane %v3299, 6
    %v3372 = vrot.slane %v3300, 6
    %v3373 = vsel %vm3370, %v3371, %v3372
    %v3374 = vrot.slane %v3301, 6
    %v3375 = vsel %vm3370, %v3372, %v3374
    %v3378 = vmul.f32 %v3365, %v3373
    %v3379 = vmul.f32 %v3366, %v3375
    %v3380 = vld [vmem:[#allocation3 + $0xc] sm:$0xf]
    %v3381 = vld [vmem:[#allocation3 + $0x10] sm:$0xf]
    %v3382 = vld [vmem:[#allocation3 + $0x14] sm:$0x1]
    %v3383 = vunpack.c.l.bf16 %v3380
    %v3384 = vunpack.c.l.bf16 %v3381
    %v3385 = vunpack.c.l.bf16 %v3382
    %vm3389 = vcmask 1046528
    %v3390 = vrot.slane %v3383, 1
    %v3391 = vrot.slane %v3384, 1
    %v3392 = vsel %vm3389, %v3390, %v3391
    %v3393 = vrot.slane %v3385, 1
    %v3394 = vsel %vm3389, %v3391, %v3393
    %v3397 = vadd.f32 %v3378, %v3392
    %v3398 = vadd.f32 %v3379, %v3394
    %v3399 = vpack.c.bf16 %v3398, %v3397
    %v3401 = vunpack.c.l.b16 %v3399
    %v3402 = vunpack.c.h.b16 %v3399
    %v3403 = vpack.c.b16 %v3401, %v3401
    %v3404 = vpack.c.b16 %v3402, %v3402
    %v3406 = vshrl.u32 %v3403, 16
    %v3408 = vrot.slane %v3406, 7
    %v3409 = vshll.u32 %v3403, 16
    %v3411 = vor.u32 %v3408, %v3409
    %v3412 = vrot.slane %v3408, 4
    %v3414 = vshrl.u32 %v3404, 16
    %v3416 = vrot.slane %v3414, 7
    %v3417 = vshll.u32 %v3404, 16
    %v3419 = vor.u32 %v3416, %v3417
    %v3420 = vsel %vm255, %v3412, %v3419
    %v3421 = vrot.slane %v3416, 4
    %v3425 = vld [vmem:[#allocation5 + $0xc] sm:$0xf]
    %v3426 = vsel %vm309, %v3411, %v3425
    %3427 = vst [vmem:[#allocation5 + $0xc] sm:$0xf] %v3426
    %3428 = vst [vmem:[#allocation5 + $0x10] sm:$0xf] %v3420
    %v3429 = vld [vmem:[#allocation5 + $0x14] sm:$0x1]
    %v3430 = vsel %vm120, %v3421, %v3429
    %3431 = vst [vmem:[#allocation5 + $0x14] sm:$0x1] %v3430
    %v3432 = vld [vmem:[#allocation5] sm:$0xe]
    %v3433 = vld [vmem:[#allocation5 + $0x4] sm:$0xf]
    %v3434 = vld [vmem:[#allocation5 + $0x8] sm:$0xf]
    %v3435 = vld [vmem:[#allocation5 + $0xc] sm:$0xf]
    %v3436 = vld [vmem:[#allocation5 + $0x10] sm:$0xf]
    %v3437 = vld [vmem:[#allocation9] sm:$0xf]
    %v3438 = vld [vmem:[#allocation9 + $0x4] sm:$0xf]
    %v3439 = vld [vmem:[#allocation9 + $0x8] sm:$0xf]
    %v3440 = vld [vmem:[#allocation9 + $0xc] sm:$0xf]
    %v3441 = vld [vmem:[#allocation9 + $0x10] sm:$0xf]
    %v3442 = vld [vmem:[#allocation9 + $0x14] sm:$0xf]
    %v3443 = vld [vmem:[#allocation9 + $0x18] sm:$0xf]
    %v3444 = vld [vmem:[#allocation9 + $0x1c] sm:$0xf]
    %v3445 = vld [vmem:[#allocation9 + $0x20] sm:$0xf]
    %v3446 = vld [vmem:[#allocation9 + $0x24] sm:$0xf]
    %v3447 = vld [vmem:[#allocation9 + $0x28] sm:$0xf]
    %v3448 = vld [vmem:[#allocation9 + $0x2c] sm:$0xf]
    %v3449 = vld [vmem:[#allocation9 + $0x30] sm:$0xf]
    %v3450 = vld [vmem:[#allocation9 + $0x34] sm:$0xf]
    %v3451 = vld [vmem:[#allocation9 + $0x38] sm:$0xf]
    %v3452 = vld [vmem:[#allocation9 + $0x3c] sm:$0xf]
    %v3453 = vld [vmem:[#allocation5 + $0x14] sm:$0x1]
    %s3454 = scalar_lea.vmem [#allocation9], 64
    %v3455 = vld [vmem:[%s3454] sm:$0xf]
    %v3456 = vld [vmem:[%s3454 + $0x4] sm:$0xf]
    %v3457 = vld [vmem:[%s3454 + $0x8] sm:$0xf]
    %v3458 = vld [vmem:[%s3454 + $0xc] sm:$0xf]
    %v3459 = vld [vmem:[%s3454 + $0x10] sm:$0xf]
    %v3460 = vld [vmem:[%s3454 + $0x14] sm:$0xf]
    %v3461 = vld [vmem:[%s3454 + $0x18] sm:$0xf]
    %v3462 = vld [vmem:[%s3454 + $0x1c] sm:$0xf]
    %v3463 = vld [vmem:[%s3454 + $0x20] sm:$0xf]
    %v3464 = vld [vmem:[%s3454 + $0x24] sm:$0xf]
    %v3465 = vld [vmem:[%s3454 + $0x28] sm:$0xf]
    %v3466 = vld [vmem:[%s3454 + $0x2c] sm:$0xf]
    %v3467 = vld [vmem:[%s3454 + $0x30] sm:$0xf]
    %v3468 = vld [vmem:[%s3454 + $0x34] sm:$0xf]
    %v3469 = vld [vmem:[%s3454 + $0x38] sm:$0xf]
    %v3470 = vld [vmem:[%s3454 + $0x3c] sm:$0xf]
    %v3477 = vunpack.c.l.b16 %v3432
    %v3478 = vunpack.c.l.b16 %v3433
    %v3479 = vunpack.c.l.b16 %v3434
    %v3480 = vunpack.c.l.b16 %v3435
    %v3481 = vunpack.c.l.b16 %v3436
    %v3482 = vunpack.c.l.b16 %v3453
    %v3483 = vpack.c.b16 %v3478, %v3477
    %v3484 = vpack.c.b16 %v3480, %v3479
    %v3485 = vpack.c.b16 %v3482, %v3481
    %v3487 = vshrl.u32 %v3483, 16
    %v3489 = vrot.slane %v3487, 1
    %v3490 = vshll.u32 %v3483, 16
    %v3492 = vrot.slane %v3490, 2
    %v3493 = vor.u32 %v3489, %v3492
    %v3495 = vshrl.u32 %v3484, 16
    %v3497 = vrot.slane %v3495, 1
    %v3498 = vshll.u32 %v3484, 16
    %v3500 = vrot.slane %v3498, 2
    %v3501 = vor.u32 %v3497, %v3500
    %v3502 = vsel %vm1220, %v3493, %v3501
    %v3504 = vshrl.u32 %v3485, 16
    %v3506 = vrot.slane %v3504, 1
    %v3507 = vshll.u32 %v3485, 16
    %v3509 = vrot.slane %v3507, 2
    %v3510 = vor.u32 %v3506, %v3509
    %v3511 = vsel %vm1220, %v3501, %v3510
    %v3531 = vunpack.c.l.b16 %v3455
    %v3532 = vunpack.c.l.b16 %v3456
    %v3533 = vunpack.c.l.b16 %v3457
    %v3534 = vunpack.c.l.b16 %v3458
    %v3535 = vunpack.c.l.b16 %v3459
    %v3536 = vunpack.c.l.b16 %v3460
    %v3537 = vunpack.c.l.b16 %v3461
    %v3538 = vunpack.c.l.b16 %v3462
    %v3539 = vunpack.c.l.b16 %v3463
    %v3540 = vunpack.c.l.b16 %v3464
    %v3541 = vunpack.c.l.b16 %v3465
    %v3542 = vunpack.c.l.b16 %v3466
    %v3543 = vunpack.c.l.b16 %v3467
    %v3544 = vunpack.c.l.b16 %v3468
    %v3545 = vunpack.c.l.b16 %v3469
    %v3546 = vunpack.c.l.b16 %v3470
    %v3547 = vpack.c.b16 %v3532, %v3531
    %v3548 = vpack.c.b16 %v3534, %v3533
    %v3549 = vpack.c.b16 %v3536, %v3535
    %v3550 = vpack.c.b16 %v3538, %v3537
    %v3551 = vpack.c.b16 %v3540, %v3539
    %v3552 = vpack.c.b16 %v3542, %v3541
    %v3553 = vpack.c.b16 %v3544, %v3543
    %v3554 = vpack.c.b16 %v3546, %v3545
    %3563 = vmatprep.subr.bf16.mxu0 0
    %3564 = vmatpush1.bf16.msra.mxu0 %v3547
    %3565 = vmatprep.subr.bf16.mxu0 0
    %3566 = vmatpush1.bf16.msra.mxu0 %v3548
    %3567 = vmatprep.subr.bf16.mxu0 0
    %3568 = vmatpush1.bf16.msra.mxu0 %v3549
    %3569 = vmatprep.subr.bf16.mxu0 0
    %3570 = vmatpush1.bf16.msra.mxu0 %v3550
    %3571 = vmatprep.subr.bf16.mxu0 0
    %3572 = vmatpush1.bf16.msra.mxu0 %v3551
    %3573 = vmatprep.subr.bf16.mxu0 0
    %3574 = vmatpush1.bf16.msra.mxu0 %v3552
    %3575 = vmatprep.subr.bf16.mxu0 0
    %3576 = vmatpush1.bf16.msra.mxu0 %v3553
    %3577 = vmatprep.subr.bf16.mxu0 0
    %3578 = vmatpush1.bf16.msra.mxu0 %v3554
    %3579 = vmatprep.subr.bf16.mxu0 0
    %3580 = vmatpush1.bf16.msra.mxu0 0
    %3581 = vmatprep.subr.bf16.mxu0 0
    %3582 = vmatpush1.bf16.msra.mxu0 0
    %3583 = vmatprep.subr.bf16.mxu0 0
    %3584 = vmatpush1.bf16.msra.mxu0 0
    %3585 = vmatprep.subr.bf16.mxu0 0
    %3586 = vmatpush1.bf16.msra.mxu0 0
    %3587 = vmatprep.subr.bf16.mxu0 0
    %3588 = vmatpush1.bf16.msra.mxu0 0
    %3589 = vmatprep.subr.bf16.mxu0 0
    %3590 = vmatpush1.bf16.msra.mxu0 0
    %3591 = vmatprep.subr.bf16.mxu0 0
    %3592 = vmatpush1.bf16.msra.mxu0 0
    %3593 = vmatprep.subr.bf16.mxu0 0
    %3594 = vmatpush1.bf16.msra.mxu0 0
    %3595 = vmatprep.mubr.bf16.mxu0 0
    %3596 = vmatmul.mubr.bf16.gmra.mrb[0].mxu0 %v3502
    %v3597 = vpop.f32.mrb[0].mxu0
    %v3598 = vadd.f32 0.0, %v3597
    %v3599 = vpop.f32.mrb[0].mxu0
    %v3600 = vpop.f32.mrb[0].mxu0
    %v3601 = vadd.f32 0.0, %v3600
    %v3602 = vpop.f32.mrb[0].mxu0
    %3603 = vmatprep.mubr.bf16.mxu0 0
    %3604 = vmatmul.mubr.bf16.gmra.mrb[0].mxu0 %v3511
    %v3605 = vpop.f32.mrb[0].mxu0
    %v3606 = vadd.f32 0.0, %v3605
    %v3607 = vpop.f32.mrb[0].mxu0
    %v3608 = vpop.f32.mrb[0].mxu0
    %v3609 = vadd.f32 0.0, %v3608
    %v3610 = vpop.f32.mrb[0].mxu0
    %3611 = vmatprep.mubr.bf16.mxu0 0
    %3612 = vmatmul.mubr.bf16.gmra.mrb[0].mxu0 %v3510
    %v3613 = vpop.f32.mrb[0].mxu0
    %v3614 = vadd.f32 0.0, %v3613
    %v3615 = vpop.f32.mrb[0].mxu0
    %v3616 = vpop.f32.mrb[0].mxu0
    %v3617 = vpop.f32.mrb[0].mxu0
    %3618 = vdwg.mxu0
    %v3619 = vpack.c.b16 %v3481, %v3481
    %v3620 = vrot.slane %v3483, 1
    %v3621 = vrot.slane %v3484, 1
    %v3622 = vsel %vm920, %v3620, %v3621
    %v3623 = vrot.slane %v3619, 1
    %v3624 = vsel %vm920, %v3621, %v3623
    %v3644 = vunpack.c.l.b16 %v3437
    %v3645 = vunpack.c.l.b16 %v3438
    %v3646 = vunpack.c.l.b16 %v3439
    %v3647 = vunpack.c.l.b16 %v3440
    %v3648 = vunpack.c.l.b16 %v3441
    %v3649 = vunpack.c.l.b16 %v3442
    %v3650 = vunpack.c.l.b16 %v3443
    %v3651 = vunpack.c.l.b16 %v3444
    %v3652 = vunpack.c.l.b16 %v3445
    %v3653 = vunpack.c.l.b16 %v3446
    %v3654 = vunpack.c.l.b16 %v3447
    %v3655 = vunpack.c.l.b16 %v3448
    %v3656 = vunpack.c.l.b16 %v3449
    %v3657 = vunpack.c.l.b16 %v3450
    %v3658 = vunpack.c.l.b16 %v3451
    %v3659 = vunpack.c.l.b16 %v3452
    %v3660 = vpack.c.b16 %v3645, %v3644
    %v3661 = vpack.c.b16 %v3647, %v3646
    %v3662 = vpack.c.b16 %v3649, %v3648
    %v3663 = vpack.c.b16 %v3651, %v3650
    %v3664 = vpack.c.b16 %v3653, %v3652
    %v3665 = vpack.c.b16 %v3655, %v3654
    %v3666 = vpack.c.b16 %v3657, %v3656
    %v3667 = vpack.c.b16 %v3659, %v3658
    %3676 = vmatprep.subr.bf16.mxu0 0
    %3677 = vmatpush1.bf16.msra.mxu0 %v3660
    %3678 = vmatprep.subr.bf16.mxu0 0
    %3679 = vmatpush1.bf16.msra.mxu0 %v3661
    %3680 = vmatprep.subr.bf16.mxu0 0
    %3681 = vmatpush1.bf16.msra.mxu0 %v3662
    %3682 = vmatprep.subr.bf16.mxu0 0
    %3683 = vmatpush1.bf16.msra.mxu0 %v3663
    %3684 = vmatprep.subr.bf16.mxu0 0
    %3685 = vmatpush1.bf16.msra.mxu0 %v3664
    %3686 = vmatprep.subr.bf16.mxu0 0
    %3687 = vmatpush1.bf16.msra.mxu0 %v3665
    %3688 = vmatprep.subr.bf16.mxu0 0
    %3689 = vmatpush1.bf16.msra.mxu0 %v3666
    %3690 = vmatprep.subr.bf16.mxu0 0
    %3691 = vmatpush1.bf16.msra.mxu0 %v3667
    %3692 = vmatprep.subr.bf16.mxu0 0
    %3693 = vmatpush1.bf16.msra.mxu0 0
    %3694 = vmatprep.subr.bf16.mxu0 0
    %3695 = vmatpush1.bf16.msra.mxu0 0
    %3696 = vmatprep.subr.bf16.mxu0 0
    %3697 = vmatpush1.bf16.msra.mxu0 0
    %3698 = vmatprep.subr.bf16.mxu0 0
    %3699 = vmatpush1.bf16.msra.mxu0 0
    %3700 = vmatprep.subr.bf16.mxu0 0
    %3701 = vmatpush1.bf16.msra.mxu0 0
    %3702 = vmatprep.subr.bf16.mxu0 0
    %3703 = vmatpush1.bf16.msra.mxu0 0
    %3704 = vmatprep.subr.bf16.mxu0 0
    %3705 = vmatpush1.bf16.msra.mxu0 0
    %3706 = vmatprep.subr.bf16.mxu0 0
    %3707 = vmatpush1.bf16.msra.mxu0 0
    %3708 = vmatprep.mubr.bf16.mxu0 0
    %3709 = vmatmul.mubr.bf16.gmra.mrb[0].mxu0 %v3622
    %v3710 = vpop.f32.mrb[0].mxu0
    %v3711 = vadd.f32 %v3598, %v3710
    %v3712 = vpop.f32.mrb[0].mxu0
    %v3713 = vpop.f32.mrb[0].mxu0
    %v3714 = vadd.f32 %v3601, %v3713
    %v3715 = vpop.f32.mrb[0].mxu0
    %3716 = vmatprep.mubr.bf16.mxu0 0
    %3717 = vmatmul.mubr.bf16.gmra.mrb[0].mxu0 %v3624
    %v3718 = vpop.f32.mrb[0].mxu0
    %v3719 = vadd.f32 %v3606, %v3718
    %v3720 = vpop.f32.mrb[0].mxu0
    %v3721 = vpop.f32.mrb[0].mxu0
    %v3722 = vadd.f32 %v3609, %v3721
    %v3723 = vpop.f32.mrb[0].mxu0
    %3724 = vmatprep.mubr.bf16.mxu0 0
    %3725 = vmatmul.mubr.bf16.gmra.mrb[0].mxu0 %v3623
    %v3726 = vpop.f32.mrb[0].mxu0
    %v3727 = vadd.f32 %v3614, %v3726
    %v3728 = vpop.f32.mrb[0].mxu0
    %v3729 = vpop.f32.mrb[0].mxu0
    %v3730 = vpop.f32.mrb[0].mxu0
    %3731 = vdwg.mxu0
    %v3732 = vld [vmem:[#allocation5] sm:$0xc]
    %s3733 = scalar_lea.vmem [#allocation9], 128
    %v3734 = vld [vmem:[%s3733] sm:$0xf]
    %v3735 = vld [vmem:[%s3733 + $0x4] sm:$0xf]
    %v3736 = vld [vmem:[%s3733 + $0x8] sm:$0xf]
    %v3737 = vld [vmem:[%s3733 + $0xc] sm:$0xf]
    %v3738 = vld [vmem:[%s3733 + $0x10] sm:$0xf]
    %v3739 = vld [vmem:[%s3733 + $0x14] sm:$0xf]
    %v3740 = vld [vmem:[%s3733 + $0x18] sm:$0xf]
    %v3741 = vld [vmem:[%s3733 + $0x1c] sm:$0xf]
    %v3742 = vld [vmem:[%s3733 + $0x20] sm:$0xf]
    %v3743 = vld [vmem:[%s3733 + $0x24] sm:$0xf]
    %v3744 = vld [vmem:[%s3733 + $0x28] sm:$0xf]
    %v3745 = vld [vmem:[%s3733 + $0x2c] sm:$0xf]
    %v3746 = vld [vmem:[%s3733 + $0x30] sm:$0xf]
    %v3747 = vld [vmem:[%s3733 + $0x34] sm:$0xf]
    %v3748 = vld [vmem:[%s3733 + $0x38] sm:$0xf]
    %v3749 = vld [vmem:[%s3733 + $0x3c] sm:$0xf]
    %v3751 = vunpack.c.l.b16 %v3732
    %v3752 = vpack.c.b16 %v3478, %v3751
    %v3753 = vrot.slane %v3752, 2
    %v3754 = vrot.slane %v3484, 2
    %v3755 = vsel %vm1562, %v3753, %v3754
    %v3756 = vrot.slane %v3485, 2
    %v3757 = vsel %vm1562, %v3754, %v3756
    %v3777 = vunpack.c.l.b16 %v3734
    %v3778 = vunpack.c.l.b16 %v3735
    %v3779 = vunpack.c.l.b16 %v3736
    %v3780 = vunpack.c.l.b16 %v3737
    %v3781 = vunpack.c.l.b16 %v3738
    %v3782 = vunpack.c.l.b16 %v3739
    %v3783 = vunpack.c.l.b16 %v3740
    %v3784 = vunpack.c.l.b16 %v3741
    %v3785 = vunpack.c.l.b16 %v3742
    %v3786 = vunpack.c.l.b16 %v3743
    %v3787 = vunpack.c.l.b16 %v3744
    %v3788 = vunpack.c.l.b16 %v3745
    %v3789 = vunpack.c.l.b16 %v3746
    %v3790 = vunpack.c.l.b16 %v3747
    %v3791 = vunpack.c.l.b16 %v3748
    %v3792 = vunpack.c.l.b16 %v3749
    %v3793 = vpack.c.b16 %v3778, %v3777
    %v3794 = vpack.c.b16 %v3780, %v3779
    %v3795 = vpack.c.b16 %v3782, %v3781
    %v3796 = vpack.c.b16 %v3784, %v3783
    %v3797 = vpack.c.b16 %v3786, %v3785
    %v3798 = vpack.c.b16 %v3788, %v3787
    %v3799 = vpack.c.b16 %v3790, %v3789
    %v3800 = vpack.c.b16 %v3792, %v3791
    %3809 = vmatprep.subr.bf16.mxu0 0
    %3810 = vmatpush1.bf16.msra.mxu0 %v3793
    %3811 = vmatprep.subr.bf16.mxu0 0
    %3812 = vmatpush1.bf16.msra.mxu0 %v3794
    %3813 = vmatprep.subr.bf16.mxu0 0
    %3814 = vmatpush1.bf16.msra.mxu0 %v3795
    %3815 = vmatprep.subr.bf16.mxu0 0
    %3816 = vmatpush1.bf16.msra.mxu0 %v3796
    %3817 = vmatprep.subr.bf16.mxu0 0
    %3818 = vmatpush1.bf16.msra.mxu0 %v3797
    %3819 = vmatprep.subr.bf16.mxu0 0
    %3820 = vmatpush1.bf16.msra.mxu0 %v3798
    %3821 = vmatprep.subr.bf16.mxu0 0
    %3822 = vmatpush1.bf16.msra.mxu0 %v3799
    %3823 = vmatprep.subr.bf16.mxu0 0
    %3824 = vmatpush1.bf16.msra.mxu0 %v3800
    %3825 = vmatprep.subr.bf16.mxu0 0
    %3826 = vmatpush1.bf16.msra.mxu0 0
    %3827 = vmatprep.subr.bf16.mxu0 0
    %3828 = vmatpush1.bf16.msra.mxu0 0
    %3829 = vmatprep.subr.bf16.mxu0 0
    %3830 = vmatpush1.bf16.msra.mxu0 0
    %3831 = vmatprep.subr.bf16.mxu0 0
    %3832 = vmatpush1.bf16.msra.mxu0 0
    %3833 = vmatprep.subr.bf16.mxu0 0
    %3834 = vmatpush1.bf16.msra.mxu0 0
    %3835 = vmatprep.subr.bf16.mxu0 0
    %3836 = vmatpush1.bf16.msra.mxu0 0
    %3837 = vmatprep.subr.bf16.mxu0 0
    %3838 = vmatpush1.bf16.msra.mxu0 0
    %3839 = vmatprep.subr.bf16.mxu0 0
    %3840 = vmatpush1.bf16.msra.mxu0 0
    %3841 = vmatprep.mubr.bf16.mxu0 0
    %3842 = vmatmul.mubr.bf16.gmra.mrb[0].mxu0 %v3755
    %v3843 = vpop.f32.mrb[0].mxu0
    %v3844 = vadd.f32 0.0, %v3843
    %v3845 = vpop.f32.mrb[0].mxu0
    %v3846 = vpop.f32.mrb[0].mxu0
    %v3847 = vadd.f32 0.0, %v3846
    %v3848 = vpop.f32.mrb[0].mxu0
    %3849 = vmatprep.mubr.bf16.mxu0 0
    %3850 = vmatmul.mubr.bf16.gmra.mrb[0].mxu0 %v3757
    %v3851 = vpop.f32.mrb[0].mxu0
    %v3852 = vadd.f32 0.0, %v3851
    %v3853 = vpop.f32.mrb[0].mxu0
    %v3854 = vpop.f32.mrb[0].mxu0
    %v3855 = vadd.f32 0.0, %v3854
    %v3856 = vpop.f32.mrb[0].mxu0
    %3857 = vmatprep.mubr.bf16.mxu0 0
    %3858 = vmatmul.mubr.bf16.gmra.mrb[0].mxu0 %v3756
    %v3859 = vpop.f32.mrb[0].mxu0
    %v3860 = vadd.f32 0.0, %v3859
    %v3861 = vpop.f32.mrb[0].mxu0
    %v3862 = vpop.f32.mrb[0].mxu0
    %v3863 = vpop.f32.mrb[0].mxu0
    %3864 = vdwg.mxu0
    %v3865 = vadd.f32 %v3711, %v3844
    %v3866 = vadd.f32 %v3714, %v3847
    %v3867 = vadd.f32 %v3719, %v3852
    %v3868 = vadd.f32 %v3722, %v3855
    %v3869 = vadd.f32 %v3727, %v3860
    %v3870 = vld [vmem:[%s9] sm:$0x1]
    %v3872 = vlaneseq
    %v3873 = vshrl.u32 %v3872, 7
    %v3874 = vsub.s32 0, %v3873
    %v3875 = vrot.slane %v3870, %v3874
    %v3877 = vadd.f32 %v3865, %v3875
    %v3878 = vadd.f32 %v3866, %v3875
    %v3879 = vadd.f32 %v3867, %v3875
    %v3880 = vadd.f32 %v3868, %v3875
    %v3881 = vadd.f32 %v3869, %v3875
    %v3882 = vmax.f32 %v3877, 0.0
    %v3883 = vmax.f32 %v3878, 0.0
    %v3884 = vmax.f32 %v3879, 0.0
    %v3885 = vmax.f32 %v3880, 0.0
    %v3886 = vmax.f32 %v3881, 0.0
    %v3887 = vpack.c.bf16 %v3883, %v3882
    %v3889 = vunpack.c.l.b16 %v3887
    %v3890 = vunpack.c.h.b16 %v3887
    %v3891 = vpack.c.b16 %v3889, %v3889
    %v3892 = vpack.c.b16 %v3890, %v3890
    %v3894 = vshrl.u32 %v3891, 16
    %v3896 = vrot.slane %v3894, 6
    %v3897 = vshll.u32 %v3891, 16
    %v3899 = vrot.slane %v3897, 7
    %v3900 = vor.u32 %v3896, %v3899
    %v3901 = vrot.slane %v3900, 4
    %v3903 = vshrl.u32 %v3892, 16
    %v3905 = vrot.slane %v3903, 6
    %v3906 = vshll.u32 %v3892, 16
    %v3908 = vrot.slane %v3906, 7
    %v3909 = vor.u32 %v3905, %v3908
    %v3910 = vsel %vm185, %v3901, %v3909
    %v3911 = vrot.slane %v3909, 4
    %v3915 = vld [vmem:[#allocation6] sm:$0xe]
    %v3916 = vsel %vm243, %v3900, %v3915
    %3917 = vst [vmem:[#allocation6] sm:$0xe] %v3916
    %3918 = vst [vmem:[#allocation6 + $0x4] sm:$0xf] %v3910
    %v3919 = vld [vmem:[#allocation6 + $0x8] sm:$0x3]
    %v3920 = vsel %vm109, %v3911, %v3919
    %3921 = vst [vmem:[#allocation6 + $0x8] sm:$0x3] %v3920
    %v3922 = vpack.c.bf16 %v3885, %v3884
    %v3923 = vpack.c.bf16 %v3886, %v3886
    %v3926 = vunpack.c.l.b16 %v3922
    %v3927 = vunpack.c.h.b16 %v3922
    %v3928 = vunpack.c.l.b16 %v3923
    %v3929 = vpack.c.b16 %v3926, %v3926
    %v3930 = vpack.c.b16 %v3927, %v3927
    %v3931 = vpack.c.b16 %v3928, %v3928
    %v3933 = vshrl.u32 %v3929, 16
    %v3935 = vrot.slane %v3933, 6
    %v3936 = vshll.u32 %v3929, 16
    %v3938 = vrot.slane %v3936, 7
    %v3939 = vor.u32 %v3935, %v3938
    %v3940 = vrot.slane %v3939, 4
    %v3942 = vshrl.u32 %v3930, 16
    %v3944 = vrot.slane %v3942, 6
    %v3945 = vshll.u32 %v3930, 16
    %v3947 = vrot.slane %v3945, 7
    %v3948 = vor.u32 %v3944, %v3947
    %v3949 = vsel %vm185, %v3940, %v3948
    %v3950 = vrot.slane %v3948, 4
    %v3952 = vshrl.u32 %v3931, 16
    %v3954 = vrot.slane %v3952, 6
    %v3955 = vshll.u32 %v3931, 16
    %v3957 = vrot.slane %v3955, 7
    %v3958 = vor.u32 %v3954, %v3957
    %v3959 = vsel %vm185, %v3950, %v3958
    %v3960 = vrot.slane %v3954, 4
    %v3964 = vld [vmem:[#allocation6 + $0xc] sm:$0xf]
    %v3965 = vsel %vm309, %v3949, %v3964
    %3966 = vst [vmem:[#allocation6 + $0xc] sm:$0xf] %v3965
    %3967 = vst [vmem:[#allocation6 + $0x10] sm:$0xf] %v3959
    %v3968 = vld [vmem:[#allocation6 + $0x14] sm:$0x1]
    %v3969 = vsel %vm120, %v3960, %v3968
    %3970 = vst [vmem:[#allocation6 + $0x14] sm:$0x1] %v3969
    %v3971 = vld [vmem:[#allocation6] sm:$0xe]
    %v3972 = vld [vmem:[#allocation6 + $0x4] sm:$0xf]
    %v3973 = vld [vmem:[#allocation6 + $0x8] sm:$0xf]
    %v3974 = vld [vmem:[#allocation6 + $0xc] sm:$0xf]
    %v3975 = vld [vmem:[#allocation6 + $0x10] sm:$0xf]
    %v3976 = vld [vmem:[#allocation11] sm:$0xf]
    %v3977 = vld [vmem:[#allocation11 + $0x4] sm:$0xf]
    %v3978 = vld [vmem:[#allocation11 + $0x8] sm:$0xf]
    %v3979 = vld [vmem:[#allocation11 + $0xc] sm:$0xf]
    %v3980 = vld [vmem:[#allocation11 + $0x10] sm:$0xf]
    %v3981 = vld [vmem:[#allocation11 + $0x14] sm:$0xf]
    %v3982 = vld [vmem:[#allocation11 + $0x18] sm:$0xf]
    %v3983 = vld [vmem:[#allocation11 + $0x1c] sm:$0xf]
    %v3984 = vld [vmem:[#allocation11 + $0x20] sm:$0xf]
    %v3985 = vld [vmem:[#allocation11 + $0x24] sm:$0xf]
    %v3986 = vld [vmem:[#allocation11 + $0x28] sm:$0xf]
    %v3987 = vld [vmem:[#allocation11 + $0x2c] sm:$0xf]
    %v3988 = vld [vmem:[#allocation11 + $0x30] sm:$0xf]
    %v3989 = vld [vmem:[#allocation11 + $0x34] sm:$0xf]
    %v3990 = vld [vmem:[#allocation11 + $0x38] sm:$0xf]
    %v3991 = vld [vmem:[#allocation11 + $0x3c] sm:$0xf]
    %v3992 = vld [vmem:[#allocation6 + $0x14] sm:$0x1]
    %s3993 = scalar_lea.vmem [#allocation11], 64
    %v3994 = vld [vmem:[%s3993] sm:$0xf]
    %v3995 = vld [vmem:[%s3993 + $0x4] sm:$0xf]
    %v3996 = vld [vmem:[%s3993 + $0x8] sm:$0xf]
    %v3997 = vld [vmem:[%s3993 + $0xc] sm:$0xf]
    %v3998 = vld [vmem:[%s3993 + $0x10] sm:$0xf]
    %v3999 = vld [vmem:[%s3993 + $0x14] sm:$0xf]
    %v4000 = vld [vmem:[%s3993 + $0x18] sm:$0xf]
    %v4001 = vld [vmem:[%s3993 + $0x1c] sm:$0xf]
    %v4002 = vld [vmem:[%s3993 + $0x20] sm:$0xf]
    %v4003 = vld [vmem:[%s3993 + $0x24] sm:$0xf]
    %v4004 = vld [vmem:[%s3993 + $0x28] sm:$0xf]
    %v4005 = vld [vmem:[%s3993 + $0x2c] sm:$0xf]
    %v4006 = vld [vmem:[%s3993 + $0x30] sm:$0xf]
    %v4007 = vld [vmem:[%s3993 + $0x34] sm:$0xf]
    %v4008 = vld [vmem:[%s3993 + $0x38] sm:$0xf]
    %v4009 = vld [vmem:[%s3993 + $0x3c] sm:$0xf]
    %v4016 = vunpack.c.l.b16 %v3971
    %v4017 = vunpack.c.l.b16 %v3972
    %v4018 = vunpack.c.l.b16 %v3973
    %v4019 = vunpack.c.l.b16 %v3974
    %v4020 = vunpack.c.l.b16 %v3975
    %v4021 = vunpack.c.l.b16 %v3992
    %v4022 = vpack.c.b16 %v4017, %v4016
    %v4023 = vpack.c.b16 %v4019, %v4018
    %v4024 = vpack.c.b16 %v4021, %v4020
    %v4026 = vshrl.u32 %v4022, 16
    %v4028 = vrot.slane %v4026, 1
    %v4029 = vshll.u32 %v4022, 16
    %v4031 = vrot.slane %v4029, 2
    %v4032 = vor.u32 %v4028, %v4031
    %v4034 = vshrl.u32 %v4023, 16
    %v4036 = vrot.slane %v4034, 1
    %v4037 = vshll.u32 %v4023, 16
    %v4039 = vrot.slane %v4037, 2
    %v4040 = vor.u32 %v4036, %v4039
    %v4041 = vsel %vm1220, %v4032, %v4040
    %v4043 = vshrl.u32 %v4024, 16
    %v4045 = vrot.slane %v4043, 1
    %v4046 = vshll.u32 %v4024, 16
    %v4048 = vrot.slane %v4046, 2
    %v4049 = vor.u32 %v4045, %v4048
    %v4050 = vsel %vm1220, %v4040, %v4049
    %v4070 = vunpack.c.l.b16 %v3994
    %v4071 = vunpack.c.l.b16 %v3995
    %v4072 = vunpack.c.l.b16 %v3996
    %v4073 = vunpack.c.l.b16 %v3997
    %v4074 = vunpack.c.l.b16 %v3998
    %v4075 = vunpack.c.l.b16 %v3999
    %v4076 = vunpack.c.l.b16 %v4000
    %v4077 = vunpack.c.l.b16 %v4001
    %v4078 = vunpack.c.l.b16 %v4002
    %v4079 = vunpack.c.l.b16 %v4003
    %v4080 = vunpack.c.l.b16 %v4004
    %v4081 = vunpack.c.l.b16 %v4005
    %v4082 = vunpack.c.l.b16 %v4006
    %v4083 = vunpack.c.l.b16 %v4007
    %v4084 = vunpack.c.l.b16 %v4008
    %v4085 = vunpack.c.l.b16 %v4009
    %v4086 = vpack.c.b16 %v4071, %v4070
    %v4087 = vpack.c.b16 %v4073, %v4072
    %v4088 = vpack.c.b16 %v4075, %v4074
    %v4089 = vpack.c.b16 %v4077, %v4076
    %v4090 = vpack.c.b16 %v4079, %v4078
    %v4091 = vpack.c.b16 %v4081, %v4080
    %v4092 = vpack.c.b16 %v4083, %v4082
    %v4093 = vpack.c.b16 %v4085, %v4084
    %4102 = vmatprep.subr.bf16.mxu0 0
    %4103 = vmatpush1.bf16.msra.mxu0 %v4086
    %4104 = vmatprep.subr.bf16.mxu0 0
    %4105 = vmatpush1.bf16.msra.mxu0 %v4087
    %4106 = vmatprep.subr.bf16.mxu0 0
    %4107 = vmatpush1.bf16.msra.mxu0 %v4088
    %4108 = vmatprep.subr.bf16.mxu0 0
    %4109 = vmatpush1.bf16.msra.mxu0 %v4089
    %4110 = vmatprep.subr.bf16.mxu0 0
    %4111 = vmatpush1.bf16.msra.mxu0 %v4090
    %4112 = vmatprep.subr.bf16.mxu0 0
    %4113 = vmatpush1.bf16.msra.mxu0 %v4091
    %4114 = vmatprep.subr.bf16.mxu0 0
    %4115 = vmatpush1.bf16.msra.mxu0 %v4092
    %4116 = vmatprep.subr.bf16.mxu0 0
    %4117 = vmatpush1.bf16.msra.mxu0 %v4093
    %4118 = vmatprep.subr.bf16.mxu0 0
    %4119 = vmatpush1.bf16.msra.mxu0 0
    %4120 = vmatprep.subr.bf16.mxu0 0
    %4121 = vmatpush1.bf16.msra.mxu0 0
    %4122 = vmatprep.subr.bf16.mxu0 0
    %4123 = vmatpush1.bf16.msra.mxu0 0
    %4124 = vmatprep.subr.bf16.mxu0 0
    %4125 = vmatpush1.bf16.msra.mxu0 0
    %4126 = vmatprep.subr.bf16.mxu0 0
    %4127 = vmatpush1.bf16.msra.mxu0 0
    %4128 = vmatprep.subr.bf16.mxu0 0
    %4129 = vmatpush1.bf16.msra.mxu0 0
    %4130 = vmatprep.subr.bf16.mxu0 0
    %4131 = vmatpush1.bf16.msra.mxu0 0
    %4132 = vmatprep.subr.bf16.mxu0 0
    %4133 = vmatpush1.bf16.msra.mxu0 0
    %4134 = vmatprep.mubr.bf16.mxu0 0
    %4135 = vmatmul.mubr.bf16.gmra.mrb[0].mxu0 %v4041
    %v4136 = vpop.f32.mrb[0].mxu0
    %v4137 = vadd.f32 0.0, %v4136
    %v4138 = vpop.f32.mrb[0].mxu0
    %v4139 = vpop.f32.mrb[0].mxu0
    %v4140 = vadd.f32 0.0, %v4139
    %v4141 = vpop.f32.mrb[0].mxu0
    %4142 = vmatprep.mubr.bf16.mxu0 0
    %4143 = vmatmul.mubr.bf16.gmra.mrb[0].mxu0 %v4050
    %v4144 = vpop.f32.mrb[0].mxu0
    %v4145 = vadd.f32 0.0, %v4144
    %v4146 = vpop.f32.mrb[0].mxu0
    %v4147 = vpop.f32.mrb[0].mxu0
    %v4148 = vadd.f32 0.0, %v4147
    %v4149 = vpop.f32.mrb[0].mxu0
    %4150 = vmatprep.mubr.bf16.mxu0 0
    %4151 = vmatmul.mubr.bf16.gmra.mrb[0].mxu0 %v4049
    %v4152 = vpop.f32.mrb[0].mxu0
    %v4153 = vadd.f32 0.0, %v4152
    %v4154 = vpop.f32.mrb[0].mxu0
    %v4155 = vpop.f32.mrb[0].mxu0
    %v4156 = vpop.f32.mrb[0].mxu0
    %4157 = vdwg.mxu0
    %v4158 = vpack.c.b16 %v4020, %v4020
    %v4159 = vrot.slane %v4022, 1
    %v4160 = vrot.slane %v4023, 1
    %v4161 = vsel %vm920, %v4159, %v4160
    %v4162 = vrot.slane %v4158, 1
    %v4163 = vsel %vm920, %v4160, %v4162
    %v4183 = vunpack.c.l.b16 %v3976
    %v4184 = vunpack.c.l.b16 %v3977
    %v4185 = vunpack.c.l.b16 %v3978
    %v4186 = vunpack.c.l.b16 %v3979
    %v4187 = vunpack.c.l.b16 %v3980
    %v4188 = vunpack.c.l.b16 %v3981
    %v4189 = vunpack.c.l.b16 %v3982
    %v4190 = vunpack.c.l.b16 %v3983
    %v4191 = vunpack.c.l.b16 %v3984
    %v4192 = vunpack.c.l.b16 %v3985
    %v4193 = vunpack.c.l.b16 %v3986
    %v4194 = vunpack.c.l.b16 %v3987
    %v4195 = vunpack.c.l.b16 %v3988
    %v4196 = vunpack.c.l.b16 %v3989
    %v4197 = vunpack.c.l.b16 %v3990
    %v4198 = vunpack.c.l.b16 %v3991
    %v4199 = vpack.c.b16 %v4184, %v4183
    %v4200 = vpack.c.b16 %v4186, %v4185
    %v4201 = vpack.c.b16 %v4188, %v4187
    %v4202 = vpack.c.b16 %v4190, %v4189
    %v4203 = vpack.c.b16 %v4192, %v4191
    %v4204 = vpack.c.b16 %v4194, %v4193
    %v4205 = vpack.c.b16 %v4196, %v4195
    %v4206 = vpack.c.b16 %v4198, %v4197
    %4215 = vmatprep.subr.bf16.mxu0 0
    %4216 = vmatpush1.bf16.msra.mxu0 %v4199
    %4217 = vmatprep.subr.bf16.mxu0 0
    %4218 = vmatpush1.bf16.msra.mxu0 %v4200
    %4219 = vmatprep.subr.bf16.mxu0 0
    %4220 = vmatpush1.bf16.msra.mxu0 %v4201
    %4221 = vmatprep.subr.bf16.mxu0 0
    %4222 = vmatpush1.bf16.msra.mxu0 %v4202
    %4223 = vmatprep.subr.bf16.mxu0 0
    %4224 = vmatpush1.bf16.msra.mxu0 %v4203
    %4225 = vmatprep.subr.bf16.mxu0 0
    %4226 = vmatpush1.bf16.msra.mxu0 %v4204
    %4227 = vmatprep.subr.bf16.mxu0 0
    %4228 = vmatpush1.bf16.msra.mxu0 %v4205
    %4229 = vmatprep.subr.bf16.mxu0 0
    %4230 = vmatpush1.bf16.msra.mxu0 %v4206
    %4231 = vmatprep.subr.bf16.mxu0 0
    %4232 = vmatpush1.bf16.msra.mxu0 0
    %4233 = vmatprep.subr.bf16.mxu0 0
    %4234 = vmatpush1.bf16.msra.mxu0 0
    %4235 = vmatprep.subr.bf16.mxu0 0
    %4236 = vmatpush1.bf16.msra.mxu0 0
    %4237 = vmatprep.subr.bf16.mxu0 0
    %4238 = vmatpush1.bf16.msra.mxu0 0
    %4239 = vmatprep.subr.bf16.mxu0 0
    %4240 = vmatpush1.bf16.msra.mxu0 0
    %4241 = vmatprep.subr.bf16.mxu0 0
    %4242 = vmatpush1.bf16.msra.mxu0 0
    %4243 = vmatprep.subr.bf16.mxu0 0
    %4244 = vmatpush1.bf16.msra.mxu0 0
    %4245 = vmatprep.subr.bf16.mxu0 0
    %4246 = vmatpush1.bf16.msra.mxu0 0
    %4247 = vmatprep.mubr.bf16.mxu0 0
    %4248 = vmatmul.mubr.bf16.gmra.mrb[0].mxu0 %v4161
    %v4249 = vpop.f32.mrb[0].mxu0
    %v4250 = vadd.f32 %v4137, %v4249
    %v4251 = vpop.f32.mrb[0].mxu0
    %v4252 = vpop.f32.mrb[0].mxu0
    %v4253 = vadd.f32 %v4140, %v4252
    %v4254 = vpop.f32.mrb[0].mxu0
    %4255 = vmatprep.mubr.bf16.mxu0 0
    %4256 = vmatmul.mubr.bf16.gmra.mrb[0].mxu0 %v4163
    %v4257 = vpop.f32.mrb[0].mxu0
    %v4258 = vadd.f32 %v4145, %v4257
    %v4259 = vpop.f32.mrb[0].mxu0
    %v4260 = vpop.f32.mrb[0].mxu0
    %v4261 = vadd.f32 %v4148, %v4260
    %v4262 = vpop.f32.mrb[0].mxu0
    %4263 = vmatprep.mubr.bf16.mxu0 0
    %4264 = vmatmul.mubr.bf16.gmra.mrb[0].mxu0 %v4162
    %v4265 = vpop.f32.mrb[0].mxu0
    %v4266 = vadd.f32 %v4153, %v4265
    %v4267 = vpop.f32.mrb[0].mxu0
    %v4268 = vpop.f32.mrb[0].mxu0
    %v4269 = vpop.f32.mrb[0].mxu0
    %4270 = vdwg.mxu0
    %v4271 = vld [vmem:[#allocation6] sm:$0xc]
    %s4272 = scalar_lea.vmem [#allocation11], 128
    %v4273 = vld [vmem:[%s4272] sm:$0xf]
    %v4274 = vld [vmem:[%s4272 + $0x4] sm:$0xf]
    %v4275 = vld [vmem:[%s4272 + $0x8] sm:$0xf]
    %v4276 = vld [vmem:[%s4272 + $0xc] sm:$0xf]
    %v4277 = vld [vmem:[%s4272 + $0x10] sm:$0xf]
    %v4278 = vld [vmem:[%s4272 + $0x14] sm:$0xf]
    %v4279 = vld [vmem:[%s4272 + $0x18] sm:$0xf]
    %v4280 = vld [vmem:[%s4272 + $0x1c] sm:$0xf]
    %v4281 = vld [vmem:[%s4272 + $0x20] sm:$0xf]
    %v4282 = vld [vmem:[%s4272 + $0x24] sm:$0xf]
    %v4283 = vld [vmem:[%s4272 + $0x28] sm:$0xf]
    %v4284 = vld [vmem:[%s4272 + $0x2c] sm:$0xf]
    %v4285 = vld [vmem:[%s4272 + $0x30] sm:$0xf]
    %v4286 = vld [vmem:[%s4272 + $0x34] sm:$0xf]
    %v4287 = vld [vmem:[%s4272 + $0x38] sm:$0xf]
    %v4288 = vld [vmem:[%s4272 + $0x3c] sm:$0xf]
    %v4290 = vunpack.c.l.b16 %v4271
    %v4291 = vpack.c.b16 %v4017, %v4290
    %v4292 = vrot.slane %v4291, 2
    %v4293 = vrot.slane %v4023, 2
    %v4294 = vsel %vm1562, %v4292, %v4293
    %v4295 = vrot.slane %v4024, 2
    %v4296 = vsel %vm1562, %v4293, %v4295
    %v4316 = vunpack.c.l.b16 %v4273
    %v4317 = vunpack.c.l.b16 %v4274
    %v4318 = vunpack.c.l.b16 %v4275
    %v4319 = vunpack.c.l.b16 %v4276
    %v4320 = vunpack.c.l.b16 %v4277
    %v4321 = vunpack.c.l.b16 %v4278
    %v4322 = vunpack.c.l.b16 %v4279
    %v4323 = vunpack.c.l.b16 %v4280
    %v4324 = vunpack.c.l.b16 %v4281
    %v4325 = vunpack.c.l.b16 %v4282
    %v4326 = vunpack.c.l.b16 %v4283
    %v4327 = vunpack.c.l.b16 %v4284
    %v4328 = vunpack.c.l.b16 %v4285
    %v4329 = vunpack.c.l.b16 %v4286
    %v4330 = vunpack.c.l.b16 %v4287
    %v4331 = vunpack.c.l.b16 %v4288
    %v4332 = vpack.c.b16 %v4317, %v4316
    %v4333 = vpack.c.b16 %v4319, %v4318
    %v4334 = vpack.c.b16 %v4321, %v4320
    %v4335 = vpack.c.b16 %v4323, %v4322
    %v4336 = vpack.c.b16 %v4325, %v4324
    %v4337 = vpack.c.b16 %v4327, %v4326
    %v4338 = vpack.c.b16 %v4329, %v4328
    %v4339 = vpack.c.b16 %v4331, %v4330
    %4348 = vmatprep.subr.bf16.mxu0 0
    %4349 = vmatpush1.bf16.msra.mxu0 %v4332
    %4350 = vmatprep.subr.bf16.mxu0 0
    %4351 = vmatpush1.bf16.msra.mxu0 %v4333
    %4352 = vmatprep.subr.bf16.mxu0 0
    %4353 = vmatpush1.bf16.msra.mxu0 %v4334
    %4354 = vmatprep.subr.bf16.mxu0 0
    %4355 = vmatpush1.bf16.msra.mxu0 %v4335
    %4356 = vmatprep.subr.bf16.mxu0 0
    %4357 = vmatpush1.bf16.msra.mxu0 %v4336
    %4358 = vmatprep.subr.bf16.mxu0 0
    %4359 = vmatpush1.bf16.msra.mxu0 %v4337
    %4360 = vmatprep.subr.bf16.mxu0 0
    %4361 = vmatpush1.bf16.msra.mxu0 %v4338
    %4362 = vmatprep.subr.bf16.mxu0 0
    %4363 = vmatpush1.bf16.msra.mxu0 %v4339
    %4364 = vmatprep.subr.bf16.mxu0 0
    %4365 = vmatpush1.bf16.msra.mxu0 0
    %4366 = vmatprep.subr.bf16.mxu0 0
    %4367 = vmatpush1.bf16.msra.mxu0 0
    %4368 = vmatprep.subr.bf16.mxu0 0
    %4369 = vmatpush1.bf16.msra.mxu0 0
    %4370 = vmatprep.subr.bf16.mxu0 0
    %4371 = vmatpush1.bf16.msra.mxu0 0
    %4372 = vmatprep.subr.bf16.mxu0 0
    %4373 = vmatpush1.bf16.msra.mxu0 0
    %4374 = vmatprep.subr.bf16.mxu0 0
    %4375 = vmatpush1.bf16.msra.mxu0 0
    %4376 = vmatprep.subr.bf16.mxu0 0
    %4377 = vmatpush1.bf16.msra.mxu0 0
    %4378 = vmatprep.subr.bf16.mxu0 0
    %4379 = vmatpush1.bf16.msra.mxu0 0
    %4380 = vmatprep.mubr.bf16.mxu0 0
    %4381 = vmatmul.mubr.bf16.gmra.mrb[0].mxu0 %v4294
    %v4382 = vpop.f32.mrb[0].mxu0
    %v4383 = vadd.f32 0.0, %v4382
    %v4384 = vpop.f32.mrb[0].mxu0
    %v4385 = vpop.f32.mrb[0].mxu0
    %v4386 = vadd.f32 0.0, %v4385
    %v4387 = vpop.f32.mrb[0].mxu0
    %4388 = vmatprep.mubr.bf16.mxu0 0
    %4389 = vmatmul.mubr.bf16.gmra.mrb[0].mxu0 %v4296
    %v4390 = vpop.f32.mrb[0].mxu0
    %v4391 = vadd.f32 0.0, %v4390
    %v4392 = vpop.f32.mrb[0].mxu0
    %v4393 = vpop.f32.mrb[0].mxu0
    %v4394 = vadd.f32 0.0, %v4393
    %v4395 = vpop.f32.mrb[0].mxu0
    %4396 = vmatprep.mubr.bf16.mxu0 0
    %4397 = vmatmul.mubr.bf16.gmra.mrb[0].mxu0 %v4295
    %v4398 = vpop.f32.mrb[0].mxu0
    %v4399 = vadd.f32 0.0, %v4398
    %v4400 = vpop.f32.mrb[0].mxu0
    %v4401 = vpop.f32.mrb[0].mxu0
    %v4402 = vpop.f32.mrb[0].mxu0
    %4403 = vdwg.mxu0
    %v4404 = vadd.f32 %v4250, %v4383
    %v4405 = vadd.f32 %v4253, %v4386
    %v4406 = vadd.f32 %v4258, %v4391
    %v4407 = vadd.f32 %v4261, %v4394
    %v4408 = vadd.f32 %v4266, %v4399
    %v4409 = vld [vmem:[%s11] sm:$0x1]
    %v4411 = vlaneseq
    %v4412 = vshrl.u32 %v4411, 7
    %v4413 = vsub.s32 0, %v4412
    %v4414 = vrot.slane %v4409, %v4413
    %v4416 = vadd.f32 %v4404, %v4414
    %v4417 = vadd.f32 %v4405, %v4414
    %v4418 = vadd.f32 %v4406, %v4414
    %v4419 = vadd.f32 %v4407, %v4414
    %v4420 = vadd.f32 %v4408, %v4414
    %v4421 = vld [vmem:[#allocation5] sm:$0xe]
    %v4422 = vld [vmem:[#allocation5 + $0x4] sm:$0xf]
    %v4423 = vld [vmem:[#allocation5 + $0x8] sm:$0x3]
    %v4424 = vunpack.c.l.bf16 %v4421
    %v4425 = vunpack.c.l.bf16 %v4422
    %v4426 = vunpack.c.l.bf16 %v4423
    %v4430 = vrot.slane %v4424, 3
    %v4431 = vrot.slane %v4425, 3
    %v4432 = vsel %vm3317, %v4430, %v4431
    %v4433 = vrot.slane %v4426, 3
    %v4434 = vsel %vm3317, %v4431, %v4433
    %v4437 = vadd.f32 %v4416, %v4432
    %v4438 = vadd.f32 %v4417, %v4434
    %4439 = vst [vmem:[%s12] sm:$0xff] %v4437
    %4440 = vst [vmem:[%s12 + $0x8] sm:$0xff] %v4438
    %v4441 = vld [vmem:[#allocation5 + $0xc] sm:$0xf]
    %v4442 = vld [vmem:[#allocation5 + $0x10] sm:$0xf]
    %v4443 = vld [vmem:[#allocation5 + $0x14] sm:$0x1]
    %v4444 = vunpack.c.l.bf16 %v4441
    %v4445 = vunpack.c.l.bf16 %v4442
    %v4446 = vunpack.c.l.bf16 %v4443
    %v4450 = vrot.slane %v4444, 3
    %v4451 = vrot.slane %v4445, 3
    %v4452 = vsel %vm3317, %v4450, %v4451
    %v4453 = vrot.slane %v4446, 3
    %v4454 = vsel %vm3317, %v4451, %v4453
    %v4458 = vadd.f32 %v4418, %v4450
    %v4459 = vadd.f32 %v4419, %v4452
    %v4460 = vadd.f32 %v4420, %v4454
    %s4461 = scalar_lea.vmem %s12, 16
    %4462 = vst [vmem:[%s4461 - $0x6] sm:$0xc0] %v4458
    %4463 = vst [vmem:[%s4461 + $0x2] sm:$0xff] %v4459
    %4464 = vst [vmem:[%s4461 + $0xa] sm:$0x3f] %v4460
    // Predicated region
    $region62: #{af_forward.1} parent=1 // pred_check
      _
    $region63: #{af_forward.1} parent=1 // pred_check_branch
      %4466 = sbr.rel (0) target = $region65
    $region64: #{af_forward.1} parent=1 // pred_region
      _
    $region65: #{af_forward.1} parent=1 // pred_fallthru
      _
    // Predicated region
    $region66: #{af_forward.1} parent=1 // pred_check
      _
    $region67: #{af_forward.1} parent=1 // pred_check_branch
      %4468 = sbr.rel (0) target = $region69
    $region68: #{af_forward.1} parent=1 // pred_region
      _
    $region69: #{af_forward.1} parent=1 // pred_fallthru
      _
    %4469 = vsyncpa [#allocation8], 1
    %4470 = vsyncpa [#allocation10], 1

</llo_original>
